<compile_context>
chip_gen: v7x
topology: tpu7x:2x2x1
jax: 0.10.0
libtpu: 0.0.40
codegen_flags: <defaults>
</compile_context>

<pallas_src>
import functools

import jax
import jax.numpy as jnp
import numpy as np
from jax.experimental import pallas as pl
from jax.experimental.pallas import tpu as pltpu

P = 8  # DFFN patch size


def _gelu(x):
    # Exact (erf-based) GELU, matching torch.nn.functional.gelu.  erf is evaluated
    # with the Abramowitz-Stegun 7.1.26 polynomial (|err| < 1.5e-7) so only ops
    # with guaranteed Mosaic lowerings (exp/abs/where) are used inside the kernel.
    a1, a2, a3, a4, a5 = 0.254829592, -0.284496736, 1.421413741, -1.453152027, 1.061405429
    p = 0.3275911
    z = x * 0.7071067811865476
    az = jnp.abs(z)
    t = 1.0 / (1.0 + p * az)
    poly = ((((a5 * t + a4) * t + a3) * t + a2) * t + a1) * t
    erf_abs = 1.0 - poly * jnp.exp(-az * az)
    erf_z = jnp.where(z >= 0, erf_abs, -erf_abs)
    return 0.5 * x * (1.0 + erf_z)


def _fuse_kernel(enc_ref, dnc_ref,
                 w1e_ref, w1d_ref, b1_ref,
                 lng_ref, lnb_ref,
                 wpi_ref, afull_ref, wfreq_ref, bfull_ref, wdw_ref,
                 sel1_ref, sel2_ref, wpo_ref,
                 wfin_ref, bfin_ref,
                 o_ref, *, H, W):
    """One batch image per grid step.  All activations are (H*W, C) rows."""
    f32 = jnp.float32
    bf16 = jnp.bfloat16
    HW = H * W
    C2 = wdw_ref.shape[1]

    xe = enc_ref[0]                        # (HW, n_feat) bf16
    xd = dnc_ref[0]

    # ---- Fuse.conv : 1x1 conv (bias) on concat(enc, dnc); the concat is avoided
    #      by splitting the weight rows in the wrapper.
    y1 = (jnp.dot(xe, w1e_ref[...], preferred_element_type=f32)
          + jnp.dot(xd, w1d_ref[...], preferred_element_type=f32)
          + b1_ref[...])                   # (HW, C1) f32

    # ---- LayerNorm 'WithBias' over channels (per pixel), eps = 1e-5, f32 math.
    mu = jnp.mean(y1, axis=-1, keepdims=True)
    var = jnp.mean(jnp.square(y1 - mu), axis=-1, keepdims=True)
    t = (y1 - mu) * jax.lax.rsqrt(var + 1e-5) * lng_ref[...] + lnb_ref[...]

    # ---- DFFN.project_in (1x1, no bias)
    u = jnp.dot(t.astype(bf16), wpi_ref[...], preferred_element_type=f32)        # (HW, C2)

    # ---- per-8x8-patch  irfft2(rfft2(.) * fft_param)  as two fused MXU matmuls
    #      (the patch gather/scatter permutation is folded into Afull / Bfull).
    freq = jnp.dot(afull_ref[...], u.astype(bf16), preferred_element_type=f32)   # (nP*80, C2)
    freq = freq * wfreq_ref[...]
    uf = jnp.dot(bfull_ref[...], freq.astype(bf16), preferred_element_type=f32)  # (HW, C2)

    # ---- depthwise 3x3 conv, padding=1, no bias: zero halo built with
    #      tile-aligned concatenates, then 9 lane-broadcast taps (per-channel
    #      weights broadcast along lanes -> pure VPU work, no matmul relayouts).
    ug = uf.reshape(H, W, C2)                                   # layout-preserving reshape
    zrow = jnp.zeros((1, W, C2), f32)
    ug = jnp.concatenate([zrow, ug, zrow], axis=0)              # (H+2, W, C2)
    zcol = jnp.zeros((H + 2, 8, C2), f32)                       # 8-wide -> sublane aligned
    mid = jnp.concatenate([zcol, ug, zcol], axis=1)             # (H+2, W+16, C2)
    acc = jnp.zeros((H, W, C2), f32)
    for k in range(9):
        dy, dx = divmod(k, 3)
        acc = acc + mid[dy:dy + H, 7 + dx:7 + dx + W, :] * wdw_ref[k:k + 1, :]
    v = acc.reshape(HW, C2)                                     # (HW, C2) f32

    # ---- chunk into (x1, x2), gate, project_out.  The channel-42 split is done
    #      with two 0/1 selector matmuls (MXU) instead of an unaligned lane slice.
    vb = v.astype(bf16)
    v1 = jnp.dot(vb, sel1_ref[...], preferred_element_type=f32)  # (HW, Ch)
    v2 = jnp.dot(vb, sel2_ref[...], preferred_element_type=f32)
    g = _gelu(v1) * v2
    ffn = jnp.dot(g.astype(bf16), wpo_ref[...], preferred_element_type=f32)       # (HW, C1)

    # ---- residual (TransformerBlock with att=False)
    x2 = y1 + ffn

    # ---- Fuse.conv2 + split(e, d) + add, folded into one matmul in the wrapper.
    out = jnp.dot(x2.astype(bf16), wfin_ref[...], preferred_element_type=f32) + bfin_ref[...]
    o_ref[0] = out.astype(o_ref.dtype)


def _build_fft_filter_operands(fftp, H, W):
    """Express per-8x8-patch  irfft2(rfft2(x) * fft_param)  as two matmuls.

    rfft2 / irfft2 are real-linear, so they are captured exactly by matrices
    built from their action on basis vectors, using the SAME jnp.fft primitives
    as the reference (so conventions, incl. DC/Nyquist handling, match exactly).
    The patch-major <-> row-major pixel permutation is folded into the matrices
    so the kernel does no data reshuffling.
    """
    C2 = fftp.shape[0]
    F = P // 2 + 1            # 5 rfft bins
    NQ = P * P                # 64 pixels per patch
    NFR = P * F               # 40 complex bins per patch
    nH, nW = H // P, W // P
    nP = nH * nW

    eye = jnp.eye(NQ, dtype=jnp.float32).reshape(NQ, P, P)
    fwd = jnp.fft.rfft2(eye)                                        # (64, 8, 5) complex
    a_r = jnp.real(fwd).reshape(NQ, NFR).T                          # (40, 64)
    a_i = jnp.imag(fwd).reshape(NQ, NFR).T
    eyef = jnp.eye(NFR, dtype=jnp.float32).reshape(NFR, P, F)
    b_r = jnp.fft.irfft2(eyef.astype(jnp.complex64), s=(P, P)).reshape(NFR, NQ).T       # (64, 40)
    b_i = jnp.fft.irfft2(1j * eyef.astype(jnp.complex64), s=(P, P)).reshape(NFR, NQ).T

    acat = jnp.concatenate([a_r, a_i], axis=0)                      # (80, 64)
    bcat = jnp.concatenate([b_r, b_i], axis=1)                      # (64, 80)
    abig = jnp.kron(jnp.eye(nP, dtype=jnp.float32), acat)           # (nP*80, nP*64)
    bbig = jnp.kron(jnp.eye(nP, dtype=jnp.float32), bcat)           # (nP*64, nP*80)

    # patch-major (ph, pw, p1, p2)  ->  row-major pixel index
    ph, pw, p1, p2 = np.meshgrid(np.arange(nH), np.arange(nW),
                                 np.arange(P), np.arange(P), indexing="ij")
    perm = ((ph * P + p1) * W + (pw * P + p2)).reshape(-1)
    inv = np.argsort(perm)

    afull = abig[:, inv].astype(jnp.bfloat16)                       # (nP*80, H*W)
    bfull = bbig[inv, :].astype(jnp.bfloat16)                       # (H*W, nP*80)

    wmat = fftp.reshape(C2, NFR).T                                  # (40, C2)
    wfreq = jnp.tile(jnp.concatenate([wmat, wmat], axis=0), (nP, 1)).astype(jnp.float32)
    return afull, wfreq, bfull                                      # Wfreq: (nP*80, C2)


@jax.jit
def fuse_forward(enc, dnc, params):
    """Pallas implementation of Fuse.forward.  enc, dnc: (B, n_feat, H, W) NCHW f32."""
    f32, bf16 = jnp.float32, jnp.bfloat16
    B, NFt, H, W = enc.shape
    C1 = 2 * NFt
    C2 = params["pi_w"].shape[0]
    Ch = C2 // 2
    HW = H * W
    nP = (H // P) * (W // P)
    NPF = nP * 2 * P * (P // 2 + 1)                 # nP * 80

    # activations: NCHW -> (B, H*W, C) channels-last rows, bf16 for the MXU
    xe = jnp.transpose(enc, (0, 2, 3, 1)).reshape(B, HW, NFt).astype(bf16)
    xd = jnp.transpose(dnc, (0, 2, 3, 1)).reshape(B, HW, NFt).astype(bf16)

    # Fuse.conv (1x1, bias): split weight rows so the channel concat never materializes
    w1m = jnp.transpose(params["conv1_w"], (1, 0))                  # (in=C1, out=C1)
    w1e = w1m[:NFt].astype(bf16)
    w1d = w1m[NFt:].astype(bf16)
    b1 = params["conv1_b"].reshape(1, C1).astype(f32)

    lng = params["ln_g"].reshape(1, C1).astype(f32)
    lnb = params["ln_b"].reshape(1, C1).astype(f32)

    # DFFN weights
    wpi = jnp.transpose(params["pi_w"], (1, 0)).astype(bf16)        # (C1, C2)
    afull, wfreq, bfull = _build_fft_filter_operands(params["fftp"], H, W)
    wdw = jnp.transpose(params["dw_w"][:, 0], (1, 2, 0)).reshape(9, C2).astype(f32)   # (9, C2)
    sel1 = jnp.concatenate([jnp.eye(Ch, dtype=f32), jnp.zeros((Ch, Ch), f32)], axis=0).astype(bf16)
    sel2 = jnp.concatenate([jnp.zeros((Ch, Ch), f32), jnp.eye(Ch, dtype=f32)], axis=0).astype(bf16)
    wpo = jnp.transpose(params["po_w"], (1, 0)).astype(bf16)        # (Ch, C1)

    # Fuse.conv2 folded with the final split(e, d) + add
    w2m = jnp.transpose(params["conv2_w"], (1, 0))                  # (in=C1, out=C1)
    wfin = (w2m[:, :NFt] + w2m[:, NFt:]).astype(bf16)               # (C1, n_feat)
    bfin = (params["conv2_b"][:NFt] + params["conv2_b"][NFt:]).reshape(1, NFt).astype(f32)

    kernel = functools.partial(_fuse_kernel, H=H, W=W)
    rep2 = lambda b: (0, 0)     # replicated weight blocks (fetched once, kept resident)

    out = pl.pallas_call(
        kernel,
        out_shape=jax.ShapeDtypeStruct((B, HW, NFt), f32),
        grid_spec=pltpu.PrefetchScalarGridSpec(
            num_scalar_prefetch=0,
            grid=(B,),                                   # >= 2 parallel steps (v7x megacore)
            in_specs=[
                pl.BlockSpec((1, HW, NFt), lambda b: (b, 0, 0)),   # enc rows
                pl.BlockSpec((1, HW, NFt), lambda b: (b, 0, 0)),   # dnc rows
                pl.BlockSpec((NFt, C1), rep2),                     # conv1 weight (enc rows)
                pl.BlockSpec((NFt, C1), rep2),                     # conv1 weight (dnc rows)
                pl.BlockSpec((1, C1), rep2),                       # conv1 bias
                pl.BlockSpec((1, C1), rep2),                       # LayerNorm gamma
                pl.BlockSpec((1, C1), rep2),                       # LayerNorm beta
                pl.BlockSpec((C1, C2), rep2),                      # project_in
                pl.BlockSpec((NPF, HW), rep2),                     # fused rfft2 operator
                pl.BlockSpec((NPF, C2), rep2),                     # per-channel frequency filter
                pl.BlockSpec((HW, NPF), rep2),                     # fused irfft2 operator
                pl.BlockSpec((9, C2), rep2),                       # depthwise 3x3 weights
                pl.BlockSpec((C2, Ch), rep2),                      # gate selector 1
                pl.BlockSpec((C2, Ch), rep2),                      # gate selector 2
                pl.BlockSpec((Ch, C1), rep2),                      # project_out
                pl.BlockSpec((C1, NFt), rep2),                     # conv2 folded with e+d
                pl.BlockSpec((1, NFt), rep2),                      # folded conv2 bias
            ],
            out_specs=pl.BlockSpec((1, HW, NFt), lambda b: (b, 0, 0)),
        ),
        compiler_params=pltpu.CompilerParams(
            dimension_semantics=("parallel",),
            vmem_limit_bytes=32 * 1024 * 1024,   # explicit; actual use is ~1-2 MiB/step
        ),
    )(xe, xd, w1e, w1d, b1, lng, lnb, wpi, afull, wfreq, bfull, wdw,
      sel1, sel2, wpo, wfin, bfin)

    out = out.reshape(B, H, W, NFt)
    return jnp.transpose(out, (0, 3, 1, 2))      # back to NCHW


# ----------------------------------------------------------------------------
# Pure-JAX reference (mirrors the PyTorch module op-for-op) and a small test.
# ----------------------------------------------------------------------------
def init_params(key, n_feat, ffn_expansion_factor=2.66):
    C1 = 2 * n_feat
    hidden = int(C1 * ffn_expansion_factor)
    C2 = 2 * hidden
    ks = jax.random.split(key, 10)
    nrm = lambda k, shape, s=0.1: s * jax.random.normal(k, shape, jnp.float32)
    return {
        "conv1_w": nrm(ks[0], (C1, C1)), "conv1_b": nrm(ks[1], (C1,)),
        "ln_g": 1.0 + nrm(ks[2], (C1,)), "ln_b": nrm(ks[3], (C1,)),
        "pi_w": nrm(ks[4], (C2, C1)),
        "fftp": 1.0 + 0.25 * jax.random.normal(ks[5], (C2, 1, 1, P, P // 2 + 1), jnp.float32),
        "dw_w": nrm(ks[6], (C2, 1, 3, 3)),
        "po_w": nrm(ks[7], (C1, hidden)),
        "conv2_w": nrm(ks[8], (C1, C1)), "conv2_b": nrm(ks[9], (C1,)),
    }


def reference_forward(enc, dnc, params):
    NFt = enc.shape[1]
    x = jnp.concatenate([enc, dnc], axis=1).astype(jnp.float32)

    def conv1x1(x, w, b=None):
        y = jnp.einsum("bihw,oi->bohw", x, w)
        return y if b is None else y + b.reshape(1, -1, 1, 1)

    x = conv1x1(x, params["conv1_w"], params["conv1_b"])

    mu = jnp.mean(x, axis=1, keepdims=True)
    var = jnp.mean(jnp.square(x - mu), axis=1, keepdims=True)
    y = (x - mu) / jnp.sqrt(var + 1e-5)
    y = y * params["ln_g"].reshape(1, -1, 1, 1) + params["ln_b"].reshape(1, -1, 1, 1)

    y = conv1x1(y, params["pi_w"])
    B, C2, H, W = y.shape
    yp = y.reshape(B, C2, H // P, P, W // P, P).transpose(0, 1, 2, 4, 3, 5)
    yf = jnp.fft.rfft2(yp) * params["fftp"].reshape(1, C2, 1, 1, P, P // 2 + 1)
    yp = jnp.fft.irfft2(yf, s=(P, P))
    y = yp.transpose(0, 1, 2, 4, 3, 5).reshape(B, C2, H, W)
    y = jax.lax.conv_general_dilated(
        y, params["dw_w"], window_strides=(1, 1), padding=((1, 1), (1, 1)),
        dimension_numbers=("NCHW", "OIHW", "NCHW"), feature_group_count=C2)
    y1, y2 = y[:, :C2 // 2], y[:, C2 // 2:]
    y = jax.nn.gelu(y1, approximate=False) * y2
    y = conv1x1(y, params["po_w"])

    x = x + y
    x = conv1x1(x, params["conv2_w"], params["conv2_b"])
    return x[:, :NFt] + x[:, NFt:]


if __name__ == "__main__":
    key = jax.random.PRNGKey(0)
    k1, k2, kp = jax.random.split(key, 3)

    B, n_feat, H, W = 2, 8, 16, 16        # dim = 16, hidden*2 = 84, four 8x8 FFT patches
    enc = jax.random.normal(k1, (B, n_feat, H, W), jnp.float32)
    dnc = jax.random.normal(k2, (B, n_feat, H, W), jnp.float32)
    params = init_params(kp, n_feat)

    out = jax.block_until_ready(fuse_forward(enc, dnc, params))
    ref = jax.block_until_ready(reference_forward(enc, dnc, params))

    assert out.shape == (B, n_feat, H, W)
    # bf16 MXU inputs in the kernel vs f32 reference -> loosened tolerance
    np.testing.assert_allclose(np.asarray(out), np.asarray(ref), rtol=3e-2, atol=2e-2)
    print("KERNEL_OK")
</pallas_src>

<mosaic_0001>
module attributes {stable_mosaic.version = 11 : i64} {
  func.func @_fuse_kernel(%arg0: i32, %arg1: memref<1x256x8xbf16, #tpu.memory_space<vmem>>, %arg2: memref<1x256x8xbf16, #tpu.memory_space<vmem>>, %arg3: memref<8x16xbf16, #tpu.memory_space<vmem>>, %arg4: memref<8x16xbf16, #tpu.memory_space<vmem>>, %arg5: memref<1x16xf32, #tpu.memory_space<vmem>>, %arg6: memref<1x16xf32, #tpu.memory_space<vmem>>, %arg7: memref<1x16xf32, #tpu.memory_space<vmem>>, %arg8: memref<16x84xbf16, #tpu.memory_space<vmem>>, %arg9: memref<320x256xbf16, #tpu.memory_space<vmem>>, %arg10: memref<320x84xf32, #tpu.memory_space<vmem>>, %arg11: memref<256x320xbf16, #tpu.memory_space<vmem>>, %arg12: memref<9x84xf32, #tpu.memory_space<vmem>>, %arg13: memref<84x42xbf16, #tpu.memory_space<vmem>>, %arg14: memref<84x42xbf16, #tpu.memory_space<vmem>>, %arg15: memref<42x16xbf16, #tpu.memory_space<vmem>>, %arg16: memref<16x8xbf16, #tpu.memory_space<vmem>>, %arg17: memref<1x8xf32, #tpu.memory_space<vmem>>, %arg18: memref<1x256x8xf32, #tpu.memory_space<vmem>>) attributes {dimension_semantics = [#tpu.dimension_semantics<parallel>], iteration_bounds = array<i64: 2>, scalar_prefetch = 0 : i64, scratch_operands = 0 : i64, tpu.core_type = #tpu.core_type<tc>, window_params = [{transform_indices = @transform_0, window_bounds = array<i64: 1, 256, 8>}, {transform_indices = @transform_1, window_bounds = array<i64: 1, 256, 8>}, {pipeline_mode = #tpu.pipeline_mode<synchronous>, transform_indices = @transform_2, window_bounds = array<i64: 8, 16>}, {pipeline_mode = #tpu.pipeline_mode<synchronous>, transform_indices = @transform_3, window_bounds = array<i64: 8, 16>}, {pipeline_mode = #tpu.pipeline_mode<synchronous>, transform_indices = @transform_4, window_bounds = array<i64: 1, 16>}, {pipeline_mode = #tpu.pipeline_mode<synchronous>, transform_indices = @transform_5, window_bounds = array<i64: 1, 16>}, {pipeline_mode = #tpu.pipeline_mode<synchronous>, transform_indices = @transform_6, window_bounds = array<i64: 1, 16>}, {pipeline_mode = #tpu.pipeline_mode<synchronous>, transform_indices = @transform_7, window_bounds = array<i64: 16, 84>}, {pipeline_mode = #tpu.pipeline_mode<synchronous>, transform_indices = @transform_8, window_bounds = array<i64: 320, 256>}, {pipeline_mode = #tpu.pipeline_mode<synchronous>, transform_indices = @transform_9, window_bounds = array<i64: 320, 84>}, {pipeline_mode = #tpu.pipeline_mode<synchronous>, transform_indices = @transform_10, window_bounds = array<i64: 256, 320>}, {pipeline_mode = #tpu.pipeline_mode<synchronous>, transform_indices = @transform_11, window_bounds = array<i64: 9, 84>}, {pipeline_mode = #tpu.pipeline_mode<synchronous>, transform_indices = @transform_12, window_bounds = array<i64: 84, 42>}, {pipeline_mode = #tpu.pipeline_mode<synchronous>, transform_indices = @transform_13, window_bounds = array<i64: 84, 42>}, {pipeline_mode = #tpu.pipeline_mode<synchronous>, transform_indices = @transform_14, window_bounds = array<i64: 42, 16>}, {pipeline_mode = #tpu.pipeline_mode<synchronous>, transform_indices = @transform_15, window_bounds = array<i64: 16, 8>}, {pipeline_mode = #tpu.pipeline_mode<synchronous>, transform_indices = @transform_16, window_bounds = array<i64: 1, 8>}, {transform_indices = @transform_17, window_bounds = array<i64: 1, 256, 8>}]} {
    %c0 = arith.constant 0 : index
    %c0_0 = arith.constant 0 : index
    %c0_1 = arith.constant 0 : index
    %0 = vector.load %arg1[%c0, %c0_0, %c0_1] : memref<1x256x8xbf16, #tpu.memory_space<vmem>>, vector<1x256x8xbf16>
    %1 = vector.shape_cast %0 : vector<1x256x8xbf16> to vector<256x8xbf16>
    %c0_2 = arith.constant 0 : index
    %c0_3 = arith.constant 0 : index
    %c0_4 = arith.constant 0 : index
    %2 = vector.load %arg2[%c0_2, %c0_3, %c0_4] : memref<1x256x8xbf16, #tpu.memory_space<vmem>>, vector<1x256x8xbf16>
    %3 = vector.shape_cast %2 : vector<1x256x8xbf16> to vector<256x8xbf16>
    %c0_5 = arith.constant 0 : index
    %c0_6 = arith.constant 0 : index
    %4 = vector.load %arg3[%c0_5, %c0_6] : memref<8x16xbf16, #tpu.memory_space<vmem>>, vector<8x16xbf16>
    %cst = arith.constant dense<0.000000e+00> : vector<256x16xf32>
    %5 = tpu.matmul %1, %4, %cst {dimension_numbers = #tpu.dot_dimension_numbers<[1], [0], [0], [1], [0, 0, 1, 1], [], []>} : vector<256x8xbf16>, vector<8x16xbf16>, vector<256x16xf32> -> vector<256x16xf32>
    %c0_7 = arith.constant 0 : index
    %c0_8 = arith.constant 0 : index
    %6 = vector.load %arg4[%c0_7, %c0_8] : memref<8x16xbf16, #tpu.memory_space<vmem>>, vector<8x16xbf16>
    %cst_9 = arith.constant dense<0.000000e+00> : vector<256x16xf32>
    %7 = tpu.matmul %3, %6, %cst_9 {dimension_numbers = #tpu.dot_dimension_numbers<[1], [0], [0], [1], [0, 0, 1, 1], [], []>} : vector<256x8xbf16>, vector<8x16xbf16>, vector<256x16xf32> -> vector<256x16xf32>
    %8 = arith.addf %5, %7 : vector<256x16xf32>
    %c0_10 = arith.constant 0 : index
    %c0_11 = arith.constant 0 : index
    %9 = vector.load %arg5[%c0_10, %c0_11] : memref<1x16xf32, #tpu.memory_space<vmem>>, vector<1x16xf32>
    %10 = vector.broadcast %9 : vector<1x16xf32> to vector<256x16xf32>
    %11 = arith.addf %8, %10 : vector<256x16xf32>
    %cst_12 = arith.constant dense<0.000000e+00> : vector<256xf32>
    %12 = vector.multi_reduction <add>, %11, %cst_12 [1] : vector<256x16xf32> to vector<256xf32>
    %13 = vector.shape_cast %12 : vector<256xf32> to vector<256x1xf32>
    %cst_13 = arith.constant 1.600000e+01 : f32
    %14 = vector.broadcast %cst_13 : f32 to vector<256x1xf32>
    %15 = arith.divf %13, %14 : vector<256x1xf32>
    %16 = vector.broadcast %15 : vector<256x1xf32> to vector<256x16xf32>
    %17 = arith.subf %11, %16 : vector<256x16xf32>
    %18 = arith.mulf %17, %17 : vector<256x16xf32>
    %cst_14 = arith.constant dense<0.000000e+00> : vector<256xf32>
    %19 = vector.multi_reduction <add>, %18, %cst_14 [1] : vector<256x16xf32> to vector<256xf32>
    %20 = vector.shape_cast %19 : vector<256xf32> to vector<256x1xf32>
    %cst_15 = arith.constant 1.600000e+01 : f32
    %21 = vector.broadcast %cst_15 : f32 to vector<256x1xf32>
    %22 = arith.divf %20, %21 : vector<256x1xf32>
    %23 = vector.broadcast %15 : vector<256x1xf32> to vector<256x16xf32>
    %24 = arith.subf %11, %23 : vector<256x16xf32>
    %cst_16 = arith.constant 9.99999974E-6 : f32
    %25 = vector.broadcast %cst_16 : f32 to vector<256x1xf32>
    %26 = arith.addf %22, %25 : vector<256x1xf32>
    %27 = math.rsqrt %26 : vector<256x1xf32>
    %28 = vector.broadcast %27 : vector<256x1xf32> to vector<256x16xf32>
    %29 = arith.mulf %24, %28 : vector<256x16xf32>
    %c0_17 = arith.constant 0 : index
    %c0_18 = arith.constant 0 : index
    %30 = vector.load %arg6[%c0_17, %c0_18] : memref<1x16xf32, #tpu.memory_space<vmem>>, vector<1x16xf32>
    %31 = vector.broadcast %30 : vector<1x16xf32> to vector<256x16xf32>
    %32 = arith.mulf %29, %31 : vector<256x16xf32>
    %c0_19 = arith.constant 0 : index
    %c0_20 = arith.constant 0 : index
    %33 = vector.load %arg7[%c0_19, %c0_20] : memref<1x16xf32, #tpu.memory_space<vmem>>, vector<1x16xf32>
    %34 = vector.broadcast %33 : vector<1x16xf32> to vector<256x16xf32>
    %35 = arith.addf %32, %34 : vector<256x16xf32>
    %36 = arith.truncf %35 : vector<256x16xf32> to vector<256x16xbf16>
    %c0_21 = arith.constant 0 : index
    %c0_22 = arith.constant 0 : index
    %37 = vector.load %arg8[%c0_21, %c0_22] : memref<16x84xbf16, #tpu.memory_space<vmem>>, vector<16x84xbf16>
    %cst_23 = arith.constant dense<0.000000e+00> : vector<256x84xf32>
    %38 = tpu.matmul %36, %37, %cst_23 {dimension_numbers = #tpu.dot_dimension_numbers<[1], [0], [0], [1], [0, 0, 1, 1], [], []>} : vector<256x16xbf16>, vector<16x84xbf16>, vector<256x84xf32> -> vector<256x84xf32>
    %c0_24 = arith.constant 0 : index
    %c0_25 = arith.constant 0 : index
    %39 = vector.load %arg9[%c0_24, %c0_25] : memref<320x256xbf16, #tpu.memory_space<vmem>>, vector<320x256xbf16>
    %40 = arith.truncf %38 : vector<256x84xf32> to vector<256x84xbf16>
    %cst_26 = arith.constant dense<0.000000e+00> : vector<320x84xf32>
    %41 = tpu.matmul %39, %40, %cst_26 {dimension_numbers = #tpu.dot_dimension_numbers<[1], [0], [0], [1], [0, 0, 1, 1], [], []>} : vector<320x256xbf16>, vector<256x84xbf16>, vector<320x84xf32> -> vector<320x84xf32>
    %c0_27 = arith.constant 0 : index
    %c0_28 = arith.constant 0 : index
    %42 = vector.load %arg10[%c0_27, %c0_28] : memref<320x84xf32, #tpu.memory_space<vmem>>, vector<320x84xf32>
    %43 = arith.mulf %41, %42 : vector<320x84xf32>
    %c0_29 = arith.constant 0 : index
    %c0_30 = arith.constant 0 : index
    %44 = vector.load %arg11[%c0_29, %c0_30] : memref<256x320xbf16, #tpu.memory_space<vmem>>, vector<256x320xbf16>
    %45 = arith.truncf %43 : vector<320x84xf32> to vector<320x84xbf16>
    %cst_31 = arith.constant dense<0.000000e+00> : vector<256x84xf32>
    %46 = tpu.matmul %44, %45, %cst_31 {dimension_numbers = #tpu.dot_dimension_numbers<[1], [0], [0], [1], [0, 0, 1, 1], [], []>} : vector<256x320xbf16>, vector<320x84xbf16>, vector<256x84xf32> -> vector<256x84xf32>
    %47 = vector.shape_cast %46 : vector<256x84xf32> to vector<16x16x84xf32>
    %cst_32 = arith.constant 0.000000e+00 : f32
    %48 = vector.broadcast %cst_32 : f32 to vector<1x16x84xf32>
    %49 = tpu.concatenate %48, %47, %48 in 0 : vector<1x16x84xf32>, vector<16x16x84xf32>, vector<1x16x84xf32> -> vector<18x16x84xf32>
    %cst_33 = arith.constant 0.000000e+00 : f32
    %50 = vector.broadcast %cst_33 : f32 to vector<18x8x84xf32>
    %51 = tpu.concatenate %50, %49, %50 in 1 : vector<18x8x84xf32>, vector<18x16x84xf32>, vector<18x8x84xf32> -> vector<18x32x84xf32>
    %cst_34 = arith.constant 0.000000e+00 : f32
    %52 = vector.broadcast %cst_34 : f32 to vector<16x16x84xf32>
    %53 = vector.extract_strided_slice %51 {offsets = [0, 7, 0], sizes = [16, 16, 84], strides = [1, 1, 1]} : vector<18x32x84xf32> to vector<16x16x84xf32>
    %c0_35 = arith.constant 0 : index
    %c0_36 = arith.constant 0 : index
    %54 = vector.load %arg12[%c0_35, %c0_36] : memref<9x84xf32, #tpu.memory_space<vmem>>, vector<1x84xf32>
    %55 = vector.shape_cast %54 : vector<1x84xf32> to vector<1x1x84xf32>
    %56 = vector.broadcast %55 : vector<1x1x84xf32> to vector<16x16x84xf32>
    %57 = arith.mulf %53, %56 : vector<16x16x84xf32>
    %58 = arith.addf %52, %57 : vector<16x16x84xf32>
    %59 = vector.extract_strided_slice %51 {offsets = [0, 8, 0], sizes = [16, 16, 84], strides = [1, 1, 1]} : vector<18x32x84xf32> to vector<16x16x84xf32>
    %c1 = arith.constant 1 : index
    %c0_37 = arith.constant 0 : index
    %60 = vector.load %arg12[%c1, %c0_37] : memref<9x84xf32, #tpu.memory_space<vmem>>, vector<1x84xf32>
    %61 = vector.shape_cast %60 : vector<1x84xf32> to vector<1x1x84xf32>
    %62 = vector.broadcast %61 : vector<1x1x84xf32> to vector<16x16x84xf32>
    %63 = arith.mulf %59, %62 : vector<16x16x84xf32>
    %64 = arith.addf %58, %63 : vector<16x16x84xf32>
    %65 = vector.extract_strided_slice %51 {offsets = [0, 9, 0], sizes = [16, 16, 84], strides = [1, 1, 1]} : vector<18x32x84xf32> to vector<16x16x84xf32>
    %c2 = arith.constant 2 : index
    %c0_38 = arith.constant 0 : index
    %66 = vector.load %arg12[%c2, %c0_38] : memref<9x84xf32, #tpu.memory_space<vmem>>, vector<1x84xf32>
    %67 = vector.shape_cast %66 : vector<1x84xf32> to vector<1x1x84xf32>
    %68 = vector.broadcast %67 : vector<1x1x84xf32> to vector<16x16x84xf32>
    %69 = arith.mulf %65, %68 : vector<16x16x84xf32>
    %70 = arith.addf %64, %69 : vector<16x16x84xf32>
    %71 = vector.extract_strided_slice %51 {offsets = [1, 7, 0], sizes = [16, 16, 84], strides = [1, 1, 1]} : vector<18x32x84xf32> to vector<16x16x84xf32>
    %c3 = arith.constant 3 : index
    %c0_39 = arith.constant 0 : index
    %72 = vector.load %arg12[%c3, %c0_39] : memref<9x84xf32, #tpu.memory_space<vmem>>, vector<1x84xf32>
    %73 = vector.shape_cast %72 : vector<1x84xf32> to vector<1x1x84xf32>
    %74 = vector.broadcast %73 : vector<1x1x84xf32> to vector<16x16x84xf32>
    %75 = arith.mulf %71, %74 : vector<16x16x84xf32>
    %76 = arith.addf %70, %75 : vector<16x16x84xf32>
    %77 = vector.extract_strided_slice %51 {offsets = [1, 8, 0], sizes = [16, 16, 84], strides = [1, 1, 1]} : vector<18x32x84xf32> to vector<16x16x84xf32>
    %c4 = arith.constant 4 : index
    %c0_40 = arith.constant 0 : index
    %78 = vector.load %arg12[%c4, %c0_40] : memref<9x84xf32, #tpu.memory_space<vmem>>, vector<1x84xf32>
    %79 = vector.shape_cast %78 : vector<1x84xf32> to vector<1x1x84xf32>
    %80 = vector.broadcast %79 : vector<1x1x84xf32> to vector<16x16x84xf32>
    %81 = arith.mulf %77, %80 : vector<16x16x84xf32>
    %82 = arith.addf %76, %81 : vector<16x16x84xf32>
    %83 = vector.extract_strided_slice %51 {offsets = [1, 9, 0], sizes = [16, 16, 84], strides = [1, 1, 1]} : vector<18x32x84xf32> to vector<16x16x84xf32>
    %c5 = arith.constant 5 : index
    %c0_41 = arith.constant 0 : index
    %84 = vector.load %arg12[%c5, %c0_41] : memref<9x84xf32, #tpu.memory_space<vmem>>, vector<1x84xf32>
    %85 = vector.shape_cast %84 : vector<1x84xf32> to vector<1x1x84xf32>
    %86 = vector.broadcast %85 : vector<1x1x84xf32> to vector<16x16x84xf32>
    %87 = arith.mulf %83, %86 : vector<16x16x84xf32>
    %88 = arith.addf %82, %87 : vector<16x16x84xf32>
    %89 = vector.extract_strided_slice %51 {offsets = [2, 7, 0], sizes = [16, 16, 84], strides = [1, 1, 1]} : vector<18x32x84xf32> to vector<16x16x84xf32>
    %c6 = arith.constant 6 : index
    %c0_42 = arith.constant 0 : index
    %90 = vector.load %arg12[%c6, %c0_42] : memref<9x84xf32, #tpu.memory_space<vmem>>, vector<1x84xf32>
    %91 = vector.shape_cast %90 : vector<1x84xf32> to vector<1x1x84xf32>
    %92 = vector.broadcast %91 : vector<1x1x84xf32> to vector<16x16x84xf32>
    %93 = arith.mulf %89, %92 : vector<16x16x84xf32>
    %94 = arith.addf %88, %93 : vector<16x16x84xf32>
    %95 = vector.extract_strided_slice %51 {offsets = [2, 8, 0], sizes = [16, 16, 84], strides = [1, 1, 1]} : vector<18x32x84xf32> to vector<16x16x84xf32>
    %c7 = arith.constant 7 : index
    %c0_43 = arith.constant 0 : index
    %96 = vector.load %arg12[%c7, %c0_43] : memref<9x84xf32, #tpu.memory_space<vmem>>, vector<1x84xf32>
    %97 = vector.shape_cast %96 : vector<1x84xf32> to vector<1x1x84xf32>
    %98 = vector.broadcast %97 : vector<1x1x84xf32> to vector<16x16x84xf32>
    %99 = arith.mulf %95, %98 : vector<16x16x84xf32>
    %100 = arith.addf %94, %99 : vector<16x16x84xf32>
    %101 = vector.extract_strided_slice %51 {offsets = [2, 9, 0], sizes = [16, 16, 84], strides = [1, 1, 1]} : vector<18x32x84xf32> to vector<16x16x84xf32>
    %c8 = arith.constant 8 : index
    %c0_44 = arith.constant 0 : index
    %102 = vector.load %arg12[%c8, %c0_44] : memref<9x84xf32, #tpu.memory_space<vmem>>, vector<1x84xf32>
    %103 = vector.shape_cast %102 : vector<1x84xf32> to vector<1x1x84xf32>
    %104 = vector.broadcast %103 : vector<1x1x84xf32> to vector<16x16x84xf32>
    %105 = arith.mulf %101, %104 : vector<16x16x84xf32>
    %106 = arith.addf %100, %105 : vector<16x16x84xf32>
    %107 = vector.shape_cast %106 : vector<16x16x84xf32> to vector<256x84xf32>
    %108 = arith.truncf %107 : vector<256x84xf32> to vector<256x84xbf16>
    %c0_45 = arith.constant 0 : index
    %c0_46 = arith.constant 0 : index
    %109 = vector.load %arg13[%c0_45, %c0_46] : memref<84x42xbf16, #tpu.memory_space<vmem>>, vector<84x42xbf16>
    %cst_47 = arith.constant dense<0.000000e+00> : vector<256x42xf32>
    %110 = tpu.matmul %108, %109, %cst_47 {dimension_numbers = #tpu.dot_dimension_numbers<[1], [0], [0], [1], [0, 0, 1, 1], [], []>} : vector<256x84xbf16>, vector<84x42xbf16>, vector<256x42xf32> -> vector<256x42xf32>
    %c0_48 = arith.constant 0 : index
    %c0_49 = arith.constant 0 : index
    %111 = vector.load %arg14[%c0_48, %c0_49] : memref<84x42xbf16, #tpu.memory_space<vmem>>, vector<84x42xbf16>
    %cst_50 = arith.constant dense<0.000000e+00> : vector<256x42xf32>
    %112 = tpu.matmul %108, %111, %cst_50 {dimension_numbers = #tpu.dot_dimension_numbers<[1], [0], [0], [1], [0, 0, 1, 1], [], []>} : vector<256x84xbf16>, vector<84x42xbf16>, vector<256x42xf32> -> vector<256x42xf32>
    %cst_51 = arith.constant 0.707106769 : f32
    %113 = vector.broadcast %cst_51 : f32 to vector<256x42xf32>
    %114 = arith.mulf %110, %113 : vector<256x42xf32>
    %115 = math.absf %114 : vector<256x42xf32>
    %cst_52 = arith.constant 0.327591091 : f32
    %116 = vector.broadcast %cst_52 : f32 to vector<256x42xf32>
    %117 = arith.mulf %116, %115 : vector<256x42xf32>
    %cst_53 = arith.constant 1.000000e+00 : f32
    %118 = vector.broadcast %cst_53 : f32 to vector<256x42xf32>
    %119 = arith.addf %118, %117 : vector<256x42xf32>
    %cst_54 = arith.constant 1.000000e+00 : f32
    %120 = vector.broadcast %cst_54 : f32 to vector<256x42xf32>
    %121 = arith.divf %120, %119 : vector<256x42xf32>
    %cst_55 = arith.constant 1.06140542 : f32
    %122 = vector.broadcast %cst_55 : f32 to vector<256x42xf32>
    %123 = arith.mulf %122, %121 : vector<256x42xf32>
    %cst_56 = arith.constant -1.45315206 : f32
    %124 = vector.broadcast %cst_56 : f32 to vector<256x42xf32>
    %125 = arith.addf %123, %124 : vector<256x42xf32>
    %126 = arith.mulf %125, %121 : vector<256x42xf32>
    %cst_57 = arith.constant 1.42141378 : f32
    %127 = vector.broadcast %cst_57 : f32 to vector<256x42xf32>
    %128 = arith.addf %126, %127 : vector<256x42xf32>
    %129 = arith.mulf %128, %121 : vector<256x42xf32>
    %cst_58 = arith.constant -0.284496725 : f32
    %130 = vector.broadcast %cst_58 : f32 to vector<256x42xf32>
    %131 = arith.addf %129, %130 : vector<256x42xf32>
    %132 = arith.mulf %131, %121 : vector<256x42xf32>
    %cst_59 = arith.constant 0.254829586 : f32
    %133 = vector.broadcast %cst_59 : f32 to vector<256x42xf32>
    %134 = arith.addf %132, %133 : vector<256x42xf32>
    %135 = arith.mulf %134, %121 : vector<256x42xf32>
    %cst_60 = arith.constant 0.000000e+00 : f32
    %136 = vector.broadcast %cst_60 : f32 to vector<256x42xf32>
    %137 = arith.subf %136, %115 : vector<256x42xf32>
    %138 = arith.mulf %137, %115 : vector<256x42xf32>
    %139 = math.exp %138 : vector<256x42xf32>
    %140 = arith.mulf %135, %139 : vector<256x42xf32>
    %cst_61 = arith.constant 1.000000e+00 : f32
    %141 = vector.broadcast %cst_61 : f32 to vector<256x42xf32>
    %142 = arith.subf %141, %140 : vector<256x42xf32>
    %cst_62 = arith.constant 0.000000e+00 : f32
    %143 = vector.broadcast %cst_62 : f32 to vector<256x42xf32>
    %144 = arith.cmpf oge, %114, %143 : vector<256x42xf32>
    %cst_63 = arith.constant 0.000000e+00 : f32
    %145 = vector.broadcast %cst_63 : f32 to vector<256x42xf32>
    %146 = arith.subf %145, %142 : vector<256x42xf32>
    %147 = arith.select %144, %142, %146 : vector<256x42xi1>, vector<256x42xf32>
    %cst_64 = arith.constant 5.000000e-01 : f32
    %148 = vector.broadcast %cst_64 : f32 to vector<256x42xf32>
    %149 = arith.mulf %148, %110 : vector<256x42xf32>
    %cst_65 = arith.constant 1.000000e+00 : f32
    %150 = vector.broadcast %cst_65 : f32 to vector<256x42xf32>
    %151 = arith.addf %150, %147 : vector<256x42xf32>
    %152 = arith.mulf %149, %151 : vector<256x42xf32>
    %153 = arith.mulf %152, %112 : vector<256x42xf32>
    %154 = arith.truncf %153 : vector<256x42xf32> to vector<256x42xbf16>
    %c0_66 = arith.constant 0 : index
    %c0_67 = arith.constant 0 : index
    %155 = vector.load %arg15[%c0_66, %c0_67] : memref<42x16xbf16, #tpu.memory_space<vmem>>, vector<42x16xbf16>
    %cst_68 = arith.constant dense<0.000000e+00> : vector<256x16xf32>
    %156 = tpu.matmul %154, %155, %cst_68 {dimension_numbers = #tpu.dot_dimension_numbers<[1], [0], [0], [1], [0, 0, 1, 1], [], []>} : vector<256x42xbf16>, vector<42x16xbf16>, vector<256x16xf32> -> vector<256x16xf32>
    %157 = arith.addf %11, %156 : vector<256x16xf32>
    %158 = arith.truncf %157 : vector<256x16xf32> to vector<256x16xbf16>
    %c0_69 = arith.constant 0 : index
    %c0_70 = arith.constant 0 : index
    %159 = vector.load %arg16[%c0_69, %c0_70] : memref<16x8xbf16, #tpu.memory_space<vmem>>, vector<16x8xbf16>
    %cst_71 = arith.constant dense<0.000000e+00> : vector<256x8xf32>
    %160 = tpu.matmul %158, %159, %cst_71 {dimension_numbers = #tpu.dot_dimension_numbers<[1], [0], [0], [1], [0, 0, 1, 1], [], []>} : vector<256x16xbf16>, vector<16x8xbf16>, vector<256x8xf32> -> vector<256x8xf32>
    %c0_72 = arith.constant 0 : index
    %c0_73 = arith.constant 0 : index
    %161 = vector.load %arg17[%c0_72, %c0_73] : memref<1x8xf32, #tpu.memory_space<vmem>>, vector<1x8xf32>
    %162 = vector.broadcast %161 : vector<1x8xf32> to vector<256x8xf32>
    %163 = arith.addf %160, %162 : vector<256x8xf32>
    %c0_74 = arith.constant 0 : index
    %c0_75 = arith.constant 0 : index
    %c0_76 = arith.constant 0 : index
    %164 = vector.load %arg18[%c0_74, %c0_75, %c0_76] : memref<1x256x8xf32, #tpu.memory_space<vmem>>, vector<1x256x8xf32>
    %165 = vector.shape_cast %164 : vector<1x256x8xf32> to vector<256x8xf32>
    %166 = vector.shape_cast %163 : vector<256x8xf32> to vector<1x256x8xf32>
    tpu.vector_store %arg18[%c0_74, %c0_75, %c0_76], %166 {strides = array<i32>} : memref<1x256x8xf32, #tpu.memory_space<vmem>>, vector<1x256x8xf32>,
    return
  }
  func.func @transform_0(%arg0: i32) -> (i32, i32, i32) {
    %c0_i32 = arith.constant 0 : i32
    %c0_i32_0 = arith.constant 0 : i32
    %c0_i32_1 = arith.constant 0 : i32
    return %arg0, %c0_i32, %c0_i32_0 : i32, i32, i32
  }
  func.func @transform_1(%arg0: i32) -> (i32, i32, i32) {
    %c0_i32 = arith.constant 0 : i32
    %c0_i32_0 = arith.constant 0 : i32
    %c0_i32_1 = arith.constant 0 : i32
    return %arg0, %c0_i32, %c0_i32_0 : i32, i32, i32
  }
  func.func @transform_2(%arg0: i32) -> (i32, i32) {
    %c0_i32 = arith.constant 0 : i32
    %c0_i32_0 = arith.constant 0 : i32
    %c0_i32_1 = arith.constant 0 : i32
    return %c0_i32, %c0_i32_0 : i32, i32
  }
  func.func @transform_3(%arg0: i32) -> (i32, i32) {
    %c0_i32 = arith.constant 0 : i32
    %c0_i32_0 = arith.constant 0 : i32
    %c0_i32_1 = arith.constant 0 : i32
    return %c0_i32, %c0_i32_0 : i32, i32
  }
  func.func @transform_4(%arg0: i32) -> (i32, i32) {
    %c0_i32 = arith.constant 0 : i32
    %c0_i32_0 = arith.constant 0 : i32
    %c0_i32_1 = arith.constant 0 : i32
    return %c0_i32, %c0_i32_0 : i32, i32
  }
  func.func @transform_5(%arg0: i32) -> (i32, i32) {
    %c0_i32 = arith.constant 0 : i32
    %c0_i32_0 = arith.constant 0 : i32
    %c0_i32_1 = arith.constant 0 : i32
    return %c0_i32, %c0_i32_0 : i32, i32
  }
  func.func @transform_6(%arg0: i32) -> (i32, i32) {
    %c0_i32 = arith.constant 0 : i32
    %c0_i32_0 = arith.constant 0 : i32
    %c0_i32_1 = arith.constant 0 : i32
    return %c0_i32, %c0_i32_0 : i32, i32
  }
  func.func @transform_7(%arg0: i32) -> (i32, i32) {
    %c0_i32 = arith.constant 0 : i32
    %c0_i32_0 = arith.constant 0 : i32
    %c0_i32_1 = arith.constant 0 : i32
    return %c0_i32, %c0_i32_0 : i32, i32
  }
  func.func @transform_8(%arg0: i32) -> (i32, i32) {
    %c0_i32 = arith.constant 0 : i32
    %c0_i32_0 = arith.constant 0 : i32
    %c0_i32_1 = arith.constant 0 : i32
    return %c0_i32, %c0_i32_0 : i32, i32
  }
  func.func @transform_9(%arg0: i32) -> (i32, i32) {
    %c0_i32 = arith.constant 0 : i32
    %c0_i32_0 = arith.constant 0 : i32
    %c0_i32_1 = arith.constant 0 : i32
    return %c0_i32, %c0_i32_0 : i32, i32
  }
  func.func @transform_10(%arg0: i32) -> (i32, i32) {
    %c0_i32 = arith.constant 0 : i32
    %c0_i32_0 = arith.constant 0 : i32
    %c0_i32_1 = arith.constant 0 : i32
    return %c0_i32, %c0_i32_0 : i32, i32
  }
  func.func @transform_11(%arg0: i32) -> (i32, i32) {
    %c0_i32 = arith.constant 0 : i32
    %c0_i32_0 = arith.constant 0 : i32
    %c0_i32_1 = arith.constant 0 : i32
    return %c0_i32, %c0_i32_0 : i32, i32
  }
  func.func @transform_12(%arg0: i32) -> (i32, i32) {
    %c0_i32 = arith.constant 0 : i32
    %c0_i32_0 = arith.constant 0 : i32
    %c0_i32_1 = arith.constant 0 : i32
    return %c0_i32, %c0_i32_0 : i32, i32
  }
  func.func @transform_13(%arg0: i32) -> (i32, i32) {
    %c0_i32 = arith.constant 0 : i32
    %c0_i32_0 = arith.constant 0 : i32
    %c0_i32_1 = arith.constant 0 : i32
    return %c0_i32, %c0_i32_0 : i32, i32
  }
  func.func @transform_14(%arg0: i32) -> (i32, i32) {
    %c0_i32 = arith.constant 0 : i32
    %c0_i32_0 = arith.constant 0 : i32
    %c0_i32_1 = arith.constant 0 : i32
    return %c0_i32, %c0_i32_0 : i32, i32
  }
  func.func @transform_15(%arg0: i32) -> (i32, i32) {
    %c0_i32 = arith.constant 0 : i32
    %c0_i32_0 = arith.constant 0 : i32
    %c0_i32_1 = arith.constant 0 : i32
    return %c0_i32, %c0_i32_0 : i32, i32
  }
  func.func @transform_16(%arg0: i32) -> (i32, i32) {
    %c0_i32 = arith.constant 0 : i32
    %c0_i32_0 = arith.constant 0 : i32
    %c0_i32_1 = arith.constant 0 : i32
    return %c0_i32, %c0_i32_0 : i32, i32
  }
  func.func @transform_17(%arg0: i32) -> (i32, i32, i32) {
    %c0_i32 = arith.constant 0 : i32
    %c0_i32_0 = arith.constant 0 : i32
    %c0_i32_1 = arith.constant 0 : i32
    return %arg0, %c0_i32, %c0_i32_0 : i32, i32, i32
  }
}

</mosaic_0001>

<llo_original>
// kernel: reverse.4
$region0: #{reverse.4}
  #allocation0 [shape = 's32[1]{0}', space=sflag, size = 0x4, scoped, tag = 'scoped memory for reverse.4']
  %s0 = inlined_call_operand.vmem [shape: f32[40,8,3], index: 0, kind: input, shape index: {}]
  %s1 = inlined_call_operand.vmem [shape: f32[40,8,3], index: 1, kind: output, shape index: {}]
  %s2 = scalar_lea.vmem %s0, 16
  %v3 = vld [vmem:[%s2] sm:$0xff]
  %4 = vst [vmem:[%s1] sm:$0xff] %v3
  %s5 = scalar_lea.vmem %s0, 8
  %v6 = vld [vmem:[%s5] sm:$0xff]
  %s7 = scalar_lea.vmem %s1, 8
  %8 = vst [vmem:[%s7] sm:$0xff] %v6
  %v9 = vld [vmem:[%s0] sm:$0xff]
  %s10 = scalar_lea.vmem %s1, 16
  %11 = vst [vmem:[%s10] sm:$0xff] %v9

// kernel: fuse_forward.1
$region0: #{fuse_forward.1}
  #allocation0 [shape = 'u32[]', space=smem, size = 0x4, offset = 0x4, fixed_abs, tag = 'smem constant byte address 0x4 - core index']
  #allocation1 [shape = 'u32[144,128]{1,0:T(1,128)}', space=vmem, size = 0x12000, scoped, tag = 'internal scratch']
  %s0 = inlined_call_operand.vmem [shape: bf16[2,256,8], index: 0, kind: input, shape index: {}]
  %s1 = inlined_call_operand.vmem [shape: bf16[2,256,8], index: 1, kind: input, shape index: {}]
  %s2 = inlined_call_operand.vmem [shape: bf16[8,16], index: 2, kind: input, shape index: {}]
  %s3 = inlined_call_operand.vmem [shape: bf16[8,16], index: 3, kind: input, shape index: {}]
  %s4 = inlined_call_operand.vmem [shape: f32[1,16], index: 4, kind: input, shape index: {}]
  %s5 = inlined_call_operand.vmem [shape: f32[1,16], index: 5, kind: input, shape index: {}]
  %s6 = inlined_call_operand.vmem [shape: f32[1,16], index: 6, kind: input, shape index: {}]
  %s7 = inlined_call_operand.vmem [shape: bf16[16,84], index: 7, kind: input, shape index: {}]
  %s8 = inlined_call_operand.vmem [shape: bf16[320,256], index: 8, kind: input, shape index: {}]
  %s9 = inlined_call_operand.vmem [shape: f32[320,84], index: 9, kind: input, shape index: {}]
  %s10 = inlined_call_operand.vmem [shape: bf16[256,320], index: 10, kind: input, shape index: {}]
  %s11 = inlined_call_operand.vmem [shape: f32[9,84], index: 11, kind: input, shape index: {}]
  %s12 = inlined_call_operand.vmem [shape: bf16[84,42], index: 12, kind: input, shape index: {}]
  %s13 = inlined_call_operand.vmem [shape: bf16[84,42], index: 13, kind: input, shape index: {}]
  %s14 = inlined_call_operand.vmem [shape: bf16[42,16], index: 14, kind: input, shape index: {}]
  %s15 = inlined_call_operand.vmem [shape: bf16[16,8], index: 15, kind: input, shape index: {}]
  %s16 = inlined_call_operand.vmem [shape: f32[1,8], index: 16, kind: input, shape index: {}]
  %s17 = inlined_call_operand.vmem [shape: f32[2,256,8], index: 17, kind: output, shape index: {}]
  %s18 = sld [smem:[#allocation0]]
  $region101: #{fuse_forward.1} parent=0
    _
  %s20 = ssub.s32 1, %s18
  %s21 = scalar_select 0, %s20, %s18
  loop: start=0, step=1, limit=4
  $region2: #{fuse_forward.1} parent=0 // loop_pre_header
    _
  $region3: #{fuse_forward.1} parent=0 // loop_header
    %s23 = sphi 0, %s27
    %p24 = scmp.ge.s32.totalorder %s23, 4
    %s33 = sphi 0, %s35
    %s36 = sphi 0, %s33
    %s37 = sphi 0, %s36
    %s53 = sphi 0, %s37
    %s59 = sphi 0, %s61
    %s62 = sphi 0, %s59
    %s63 = sphi 0, %s62
    %s79 = sphi 0, %s63
    %s83 = sphi 0, %s83
    %s85 = sphi 0, %s83
    %s86 = sphi 0, %s85
    %s100 = sphi 0, %s86
    %s104 = sphi 0, %s104
    %s106 = sphi 0, %s104
    %s107 = sphi 0, %s106
    %s121 = sphi 0, %s107
    %s125 = sphi 0, %s125
    %s127 = sphi 0, %s125
    %s128 = sphi 0, %s127
    %s142 = sphi 0, %s128
    %s146 = sphi 0, %s146
    %s148 = sphi 0, %s146
    %s149 = sphi 0, %s148
    %s163 = sphi 0, %s149
    %s167 = sphi 0, %s167
    %s169 = sphi 0, %s167
    %s170 = sphi 0, %s169
    %s184 = sphi 0, %s170
    %s188 = sphi 0, %s188
    %s190 = sphi 0, %s188
    %s191 = sphi 0, %s190
    %s205 = sphi 0, %s191
    %s209 = sphi 0, %s209
    %s211 = sphi 0, %s209
    %s212 = sphi 0, %s211
    %s226 = sphi 0, %s212
    %s230 = sphi 0, %s230
    %s232 = sphi 0, %s230
    %s233 = sphi 0, %s232
    %s247 = sphi 0, %s233
    %s251 = sphi 0, %s251
    %s253 = sphi 0, %s251
    %s254 = sphi 0, %s253
    %s268 = sphi 0, %s254
    %s272 = sphi 0, %s272
    %s274 = sphi 0, %s272
    %s275 = sphi 0, %s274
    %s289 = sphi 0, %s275
    %s293 = sphi 0, %s293
    %s295 = sphi 0, %s293
    %s296 = sphi 0, %s295
    %s310 = sphi 0, %s296
    %s314 = sphi 0, %s314
    %s316 = sphi 0, %s314
    %s317 = sphi 0, %s316
    %s331 = sphi 0, %s317
    %s335 = sphi 0, %s335
    %s337 = sphi 0, %s335
    %s338 = sphi 0, %s337
    %s352 = sphi 0, %s338
    %s356 = sphi 0, %s356
    %s358 = sphi 0, %s356
    %s359 = sphi 0, %s358
    %s373 = sphi 0, %s359
    %s377 = sphi 0, %s377
    %s379 = sphi 0, %s377
    %s380 = sphi 0, %s379
    %s394 = sphi 0, %s380
    %s400 = sphi 0, %s402
    %s403 = sphi 0, %s400
    %s404 = sphi 0, %s403
    %s420 = sphi 0, %s404
  $region4: #{fuse_forward.1} parent=0 // loop_header_branch
    %26 = sbr.rel (%p24) target = $region8
  $region5: #{fuse_forward.1} parent=0 // loop_body
    %s28 = ssub.s32 %s23, 1
    %s29 = ssub.s32 %s23, 2
    %s30 = sadd.s32 %s23, 1
    %s31 = ssub.s32 %s23, %s30
    %p32 = scmp.eq.s32.totalorder %s31, 0
    %s34 = sadd.s32 %s33, 1
    %s35 = scalar_select %p32, %s33, %s34
    %p38 = pneg %p32
    %p39 = scmp.eq.s32.totalorder %s23, 1
    %p40 = por %p38, %p39
    %p41 = scmp.ne.s32.totalorder %s33, %s36
    %p42 = scmp.eq.s32.totalorder %s23, 0
    %p43 = por %p41, %p42
    %p44 = scmp.ne.s32.totalorder %s33, %s36
    %p45 = scmp.eq.s32.totalorder %s28, 1
    %p46 = por %p44, %p45
    %p47 = scmp.ne.s32.totalorder %s36, %s37
    %p48 = scmp.eq.s32.totalorder %s28, 0
    %p49 = por %p47, %p48
    %p50 = scmp.ne.s32.totalorder %s36, %s37
    %p51 = scmp.eq.s32.totalorder %s29, 1
    %p52 = por %p50, %p51
    %p54 = scmp.ne.s32.totalorder %s37, %s53
    %p55 = scmp.eq.s32.totalorder %s29, 0
    %p56 = por %p54, %p55
    %s57 = ssub.s32 %s23, %s30
    %p58 = scmp.eq.s32.totalorder %s57, 0
    %s60 = sadd.s32 %s59, 1
    %s61 = scalar_select %p58, %s59, %s60
    %p64 = pneg %p58
    %p65 = scmp.eq.s32.totalorder %s23, 1
    %p66 = por %p64, %p65
    %p67 = scmp.ne.s32.totalorder %s59, %s62
    %p68 = scmp.eq.s32.totalorder %s23, 0
    %p69 = por %p67, %p68
    %p70 = scmp.ne.s32.totalorder %s59, %s62
    %p71 = scmp.eq.s32.totalorder %s28, 1
    %p72 = por %p70, %p71
    %p73 = scmp.ne.s32.totalorder %s62, %s63
    %p74 = scmp.eq.s32.totalorder %s28, 0
    %p75 = por %p73, %p74
    %p76 = scmp.ne.s32.totalorder %s62, %s63
    %p77 = scmp.eq.s32.totalorder %s29, 1
    %p78 = por %p76, %p77
    %p80 = scmp.ne.s32.totalorder %s63, %s79
    %p81 = scmp.eq.s32.totalorder %s29, 0
    %p82 = por %p80, %p81
    %s84 = sadd.s32 %s83, 1
    %p87 = scmp.eq.s32.totalorder %s23, 1
    %p88 = scmp.ne.s32.totalorder %s83, %s85
    %p89 = scmp.eq.s32.totalorder %s23, 0
    %p90 = por %p88, %p89
    %p91 = scmp.ne.s32.totalorder %s83, %s85
    %p92 = scmp.eq.s32.totalorder %s28, 1
    %p93 = por %p91, %p92
    %p94 = scmp.ne.s32.totalorder %s85, %s86
    %p95 = scmp.eq.s32.totalorder %s28, 0
    %p96 = por %p94, %p95
    %p97 = scmp.ne.s32.totalorder %s85, %s86
    %p98 = scmp.eq.s32.totalorder %s29, 1
    %p99 = por %p97, %p98
    %p101 = scmp.ne.s32.totalorder %s86, %s100
    %p102 = scmp.eq.s32.totalorder %s29, 0
    %p103 = por %p101, %p102
    %s105 = sadd.s32 %s104, 1
    %p108 = scmp.eq.s32.totalorder %s23, 1
    %p109 = scmp.ne.s32.totalorder %s104, %s106
    %p110 = scmp.eq.s32.totalorder %s23, 0
    %p111 = por %p109, %p110
    %p112 = scmp.ne.s32.totalorder %s104, %s106
    %p113 = scmp.eq.s32.totalorder %s28, 1
    %p114 = por %p112, %p113
    %p115 = scmp.ne.s32.totalorder %s106, %s107
    %p116 = scmp.eq.s32.totalorder %s28, 0
    %p117 = por %p115, %p116
    %p118 = scmp.ne.s32.totalorder %s106, %s107
    %p119 = scmp.eq.s32.totalorder %s29, 1
    %p120 = por %p118, %p119
    %p122 = scmp.ne.s32.totalorder %s107, %s121
    %p123 = scmp.eq.s32.totalorder %s29, 0
    %p124 = por %p122, %p123
    %s126 = sadd.s32 %s125, 1
    %p129 = scmp.eq.s32.totalorder %s23, 1
    %p130 = scmp.ne.s32.totalorder %s125, %s127
    %p131 = scmp.eq.s32.totalorder %s23, 0
    %p132 = por %p130, %p131
    %p133 = scmp.ne.s32.totalorder %s125, %s127
    %p134 = scmp.eq.s32.totalorder %s28, 1
    %p135 = por %p133, %p134
    %p136 = scmp.ne.s32.totalorder %s127, %s128
    %p137 = scmp.eq.s32.totalorder %s28, 0
    %p138 = por %p136, %p137
    %p139 = scmp.ne.s32.totalorder %s127, %s128
    %p140 = scmp.eq.s32.totalorder %s29, 1
    %p141 = por %p139, %p140
    %p143 = scmp.ne.s32.totalorder %s128, %s142
    %p144 = scmp.eq.s32.totalorder %s29, 0
    %p145 = por %p143, %p144
    %s147 = sadd.s32 %s146, 1
    %p150 = scmp.eq.s32.totalorder %s23, 1
    %p151 = scmp.ne.s32.totalorder %s146, %s148
    %p152 = scmp.eq.s32.totalorder %s23, 0
    %p153 = por %p151, %p152
    %p154 = scmp.ne.s32.totalorder %s146, %s148
    %p155 = scmp.eq.s32.totalorder %s28, 1
    %p156 = por %p154, %p155
    %p157 = scmp.ne.s32.totalorder %s148, %s149
    %p158 = scmp.eq.s32.totalorder %s28, 0
    %p159 = por %p157, %p158
    %p160 = scmp.ne.s32.totalorder %s148, %s149
    %p161 = scmp.eq.s32.totalorder %s29, 1
    %p162 = por %p160, %p161
    %p164 = scmp.ne.s32.totalorder %s149, %s163
    %p165 = scmp.eq.s32.totalorder %s29, 0
    %p166 = por %p164, %p165
    %s168 = sadd.s32 %s167, 1
    %p171 = scmp.eq.s32.totalorder %s23, 1
    %p172 = scmp.ne.s32.totalorder %s167, %s169
    %p173 = scmp.eq.s32.totalorder %s23, 0
    %p174 = por %p172, %p173
    %p175 = scmp.ne.s32.totalorder %s167, %s169
    %p176 = scmp.eq.s32.totalorder %s28, 1
    %p177 = por %p175, %p176
    %p178 = scmp.ne.s32.totalorder %s169, %s170
    %p179 = scmp.eq.s32.totalorder %s28, 0
    %p180 = por %p178, %p179
    %p181 = scmp.ne.s32.totalorder %s169, %s170
    %p182 = scmp.eq.s32.totalorder %s29, 1
    %p183 = por %p181, %p182
    %p185 = scmp.ne.s32.totalorder %s170, %s184
    %p186 = scmp.eq.s32.totalorder %s29, 0
    %p187 = por %p185, %p186
    %s189 = sadd.s32 %s188, 1
    %p192 = scmp.eq.s32.totalorder %s23, 1
    %p193 = scmp.ne.s32.totalorder %s188, %s190
    %p194 = scmp.eq.s32.totalorder %s23, 0
    %p195 = por %p193, %p194
    %p196 = scmp.ne.s32.totalorder %s188, %s190
    %p197 = scmp.eq.s32.totalorder %s28, 1
    %p198 = por %p196, %p197
    %p199 = scmp.ne.s32.totalorder %s190, %s191
    %p200 = scmp.eq.s32.totalorder %s28, 0
    %p201 = por %p199, %p200
    %p202 = scmp.ne.s32.totalorder %s190, %s191
    %p203 = scmp.eq.s32.totalorder %s29, 1
    %p204 = por %p202, %p203
    %p206 = scmp.ne.s32.totalorder %s191, %s205
    %p207 = scmp.eq.s32.totalorder %s29, 0
    %p208 = por %p206, %p207
    %s210 = sadd.s32 %s209, 1
    %p213 = scmp.eq.s32.totalorder %s23, 1
    %p214 = scmp.ne.s32.totalorder %s209, %s211
    %p215 = scmp.eq.s32.totalorder %s23, 0
    %p216 = por %p214, %p215
    %p217 = scmp.ne.s32.totalorder %s209, %s211
    %p218 = scmp.eq.s32.totalorder %s28, 1
    %p219 = por %p217, %p218
    %p220 = scmp.ne.s32.totalorder %s211, %s212
    %p221 = scmp.eq.s32.totalorder %s28, 0
    %p222 = por %p220, %p221
    %p223 = scmp.ne.s32.totalorder %s211, %s212
    %p224 = scmp.eq.s32.totalorder %s29, 1
    %p225 = por %p223, %p224
    %p227 = scmp.ne.s32.totalorder %s212, %s226
    %p228 = scmp.eq.s32.totalorder %s29, 0
    %p229 = por %p227, %p228
    %s231 = sadd.s32 %s230, 1
    %p234 = scmp.eq.s32.totalorder %s23, 1
    %p235 = scmp.ne.s32.totalorder %s230, %s232
    %p236 = scmp.eq.s32.totalorder %s23, 0
    %p237 = por %p235, %p236
    %p238 = scmp.ne.s32.totalorder %s230, %s232
    %p239 = scmp.eq.s32.totalorder %s28, 1
    %p240 = por %p238, %p239
    %p241 = scmp.ne.s32.totalorder %s232, %s233
    %p242 = scmp.eq.s32.totalorder %s28, 0
    %p243 = por %p241, %p242
    %p244 = scmp.ne.s32.totalorder %s232, %s233
    %p245 = scmp.eq.s32.totalorder %s29, 1
    %p246 = por %p244, %p245
    %p248 = scmp.ne.s32.totalorder %s233, %s247
    %p249 = scmp.eq.s32.totalorder %s29, 0
    %p250 = por %p248, %p249
    %s252 = sadd.s32 %s251, 1
    %p255 = scmp.eq.s32.totalorder %s23, 1
    %p256 = scmp.ne.s32.totalorder %s251, %s253
    %p257 = scmp.eq.s32.totalorder %s23, 0
    %p258 = por %p256, %p257
    %p259 = scmp.ne.s32.totalorder %s251, %s253
    %p260 = scmp.eq.s32.totalorder %s28, 1
    %p261 = por %p259, %p260
    %p262 = scmp.ne.s32.totalorder %s253, %s254
    %p263 = scmp.eq.s32.totalorder %s28, 0
    %p264 = por %p262, %p263
    %p265 = scmp.ne.s32.totalorder %s253, %s254
    %p266 = scmp.eq.s32.totalorder %s29, 1
    %p267 = por %p265, %p266
    %p269 = scmp.ne.s32.totalorder %s254, %s268
    %p270 = scmp.eq.s32.totalorder %s29, 0
    %p271 = por %p269, %p270
    %s273 = sadd.s32 %s272, 1
    %p276 = scmp.eq.s32.totalorder %s23, 1
    %p277 = scmp.ne.s32.totalorder %s272, %s274
    %p278 = scmp.eq.s32.totalorder %s23, 0
    %p279 = por %p277, %p278
    %p280 = scmp.ne.s32.totalorder %s272, %s274
    %p281 = scmp.eq.s32.totalorder %s28, 1
    %p282 = por %p280, %p281
    %p283 = scmp.ne.s32.totalorder %s274, %s275
    %p284 = scmp.eq.s32.totalorder %s28, 0
    %p285 = por %p283, %p284
    %p286 = scmp.ne.s32.totalorder %s274, %s275
    %p287 = scmp.eq.s32.totalorder %s29, 1
    %p288 = por %p286, %p287
    %p290 = scmp.ne.s32.totalorder %s275, %s289
    %p291 = scmp.eq.s32.totalorder %s29, 0
    %p292 = por %p290, %p291
    %s294 = sadd.s32 %s293, 1
    %p297 = scmp.eq.s32.totalorder %s23, 1
    %p298 = scmp.ne.s32.totalorder %s293, %s295
    %p299 = scmp.eq.s32.totalorder %s23, 0
    %p300 = por %p298, %p299
    %p301 = scmp.ne.s32.totalorder %s293, %s295
    %p302 = scmp.eq.s32.totalorder %s28, 1
    %p303 = por %p301, %p302
    %p304 = scmp.ne.s32.totalorder %s295, %s296
    %p305 = scmp.eq.s32.totalorder %s28, 0
    %p306 = por %p304, %p305
    %p307 = scmp.ne.s32.totalorder %s295, %s296
    %p308 = scmp.eq.s32.totalorder %s29, 1
    %p309 = por %p307, %p308
    %p311 = scmp.ne.s32.totalorder %s296, %s310
    %p312 = scmp.eq.s32.totalorder %s29, 0
    %p313 = por %p311, %p312
    %s315 = sadd.s32 %s314, 1
    %p318 = scmp.eq.s32.totalorder %s23, 1
    %p319 = scmp.ne.s32.totalorder %s314, %s316
    %p320 = scmp.eq.s32.totalorder %s23, 0
    %p321 = por %p319, %p320
    %p322 = scmp.ne.s32.totalorder %s314, %s316
    %p323 = scmp.eq.s32.totalorder %s28, 1
    %p324 = por %p322, %p323
    %p325 = scmp.ne.s32.totalorder %s316, %s317
    %p326 = scmp.eq.s32.totalorder %s28, 0
    %p327 = por %p325, %p326
    %p328 = scmp.ne.s32.totalorder %s316, %s317
    %p329 = scmp.eq.s32.totalorder %s29, 1
    %p330 = por %p328, %p329
    %p332 = scmp.ne.s32.totalorder %s317, %s331
    %p333 = scmp.eq.s32.totalorder %s29, 0
    %p334 = por %p332, %p333
    %s336 = sadd.s32 %s335, 1
    %p339 = scmp.eq.s32.totalorder %s23, 1
    %p340 = scmp.ne.s32.totalorder %s335, %s337
    %p341 = scmp.eq.s32.totalorder %s23, 0
    %p342 = por %p340, %p341
    %p343 = scmp.ne.s32.totalorder %s335, %s337
    %p344 = scmp.eq.s32.totalorder %s28, 1
    %p345 = por %p343, %p344
    %p346 = scmp.ne.s32.totalorder %s337, %s338
    %p347 = scmp.eq.s32.totalorder %s28, 0
    %p348 = por %p346, %p347
    %p349 = scmp.ne.s32.totalorder %s337, %s338
    %p350 = scmp.eq.s32.totalorder %s29, 1
    %p351 = por %p349, %p350
    %p353 = scmp.ne.s32.totalorder %s338, %s352
    %p354 = scmp.eq.s32.totalorder %s29, 0
    %p355 = por %p353, %p354
    %s357 = sadd.s32 %s356, 1
    %p360 = scmp.eq.s32.totalorder %s23, 1
    %p361 = scmp.ne.s32.totalorder %s356, %s358
    %p362 = scmp.eq.s32.totalorder %s23, 0
    %p363 = por %p361, %p362
    %p364 = scmp.ne.s32.totalorder %s356, %s358
    %p365 = scmp.eq.s32.totalorder %s28, 1
    %p366 = por %p364, %p365
    %p367 = scmp.ne.s32.totalorder %s358, %s359
    %p368 = scmp.eq.s32.totalorder %s28, 0
    %p369 = por %p367, %p368
    %p370 = scmp.ne.s32.totalorder %s358, %s359
    %p371 = scmp.eq.s32.totalorder %s29, 1
    %p372 = por %p370, %p371
    %p374 = scmp.ne.s32.totalorder %s359, %s373
    %p375 = scmp.eq.s32.totalorder %s29, 0
    %p376 = por %p374, %p375
    %s378 = sadd.s32 %s377, 1
    %p381 = scmp.eq.s32.totalorder %s23, 1
    %p382 = scmp.ne.s32.totalorder %s377, %s379
    %p383 = scmp.eq.s32.totalorder %s23, 0
    %p384 = por %p382, %p383
    %p385 = scmp.ne.s32.totalorder %s377, %s379
    %p386 = scmp.eq.s32.totalorder %s28, 1
    %p387 = por %p385, %p386
    %p388 = scmp.ne.s32.totalorder %s379, %s380
    %p389 = scmp.eq.s32.totalorder %s28, 0
    %p390 = por %p388, %p389
    %p391 = scmp.ne.s32.totalorder %s379, %s380
    %p392 = scmp.eq.s32.totalorder %s29, 1
    %p393 = por %p391, %p392
    %p395 = scmp.ne.s32.totalorder %s380, %s394
    %p396 = scmp.eq.s32.totalorder %s29, 0
    %p397 = por %p395, %p396
    %s398 = ssub.s32 %s23, %s30
    %p399 = scmp.eq.s32.totalorder %s398, 0
    %s401 = sadd.s32 %s400, 1
    %s402 = scalar_select %p399, %s400, %s401
    %p405 = pneg %p399
    %p406 = scmp.eq.s32.totalorder %s23, 1
    %p407 = por %p405, %p406
    %p408 = scmp.ne.s32.totalorder %s400, %s403
    %p409 = scmp.eq.s32.totalorder %s23, 0
    %p410 = por %p408, %p409
    %p411 = scmp.ne.s32.totalorder %s400, %s403
    %p412 = scmp.eq.s32.totalorder %s28, 1
    %p413 = por %p411, %p412
    %p414 = scmp.ne.s32.totalorder %s403, %s404
    %p415 = scmp.eq.s32.totalorder %s28, 0
    %p416 = por %p414, %p415
    %p417 = scmp.ne.s32.totalorder %s403, %s404
    %p418 = scmp.eq.s32.totalorder %s29, 1
    %p419 = por %p417, %p418
    %p421 = scmp.ne.s32.totalorder %s404, %s420
    %p422 = scmp.eq.s32.totalorder %s29, 0
    %p423 = por %p421, %p422
    %p424 = scmp.le.s32.totalorder 1, %s23
    %p425 = scmp.lt.s32.totalorder %s23, 3
    %p426 = pnand %p424, %p425
    %p427 = pneg %p426
    // Predicated region
    $region9: #{fuse_forward.1} parent=5 // pred_check
      _
    $region10: #{fuse_forward.1} parent=5 // pred_check_branch
      %429 = sbr.rel (%p426) target = $region12
    $region11: #{fuse_forward.1} parent=5 // pred_region
      %s430 = ssub.s32 %s23, 1
      // Predicated region
      $region13: #{fuse_forward.1} parent=11 // pred_check
        %p431 = pneg %p96
      $region14: #{fuse_forward.1} parent=11 // pred_check_branch
        %433 = sbr.rel (%p431) target = $region16
      $region15: #{fuse_forward.1} parent=11 // pred_region
        _
      $region16: #{fuse_forward.1} parent=11 // pred_fallthru
        _
      // Predicated region
      $region17: #{fuse_forward.1} parent=11 // pred_check
        %p434 = pneg %p117
      $region18: #{fuse_forward.1} parent=11 // pred_check_branch
        %436 = sbr.rel (%p434) target = $region20
      $region19: #{fuse_forward.1} parent=11 // pred_region
        _
      $region20: #{fuse_forward.1} parent=11 // pred_fallthru
        _
      // Predicated region
      $region21: #{fuse_forward.1} parent=11 // pred_check
        %p437 = pneg %p138
      $region22: #{fuse_forward.1} parent=11 // pred_check_branch
        %439 = sbr.rel (%p437) target = $region24
      $region23: #{fuse_forward.1} parent=11 // pred_region
        _
      $region24: #{fuse_forward.1} parent=11 // pred_fallthru
        _
      // Predicated region
      $region25: #{fuse_forward.1} parent=11 // pred_check
        %p440 = pneg %p159
      $region26: #{fuse_forward.1} parent=11 // pred_check_branch
        %442 = sbr.rel (%p440) target = $region28
      $region27: #{fuse_forward.1} parent=11 // pred_region
        _
      $region28: #{fuse_forward.1} parent=11 // pred_fallthru
        _
      // Predicated region
      $region29: #{fuse_forward.1} parent=11 // pred_check
        %p443 = pneg %p180
      $region30: #{fuse_forward.1} parent=11 // pred_check_branch
        %445 = sbr.rel (%p443) target = $region32
      $region31: #{fuse_forward.1} parent=11 // pred_region
        _
      $region32: #{fuse_forward.1} parent=11 // pred_fallthru
        _
      // Predicated region
      $region33: #{fuse_forward.1} parent=11 // pred_check
        %p446 = pneg %p201
      $region34: #{fuse_forward.1} parent=11 // pred_check_branch
        %448 = sbr.rel (%p446) target = $region36
      $region35: #{fuse_forward.1} parent=11 // pred_region
        _
      $region36: #{fuse_forward.1} parent=11 // pred_fallthru
        _
      // Predicated region
      $region37: #{fuse_forward.1} parent=11 // pred_check
        %p449 = pneg %p222
      $region38: #{fuse_forward.1} parent=11 // pred_check_branch
        %451 = sbr.rel (%p449) target = $region40
      $region39: #{fuse_forward.1} parent=11 // pred_region
        _
      $region40: #{fuse_forward.1} parent=11 // pred_fallthru
        _
      // Predicated region
      $region41: #{fuse_forward.1} parent=11 // pred_check
        %p452 = pneg %p243
      $region42: #{fuse_forward.1} parent=11 // pred_check_branch
        %454 = sbr.rel (%p452) target = $region44
      $region43: #{fuse_forward.1} parent=11 // pred_region
        _
      $region44: #{fuse_forward.1} parent=11 // pred_fallthru
        _
      // Predicated region
      $region45: #{fuse_forward.1} parent=11 // pred_check
        %p455 = pneg %p264
      $region46: #{fuse_forward.1} parent=11 // pred_check_branch
        %457 = sbr.rel (%p455) target = $region48
      $region47: #{fuse_forward.1} parent=11 // pred_region
        _
      $region48: #{fuse_forward.1} parent=11 // pred_fallthru
        _
      // Predicated region
      $region49: #{fuse_forward.1} parent=11 // pred_check
        %p458 = pneg %p285
      $region50: #{fuse_forward.1} parent=11 // pred_check_branch
        %460 = sbr.rel (%p458) target = $region52
      $region51: #{fuse_forward.1} parent=11 // pred_region
        _
      $region52: #{fuse_forward.1} parent=11 // pred_fallthru
        _
      // Predicated region
      $region53: #{fuse_forward.1} parent=11 // pred_check
        %p461 = pneg %p306
      $region54: #{fuse_forward.1} parent=11 // pred_check_branch
        %463 = sbr.rel (%p461) target = $region56
      $region55: #{fuse_forward.1} parent=11 // pred_region
        _
      $region56: #{fuse_forward.1} parent=11 // pred_fallthru
        _
      // Predicated region
      $region57: #{fuse_forward.1} parent=11 // pred_check
        %p464 = pneg %p327
      $region58: #{fuse_forward.1} parent=11 // pred_check_branch
        %466 = sbr.rel (%p464) target = $region60
      $region59: #{fuse_forward.1} parent=11 // pred_region
        _
      $region60: #{fuse_forward.1} parent=11 // pred_fallthru
        _
      // Predicated region
      $region61: #{fuse_forward.1} parent=11 // pred_check
        %p467 = pneg %p348
      $region62: #{fuse_forward.1} parent=11 // pred_check_branch
        %469 = sbr.rel (%p467) target = $region64
      $region63: #{fuse_forward.1} parent=11 // pred_region
        _
      $region64: #{fuse_forward.1} parent=11 // pred_fallthru
        _
      // Predicated region
      $region65: #{fuse_forward.1} parent=11 // pred_check
        %p470 = pneg %p369
      $region66: #{fuse_forward.1} parent=11 // pred_check_branch
        %472 = sbr.rel (%p470) target = $region68
      $region67: #{fuse_forward.1} parent=11 // pred_region
        _
      $region68: #{fuse_forward.1} parent=11 // pred_fallthru
        _
      // Predicated region
      $region69: #{fuse_forward.1} parent=11 // pred_check
        %p473 = pneg %p390
      $region70: #{fuse_forward.1} parent=11 // pred_check_branch
        %475 = sbr.rel (%p473) target = $region72
      $region71: #{fuse_forward.1} parent=11 // pred_region
        _
      $region72: #{fuse_forward.1} parent=11 // pred_fallthru
        _
    $region12: #{fuse_forward.1} parent=5 // pred_fallthru
      _
    %p476 = scmp.lt.s32.totalorder %s23, 2
    // Predicated region
    $region73: #{fuse_forward.1} parent=5 // pred_check
      %p477 = pneg %p476
    $region74: #{fuse_forward.1} parent=5 // pred_check_branch
      %479 = sbr.rel (%p477) target = $region76
    $region75: #{fuse_forward.1} parent=5 // pred_region
      // Predicated region
      $region77: #{fuse_forward.1} parent=75 // pred_check
        %p480 = pneg %p43
      $region78: #{fuse_forward.1} parent=75 // pred_check_branch
        %482 = sbr.rel (%p480) target = $region80
      $region79: #{fuse_forward.1} parent=75 // pred_region
        %p483 = scmp.lt.s32.totalorder %s23, 1
        %s484 = scalar_select %p483, %s23, 1
        %s485 = smul.addr %s484, 32
        %s486 = smul.addr %s485, 4
        %s487 = scalar_lea.vmem %s0, %s486
      $region80: #{fuse_forward.1} parent=75 // pred_fallthru
        _
      // Predicated region
      $region81: #{fuse_forward.1} parent=75 // pred_check
        %p488 = pneg %p69
      $region82: #{fuse_forward.1} parent=75 // pred_check_branch
        %490 = sbr.rel (%p488) target = $region84
      $region83: #{fuse_forward.1} parent=75 // pred_region
        %p491 = scmp.lt.s32.totalorder %s23, 1
        %s492 = scalar_select %p491, %s23, 1
        %s493 = smul.addr %s492, 32
        %s494 = smul.addr %s493, 4
        %s495 = scalar_lea.vmem %s1, %s494
      $region84: #{fuse_forward.1} parent=75 // pred_fallthru
        _
    $region76: #{fuse_forward.1} parent=5 // pred_fallthru
      _
    %p496 = scmp.le.s32.totalorder 1, %s23
    %p497 = scmp.lt.s32.totalorder %s23, 3
    %p498 = pnand %p496, %p497
    %p499 = pneg %p498
    // Predicated region
    $region85: #{fuse_forward.1} parent=5 // pred_check
      _
    $region86: #{fuse_forward.1} parent=5 // pred_check_branch
      %501 = sbr.rel (%p498) target = $region88
    $region87: #{fuse_forward.1} parent=5 // pred_region
      %s502 = ssub.s32 %s23, 1
      %p503 = scmp.lt.s32.totalorder %s28, 1
      %s504 = scalar_select %p503, %s28, 1
      %s505 = smul.addr %s504, 32
      %s506 = smul.addr %s505, 4
      %s507 = scalar_lea.vmem %s0, %s506
      %p508 = pneg %p49
      %p509 = pneg %p46
      %p510 = scmp.lt.s32.totalorder %s28, 1
      %s511 = scalar_select %p510, %s28, 1
      %s512 = smul.addr %s511, 32
      %s513 = smul.addr %s512, 4
      %s514 = scalar_lea.vmem %s1, %s513
      %p515 = pneg %p75
      %p516 = pneg %p72
      %p517 = pneg %p96
      %p518 = pneg %p93
      %p519 = pneg %p117
      %p520 = pneg %p114
      %p521 = pneg %p138
      %p522 = pneg %p135
      %p523 = pneg %p159
      %p524 = pneg %p156
      %p525 = pneg %p180
      %p526 = pneg %p177
      %p527 = pneg %p201
      %p528 = pneg %p198
      %p529 = pneg %p222
      %p530 = pneg %p219
      %p531 = pneg %p243
      %p532 = pneg %p240
      %p533 = pneg %p264
      %p534 = pneg %p261
      %p535 = pneg %p285
      %p536 = pneg %p282
      %p537 = pneg %p306
      %p538 = pneg %p303
      %p539 = pneg %p327
      %p540 = pneg %p324
      %p541 = pneg %p348
      %p542 = pneg %p345
      %p543 = pneg %p369
      %p544 = pneg %p366
      %p545 = pneg %p390
      %p546 = pneg %p387
      %p547 = pneg %p416
      %p548 = pneg %p413
      %p549 = scmp.lt.s32.totalorder %s28, 1
      %s550 = scalar_select %p549, %s28, 1
      %s551 = smul.addr %s550, 32
      %s552 = smul.addr %s551, 8
      %s553 = scalar_lea.vmem %s17, %s552
      %p554 = scmp.lt.s32.totalorder %s28, 1
      %s555 = scalar_select %p554, %s28, 1
      %s556 = smul.addr %s555, 32
      %s557 = smul.addr %s556, 4
      %s558 = scalar_lea.vmem %s0, %s557
      %p559 = scmp.lt.s32.totalorder %s28, 1
      %s560 = scalar_select %p559, %s28, 1
      %s561 = smul.addr %s560, 32
      %s562 = smul.addr %s561, 4
      %s563 = scalar_lea.vmem %s1, %s562
      %p564 = scmp.lt.s32.totalorder %s28, 1
      %s565 = scalar_select %p564, %s28, 1
      %s566 = smul.addr %s565, 32
      %s567 = smul.addr %s566, 8
      %s568 = scalar_lea.vmem %s17, %s567
      %v570 = vld [vmem:[%s558] sm:$0xf]
      %v571 = vld [vmem:[%s558 + $0x4] sm:$0xf]
      %v572 = vld [vmem:[%s558 + $0x8] sm:$0xf]
      %v573 = vld [vmem:[%s558 + $0xc] sm:$0xf]
      %v574 = vld [vmem:[%s558 + $0x10] sm:$0xf]
      %v575 = vld [vmem:[%s558 + $0x14] sm:$0xf]
      %v576 = vld [vmem:[%s558 + $0x18] sm:$0xf]
      %v577 = vld [vmem:[%s558 + $0x1c] sm:$0xf]
      %v578 = vld [vmem:[%s558 + $0x20] sm:$0xf]
      %v579 = vld [vmem:[%s558 + $0x24] sm:$0xf]
      %v580 = vld [vmem:[%s558 + $0x28] sm:$0xf]
      %v581 = vld [vmem:[%s558 + $0x2c] sm:$0xf]
      %v582 = vld [vmem:[%s558 + $0x30] sm:$0xf]
      %v583 = vld [vmem:[%s558 + $0x34] sm:$0xf]
      %v584 = vld [vmem:[%s558 + $0x38] sm:$0xf]
      %v585 = vld [vmem:[%s558 + $0x3c] sm:$0xf]
      %v586 = vld [vmem:[%s558 + $0x40] sm:$0xf]
      %v587 = vld [vmem:[%s558 + $0x44] sm:$0xf]
      %v588 = vld [vmem:[%s558 + $0x48] sm:$0xf]
      %v589 = vld [vmem:[%s558 + $0x4c] sm:$0xf]
      %v590 = vld [vmem:[%s558 + $0x50] sm:$0xf]
      %v591 = vld [vmem:[%s558 + $0x54] sm:$0xf]
      %v592 = vld [vmem:[%s558 + $0x58] sm:$0xf]
      %v593 = vld [vmem:[%s558 + $0x5c] sm:$0xf]
      %v594 = vld [vmem:[%s558 + $0x60] sm:$0xf]
      %v595 = vld [vmem:[%s558 + $0x64] sm:$0xf]
      %v596 = vld [vmem:[%s558 + $0x68] sm:$0xf]
      %v597 = vld [vmem:[%s558 + $0x6c] sm:$0xf]
      %v598 = vld [vmem:[%s558 + $0x70] sm:$0xf]
      %v599 = vld [vmem:[%s558 + $0x74] sm:$0xf]
      %v600 = vld [vmem:[%s558 + $0x78] sm:$0xf]
      %v601 = vld [vmem:[%s558 + $0x7c] sm:$0xf]
      %v602 = vld [vmem:[%s563] sm:$0xf]
      %v603 = vld [vmem:[%s563 + $0x4] sm:$0xf]
      %v604 = vld [vmem:[%s563 + $0x8] sm:$0xf]
      %v605 = vld [vmem:[%s563 + $0xc] sm:$0xf]
      %v606 = vld [vmem:[%s563 + $0x10] sm:$0xf]
      %v607 = vld [vmem:[%s563 + $0x14] sm:$0xf]
      %v608 = vld [vmem:[%s563 + $0x18] sm:$0xf]
      %v609 = vld [vmem:[%s563 + $0x1c] sm:$0xf]
      %v610 = vld [vmem:[%s563 + $0x20] sm:$0xf]
      %v611 = vld [vmem:[%s563 + $0x24] sm:$0xf]
      %v612 = vld [vmem:[%s563 + $0x28] sm:$0xf]
      %v613 = vld [vmem:[%s563 + $0x2c] sm:$0xf]
      %v614 = vld [vmem:[%s563 + $0x30] sm:$0xf]
      %v615 = vld [vmem:[%s563 + $0x34] sm:$0xf]
      %v616 = vld [vmem:[%s563 + $0x38] sm:$0xf]
      %v617 = vld [vmem:[%s563 + $0x3c] sm:$0xf]
      %v618 = vld [vmem:[%s563 + $0x40] sm:$0xf]
      %v619 = vld [vmem:[%s563 + $0x44] sm:$0xf]
      %v620 = vld [vmem:[%s563 + $0x48] sm:$0xf]
      %v621 = vld [vmem:[%s563 + $0x4c] sm:$0xf]
      %v622 = vld [vmem:[%s563 + $0x50] sm:$0xf]
      %v623 = vld [vmem:[%s563 + $0x54] sm:$0xf]
      %v624 = vld [vmem:[%s563 + $0x58] sm:$0xf]
      %v625 = vld [vmem:[%s563 + $0x5c] sm:$0xf]
      %v626 = vld [vmem:[%s563 + $0x60] sm:$0xf]
      %v627 = vld [vmem:[%s563 + $0x64] sm:$0xf]
      %v628 = vld [vmem:[%s563 + $0x68] sm:$0xf]
      %v629 = vld [vmem:[%s563 + $0x6c] sm:$0xf]
      %v630 = vld [vmem:[%s563 + $0x70] sm:$0xf]
      %v631 = vld [vmem:[%s563 + $0x74] sm:$0xf]
      %v632 = vld [vmem:[%s563 + $0x78] sm:$0xf]
      %v633 = vld [vmem:[%s563 + $0x7c] sm:$0xf]
      %v634 = vld [vmem:[%s2] sm:$0xf]
      %v635 = vld [vmem:[%s3] sm:$0xf]
      %v668 = vunpack.c.l.b16 %v602
      %v669 = vunpack.c.l.b16 %v603
      %v670 = vunpack.c.l.b16 %v604
      %v671 = vunpack.c.l.b16 %v605
      %v672 = vunpack.c.l.b16 %v606
      %v673 = vunpack.c.l.b16 %v607
      %v674 = vunpack.c.l.b16 %v608
      %v675 = vunpack.c.l.b16 %v609
      %v676 = vunpack.c.l.b16 %v610
      %v677 = vunpack.c.l.b16 %v611
      %v678 = vunpack.c.l.b16 %v612
      %v679 = vunpack.c.l.b16 %v613
      %v680 = vunpack.c.l.b16 %v614
      %v681 = vunpack.c.l.b16 %v615
      %v682 = vunpack.c.l.b16 %v616
      %v683 = vunpack.c.l.b16 %v617
      %v684 = vunpack.c.l.b16 %v618
      %v685 = vunpack.c.l.b16 %v619
      %v686 = vunpack.c.l.b16 %v620
      %v687 = vunpack.c.l.b16 %v621
      %v688 = vunpack.c.l.b16 %v622
      %v689 = vunpack.c.l.b16 %v623
      %v690 = vunpack.c.l.b16 %v624
      %v691 = vunpack.c.l.b16 %v625
      %v692 = vunpack.c.l.b16 %v626
      %v693 = vunpack.c.l.b16 %v627
      %v694 = vunpack.c.l.b16 %v628
      %v695 = vunpack.c.l.b16 %v629
      %v696 = vunpack.c.l.b16 %v630
      %v697 = vunpack.c.l.b16 %v631
      %v698 = vunpack.c.l.b16 %v632
      %v699 = vunpack.c.l.b16 %v633
      %v700 = vpack.c.b16 %v669, %v668
      %v701 = vpack.c.b16 %v671, %v670
      %v702 = vpack.c.b16 %v673, %v672
      %v703 = vpack.c.b16 %v675, %v674
      %v704 = vpack.c.b16 %v677, %v676
      %v705 = vpack.c.b16 %v679, %v678
      %v706 = vpack.c.b16 %v681, %v680
      %v707 = vpack.c.b16 %v683, %v682
      %v708 = vpack.c.b16 %v685, %v684
      %v709 = vpack.c.b16 %v687, %v686
      %v710 = vpack.c.b16 %v689, %v688
      %v711 = vpack.c.b16 %v691, %v690
      %v712 = vpack.c.b16 %v693, %v692
      %v713 = vpack.c.b16 %v695, %v694
      %v714 = vpack.c.b16 %v697, %v696
      %v715 = vpack.c.b16 %v699, %v698
      %vm716 = vcmask 64512
      %v718 = vsel %vm716, %v700, 0
      %v721 = vsel %vm716, %v701, 0
      %v724 = vsel %vm716, %v702, 0
      %v727 = vsel %vm716, %v703, 0
      %v730 = vsel %vm716, %v704, 0
      %v733 = vsel %vm716, %v705, 0
      %v736 = vsel %vm716, %v706, 0
      %v739 = vsel %vm716, %v707, 0
      %v742 = vsel %vm716, %v708, 0
      %v745 = vsel %vm716, %v709, 0
      %v748 = vsel %vm716, %v710, 0
      %v751 = vsel %vm716, %v711, 0
      %v754 = vsel %vm716, %v712, 0
      %v757 = vsel %vm716, %v713, 0
      %v760 = vsel %vm716, %v714, 0
      %v763 = vsel %vm716, %v715, 0
      %vm765 = vcmask 1043456
      %v767 = vsel %vm765, %v635, 0
      %769 = vmatprep.subr.bf16.mxu0 0
      %770 = vmatpush1.bf16.msra.mxu0 %v767
      %771 = vmatprep.subr.bf16.mxu0 0
      %772 = vmatpush1.bf16.msra.mxu0 0
      %773 = vmatprep.subr.bf16.mxu0 0
      %774 = vmatpush1.bf16.msra.mxu0 0
      %775 = vmatprep.subr.bf16.mxu0 0
      %776 = vmatpush1.bf16.msra.mxu0 0
      %777 = vmatprep.subr.bf16.mxu0 0
      %778 = vmatpush1.bf16.msra.mxu0 0
      %779 = vmatprep.subr.bf16.mxu0 0
      %780 = vmatpush1.bf16.msra.mxu0 0
      %781 = vmatprep.subr.bf16.mxu0 0
      %782 = vmatpush1.bf16.msra.mxu0 0
      %783 = vmatprep.subr.bf16.mxu0 0
      %784 = vmatpush1.bf16.msra.mxu0 0
      %785 = vmatprep.subr.bf16.mxu0 0
      %786 = vmatpush1.bf16.msra.mxu0 0
      %787 = vmatprep.subr.bf16.mxu0 0
      %788 = vmatpush1.bf16.msra.mxu0 0
      %789 = vmatprep.subr.bf16.mxu0 0
      %790 = vmatpush1.bf16.msra.mxu0 0
      %791 = vmatprep.subr.bf16.mxu0 0
      %792 = vmatpush1.bf16.msra.mxu0 0
      %793 = vmatprep.subr.bf16.mxu0 0
      %794 = vmatpush1.bf16.msra.mxu0 0
      %795 = vmatprep.subr.bf16.mxu0 0
      %796 = vmatpush1.bf16.msra.mxu0 0
      %797 = vmatprep.subr.bf16.mxu0 0
      %798 = vmatpush1.bf16.msra.mxu0 0
      %799 = vmatprep.subr.bf16.mxu0 0
      %800 = vmatpush1.bf16.msra.mxu0 0
      %801 = vmatprep.mubr.bf16.mxu0 0
      %802 = vmatmul.mubr.bf16.gmra.mrb[0].mxu0 %v718
      %v803 = vpop.f32.mrb[0].mxu0
      %v804 = vadd.f32 0.0, %v803
      %v805 = vpop.f32.mrb[0].mxu0
      %v806 = vpop.f32.mrb[0].mxu0
      %v807 = vadd.f32 0.0, %v806
      %v808 = vpop.f32.mrb[0].mxu0
      %809 = vmatprep.mubr.bf16.mxu0 0
      %810 = vmatmul.mubr.bf16.gmra.mrb[0].mxu0 %v721
      %v811 = vpop.f32.mrb[0].mxu0
      %v812 = vadd.f32 0.0, %v811
      %v813 = vpop.f32.mrb[0].mxu0
      %v814 = vpop.f32.mrb[0].mxu0
      %v815 = vadd.f32 0.0, %v814
      %v816 = vpop.f32.mrb[0].mxu0
      %817 = vmatprep.mubr.bf16.mxu0 0
      %818 = vmatmul.mubr.bf16.gmra.mrb[0].mxu0 %v724
      %v819 = vpop.f32.mrb[0].mxu0
      %v820 = vadd.f32 0.0, %v819
      %v821 = vpop.f32.mrb[0].mxu0
      %v822 = vpop.f32.mrb[0].mxu0
      %v823 = vadd.f32 0.0, %v822
      %v824 = vpop.f32.mrb[0].mxu0
      %825 = vmatprep.mubr.bf16.mxu0 0
      %826 = vmatmul.mubr.bf16.gmra.mrb[0].mxu0 %v727
      %v827 = vpop.f32.mrb[0].mxu0
      %v828 = vadd.f32 0.0, %v827
      %v829 = vpop.f32.mrb[0].mxu0
      %v830 = vpop.f32.mrb[0].mxu0
      %v831 = vadd.f32 0.0, %v830
      %v832 = vpop.f32.mrb[0].mxu0
      %833 = vmatprep.mubr.bf16.mxu0 0
      %834 = vmatmul.mubr.bf16.gmra.mrb[0].mxu0 %v730
      %v835 = vpop.f32.mrb[0].mxu0
      %v836 = vadd.f32 0.0, %v835
      %v837 = vpop.f32.mrb[0].mxu0
      %v838 = vpop.f32.mrb[0].mxu0
      %v839 = vadd.f32 0.0, %v838
      %v840 = vpop.f32.mrb[0].mxu0
      %841 = vmatprep.mubr.bf16.mxu0 0
      %842 = vmatmul.mubr.bf16.gmra.mrb[0].mxu0 %v733
      %v843 = vpop.f32.mrb[0].mxu0
      %v844 = vadd.f32 0.0, %v843
      %v845 = vpop.f32.mrb[0].mxu0
      %v846 = vpop.f32.mrb[0].mxu0
      %v847 = vadd.f32 0.0, %v846
      %v848 = vpop.f32.mrb[0].mxu0
      %849 = vmatprep.mubr.bf16.mxu0 0
      %850 = vmatmul.mubr.bf16.gmra.mrb[0].mxu0 %v736
      %v851 = vpop.f32.mrb[0].mxu0
      %v852 = vadd.f32 0.0, %v851
      %v853 = vpop.f32.mrb[0].mxu0
      %v854 = vpop.f32.mrb[0].mxu0
      %v855 = vadd.f32 0.0, %v854
      %v856 = vpop.f32.mrb[0].mxu0
      %857 = vmatprep.mubr.bf16.mxu0 0
      %858 = vmatmul.mubr.bf16.gmra.mrb[0].mxu0 %v739
      %v859 = vpop.f32.mrb[0].mxu0
      %v860 = vadd.f32 0.0, %v859
      %v861 = vpop.f32.mrb[0].mxu0
      %v862 = vpop.f32.mrb[0].mxu0
      %v863 = vadd.f32 0.0, %v862
      %v864 = vpop.f32.mrb[0].mxu0
      %865 = vmatprep.mubr.bf16.mxu0 0
      %866 = vmatmul.mubr.bf16.gmra.mrb[0].mxu0 %v742
      %v867 = vpop.f32.mrb[0].mxu0
      %v868 = vadd.f32 0.0, %v867
      %v869 = vpop.f32.mrb[0].mxu0
      %v870 = vpop.f32.mrb[0].mxu0
      %v871 = vadd.f32 0.0, %v870
      %v872 = vpop.f32.mrb[0].mxu0
      %873 = vmatprep.mubr.bf16.mxu0 0
      %874 = vmatmul.mubr.bf16.gmra.mrb[0].mxu0 %v745
      %v875 = vpop.f32.mrb[0].mxu0
      %v876 = vadd.f32 0.0, %v875
      %v877 = vpop.f32.mrb[0].mxu0
      %v878 = vpop.f32.mrb[0].mxu0
      %v879 = vadd.f32 0.0, %v878
      %v880 = vpop.f32.mrb[0].mxu0
      %881 = vmatprep.mubr.bf16.mxu0 0
      %882 = vmatmul.mubr.bf16.gmra.mrb[0].mxu0 %v748
      %v883 = vpop.f32.mrb[0].mxu0
      %v884 = vadd.f32 0.0, %v883
      %v885 = vpop.f32.mrb[0].mxu0
      %v886 = vpop.f32.mrb[0].mxu0
      %v887 = vadd.f32 0.0, %v886
      %v888 = vpop.f32.mrb[0].mxu0
      %889 = vmatprep.mubr.bf16.mxu0 0
      %890 = vmatmul.mubr.bf16.gmra.mrb[0].mxu0 %v751
      %v891 = vpop.f32.mrb[0].mxu0
      %v892 = vadd.f32 0.0, %v891
      %v893 = vpop.f32.mrb[0].mxu0
      %v894 = vpop.f32.mrb[0].mxu0
      %v895 = vadd.f32 0.0, %v894
      %v896 = vpop.f32.mrb[0].mxu0
      %897 = vmatprep.mubr.bf16.mxu0 0
      %898 = vmatmul.mubr.bf16.gmra.mrb[0].mxu0 %v754
      %v899 = vpop.f32.mrb[0].mxu0
      %v900 = vadd.f32 0.0, %v899
      %v901 = vpop.f32.mrb[0].mxu0
      %v902 = vpop.f32.mrb[0].mxu0
      %v903 = vadd.f32 0.0, %v902
      %v904 = vpop.f32.mrb[0].mxu0
      %905 = vmatprep.mubr.bf16.mxu0 0
      %906 = vmatmul.mubr.bf16.gmra.mrb[0].mxu0 %v757
      %v907 = vpop.f32.mrb[0].mxu0
      %v908 = vadd.f32 0.0, %v907
      %v909 = vpop.f32.mrb[0].mxu0
      %v910 = vpop.f32.mrb[0].mxu0
      %v911 = vadd.f32 0.0, %v910
      %v912 = vpop.f32.mrb[0].mxu0
      %913 = vmatprep.mubr.bf16.mxu0 0
      %914 = vmatmul.mubr.bf16.gmra.mrb[0].mxu0 %v760
      %v915 = vpop.f32.mrb[0].mxu0
      %v916 = vadd.f32 0.0, %v915
      %v917 = vpop.f32.mrb[0].mxu0
      %v918 = vpop.f32.mrb[0].mxu0
      %v919 = vadd.f32 0.0, %v918
      %v920 = vpop.f32.mrb[0].mxu0
      %921 = vmatprep.mubr.bf16.mxu0 0
      %922 = vmatmul.mubr.bf16.gmra.mrb[0].mxu0 %v763
      %v923 = vpop.f32.mrb[0].mxu0
      %v924 = vadd.f32 0.0, %v923
      %v925 = vpop.f32.mrb[0].mxu0
      %v926 = vpop.f32.mrb[0].mxu0
      %v927 = vadd.f32 0.0, %v926
      %v928 = vpop.f32.mrb[0].mxu0
      %929 = vdwg.mxu0
      %v962 = vunpack.c.l.b16 %v570
      %v963 = vunpack.c.l.b16 %v571
      %v964 = vunpack.c.l.b16 %v572
      %v965 = vunpack.c.l.b16 %v573
      %v966 = vunpack.c.l.b16 %v574
      %v967 = vunpack.c.l.b16 %v575
      %v968 = vunpack.c.l.b16 %v576
      %v969 = vunpack.c.l.b16 %v577
      %v970 = vunpack.c.l.b16 %v578
      %v971 = vunpack.c.l.b16 %v579
      %v972 = vunpack.c.l.b16 %v580
      %v973 = vunpack.c.l.b16 %v581
      %v974 = vunpack.c.l.b16 %v582
      %v975 = vunpack.c.l.b16 %v583
      %v976 = vunpack.c.l.b16 %v584
      %v977 = vunpack.c.l.b16 %v585
      %v978 = vunpack.c.l.b16 %v586
      %v979 = vunpack.c.l.b16 %v587
      %v980 = vunpack.c.l.b16 %v588
      %v981 = vunpack.c.l.b16 %v589
      %v982 = vunpack.c.l.b16 %v590
      %v983 = vunpack.c.l.b16 %v591
      %v984 = vunpack.c.l.b16 %v592
      %v985 = vunpack.c.l.b16 %v593
      %v986 = vunpack.c.l.b16 %v594
      %v987 = vunpack.c.l.b16 %v595
      %v988 = vunpack.c.l.b16 %v596
      %v989 = vunpack.c.l.b16 %v597
      %v990 = vunpack.c.l.b16 %v598
      %v991 = vunpack.c.l.b16 %v599
      %v992 = vunpack.c.l.b16 %v600
      %v993 = vunpack.c.l.b16 %v601
      %v994 = vpack.c.b16 %v963, %v962
      %v995 = vpack.c.b16 %v965, %v964
      %v996 = vpack.c.b16 %v967, %v966
      %v997 = vpack.c.b16 %v969, %v968
      %v998 = vpack.c.b16 %v971, %v970
      %v999 = vpack.c.b16 %v973, %v972
      %v1000 = vpack.c.b16 %v975, %v974
      %v1001 = vpack.c.b16 %v977, %v976
      %v1002 = vpack.c.b16 %v979, %v978
      %v1003 = vpack.c.b16 %v981, %v980
      %v1004 = vpack.c.b16 %v983, %v982
      %v1005 = vpack.c.b16 %v985, %v984
      %v1006 = vpack.c.b16 %v987, %v986
      %v1007 = vpack.c.b16 %v989, %v988
      %v1008 = vpack.c.b16 %v991, %v990
      %v1009 = vpack.c.b16 %v993, %v992
      %v1011 = vsel %vm716, %v994, 0
      %v1014 = vsel %vm716, %v995, 0
      %v1017 = vsel %vm716, %v996, 0
      %v1020 = vsel %vm716, %v997, 0
      %v1023 = vsel %vm716, %v998, 0
      %v1026 = vsel %vm716, %v999, 0
      %v1029 = vsel %vm716, %v1000, 0
      %v1032 = vsel %vm716, %v1001, 0
      %v1035 = vsel %vm716, %v1002, 0
      %v1038 = vsel %vm716, %v1003, 0
      %v1041 = vsel %vm716, %v1004, 0
      %v1044 = vsel %vm716, %v1005, 0
      %v1047 = vsel %vm716, %v1006, 0
      %v1050 = vsel %vm716, %v1007, 0
      %v1053 = vsel %vm716, %v1008, 0
      %v1056 = vsel %vm716, %v1009, 0
      %v1059 = vsel %vm765, %v634, 0
      %1061 = vmatprep.subr.bf16.mxu0 0
      %1062 = vmatpush1.bf16.msra.mxu0 %v1059
      %1063 = vmatprep.subr.bf16.mxu0 0
      %1064 = vmatpush1.bf16.msra.mxu0 0
      %1065 = vmatprep.subr.bf16.mxu0 0
      %1066 = vmatpush1.bf16.msra.mxu0 0
      %1067 = vmatprep.subr.bf16.mxu0 0
      %1068 = vmatpush1.bf16.msra.mxu0 0
      %1069 = vmatprep.subr.bf16.mxu0 0
      %1070 = vmatpush1.bf16.msra.mxu0 0
      %1071 = vmatprep.subr.bf16.mxu0 0
      %1072 = vmatpush1.bf16.msra.mxu0 0
      %1073 = vmatprep.subr.bf16.mxu0 0
      %1074 = vmatpush1.bf16.msra.mxu0 0
      %1075 = vmatprep.subr.bf16.mxu0 0
      %1076 = vmatpush1.bf16.msra.mxu0 0
      %1077 = vmatprep.subr.bf16.mxu0 0
      %1078 = vmatpush1.bf16.msra.mxu0 0
      %1079 = vmatprep.subr.bf16.mxu0 0
      %1080 = vmatpush1.bf16.msra.mxu0 0
      %1081 = vmatprep.subr.bf16.mxu0 0
      %1082 = vmatpush1.bf16.msra.mxu0 0
      %1083 = vmatprep.subr.bf16.mxu0 0
      %1084 = vmatpush1.bf16.msra.mxu0 0
      %1085 = vmatprep.subr.bf16.mxu0 0
      %1086 = vmatpush1.bf16.msra.mxu0 0
      %1087 = vmatprep.subr.bf16.mxu0 0
      %1088 = vmatpush1.bf16.msra.mxu0 0
      %1089 = vmatprep.subr.bf16.mxu0 0
      %1090 = vmatpush1.bf16.msra.mxu0 0
      %1091 = vmatprep.subr.bf16.mxu0 0
      %1092 = vmatpush1.bf16.msra.mxu0 0
      %1093 = vmatprep.mubr.bf16.mxu0 0
      %1094 = vmatmul.mubr.bf16.gmra.mrb[0].mxu0 %v1011
      %v1095 = vpop.f32.mrb[0].mxu0
      %v1096 = vadd.f32 %v804, %v1095
      %v1097 = vpop.f32.mrb[0].mxu0
      %v1098 = vpop.f32.mrb[0].mxu0
      %v1099 = vadd.f32 %v807, %v1098
      %v1100 = vpop.f32.mrb[0].mxu0
      %1101 = vmatprep.mubr.bf16.mxu0 0
      %1102 = vmatmul.mubr.bf16.gmra.mrb[0].mxu0 %v1014
      %v1103 = vpop.f32.mrb[0].mxu0
      %v1104 = vadd.f32 %v812, %v1103
      %v1105 = vpop.f32.mrb[0].mxu0
      %v1106 = vpop.f32.mrb[0].mxu0
      %v1107 = vadd.f32 %v815, %v1106
      %v1108 = vpop.f32.mrb[0].mxu0
      %1109 = vmatprep.mubr.bf16.mxu0 0
      %1110 = vmatmul.mubr.bf16.gmra.mrb[0].mxu0 %v1017
      %v1111 = vpop.f32.mrb[0].mxu0
      %v1112 = vadd.f32 %v820, %v1111
      %v1113 = vpop.f32.mrb[0].mxu0
      %v1114 = vpop.f32.mrb[0].mxu0
      %v1115 = vadd.f32 %v823, %v1114
      %v1116 = vpop.f32.mrb[0].mxu0
      %1117 = vmatprep.mubr.bf16.mxu0 0
      %1118 = vmatmul.mubr.bf16.gmra.mrb[0].mxu0 %v1020
      %v1119 = vpop.f32.mrb[0].mxu0
      %v1120 = vadd.f32 %v828, %v1119
      %v1121 = vpop.f32.mrb[0].mxu0
      %v1122 = vpop.f32.mrb[0].mxu0
      %v1123 = vadd.f32 %v831, %v1122
      %v1124 = vpop.f32.mrb[0].mxu0
      %1125 = vmatprep.mubr.bf16.mxu0 0
      %1126 = vmatmul.mubr.bf16.gmra.mrb[0].mxu0 %v1023
      %v1127 = vpop.f32.mrb[0].mxu0
      %v1128 = vadd.f32 %v836, %v1127
      %v1129 = vpop.f32.mrb[0].mxu0
      %v1130 = vpop.f32.mrb[0].mxu0
      %v1131 = vadd.f32 %v839, %v1130
      %v1132 = vpop.f32.mrb[0].mxu0
      %1133 = vmatprep.mubr.bf16.mxu0 0
      %1134 = vmatmul.mubr.bf16.gmra.mrb[0].mxu0 %v1026
      %v1135 = vpop.f32.mrb[0].mxu0
      %v1136 = vadd.f32 %v844, %v1135
      %v1137 = vpop.f32.mrb[0].mxu0
      %v1138 = vpop.f32.mrb[0].mxu0
      %v1139 = vadd.f32 %v847, %v1138
      %v1140 = vpop.f32.mrb[0].mxu0
      %1141 = vmatprep.mubr.bf16.mxu0 0
      %1142 = vmatmul.mubr.bf16.gmra.mrb[0].mxu0 %v1029
      %v1143 = vpop.f32.mrb[0].mxu0
      %v1144 = vadd.f32 %v852, %v1143
      %v1145 = vpop.f32.mrb[0].mxu0
      %v1146 = vpop.f32.mrb[0].mxu0
      %v1147 = vadd.f32 %v855, %v1146
      %v1148 = vpop.f32.mrb[0].mxu0
      %1149 = vmatprep.mubr.bf16.mxu0 0
      %1150 = vmatmul.mubr.bf16.gmra.mrb[0].mxu0 %v1032
      %v1151 = vpop.f32.mrb[0].mxu0
      %v1152 = vadd.f32 %v860, %v1151
      %v1153 = vpop.f32.mrb[0].mxu0
      %v1154 = vpop.f32.mrb[0].mxu0
      %v1155 = vadd.f32 %v863, %v1154
      %v1156 = vpop.f32.mrb[0].mxu0
      %1157 = vmatprep.mubr.bf16.mxu0 0
      %1158 = vmatmul.mubr.bf16.gmra.mrb[0].mxu0 %v1035
      %v1159 = vpop.f32.mrb[0].mxu0
      %v1160 = vadd.f32 %v868, %v1159
      %v1161 = vpop.f32.mrb[0].mxu0
      %v1162 = vpop.f32.mrb[0].mxu0
      %v1163 = vadd.f32 %v871, %v1162
      %v1164 = vpop.f32.mrb[0].mxu0
      %1165 = vmatprep.mubr.bf16.mxu0 0
      %1166 = vmatmul.mubr.bf16.gmra.mrb[0].mxu0 %v1038
      %v1167 = vpop.f32.mrb[0].mxu0
      %v1168 = vadd.f32 %v876, %v1167
      %v1169 = vpop.f32.mrb[0].mxu0
      %v1170 = vpop.f32.mrb[0].mxu0
      %v1171 = vadd.f32 %v879, %v1170
      %v1172 = vpop.f32.mrb[0].mxu0
      %1173 = vmatprep.mubr.bf16.mxu0 0
      %1174 = vmatmul.mubr.bf16.gmra.mrb[0].mxu0 %v1041
      %v1175 = vpop.f32.mrb[0].mxu0
      %v1176 = vadd.f32 %v884, %v1175
      %v1177 = vpop.f32.mrb[0].mxu0
      %v1178 = vpop.f32.mrb[0].mxu0
      %v1179 = vadd.f32 %v887, %v1178
      %v1180 = vpop.f32.mrb[0].mxu0
      %1181 = vmatprep.mubr.bf16.mxu0 0
      %1182 = vmatmul.mubr.bf16.gmra.mrb[0].mxu0 %v1044
      %v1183 = vpop.f32.mrb[0].mxu0
      %v1184 = vadd.f32 %v892, %v1183
      %v1185 = vpop.f32.mrb[0].mxu0
      %v1186 = vpop.f32.mrb[0].mxu0
      %v1187 = vadd.f32 %v895, %v1186
      %v1188 = vpop.f32.mrb[0].mxu0
      %1189 = vmatprep.mubr.bf16.mxu0 0
      %1190 = vmatmul.mubr.bf16.gmra.mrb[0].mxu0 %v1047
      %v1191 = vpop.f32.mrb[0].mxu0
      %v1192 = vadd.f32 %v900, %v1191
      %v1193 = vpop.f32.mrb[0].mxu0
      %v1194 = vpop.f32.mrb[0].mxu0
      %v1195 = vadd.f32 %v903, %v1194
      %v1196 = vpop.f32.mrb[0].mxu0
      %1197 = vmatprep.mubr.bf16.mxu0 0
      %1198 = vmatmul.mubr.bf16.gmra.mrb[0].mxu0 %v1050
      %v1199 = vpop.f32.mrb[0].mxu0
      %v1200 = vadd.f32 %v908, %v1199
      %v1201 = vpop.f32.mrb[0].mxu0
      %v1202 = vpop.f32.mrb[0].mxu0
      %v1203 = vadd.f32 %v911, %v1202
      %v1204 = vpop.f32.mrb[0].mxu0
      %1205 = vmatprep.mubr.bf16.mxu0 0
      %1206 = vmatmul.mubr.bf16.gmra.mrb[0].mxu0 %v1053
      %v1207 = vpop.f32.mrb[0].mxu0
      %v1208 = vadd.f32 %v916, %v1207
      %v1209 = vpop.f32.mrb[0].mxu0
      %v1210 = vpop.f32.mrb[0].mxu0
      %v1211 = vadd.f32 %v919, %v1210
      %v1212 = vpop.f32.mrb[0].mxu0
      %1213 = vmatprep.mubr.bf16.mxu0 0
      %1214 = vmatmul.mubr.bf16.gmra.mrb[0].mxu0 %v1056
      %v1215 = vpop.f32.mrb[0].mxu0
      %v1216 = vadd.f32 %v924, %v1215
      %v1217 = vpop.f32.mrb[0].mxu0
      %v1218 = vpop.f32.mrb[0].mxu0
      %v1219 = vadd.f32 %v927, %v1218
      %v1220 = vpop.f32.mrb[0].mxu0
      %1221 = vdwg.mxu0
      %v1222 = vld [vmem:[%s4] sm:$0x1]
      %v1224 = vlaneseq
      %v1225 = vshrl.u32 %v1224, 7
      %v1226 = vsub.s32 0, %v1225
      %v1227 = vrot.slane %v1222, %v1226
      %v1229 = vadd.f32 %v1096, %v1227
      %v1230 = vadd.f32 %v1099, %v1227
      %v1231 = vadd.f32 %v1104, %v1227
      %v1232 = vadd.f32 %v1107, %v1227
      %v1233 = vadd.f32 %v1112, %v1227
      %v1234 = vadd.f32 %v1115, %v1227
      %v1235 = vadd.f32 %v1120, %v1227
      %v1236 = vadd.f32 %v1123, %v1227
      %v1237 = vadd.f32 %v1128, %v1227
      %v1238 = vadd.f32 %v1131, %v1227
      %v1239 = vadd.f32 %v1136, %v1227
      %v1240 = vadd.f32 %v1139, %v1227
      %v1241 = vadd.f32 %v1144, %v1227
      %v1242 = vadd.f32 %v1147, %v1227
      %v1243 = vadd.f32 %v1152, %v1227
      %v1244 = vadd.f32 %v1155, %v1227
      %v1245 = vadd.f32 %v1160, %v1227
      %v1246 = vadd.f32 %v1163, %v1227
      %v1247 = vadd.f32 %v1168, %v1227
      %v1248 = vadd.f32 %v1171, %v1227
      %v1249 = vadd.f32 %v1176, %v1227
      %v1250 = vadd.f32 %v1179, %v1227
      %v1251 = vadd.f32 %v1184, %v1227
      %v1252 = vadd.f32 %v1187, %v1227
      %v1253 = vadd.f32 %v1192, %v1227
      %v1254 = vadd.f32 %v1195, %v1227
      %v1255 = vadd.f32 %v1200, %v1227
      %v1256 = vadd.f32 %v1203, %v1227
      %v1257 = vadd.f32 %v1208, %v1227
      %v1258 = vadd.f32 %v1211, %v1227
      %v1259 = vadd.f32 %v1216, %v1227
      %v1260 = vadd.f32 %v1219, %v1227
      %vm1261 = vcmask 130048
      %v1262 = vsel %vm1261, %v1229, 0.0
      %1263 = vadd.xlane.f32.xlu0 %v1262
      %v1264 = vpop.xlane.xlu0 %1263
      %v1265 = vsel %vm1261, %v1230, 0.0
      %1266 = vadd.xlane.f32.xlu0 %v1265
      %v1267 = vpop.xlane.xlu0 %1266
      %v1268 = vsel %vm1261, %v1231, 0.0
      %1269 = vadd.xlane.f32.xlu0 %v1268
      %v1270 = vpop.xlane.xlu0 %1269
      %v1271 = vsel %vm1261, %v1232, 0.0
      %1272 = vadd.xlane.f32.xlu0 %v1271
      %v1273 = vpop.xlane.xlu0 %1272
      %v1274 = vsel %vm1261, %v1233, 0.0
      %1275 = vadd.xlane.f32.xlu0 %v1274
      %v1276 = vpop.xlane.xlu0 %1275
      %v1277 = vsel %vm1261, %v1234, 0.0
      %1278 = vadd.xlane.f32.xlu0 %v1277
      %v1279 = vpop.xlane.xlu0 %1278
      %v1280 = vsel %vm1261, %v1235, 0.0
      %1281 = vadd.xlane.f32.xlu0 %v1280
      %v1282 = vpop.xlane.xlu0 %1281
      %v1283 = vsel %vm1261, %v1236, 0.0
      %1284 = vadd.xlane.f32.xlu0 %v1283
      %v1285 = vpop.xlane.xlu0 %1284
      %v1286 = vsel %vm1261, %v1237, 0.0
      %1287 = vadd.xlane.f32.xlu0 %v1286
      %v1288 = vpop.xlane.xlu0 %1287
      %v1289 = vsel %vm1261, %v1238, 0.0
      %1290 = vadd.xlane.f32.xlu0 %v1289
      %v1291 = vpop.xlane.xlu0 %1290
      %v1292 = vsel %vm1261, %v1239, 0.0
      %1293 = vadd.xlane.f32.xlu0 %v1292
      %v1294 = vpop.xlane.xlu0 %1293
      %v1295 = vsel %vm1261, %v1240, 0.0
      %1296 = vadd.xlane.f32.xlu0 %v1295
      %v1297 = vpop.xlane.xlu0 %1296
      %v1298 = vsel %vm1261, %v1241, 0.0
      %1299 = vadd.xlane.f32.xlu0 %v1298
      %v1300 = vpop.xlane.xlu0 %1299
      %v1301 = vsel %vm1261, %v1242, 0.0
      %1302 = vadd.xlane.f32.xlu0 %v1301
      %v1303 = vpop.xlane.xlu0 %1302
      %v1304 = vsel %vm1261, %v1243, 0.0
      %1305 = vadd.xlane.f32.xlu0 %v1304
      %v1306 = vpop.xlane.xlu0 %1305
      %v1307 = vsel %vm1261, %v1244, 0.0
      %1308 = vadd.xlane.f32.xlu0 %v1307
      %v1309 = vpop.xlane.xlu0 %1308
      %v1310 = vsel %vm1261, %v1245, 0.0
      %1311 = vadd.xlane.f32.xlu0 %v1310
      %v1312 = vpop.xlane.xlu0 %1311
      %v1313 = vsel %vm1261, %v1246, 0.0
      %1314 = vadd.xlane.f32.xlu0 %v1313
      %v1315 = vpop.xlane.xlu0 %1314
      %v1316 = vsel %vm1261, %v1247, 0.0
      %1317 = vadd.xlane.f32.xlu0 %v1316
      %v1318 = vpop.xlane.xlu0 %1317
      %v1319 = vsel %vm1261, %v1248, 0.0
      %1320 = vadd.xlane.f32.xlu0 %v1319
      %v1321 = vpop.xlane.xlu0 %1320
      %v1322 = vsel %vm1261, %v1249, 0.0
      %1323 = vadd.xlane.f32.xlu0 %v1322
      %v1324 = vpop.xlane.xlu0 %1323
      %v1325 = vsel %vm1261, %v1250, 0.0
      %1326 = vadd.xlane.f32.xlu0 %v1325
      %v1327 = vpop.xlane.xlu0 %1326
      %v1328 = vsel %vm1261, %v1251, 0.0
      %1329 = vadd.xlane.f32.xlu0 %v1328
      %v1330 = vpop.xlane.xlu0 %1329
      %v1331 = vsel %vm1261, %v1252, 0.0
      %1332 = vadd.xlane.f32.xlu0 %v1331
      %v1333 = vpop.xlane.xlu0 %1332
      %v1334 = vsel %vm1261, %v1253, 0.0
      %1335 = vadd.xlane.f32.xlu0 %v1334
      %v1336 = vpop.xlane.xlu0 %1335
      %v1337 = vsel %vm1261, %v1254, 0.0
      %1338 = vadd.xlane.f32.xlu0 %v1337
      %v1339 = vpop.xlane.xlu0 %1338
      %v1340 = vsel %vm1261, %v1255, 0.0
      %1341 = vadd.xlane.f32.xlu0 %v1340
      %v1342 = vpop.xlane.xlu0 %1341
      %v1343 = vsel %vm1261, %v1256, 0.0
      %1344 = vadd.xlane.f32.xlu0 %v1343
      %v1345 = vpop.xlane.xlu0 %1344
      %v1346 = vsel %vm1261, %v1257, 0.0
      %1347 = vadd.xlane.f32.xlu0 %v1346
      %v1348 = vpop.xlane.xlu0 %1347
      %v1349 = vsel %vm1261, %v1258, 0.0
      %1350 = vadd.xlane.f32.xlu0 %v1349
      %v1351 = vpop.xlane.xlu0 %1350
      %v1352 = vsel %vm1261, %v1259, 0.0
      %1353 = vadd.xlane.f32.xlu0 %v1352
      %v1354 = vpop.xlane.xlu0 %1353
      %v1355 = vsel %vm1261, %v1260, 0.0
      %1356 = vadd.xlane.f32.xlu0 %v1355
      %v1357 = vpop.xlane.xlu0 %1356
      %v1358 = vrcp.pop 16.0
      %v1359 = vmul.f32 %v1264, %v1358
      %v1360 = vmul.f32 %v1267, %v1358
      %v1361 = vmul.f32 %v1270, %v1358
      %v1362 = vmul.f32 %v1273, %v1358
      %v1363 = vmul.f32 %v1276, %v1358
      %v1364 = vmul.f32 %v1279, %v1358
      %v1365 = vmul.f32 %v1282, %v1358
      %v1366 = vmul.f32 %v1285, %v1358
      %v1367 = vmul.f32 %v1288, %v1358
      %v1368 = vmul.f32 %v1291, %v1358
      %v1369 = vmul.f32 %v1294, %v1358
      %v1370 = vmul.f32 %v1297, %v1358
      %v1371 = vmul.f32 %v1300, %v1358
      %v1372 = vmul.f32 %v1303, %v1358
      %v1373 = vmul.f32 %v1306, %v1358
      %v1374 = vmul.f32 %v1309, %v1358
      %v1375 = vmul.f32 %v1312, %v1358
      %v1376 = vmul.f32 %v1315, %v1358
      %v1377 = vmul.f32 %v1318, %v1358
      %v1378 = vmul.f32 %v1321, %v1358
      %v1379 = vmul.f32 %v1324, %v1358
      %v1380 = vmul.f32 %v1327, %v1358
      %v1381 = vmul.f32 %v1330, %v1358
      %v1382 = vmul.f32 %v1333, %v1358
      %v1383 = vmul.f32 %v1336, %v1358
      %v1384 = vmul.f32 %v1339, %v1358
      %v1385 = vmul.f32 %v1342, %v1358
      %v1386 = vmul.f32 %v1345, %v1358
      %v1387 = vmul.f32 %v1348, %v1358
      %v1388 = vmul.f32 %v1351, %v1358
      %v1389 = vmul.f32 %v1354, %v1358
      %v1390 = vmul.f32 %v1357, %v1358
      %v1391 = vsub.f32 %v1229, %v1359
      %v1392 = vsub.f32 %v1230, %v1360
      %v1393 = vsub.f32 %v1231, %v1361
      %v1394 = vsub.f32 %v1232, %v1362
      %v1395 = vsub.f32 %v1233, %v1363
      %v1396 = vsub.f32 %v1234, %v1364
      %v1397 = vsub.f32 %v1235, %v1365
      %v1398 = vsub.f32 %v1236, %v1366
      %v1399 = vsub.f32 %v1237, %v1367
      %v1400 = vsub.f32 %v1238, %v1368
      %v1401 = vsub.f32 %v1239, %v1369
      %v1402 = vsub.f32 %v1240, %v1370
      %v1403 = vsub.f32 %v1241, %v1371
      %v1404 = vsub.f32 %v1242, %v1372
      %v1405 = vsub.f32 %v1243, %v1373
      %v1406 = vsub.f32 %v1244, %v1374
      %v1407 = vsub.f32 %v1245, %v1375
      %v1408 = vsub.f32 %v1246, %v1376
      %v1409 = vsub.f32 %v1247, %v1377
      %v1410 = vsub.f32 %v1248, %v1378
      %v1411 = vsub.f32 %v1249, %v1379
      %v1412 = vsub.f32 %v1250, %v1380
      %v1413 = vsub.f32 %v1251, %v1381
      %v1414 = vsub.f32 %v1252, %v1382
      %v1415 = vsub.f32 %v1253, %v1383
      %v1416 = vsub.f32 %v1254, %v1384
      %v1417 = vsub.f32 %v1255, %v1385
      %v1418 = vsub.f32 %v1256, %v1386
      %v1419 = vsub.f32 %v1257, %v1387
      %v1420 = vsub.f32 %v1258, %v1388
      %v1421 = vsub.f32 %v1259, %v1389
      %v1422 = vsub.f32 %v1260, %v1390
      %v1423 = vmul.f32 %v1391, %v1391
      %v1424 = vmul.f32 %v1392, %v1392
      %v1425 = vmul.f32 %v1393, %v1393
      %v1426 = vmul.f32 %v1394, %v1394
      %v1427 = vmul.f32 %v1395, %v1395
      %v1428 = vmul.f32 %v1396, %v1396
      %v1429 = vmul.f32 %v1397, %v1397
      %v1430 = vmul.f32 %v1398, %v1398
      %v1431 = vmul.f32 %v1399, %v1399
      %v1432 = vmul.f32 %v1400, %v1400
      %v1433 = vmul.f32 %v1401, %v1401
      %v1434 = vmul.f32 %v1402, %v1402
      %v1435 = vmul.f32 %v1403, %v1403
      %v1436 = vmul.f32 %v1404, %v1404
      %v1437 = vmul.f32 %v1405, %v1405
      %v1438 = vmul.f32 %v1406, %v1406
      %v1439 = vmul.f32 %v1407, %v1407
      %v1440 = vmul.f32 %v1408, %v1408
      %v1441 = vmul.f32 %v1409, %v1409
      %v1442 = vmul.f32 %v1410, %v1410
      %v1443 = vmul.f32 %v1411, %v1411
      %v1444 = vmul.f32 %v1412, %v1412
      %v1445 = vmul.f32 %v1413, %v1413
      %v1446 = vmul.f32 %v1414, %v1414
      %v1447 = vmul.f32 %v1415, %v1415
      %v1448 = vmul.f32 %v1416, %v1416
      %v1449 = vmul.f32 %v1417, %v1417
      %v1450 = vmul.f32 %v1418, %v1418
      %v1451 = vmul.f32 %v1419, %v1419
      %v1452 = vmul.f32 %v1420, %v1420
      %v1453 = vmul.f32 %v1421, %v1421
      %v1454 = vmul.f32 %v1422, %v1422
      %v1455 = vsel %vm1261, %v1423, 0.0
      %1456 = vadd.xlane.f32.xlu0 %v1455
      %v1457 = vpop.xlane.xlu0 %1456
      %v1458 = vsel %vm1261, %v1424, 0.0
      %1459 = vadd.xlane.f32.xlu0 %v1458
      %v1460 = vpop.xlane.xlu0 %1459
      %v1461 = vsel %vm1261, %v1425, 0.0
      %1462 = vadd.xlane.f32.xlu0 %v1461
      %v1463 = vpop.xlane.xlu0 %1462
      %v1464 = vsel %vm1261, %v1426, 0.0
      %1465 = vadd.xlane.f32.xlu0 %v1464
      %v1466 = vpop.xlane.xlu0 %1465
      %v1467 = vsel %vm1261, %v1427, 0.0
      %1468 = vadd.xlane.f32.xlu0 %v1467
      %v1469 = vpop.xlane.xlu0 %1468
      %v1470 = vsel %vm1261, %v1428, 0.0
      %1471 = vadd.xlane.f32.xlu0 %v1470
      %v1472 = vpop.xlane.xlu0 %1471
      %v1473 = vsel %vm1261, %v1429, 0.0
      %1474 = vadd.xlane.f32.xlu0 %v1473
      %v1475 = vpop.xlane.xlu0 %1474
      %v1476 = vsel %vm1261, %v1430, 0.0
      %1477 = vadd.xlane.f32.xlu0 %v1476
      %v1478 = vpop.xlane.xlu0 %1477
      %v1479 = vsel %vm1261, %v1431, 0.0
      %1480 = vadd.xlane.f32.xlu0 %v1479
      %v1481 = vpop.xlane.xlu0 %1480
      %v1482 = vsel %vm1261, %v1432, 0.0
      %1483 = vadd.xlane.f32.xlu0 %v1482
      %v1484 = vpop.xlane.xlu0 %1483
      %v1485 = vsel %vm1261, %v1433, 0.0
      %1486 = vadd.xlane.f32.xlu0 %v1485
      %v1487 = vpop.xlane.xlu0 %1486
      %v1488 = vsel %vm1261, %v1434, 0.0
      %1489 = vadd.xlane.f32.xlu0 %v1488
      %v1490 = vpop.xlane.xlu0 %1489
      %v1491 = vsel %vm1261, %v1435, 0.0
      %1492 = vadd.xlane.f32.xlu0 %v1491
      %v1493 = vpop.xlane.xlu0 %1492
      %v1494 = vsel %vm1261, %v1436, 0.0
      %1495 = vadd.xlane.f32.xlu0 %v1494
      %v1496 = vpop.xlane.xlu0 %1495
      %v1497 = vsel %vm1261, %v1437, 0.0
      %1498 = vadd.xlane.f32.xlu0 %v1497
      %v1499 = vpop.xlane.xlu0 %1498
      %v1500 = vsel %vm1261, %v1438, 0.0
      %1501 = vadd.xlane.f32.xlu0 %v1500
      %v1502 = vpop.xlane.xlu0 %1501
      %v1503 = vsel %vm1261, %v1439, 0.0
      %1504 = vadd.xlane.f32.xlu0 %v1503
      %v1505 = vpop.xlane.xlu0 %1504
      %v1506 = vsel %vm1261, %v1440, 0.0
      %1507 = vadd.xlane.f32.xlu0 %v1506
      %v1508 = vpop.xlane.xlu0 %1507
      %v1509 = vsel %vm1261, %v1441, 0.0
      %1510 = vadd.xlane.f32.xlu0 %v1509
      %v1511 = vpop.xlane.xlu0 %1510
      %v1512 = vsel %vm1261, %v1442, 0.0
      %1513 = vadd.xlane.f32.xlu0 %v1512
      %v1514 = vpop.xlane.xlu0 %1513
      %v1515 = vsel %vm1261, %v1443, 0.0
      %1516 = vadd.xlane.f32.xlu0 %v1515
      %v1517 = vpop.xlane.xlu0 %1516
      %v1518 = vsel %vm1261, %v1444, 0.0
      %1519 = vadd.xlane.f32.xlu0 %v1518
      %v1520 = vpop.xlane.xlu0 %1519
      %v1521 = vsel %vm1261, %v1445, 0.0
      %1522 = vadd.xlane.f32.xlu0 %v1521
      %v1523 = vpop.xlane.xlu0 %1522
      %v1524 = vsel %vm1261, %v1446, 0.0
      %1525 = vadd.xlane.f32.xlu0 %v1524
      %v1526 = vpop.xlane.xlu0 %1525
      %v1527 = vsel %vm1261, %v1447, 0.0
      %1528 = vadd.xlane.f32.xlu0 %v1527
      %v1529 = vpop.xlane.xlu0 %1528
      %v1530 = vsel %vm1261, %v1448, 0.0
      %1531 = vadd.xlane.f32.xlu0 %v1530
      %v1532 = vpop.xlane.xlu0 %1531
      %v1533 = vsel %vm1261, %v1449, 0.0
      %1534 = vadd.xlane.f32.xlu0 %v1533
      %v1535 = vpop.xlane.xlu0 %1534
      %v1536 = vsel %vm1261, %v1450, 0.0
      %1537 = vadd.xlane.f32.xlu0 %v1536
      %v1538 = vpop.xlane.xlu0 %1537
      %v1539 = vsel %vm1261, %v1451, 0.0
      %1540 = vadd.xlane.f32.xlu0 %v1539
      %v1541 = vpop.xlane.xlu0 %1540
      %v1542 = vsel %vm1261, %v1452, 0.0
      %1543 = vadd.xlane.f32.xlu0 %v1542
      %v1544 = vpop.xlane.xlu0 %1543
      %v1545 = vsel %vm1261, %v1453, 0.0
      %1546 = vadd.xlane.f32.xlu0 %v1545
      %v1547 = vpop.xlane.xlu0 %1546
      %v1548 = vsel %vm1261, %v1454, 0.0
      %1549 = vadd.xlane.f32.xlu0 %v1548
      %v1550 = vpop.xlane.xlu0 %1549
      %v1551 = vmul.f32 %v1457, %v1358
      %v1552 = vmul.f32 %v1460, %v1358
      %v1553 = vmul.f32 %v1463, %v1358
      %v1554 = vmul.f32 %v1466, %v1358
      %v1555 = vmul.f32 %v1469, %v1358
      %v1556 = vmul.f32 %v1472, %v1358
      %v1557 = vmul.f32 %v1475, %v1358
      %v1558 = vmul.f32 %v1478, %v1358
      %v1559 = vmul.f32 %v1481, %v1358
      %v1560 = vmul.f32 %v1484, %v1358
      %v1561 = vmul.f32 %v1487, %v1358
      %v1562 = vmul.f32 %v1490, %v1358
      %v1563 = vmul.f32 %v1493, %v1358
      %v1564 = vmul.f32 %v1496, %v1358
      %v1565 = vmul.f32 %v1499, %v1358
      %v1566 = vmul.f32 %v1502, %v1358
      %v1567 = vmul.f32 %v1505, %v1358
      %v1568 = vmul.f32 %v1508, %v1358
      %v1569 = vmul.f32 %v1511, %v1358
      %v1570 = vmul.f32 %v1514, %v1358
      %v1571 = vmul.f32 %v1517, %v1358
      %v1572 = vmul.f32 %v1520, %v1358
      %v1573 = vmul.f32 %v1523, %v1358
      %v1574 = vmul.f32 %v1526, %v1358
      %v1575 = vmul.f32 %v1529, %v1358
      %v1576 = vmul.f32 %v1532, %v1358
      %v1577 = vmul.f32 %v1535, %v1358
      %v1578 = vmul.f32 %v1538, %v1358
      %v1579 = vmul.f32 %v1541, %v1358
      %v1580 = vmul.f32 %v1544, %v1358
      %v1581 = vmul.f32 %v1547, %v1358
      %v1582 = vmul.f32 %v1550, %v1358
      %v1583 = vadd.f32 %v1551, 1e-05
      %v1584 = vadd.f32 %v1552, 1e-05
      %v1585 = vadd.f32 %v1553, 1e-05
      %v1586 = vadd.f32 %v1554, 1e-05
      %v1587 = vadd.f32 %v1555, 1e-05
      %v1588 = vadd.f32 %v1556, 1e-05
      %v1589 = vadd.f32 %v1557, 1e-05
      %v1590 = vadd.f32 %v1558, 1e-05
      %v1591 = vadd.f32 %v1559, 1e-05
      %v1592 = vadd.f32 %v1560, 1e-05
      %v1593 = vadd.f32 %v1561, 1e-05
      %v1594 = vadd.f32 %v1562, 1e-05
      %v1595 = vadd.f32 %v1563, 1e-05
      %v1596 = vadd.f32 %v1564, 1e-05
      %v1597 = vadd.f32 %v1565, 1e-05
      %v1598 = vadd.f32 %v1566, 1e-05
      %v1599 = vadd.f32 %v1567, 1e-05
      %v1600 = vadd.f32 %v1568, 1e-05
      %v1601 = vadd.f32 %v1569, 1e-05
      %v1602 = vadd.f32 %v1570, 1e-05
      %v1603 = vadd.f32 %v1571, 1e-05
      %v1604 = vadd.f32 %v1572, 1e-05
      %v1605 = vadd.f32 %v1573, 1e-05
      %v1606 = vadd.f32 %v1574, 1e-05
      %v1607 = vadd.f32 %v1575, 1e-05
      %v1608 = vadd.f32 %v1576, 1e-05
      %v1609 = vadd.f32 %v1577, 1e-05
      %v1610 = vadd.f32 %v1578, 1e-05
      %v1611 = vadd.f32 %v1579, 1e-05
      %v1612 = vadd.f32 %v1580, 1e-05
      %v1613 = vadd.f32 %v1581, 1e-05
      %v1614 = vadd.f32 %v1582, 1e-05
      %v1615 = vrsqrt.pop %v1583
      %v1616 = vrsqrt.pop %v1584
      %v1617 = vrsqrt.pop %v1585
      %v1618 = vrsqrt.pop %v1586
      %v1619 = vrsqrt.pop %v1587
      %v1620 = vrsqrt.pop %v1588
      %v1621 = vrsqrt.pop %v1589
      %v1622 = vrsqrt.pop %v1590
      %v1623 = vrsqrt.pop %v1591
      %v1624 = vrsqrt.pop %v1592
      %v1625 = vrsqrt.pop %v1593
      %v1626 = vrsqrt.pop %v1594
      %v1627 = vrsqrt.pop %v1595
      %v1628 = vrsqrt.pop %v1596
      %v1629 = vrsqrt.pop %v1597
      %v1630 = vrsqrt.pop %v1598
      %v1631 = vrsqrt.pop %v1599
      %v1632 = vrsqrt.pop %v1600
      %v1633 = vrsqrt.pop %v1601
      %v1634 = vrsqrt.pop %v1602
      %v1635 = vrsqrt.pop %v1603
      %v1636 = vrsqrt.pop %v1604
      %v1637 = vrsqrt.pop %v1605
      %v1638 = vrsqrt.pop %v1606
      %v1639 = vrsqrt.pop %v1607
      %v1640 = vrsqrt.pop %v1608
      %v1641 = vrsqrt.pop %v1609
      %v1642 = vrsqrt.pop %v1610
      %v1643 = vrsqrt.pop %v1611
      %v1644 = vrsqrt.pop %v1612
      %v1645 = vrsqrt.pop %v1613
      %v1646 = vrsqrt.pop %v1614
      %v1647 = vmul.f32 %v1391, %v1615
      %v1648 = vmul.f32 %v1392, %v1616
      %v1649 = vmul.f32 %v1393, %v1617
      %v1650 = vmul.f32 %v1394, %v1618
      %v1651 = vmul.f32 %v1395, %v1619
      %v1652 = vmul.f32 %v1396, %v1620
      %v1653 = vmul.f32 %v1397, %v1621
      %v1654 = vmul.f32 %v1398, %v1622
      %v1655 = vmul.f32 %v1399, %v1623
      %v1656 = vmul.f32 %v1400, %v1624
      %v1657 = vmul.f32 %v1401, %v1625
      %v1658 = vmul.f32 %v1402, %v1626
      %v1659 = vmul.f32 %v1403, %v1627
      %v1660 = vmul.f32 %v1404, %v1628
      %v1661 = vmul.f32 %v1405, %v1629
      %v1662 = vmul.f32 %v1406, %v1630
      %v1663 = vmul.f32 %v1407, %v1631
      %v1664 = vmul.f32 %v1408, %v1632
      %v1665 = vmul.f32 %v1409, %v1633
      %v1666 = vmul.f32 %v1410, %v1634
      %v1667 = vmul.f32 %v1411, %v1635
      %v1668 = vmul.f32 %v1412, %v1636
      %v1669 = vmul.f32 %v1413, %v1637
      %v1670 = vmul.f32 %v1414, %v1638
      %v1671 = vmul.f32 %v1415, %v1639
      %v1672 = vmul.f32 %v1416, %v1640
      %v1673 = vmul.f32 %v1417, %v1641
      %v1674 = vmul.f32 %v1418, %v1642
      %v1675 = vmul.f32 %v1419, %v1643
      %v1676 = vmul.f32 %v1420, %v1644
      %v1677 = vmul.f32 %v1421, %v1645
      %v1678 = vmul.f32 %v1422, %v1646
      %v1679 = vld [vmem:[%s5] sm:$0x1]
      %v1681 = vlaneseq
      %v1682 = vshrl.u32 %v1681, 7
      %v1683 = vsub.s32 0, %v1682
      %v1684 = vrot.slane %v1679, %v1683
      %v1686 = vmul.f32 %v1647, %v1684
      %v1687 = vmul.f32 %v1648, %v1684
      %v1688 = vmul.f32 %v1649, %v1684
      %v1689 = vmul.f32 %v1650, %v1684
      %v1690 = vmul.f32 %v1651, %v1684
      %v1691 = vmul.f32 %v1652, %v1684
      %v1692 = vmul.f32 %v1653, %v1684
      %v1693 = vmul.f32 %v1654, %v1684
      %v1694 = vmul.f32 %v1655, %v1684
      %v1695 = vmul.f32 %v1656, %v1684
      %v1696 = vmul.f32 %v1657, %v1684
      %v1697 = vmul.f32 %v1658, %v1684
      %v1698 = vmul.f32 %v1659, %v1684
      %v1699 = vmul.f32 %v1660, %v1684
      %v1700 = vmul.f32 %v1661, %v1684
      %v1701 = vmul.f32 %v1662, %v1684
      %v1702 = vmul.f32 %v1663, %v1684
      %v1703 = vmul.f32 %v1664, %v1684
      %v1704 = vmul.f32 %v1665, %v1684
      %v1705 = vmul.f32 %v1666, %v1684
      %v1706 = vmul.f32 %v1667, %v1684
      %v1707 = vmul.f32 %v1668, %v1684
      %v1708 = vmul.f32 %v1669, %v1684
      %v1709 = vmul.f32 %v1670, %v1684
      %v1710 = vmul.f32 %v1671, %v1684
      %v1711 = vmul.f32 %v1672, %v1684
      %v1712 = vmul.f32 %v1673, %v1684
      %v1713 = vmul.f32 %v1674, %v1684
      %v1714 = vmul.f32 %v1675, %v1684
      %v1715 = vmul.f32 %v1676, %v1684
      %v1716 = vmul.f32 %v1677, %v1684
      %v1717 = vmul.f32 %v1678, %v1684
      %v1718 = vld [vmem:[%s6] sm:$0x1]
      %v1720 = vlaneseq
      %v1721 = vshrl.u32 %v1720, 7
      %v1722 = vsub.s32 0, %v1721
      %v1723 = vrot.slane %v1718, %v1722
      %v1725 = vadd.f32 %v1686, %v1723
      %v1726 = vadd.f32 %v1687, %v1723
      %v1727 = vadd.f32 %v1688, %v1723
      %v1728 = vadd.f32 %v1689, %v1723
      %v1729 = vadd.f32 %v1690, %v1723
      %v1730 = vadd.f32 %v1691, %v1723
      %v1731 = vadd.f32 %v1692, %v1723
      %v1732 = vadd.f32 %v1693, %v1723
      %v1733 = vadd.f32 %v1694, %v1723
      %v1734 = vadd.f32 %v1695, %v1723
      %v1735 = vadd.f32 %v1696, %v1723
      %v1736 = vadd.f32 %v1697, %v1723
      %v1737 = vadd.f32 %v1698, %v1723
      %v1738 = vadd.f32 %v1699, %v1723
      %v1739 = vadd.f32 %v1700, %v1723
      %v1740 = vadd.f32 %v1701, %v1723
      %v1741 = vadd.f32 %v1702, %v1723
      %v1742 = vadd.f32 %v1703, %v1723
      %v1743 = vadd.f32 %v1704, %v1723
      %v1744 = vadd.f32 %v1705, %v1723
      %v1745 = vadd.f32 %v1706, %v1723
      %v1746 = vadd.f32 %v1707, %v1723
      %v1747 = vadd.f32 %v1708, %v1723
      %v1748 = vadd.f32 %v1709, %v1723
      %v1749 = vadd.f32 %v1710, %v1723
      %v1750 = vadd.f32 %v1711, %v1723
      %v1751 = vadd.f32 %v1712, %v1723
      %v1752 = vadd.f32 %v1713, %v1723
      %v1753 = vadd.f32 %v1714, %v1723
      %v1754 = vadd.f32 %v1715, %v1723
      %v1755 = vadd.f32 %v1716, %v1723
      %v1756 = vadd.f32 %v1717, %v1723
      %v1757 = vpack.c.bf16 %v1726, %v1725
      %v1758 = vpack.c.bf16 %v1728, %v1727
      %v1759 = vpack.c.bf16 %v1730, %v1729
      %v1760 = vpack.c.bf16 %v1732, %v1731
      %v1761 = vpack.c.bf16 %v1734, %v1733
      %v1762 = vpack.c.bf16 %v1736, %v1735
      %v1763 = vpack.c.bf16 %v1738, %v1737
      %v1764 = vpack.c.bf16 %v1740, %v1739
      %v1765 = vpack.c.bf16 %v1742, %v1741
      %v1766 = vpack.c.bf16 %v1744, %v1743
      %v1767 = vpack.c.bf16 %v1746, %v1745
      %v1768 = vpack.c.bf16 %v1748, %v1747
      %v1769 = vpack.c.bf16 %v1750, %v1749
      %v1770 = vpack.c.bf16 %v1752, %v1751
      %v1771 = vpack.c.bf16 %v1754, %v1753
      %v1772 = vpack.c.bf16 %v1756, %v1755
      %v1773 = vld [vmem:[%s7] sm:$0xf]
      %v1774 = vld [vmem:[%s7 + $0x4] sm:$0xf]
      %v1777 = vunpack.c.l.b16 %v1773
      %v1778 = vunpack.c.l.b16 %v1774
      %v1779 = vpack.c.b16 %v1778, %v1777
      %v1782 = vsel %vm1261, %v1757, 0
      %v1785 = vsel %vm1261, %v1758, 0
      %v1788 = vsel %vm1261, %v1759, 0
      %v1791 = vsel %vm1261, %v1760, 0
      %v1794 = vsel %vm1261, %v1761, 0
      %v1797 = vsel %vm1261, %v1762, 0
      %v1800 = vsel %vm1261, %v1763, 0
      %v1803 = vsel %vm1261, %v1764, 0
      %v1806 = vsel %vm1261, %v1765, 0
      %v1809 = vsel %vm1261, %v1766, 0
      %v1812 = vsel %vm1261, %v1767, 0
      %v1815 = vsel %vm1261, %v1768, 0
      %v1818 = vsel %vm1261, %v1769, 0
      %v1821 = vsel %vm1261, %v1770, 0
      %v1824 = vsel %vm1261, %v1771, 0
      %v1827 = vsel %vm1261, %v1772, 0
      %1829 = vmatprep.subr.bf16.mxu0 0
      %1830 = vmatpush1.bf16.msra.mxu0 %v1779
      %1831 = vmatprep.subr.bf16.mxu0 0
      %1832 = vmatpush1.bf16.msra.mxu0 0
      %1833 = vmatprep.subr.bf16.mxu0 0
      %1834 = vmatpush1.bf16.msra.mxu0 0
      %1835 = vmatprep.subr.bf16.mxu0 0
      %1836 = vmatpush1.bf16.msra.mxu0 0
      %1837 = vmatprep.subr.bf16.mxu0 0
      %1838 = vmatpush1.bf16.msra.mxu0 0
      %1839 = vmatprep.subr.bf16.mxu0 0
      %1840 = vmatpush1.bf16.msra.mxu0 0
      %1841 = vmatprep.subr.bf16.mxu0 0
      %1842 = vmatpush1.bf16.msra.mxu0 0
      %1843 = vmatprep.subr.bf16.mxu0 0
      %1844 = vmatpush1.bf16.msra.mxu0 0
      %1845 = vmatprep.subr.bf16.mxu0 0
      %1846 = vmatpush1.bf16.msra.mxu0 0
      %1847 = vmatprep.subr.bf16.mxu0 0
      %1848 = vmatpush1.bf16.msra.mxu0 0
      %1849 = vmatprep.subr.bf16.mxu0 0
      %1850 = vmatpush1.bf16.msra.mxu0 0
      %1851 = vmatprep.subr.bf16.mxu0 0
      %1852 = vmatpush1.bf16.msra.mxu0 0
      %1853 = vmatprep.subr.bf16.mxu0 0
      %1854 = vmatpush1.bf16.msra.mxu0 0
      %1855 = vmatprep.subr.bf16.mxu0 0
      %1856 = vmatpush1.bf16.msra.mxu0 0
      %1857 = vmatprep.subr.bf16.mxu0 0
      %1858 = vmatpush1.bf16.msra.mxu0 0
      %1859 = vmatprep.subr.bf16.mxu0 0
      %1860 = vmatpush1.bf16.msra.mxu0 0
      %1861 = vmatprep.mubr.bf16.mxu0 0
      %1862 = vmatmul.mubr.bf16.gmra.mrb[0].mxu0 %v1782
      %v1863 = vpop.f32.mrb[0].mxu0
      %v1864 = vadd.f32 0.0, %v1863
      %v1865 = vpop.f32.mrb[0].mxu0
      %v1866 = vpop.f32.mrb[0].mxu0
      %v1867 = vadd.f32 0.0, %v1866
      %v1868 = vpop.f32.mrb[0].mxu0
      %1869 = vmatprep.mubr.bf16.mxu0 0
      %1870 = vmatmul.mubr.bf16.gmra.mrb[0].mxu0 %v1785
      %v1871 = vpop.f32.mrb[0].mxu0
      %v1872 = vadd.f32 0.0, %v1871
      %v1873 = vpop.f32.mrb[0].mxu0
      %v1874 = vpop.f32.mrb[0].mxu0
      %v1875 = vadd.f32 0.0, %v1874
      %v1876 = vpop.f32.mrb[0].mxu0
      %1877 = vmatprep.mubr.bf16.mxu0 0
      %1878 = vmatmul.mubr.bf16.gmra.mrb[0].mxu0 %v1788
      %v1879 = vpop.f32.mrb[0].mxu0
      %v1880 = vadd.f32 0.0, %v1879
      %v1881 = vpop.f32.mrb[0].mxu0
      %v1882 = vpop.f32.mrb[0].mxu0
      %v1883 = vadd.f32 0.0, %v1882
      %v1884 = vpop.f32.mrb[0].mxu0
      %1885 = vmatprep.mubr.bf16.mxu0 0
      %1886 = vmatmul.mubr.bf16.gmra.mrb[0].mxu0 %v1791
      %v1887 = vpop.f32.mrb[0].mxu0
      %v1888 = vadd.f32 0.0, %v1887
      %v1889 = vpop.f32.mrb[0].mxu0
      %v1890 = vpop.f32.mrb[0].mxu0
      %v1891 = vadd.f32 0.0, %v1890
      %v1892 = vpop.f32.mrb[0].mxu0
      %1893 = vmatprep.mubr.bf16.mxu0 0
      %1894 = vmatmul.mubr.bf16.gmra.mrb[0].mxu0 %v1794
      %v1895 = vpop.f32.mrb[0].mxu0
      %v1896 = vadd.f32 0.0, %v1895
      %v1897 = vpop.f32.mrb[0].mxu0
      %v1898 = vpop.f32.mrb[0].mxu0
      %v1899 = vadd.f32 0.0, %v1898
      %v1900 = vpop.f32.mrb[0].mxu0
      %1901 = vmatprep.mubr.bf16.mxu0 0
      %1902 = vmatmul.mubr.bf16.gmra.mrb[0].mxu0 %v1797
      %v1903 = vpop.f32.mrb[0].mxu0
      %v1904 = vadd.f32 0.0, %v1903
      %v1905 = vpop.f32.mrb[0].mxu0
      %v1906 = vpop.f32.mrb[0].mxu0
      %v1907 = vadd.f32 0.0, %v1906
      %v1908 = vpop.f32.mrb[0].mxu0
      %1909 = vmatprep.mubr.bf16.mxu0 0
      %1910 = vmatmul.mubr.bf16.gmra.mrb[0].mxu0 %v1800
      %v1911 = vpop.f32.mrb[0].mxu0
      %v1912 = vadd.f32 0.0, %v1911
      %v1913 = vpop.f32.mrb[0].mxu0
      %v1914 = vpop.f32.mrb[0].mxu0
      %v1915 = vadd.f32 0.0, %v1914
      %v1916 = vpop.f32.mrb[0].mxu0
      %1917 = vmatprep.mubr.bf16.mxu0 0
      %1918 = vmatmul.mubr.bf16.gmra.mrb[0].mxu0 %v1803
      %v1919 = vpop.f32.mrb[0].mxu0
      %v1920 = vadd.f32 0.0, %v1919
      %v1921 = vpop.f32.mrb[0].mxu0
      %v1922 = vpop.f32.mrb[0].mxu0
      %v1923 = vadd.f32 0.0, %v1922
      %v1924 = vpop.f32.mrb[0].mxu0
      %1925 = vmatprep.mubr.bf16.mxu0 0
      %1926 = vmatmul.mubr.bf16.gmra.mrb[0].mxu0 %v1806
      %v1927 = vpop.f32.mrb[0].mxu0
      %v1928 = vadd.f32 0.0, %v1927
      %v1929 = vpop.f32.mrb[0].mxu0
      %v1930 = vpop.f32.mrb[0].mxu0
      %v1931 = vadd.f32 0.0, %v1930
      %v1932 = vpop.f32.mrb[0].mxu0
      %1933 = vmatprep.mubr.bf16.mxu0 0
      %1934 = vmatmul.mubr.bf16.gmra.mrb[0].mxu0 %v1809
      %v1935 = vpop.f32.mrb[0].mxu0
      %v1936 = vadd.f32 0.0, %v1935
      %v1937 = vpop.f32.mrb[0].mxu0
      %v1938 = vpop.f32.mrb[0].mxu0
      %v1939 = vadd.f32 0.0, %v1938
      %v1940 = vpop.f32.mrb[0].mxu0
      %1941 = vmatprep.mubr.bf16.mxu0 0
      %1942 = vmatmul.mubr.bf16.gmra.mrb[0].mxu0 %v1812
      %v1943 = vpop.f32.mrb[0].mxu0
      %v1944 = vadd.f32 0.0, %v1943
      %v1945 = vpop.f32.mrb[0].mxu0
      %v1946 = vpop.f32.mrb[0].mxu0
      %v1947 = vadd.f32 0.0, %v1946
      %v1948 = vpop.f32.mrb[0].mxu0
      %1949 = vmatprep.mubr.bf16.mxu0 0
      %1950 = vmatmul.mubr.bf16.gmra.mrb[0].mxu0 %v1815
      %v1951 = vpop.f32.mrb[0].mxu0
      %v1952 = vadd.f32 0.0, %v1951
      %v1953 = vpop.f32.mrb[0].mxu0
      %v1954 = vpop.f32.mrb[0].mxu0
      %v1955 = vadd.f32 0.0, %v1954
      %v1956 = vpop.f32.mrb[0].mxu0
      %1957 = vmatprep.mubr.bf16.mxu0 0
      %1958 = vmatmul.mubr.bf16.gmra.mrb[0].mxu0 %v1818
      %v1959 = vpop.f32.mrb[0].mxu0
      %v1960 = vadd.f32 0.0, %v1959
      %v1961 = vpop.f32.mrb[0].mxu0
      %v1962 = vpop.f32.mrb[0].mxu0
      %v1963 = vadd.f32 0.0, %v1962
      %v1964 = vpop.f32.mrb[0].mxu0
      %1965 = vmatprep.mubr.bf16.mxu0 0
      %1966 = vmatmul.mubr.bf16.gmra.mrb[0].mxu0 %v1821
      %v1967 = vpop.f32.mrb[0].mxu0
      %v1968 = vadd.f32 0.0, %v1967
      %v1969 = vpop.f32.mrb[0].mxu0
      %v1970 = vpop.f32.mrb[0].mxu0
      %v1971 = vadd.f32 0.0, %v1970
      %v1972 = vpop.f32.mrb[0].mxu0
      %1973 = vmatprep.mubr.bf16.mxu0 0
      %1974 = vmatmul.mubr.bf16.gmra.mrb[0].mxu0 %v1824
      %v1975 = vpop.f32.mrb[0].mxu0
      %v1976 = vadd.f32 0.0, %v1975
      %v1977 = vpop.f32.mrb[0].mxu0
      %v1978 = vpop.f32.mrb[0].mxu0
      %v1979 = vadd.f32 0.0, %v1978
      %v1980 = vpop.f32.mrb[0].mxu0
      %1981 = vmatprep.mubr.bf16.mxu0 0
      %1982 = vmatmul.mubr.bf16.gmra.mrb[0].mxu0 %v1827
      %v1983 = vpop.f32.mrb[0].mxu0
      %v1984 = vadd.f32 0.0, %v1983
      %v1985 = vpop.f32.mrb[0].mxu0
      %v1986 = vpop.f32.mrb[0].mxu0
      %v1987 = vadd.f32 0.0, %v1986
      %v1988 = vpop.f32.mrb[0].mxu0
      %1989 = vdwg.mxu0
      %v1990 = vld [vmem:[%s8] sm:$0xff]
      %v1991 = vld [vmem:[%s8 + $0x8] sm:$0xff]
      %v1992 = vld [vmem:[%s8 + $0x10] sm:$0xff]
      %v1993 = vld [vmem:[%s8 + $0x18] sm:$0xff]
      %v1994 = vld [vmem:[%s8 + $0x20] sm:$0xff]
      %v1995 = vld [vmem:[%s8 + $0x28] sm:$0xff]
      %v1996 = vld [vmem:[%s8 + $0x30] sm:$0xff]
      %v1997 = vld [vmem:[%s8 + $0x38] sm:$0xff]
      %v1998 = vld [vmem:[%s8 + $0x40] sm:$0xff]
      %v1999 = vld [vmem:[%s8 + $0x48] sm:$0xff]
      %v2000 = vld [vmem:[%s8 + $0x50] sm:$0xff]
      %v2001 = vld [vmem:[%s8 + $0x58] sm:$0xff]
      %v2002 = vld [vmem:[%s8 + $0x60] sm:$0xff]
      %v2003 = vld [vmem:[%s8 + $0x68] sm:$0xff]
      %v2004 = vld [vmem:[%s8 + $0x70] sm:$0xff]
      %v2005 = vld [vmem:[%s8 + $0x78] sm:$0xff]
      %v2006 = vld [vmem:[%s8 + $0x80] sm:$0xff]
      %v2007 = vld [vmem:[%s8 + $0x88] sm:$0xff]
      %v2008 = vld [vmem:[%s8 + $0x90] sm:$0xff]
      %v2009 = vld [vmem:[%s8 + $0x98] sm:$0xff]
      %v2010 = vld [vmem:[%s8 + $0xa0] sm:$0xff]
      %v2011 = vld [vmem:[%s8 + $0xa8] sm:$0xff]
      %v2012 = vld [vmem:[%s8 + $0xb0] sm:$0xff]
      %v2013 = vld [vmem:[%s8 + $0xb8] sm:$0xff]
      %v2014 = vld [vmem:[%s8 + $0xc0] sm:$0xff]
      %v2015 = vld [vmem:[%s8 + $0xc8] sm:$0xff]
      %v2016 = vld [vmem:[%s8 + $0xd0] sm:$0xff]
      %v2017 = vld [vmem:[%s8 + $0xd8] sm:$0xff]
      %v2018 = vld [vmem:[%s8 + $0xe0] sm:$0xff]
      %v2019 = vld [vmem:[%s8 + $0xe8] sm:$0xff]
      %v2020 = vld [vmem:[%s8 + $0xf0] sm:$0xff]
      %v2021 = vld [vmem:[%s8 + $0xf8] sm:$0xff]
      %v2022 = vld [vmem:[%s8 + $0x100] sm:$0xff]
      %v2023 = vld [vmem:[%s8 + $0x108] sm:$0xff]
      %v2024 = vld [vmem:[%s8 + $0x110] sm:$0xff]
      %v2025 = vld [vmem:[%s8 + $0x118] sm:$0xff]
      %v2026 = vld [vmem:[%s8 + $0x120] sm:$0xff]
      %v2027 = vld [vmem:[%s8 + $0x128] sm:$0xff]
      %v2028 = vld [vmem:[%s8 + $0x130] sm:$0xff]
      %v2029 = vld [vmem:[%s8 + $0x138] sm:$0xff]
      %v2030 = vpack.c.bf16 %v1867, %v1864
      %v2031 = vpack.c.bf16 %v1875, %v1872
      %v2032 = vpack.c.bf16 %v1883, %v1880
      %v2033 = vpack.c.bf16 %v1891, %v1888
      %v2034 = vpack.c.bf16 %v1899, %v1896
      %v2035 = vpack.c.bf16 %v1907, %v1904
      %v2036 = vpack.c.bf16 %v1915, %v1912
      %v2037 = vpack.c.bf16 %v1923, %v1920
      %v2038 = vpack.c.bf16 %v1931, %v1928
      %v2039 = vpack.c.bf16 %v1939, %v1936
      %v2040 = vpack.c.bf16 %v1947, %v1944
      %v2041 = vpack.c.bf16 %v1955, %v1952
      %v2042 = vpack.c.bf16 %v1963, %v1960
      %v2043 = vpack.c.bf16 %v1971, %v1968
      %v2044 = vpack.c.bf16 %v1979, %v1976
      %v2045 = vpack.c.bf16 %v1987, %v1984
      %v2086 = vunpack.c.l.b16 %v1990
      %v2087 = vunpack.c.h.b16 %v1990
      %v2088 = vunpack.c.l.b16 %v1991
      %v2089 = vunpack.c.h.b16 %v1991
      %v2090 = vunpack.c.l.b16 %v1992
      %v2091 = vunpack.c.h.b16 %v1992
      %v2092 = vunpack.c.l.b16 %v1993
      %v2093 = vunpack.c.h.b16 %v1993
      %v2094 = vunpack.c.l.b16 %v1994
      %v2095 = vunpack.c.h.b16 %v1994
      %v2096 = vunpack.c.l.b16 %v1995
      %v2097 = vunpack.c.h.b16 %v1995
      %v2098 = vunpack.c.l.b16 %v1996
      %v2099 = vunpack.c.h.b16 %v1996
      %v2100 = vunpack.c.l.b16 %v1997
      %v2101 = vunpack.c.h.b16 %v1997
      %v2102 = vunpack.c.l.b16 %v1998
      %v2103 = vunpack.c.h.b16 %v1998
      %v2104 = vunpack.c.l.b16 %v1999
      %v2105 = vunpack.c.h.b16 %v1999
      %v2106 = vunpack.c.l.b16 %v2000
      %v2107 = vunpack.c.h.b16 %v2000
      %v2108 = vunpack.c.l.b16 %v2001
      %v2109 = vunpack.c.h.b16 %v2001
      %v2110 = vunpack.c.l.b16 %v2002
      %v2111 = vunpack.c.h.b16 %v2002
      %v2112 = vunpack.c.l.b16 %v2003
      %v2113 = vunpack.c.h.b16 %v2003
      %v2114 = vunpack.c.l.b16 %v2004
      %v2115 = vunpack.c.h.b16 %v2004
      %v2116 = vunpack.c.l.b16 %v2005
      %v2117 = vunpack.c.h.b16 %v2005
      %v2118 = vunpack.c.l.b16 %v2006
      %v2119 = vunpack.c.h.b16 %v2006
      %v2120 = vunpack.c.l.b16 %v2007
      %v2121 = vunpack.c.h.b16 %v2007
      %v2122 = vunpack.c.l.b16 %v2008
      %v2123 = vunpack.c.h.b16 %v2008
      %v2124 = vunpack.c.l.b16 %v2009
      %v2125 = vunpack.c.h.b16 %v2009
      %v2126 = vunpack.c.l.b16 %v2010
      %v2127 = vunpack.c.h.b16 %v2010
      %v2128 = vunpack.c.l.b16 %v2011
      %v2129 = vunpack.c.h.b16 %v2011
      %v2130 = vunpack.c.l.b16 %v2012
      %v2131 = vunpack.c.h.b16 %v2012
      %v2132 = vunpack.c.l.b16 %v2013
      %v2133 = vunpack.c.h.b16 %v2013
      %v2134 = vunpack.c.l.b16 %v2014
      %v2135 = vunpack.c.h.b16 %v2014
      %v2136 = vunpack.c.l.b16 %v2015
      %v2137 = vunpack.c.h.b16 %v2015
      %v2138 = vunpack.c.l.b16 %v2016
      %v2139 = vunpack.c.h.b16 %v2016
      %v2140 = vunpack.c.l.b16 %v2017
      %v2141 = vunpack.c.h.b16 %v2017
      %v2142 = vunpack.c.l.b16 %v2018
      %v2143 = vunpack.c.h.b16 %v2018
      %v2144 = vunpack.c.l.b16 %v2019
      %v2145 = vunpack.c.h.b16 %v2019
      %v2146 = vunpack.c.l.b16 %v2020
      %v2147 = vunpack.c.h.b16 %v2020
      %v2148 = vunpack.c.l.b16 %v2021
      %v2149 = vunpack.c.h.b16 %v2021
      %v2150 = vunpack.c.l.b16 %v2022
      %v2151 = vunpack.c.h.b16 %v2022
      %v2152 = vunpack.c.l.b16 %v2023
      %v2153 = vunpack.c.h.b16 %v2023
      %v2154 = vunpack.c.l.b16 %v2024
      %v2155 = vunpack.c.h.b16 %v2024
      %v2156 = vunpack.c.l.b16 %v2025
      %v2157 = vunpack.c.h.b16 %v2025
      %v2158 = vunpack.c.l.b16 %v2026
      %v2159 = vunpack.c.h.b16 %v2026
      %v2160 = vunpack.c.l.b16 %v2027
      %v2161 = vunpack.c.h.b16 %v2027
      %v2162 = vunpack.c.l.b16 %v2028
      %v2163 = vunpack.c.h.b16 %v2028
      %v2164 = vunpack.c.l.b16 %v2029
      %v2165 = vunpack.c.h.b16 %v2029
      %v2166 = vpack.c.b16 %v2088, %v2086
      %v2167 = vpack.c.b16 %v2089, %v2087
      %v2168 = vpack.c.b16 %v2092, %v2090
      %v2169 = vpack.c.b16 %v2093, %v2091
      %v2170 = vpack.c.b16 %v2096, %v2094
      %v2171 = vpack.c.b16 %v2097, %v2095
      %v2172 = vpack.c.b16 %v2100, %v2098
      %v2173 = vpack.c.b16 %v2101, %v2099
      %v2174 = vpack.c.b16 %v2104, %v2102
      %v2175 = vpack.c.b16 %v2105, %v2103
      %v2176 = vpack.c.b16 %v2108, %v2106
      %v2177 = vpack.c.b16 %v2109, %v2107
      %v2178 = vpack.c.b16 %v2112, %v2110
      %v2179 = vpack.c.b16 %v2113, %v2111
      %v2180 = vpack.c.b16 %v2116, %v2114
      %v2181 = vpack.c.b16 %v2117, %v2115
      %v2182 = vpack.c.b16 %v2120, %v2118
      %v2183 = vpack.c.b16 %v2121, %v2119
      %v2184 = vpack.c.b16 %v2124, %v2122
      %v2185 = vpack.c.b16 %v2125, %v2123
      %v2186 = vpack.c.b16 %v2128, %v2126
      %v2187 = vpack.c.b16 %v2129, %v2127
      %v2188 = vpack.c.b16 %v2132, %v2130
      %v2189 = vpack.c.b16 %v2133, %v2131
      %v2190 = vpack.c.b16 %v2136, %v2134
      %v2191 = vpack.c.b16 %v2137, %v2135
      %v2192 = vpack.c.b16 %v2140, %v2138
      %v2193 = vpack.c.b16 %v2141, %v2139
      %v2194 = vpack.c.b16 %v2144, %v2142
      %v2195 = vpack.c.b16 %v2145, %v2143
      %v2196 = vpack.c.b16 %v2148, %v2146
      %v2197 = vpack.c.b16 %v2149, %v2147
      %v2198 = vpack.c.b16 %v2152, %v2150
      %v2199 = vpack.c.b16 %v2153, %v2151
      %v2200 = vpack.c.b16 %v2156, %v2154
      %v2201 = vpack.c.b16 %v2157, %v2155
      %v2202 = vpack.c.b16 %v2160, %v2158
      %v2203 = vpack.c.b16 %v2161, %v2159
      %v2204 = vpack.c.b16 %v2164, %v2162
      %v2205 = vpack.c.b16 %v2165, %v2163
      %2246 = vmatprep.subr.bf16.mxu0 0
      %2247 = vmatpush1.bf16.msra.mxu0 %v2030
      %2248 = vmatprep.subr.bf16.mxu0 0
      %2249 = vmatpush1.bf16.msra.mxu0 %v2031
      %2250 = vmatprep.subr.bf16.mxu0 0
      %2251 = vmatpush1.bf16.msra.mxu0 %v2032
      %2252 = vmatprep.subr.bf16.mxu0 0
      %2253 = vmatpush1.bf16.msra.mxu0 %v2033
      %2254 = vmatprep.subr.bf16.mxu0 0
      %2255 = vmatpush1.bf16.msra.mxu0 %v2034
      %2256 = vmatprep.subr.bf16.mxu0 0
      %2257 = vmatpush1.bf16.msra.mxu0 %v2035
      %2258 = vmatprep.subr.bf16.mxu0 0
      %2259 = vmatpush1.bf16.msra.mxu0 %v2036
      %2260 = vmatprep.subr.bf16.mxu0 0
      %2261 = vmatpush1.bf16.msra.mxu0 %v2037
      %2262 = vmatprep.subr.bf16.mxu0 0
      %2263 = vmatpush1.bf16.msra.mxu0 %v2038
      %2264 = vmatprep.subr.bf16.mxu0 0
      %2265 = vmatpush1.bf16.msra.mxu0 %v2039
      %2266 = vmatprep.subr.bf16.mxu0 0
      %2267 = vmatpush1.bf16.msra.mxu0 %v2040
      %2268 = vmatprep.subr.bf16.mxu0 0
      %2269 = vmatpush1.bf16.msra.mxu0 %v2041
      %2270 = vmatprep.subr.bf16.mxu0 0
      %2271 = vmatpush1.bf16.msra.mxu0 %v2042
      %2272 = vmatprep.subr.bf16.mxu0 0
      %2273 = vmatpush1.bf16.msra.mxu0 %v2043
      %2274 = vmatprep.subr.bf16.mxu0 0
      %2275 = vmatpush1.bf16.msra.mxu0 %v2044
      %2276 = vmatprep.subr.bf16.mxu0 0
      %2277 = vmatpush1.bf16.msra.mxu0 %v2045
      %2278 = vmatprep.mubr.bf16.mxu0 %v2167
      %2279 = vmatmul.mubr.bf16.gmra.mrb[0].mxu0 %v2166
      %v2280 = vpop.f32.mrb[0].mxu0
      %v2281 = vadd.f32 0.0, %v2280
      %v2282 = vpop.f32.mrb[0].mxu0
      %v2283 = vpop.f32.mrb[0].mxu0
      %v2284 = vadd.f32 0.0, %v2283
      %v2285 = vpop.f32.mrb[0].mxu0
      %2286 = vmatprep.mubr.bf16.mxu0 %v2169
      %2287 = vmatmul.mubr.bf16.gmra.mrb[0].mxu0 %v2168
      %v2288 = vpop.f32.mrb[0].mxu0
      %v2289 = vadd.f32 0.0, %v2288
      %v2290 = vpop.f32.mrb[0].mxu0
      %v2291 = vpop.f32.mrb[0].mxu0
      %v2292 = vadd.f32 0.0, %v2291
      %v2293 = vpop.f32.mrb[0].mxu0
      %2294 = vmatprep.mubr.bf16.mxu0 %v2171
      %2295 = vmatmul.mubr.bf16.gmra.mrb[0].mxu0 %v2170
      %v2296 = vpop.f32.mrb[0].mxu0
      %v2297 = vadd.f32 0.0, %v2296
      %v2298 = vpop.f32.mrb[0].mxu0
      %v2299 = vpop.f32.mrb[0].mxu0
      %v2300 = vadd.f32 0.0, %v2299
      %v2301 = vpop.f32.mrb[0].mxu0
      %2302 = vmatprep.mubr.bf16.mxu0 %v2173
      %2303 = vmatmul.mubr.bf16.gmra.mrb[0].mxu0 %v2172
      %v2304 = vpop.f32.mrb[0].mxu0
      %v2305 = vadd.f32 0.0, %v2304
      %v2306 = vpop.f32.mrb[0].mxu0
      %v2307 = vpop.f32.mrb[0].mxu0
      %v2308 = vadd.f32 0.0, %v2307
      %v2309 = vpop.f32.mrb[0].mxu0
      %2310 = vmatprep.mubr.bf16.mxu0 %v2175
      %2311 = vmatmul.mubr.bf16.gmra.mrb[0].mxu0 %v2174
      %v2312 = vpop.f32.mrb[0].mxu0
      %v2313 = vadd.f32 0.0, %v2312
      %v2314 = vpop.f32.mrb[0].mxu0
      %v2315 = vpop.f32.mrb[0].mxu0
      %v2316 = vadd.f32 0.0, %v2315
      %v2317 = vpop.f32.mrb[0].mxu0
      %2318 = vmatprep.mubr.bf16.mxu0 %v2177
      %2319 = vmatmul.mubr.bf16.gmra.mrb[0].mxu0 %v2176
      %v2320 = vpop.f32.mrb[0].mxu0
      %v2321 = vadd.f32 0.0, %v2320
      %v2322 = vpop.f32.mrb[0].mxu0
      %v2323 = vpop.f32.mrb[0].mxu0
      %v2324 = vadd.f32 0.0, %v2323
      %v2325 = vpop.f32.mrb[0].mxu0
      %2326 = vmatprep.mubr.bf16.mxu0 %v2179
      %2327 = vmatmul.mubr.bf16.gmra.mrb[0].mxu0 %v2178
      %v2328 = vpop.f32.mrb[0].mxu0
      %v2329 = vadd.f32 0.0, %v2328
      %v2330 = vpop.f32.mrb[0].mxu0
      %v2331 = vpop.f32.mrb[0].mxu0
      %v2332 = vadd.f32 0.0, %v2331
      %v2333 = vpop.f32.mrb[0].mxu0
      %2334 = vmatprep.mubr.bf16.mxu0 %v2181
      %2335 = vmatmul.mubr.bf16.gmra.mrb[0].mxu0 %v2180
      %v2336 = vpop.f32.mrb[0].mxu0
      %v2337 = vadd.f32 0.0, %v2336
      %v2338 = vpop.f32.mrb[0].mxu0
      %v2339 = vpop.f32.mrb[0].mxu0
      %v2340 = vadd.f32 0.0, %v2339
      %v2341 = vpop.f32.mrb[0].mxu0
      %2342 = vmatprep.mubr.bf16.mxu0 %v2183
      %2343 = vmatmul.mubr.bf16.gmra.mrb[0].mxu0 %v2182
      %v2344 = vpop.f32.mrb[0].mxu0
      %v2345 = vadd.f32 0.0, %v2344
      %v2346 = vpop.f32.mrb[0].mxu0
      %v2347 = vpop.f32.mrb[0].mxu0
      %v2348 = vadd.f32 0.0, %v2347
      %v2349 = vpop.f32.mrb[0].mxu0
      %2350 = vmatprep.mubr.bf16.mxu0 %v2185
      %2351 = vmatmul.mubr.bf16.gmra.mrb[0].mxu0 %v2184
      %v2352 = vpop.f32.mrb[0].mxu0
      %v2353 = vadd.f32 0.0, %v2352
      %v2354 = vpop.f32.mrb[0].mxu0
      %v2355 = vpop.f32.mrb[0].mxu0
      %v2356 = vadd.f32 0.0, %v2355
      %v2357 = vpop.f32.mrb[0].mxu0
      %2358 = vmatprep.mubr.bf16.mxu0 %v2187
      %2359 = vmatmul.mubr.bf16.gmra.mrb[0].mxu0 %v2186
      %v2360 = vpop.f32.mrb[0].mxu0
      %v2361 = vadd.f32 0.0, %v2360
      %v2362 = vpop.f32.mrb[0].mxu0
      %v2363 = vpop.f32.mrb[0].mxu0
      %v2364 = vadd.f32 0.0, %v2363
      %v2365 = vpop.f32.mrb[0].mxu0
      %2366 = vmatprep.mubr.bf16.mxu0 %v2189
      %2367 = vmatmul.mubr.bf16.gmra.mrb[0].mxu0 %v2188
      %v2368 = vpop.f32.mrb[0].mxu0
      %v2369 = vadd.f32 0.0, %v2368
      %v2370 = vpop.f32.mrb[0].mxu0
      %v2371 = vpop.f32.mrb[0].mxu0
      %v2372 = vadd.f32 0.0, %v2371
      %v2373 = vpop.f32.mrb[0].mxu0
      %2374 = vmatprep.mubr.bf16.mxu0 %v2191
      %2375 = vmatmul.mubr.bf16.gmra.mrb[0].mxu0 %v2190
      %v2376 = vpop.f32.mrb[0].mxu0
      %v2377 = vadd.f32 0.0, %v2376
      %v2378 = vpop.f32.mrb[0].mxu0
      %v2379 = vpop.f32.mrb[0].mxu0
      %v2380 = vadd.f32 0.0, %v2379
      %v2381 = vpop.f32.mrb[0].mxu0
      %2382 = vmatprep.mubr.bf16.mxu0 %v2193
      %2383 = vmatmul.mubr.bf16.gmra.mrb[0].mxu0 %v2192
      %v2384 = vpop.f32.mrb[0].mxu0
      %v2385 = vadd.f32 0.0, %v2384
      %v2386 = vpop.f32.mrb[0].mxu0
      %v2387 = vpop.f32.mrb[0].mxu0
      %v2388 = vadd.f32 0.0, %v2387
      %v2389 = vpop.f32.mrb[0].mxu0
      %2390 = vmatprep.mubr.bf16.mxu0 %v2195
      %2391 = vmatmul.mubr.bf16.gmra.mrb[0].mxu0 %v2194
      %v2392 = vpop.f32.mrb[0].mxu0
      %v2393 = vadd.f32 0.0, %v2392
      %v2394 = vpop.f32.mrb[0].mxu0
      %v2395 = vpop.f32.mrb[0].mxu0
      %v2396 = vadd.f32 0.0, %v2395
      %v2397 = vpop.f32.mrb[0].mxu0
      %2398 = vmatprep.mubr.bf16.mxu0 %v2197
      %2399 = vmatmul.mubr.bf16.gmra.mrb[0].mxu0 %v2196
      %v2400 = vpop.f32.mrb[0].mxu0
      %v2401 = vadd.f32 0.0, %v2400
      %v2402 = vpop.f32.mrb[0].mxu0
      %v2403 = vpop.f32.mrb[0].mxu0
      %v2404 = vadd.f32 0.0, %v2403
      %v2405 = vpop.f32.mrb[0].mxu0
      %2406 = vmatprep.mubr.bf16.mxu0 %v2199
      %2407 = vmatmul.mubr.bf16.gmra.mrb[0].mxu0 %v2198
      %v2408 = vpop.f32.mrb[0].mxu0
      %v2409 = vadd.f32 0.0, %v2408
      %v2410 = vpop.f32.mrb[0].mxu0
      %v2411 = vpop.f32.mrb[0].mxu0
      %v2412 = vadd.f32 0.0, %v2411
      %v2413 = vpop.f32.mrb[0].mxu0
      %2414 = vmatprep.mubr.bf16.mxu0 %v2201
      %2415 = vmatmul.mubr.bf16.gmra.mrb[0].mxu0 %v2200
      %v2416 = vpop.f32.mrb[0].mxu0
      %v2417 = vadd.f32 0.0, %v2416
      %v2418 = vpop.f32.mrb[0].mxu0
      %v2419 = vpop.f32.mrb[0].mxu0
      %v2420 = vadd.f32 0.0, %v2419
      %v2421 = vpop.f32.mrb[0].mxu0
      %2422 = vmatprep.mubr.bf16.mxu0 %v2203
      %2423 = vmatmul.mubr.bf16.gmra.mrb[0].mxu0 %v2202
      %v2424 = vpop.f32.mrb[0].mxu0
      %v2425 = vadd.f32 0.0, %v2424
      %v2426 = vpop.f32.mrb[0].mxu0
      %v2427 = vpop.f32.mrb[0].mxu0
      %v2428 = vadd.f32 0.0, %v2427
      %v2429 = vpop.f32.mrb[0].mxu0
      %2430 = vmatprep.mubr.bf16.mxu0 %v2205
      %2431 = vmatmul.mubr.bf16.gmra.mrb[0].mxu0 %v2204
      %v2432 = vpop.f32.mrb[0].mxu0
      %v2433 = vadd.f32 0.0, %v2432
      %v2434 = vpop.f32.mrb[0].mxu0
      %v2435 = vpop.f32.mrb[0].mxu0
      %v2436 = vadd.f32 0.0, %v2435
      %v2437 = vpop.f32.mrb[0].mxu0
      %2438 = vdwg.mxu0
      %v2439 = vld [vmem:[%s9] sm:$0xff]
      %v2440 = vld [vmem:[%s9 + $0x8] sm:$0xff]
      %v2441 = vld [vmem:[%s9 + $0x10] sm:$0xff]
      %v2442 = vld [vmem:[%s9 + $0x18] sm:$0xff]
      %v2443 = vld [vmem:[%s9 + $0x20] sm:$0xff]
      %v2444 = vld [vmem:[%s9 + $0x28] sm:$0xff]
      %v2445 = vld [vmem:[%s9 + $0x30] sm:$0xff]
      %v2446 = vld [vmem:[%s9 + $0x38] sm:$0xff]
      %v2447 = vld [vmem:[%s9 + $0x40] sm:$0xff]
      %v2448 = vld [vmem:[%s9 + $0x48] sm:$0xff]
      %v2449 = vld [vmem:[%s9 + $0x50] sm:$0xff]
      %v2450 = vld [vmem:[%s9 + $0x58] sm:$0xff]
      %v2451 = vld [vmem:[%s9 + $0x60] sm:$0xff]
      %v2452 = vld [vmem:[%s9 + $0x68] sm:$0xff]
      %v2453 = vld [vmem:[%s9 + $0x70] sm:$0xff]
      %v2454 = vld [vmem:[%s9 + $0x78] sm:$0xff]
      %v2455 = vld [vmem:[%s9 + $0x80] sm:$0xff]
      %v2456 = vld [vmem:[%s9 + $0x88] sm:$0xff]
      %v2457 = vld [vmem:[%s9 + $0x90] sm:$0xff]
      %v2458 = vld [vmem:[%s9 + $0x98] sm:$0xff]
      %v2459 = vld [vmem:[%s9 + $0xa0] sm:$0xff]
      %v2460 = vld [vmem:[%s9 + $0xa8] sm:$0xff]
      %v2461 = vld [vmem:[%s9 + $0xb0] sm:$0xff]
      %v2462 = vld [vmem:[%s9 + $0xb8] sm:$0xff]
      %v2463 = vld [vmem:[%s9 + $0xc0] sm:$0xff]
      %v2464 = vld [vmem:[%s9 + $0xc8] sm:$0xff]
      %v2465 = vld [vmem:[%s9 + $0xd0] sm:$0xff]
      %v2466 = vld [vmem:[%s9 + $0xd8] sm:$0xff]
      %v2467 = vld [vmem:[%s9 + $0xe0] sm:$0xff]
      %v2468 = vld [vmem:[%s9 + $0xe8] sm:$0xff]
      %v2469 = vld [vmem:[%s9 + $0xf0] sm:$0xff]
      %v2470 = vld [vmem:[%s9 + $0xf8] sm:$0xff]
      %v2471 = vld [vmem:[%s9 + $0x100] sm:$0xff]
      %v2472 = vld [vmem:[%s9 + $0x108] sm:$0xff]
      %v2473 = vld [vmem:[%s9 + $0x110] sm:$0xff]
      %v2474 = vld [vmem:[%s9 + $0x118] sm:$0xff]
      %v2475 = vld [vmem:[%s9 + $0x120] sm:$0xff]
      %v2476 = vld [vmem:[%s9 + $0x128] sm:$0xff]
      %v2477 = vld [vmem:[%s9 + $0x130] sm:$0xff]
      %v2478 = vld [vmem:[%s9 + $0x138] sm:$0xff]
      %v2479 = vmul.f32 %v2281, %v2439
      %v2480 = vmul.f32 %v2284, %v2440
      %v2481 = vmul.f32 %v2289, %v2441
      %v2482 = vmul.f32 %v2292, %v2442
      %v2483 = vmul.f32 %v2297, %v2443
      %v2484 = vmul.f32 %v2300, %v2444
      %v2485 = vmul.f32 %v2305, %v2445
      %v2486 = vmul.f32 %v2308, %v2446
      %v2487 = vmul.f32 %v2313, %v2447
      %v2488 = vmul.f32 %v2316, %v2448
      %v2489 = vmul.f32 %v2321, %v2449
      %v2490 = vmul.f32 %v2324, %v2450
      %v2491 = vmul.f32 %v2329, %v2451
      %v2492 = vmul.f32 %v2332, %v2452
      %v2493 = vmul.f32 %v2337, %v2453
      %v2494 = vmul.f32 %v2340, %v2454
      %v2495 = vmul.f32 %v2345, %v2455
      %v2496 = vmul.f32 %v2348, %v2456
      %v2497 = vmul.f32 %v2353, %v2457
      %v2498 = vmul.f32 %v2356, %v2458
      %v2499 = vmul.f32 %v2361, %v2459
      %v2500 = vmul.f32 %v2364, %v2460
      %v2501 = vmul.f32 %v2369, %v2461
      %v2502 = vmul.f32 %v2372, %v2462
      %v2503 = vmul.f32 %v2377, %v2463
      %v2504 = vmul.f32 %v2380, %v2464
      %v2505 = vmul.f32 %v2385, %v2465
      %v2506 = vmul.f32 %v2388, %v2466
      %v2507 = vmul.f32 %v2393, %v2467
      %v2508 = vmul.f32 %v2396, %v2468
      %v2509 = vmul.f32 %v2401, %v2469
      %v2510 = vmul.f32 %v2404, %v2470
      %v2511 = vmul.f32 %v2409, %v2471
      %v2512 = vmul.f32 %v2412, %v2472
      %v2513 = vmul.f32 %v2417, %v2473
      %v2514 = vmul.f32 %v2420, %v2474
      %v2515 = vmul.f32 %v2425, %v2475
      %v2516 = vmul.f32 %v2428, %v2476
      %v2517 = vmul.f32 %v2433, %v2477
      %v2518 = vmul.f32 %v2436, %v2478
      %v2519 = vld [vmem:[%s10] sm:$0xff]
      %v2520 = vld [vmem:[%s10 + $0x8] sm:$0xf]
      %v2521 = vld [vmem:[%s10 + $0xc] sm:$0xff]
      %v2522 = vld [vmem:[%s10 + $0x14] sm:$0xf]
      %v2523 = vld [vmem:[%s10 + $0x18] sm:$0xff]
      %v2524 = vld [vmem:[%s10 + $0x20] sm:$0xf]
      %v2525 = vld [vmem:[%s10 + $0x24] sm:$0xff]
      %v2526 = vld [vmem:[%s10 + $0x2c] sm:$0xf]
      %v2527 = vld [vmem:[%s10 + $0x30] sm:$0xff]
      %v2528 = vld [vmem:[%s10 + $0x38] sm:$0xf]
      %v2529 = vld [vmem:[%s10 + $0x3c] sm:$0xff]
      %v2530 = vld [vmem:[%s10 + $0x44] sm:$0xf]
      %v2531 = vld [vmem:[%s10 + $0x48] sm:$0xff]
      %v2532 = vld [vmem:[%s10 + $0x50] sm:$0xf]
      %v2533 = vld [vmem:[%s10 + $0x54] sm:$0xff]
      %v2534 = vld [vmem:[%s10 + $0x5c] sm:$0xf]
      %v2535 = vld [vmem:[%s10 + $0x60] sm:$0xff]
      %v2536 = vld [vmem:[%s10 + $0x68] sm:$0xf]
      %v2537 = vld [vmem:[%s10 + $0x6c] sm:$0xff]
      %v2538 = vld [vmem:[%s10 + $0x74] sm:$0xf]
      %v2539 = vld [vmem:[%s10 + $0x78] sm:$0xff]
      %v2540 = vld [vmem:[%s10 + $0x80] sm:$0xf]
      %v2541 = vld [vmem:[%s10 + $0x84] sm:$0xff]
      %v2542 = vld [vmem:[%s10 + $0x8c] sm:$0xf]
      %v2543 = vld [vmem:[%s10 + $0x90] sm:$0xff]
      %v2544 = vld [vmem:[%s10 + $0x98] sm:$0xf]
      %v2545 = vld [vmem:[%s10 + $0x9c] sm:$0xff]
      %v2546 = vld [vmem:[%s10 + $0xa4] sm:$0xf]
      %v2547 = vld [vmem:[%s10 + $0xa8] sm:$0xff]
      %v2548 = vld [vmem:[%s10 + $0xb0] sm:$0xf]
      %v2549 = vld [vmem:[%s10 + $0xb4] sm:$0xff]
      %v2550 = vld [vmem:[%s10 + $0xbc] sm:$0xf]
      %v2551 = vld [vmem:[%s10 + $0xc0] sm:$0xff]
      %v2552 = vld [vmem:[%s10 + $0xc8] sm:$0xf]
      %v2553 = vld [vmem:[%s10 + $0xcc] sm:$0xff]
      %v2554 = vld [vmem:[%s10 + $0xd4] sm:$0xf]
      %v2555 = vld [vmem:[%s10 + $0xd8] sm:$0xff]
      %v2556 = vld [vmem:[%s10 + $0xe0] sm:$0xf]
      %v2557 = vld [vmem:[%s10 + $0xe4] sm:$0xff]
      %v2558 = vld [vmem:[%s10 + $0xec] sm:$0xf]
      %v2559 = vld [vmem:[%s10 + $0xf0] sm:$0xff]
      %v2560 = vld [vmem:[%s10 + $0xf8] sm:$0xf]
      %v2561 = vld [vmem:[%s10 + $0xfc] sm:$0xff]
      %v2562 = vld [vmem:[%s10 + $0x104] sm:$0xf]
      %v2563 = vld [vmem:[%s10 + $0x108] sm:$0xff]
      %v2564 = vld [vmem:[%s10 + $0x110] sm:$0xf]
      %v2565 = vld [vmem:[%s10 + $0x114] sm:$0xff]
      %v2566 = vld [vmem:[%s10 + $0x11c] sm:$0xf]
      %v2567 = vld [vmem:[%s10 + $0x120] sm:$0xff]
      %v2568 = vld [vmem:[%s10 + $0x128] sm:$0xf]
      %v2569 = vld [vmem:[%s10 + $0x12c] sm:$0xff]
      %v2570 = vld [vmem:[%s10 + $0x134] sm:$0xf]
      %v2571 = vld [vmem:[%s10 + $0x138] sm:$0xff]
      %v2572 = vld [vmem:[%s10 + $0x140] sm:$0xf]
      %v2573 = vld [vmem:[%s10 + $0x144] sm:$0xff]
      %v2574 = vld [vmem:[%s10 + $0x14c] sm:$0xf]
      %v2575 = vld [vmem:[%s10 + $0x150] sm:$0xff]
      %v2576 = vld [vmem:[%s10 + $0x158] sm:$0xf]
      %v2577 = vld [vmem:[%s10 + $0x15c] sm:$0xff]
      %v2578 = vld [vmem:[%s10 + $0x164] sm:$0xf]
      %v2579 = vld [vmem:[%s10 + $0x168] sm:$0xff]
      %v2580 = vld [vmem:[%s10 + $0x170] sm:$0xf]
      %v2581 = vld [vmem:[%s10 + $0x174] sm:$0xff]
      %v2582 = vld [vmem:[%s10 + $0x17c] sm:$0xf]
      %v2583 = vpack.c.bf16 %v2480, %v2479
      %v2584 = vpack.c.bf16 %v2482, %v2481
      %v2585 = vpack.c.bf16 %v2484, %v2483
      %v2586 = vpack.c.bf16 %v2486, %v2485
      %v2587 = vpack.c.bf16 %v2488, %v2487
      %v2588 = vpack.c.bf16 %v2490, %v2489
      %v2589 = vpack.c.bf16 %v2492, %v2491
      %v2590 = vpack.c.bf16 %v2494, %v2493
      %v2591 = vpack.c.bf16 %v2496, %v2495
      %v2592 = vpack.c.bf16 %v2498, %v2497
      %v2593 = vpack.c.bf16 %v2500, %v2499
      %v2594 = vpack.c.bf16 %v2502, %v2501
      %v2595 = vpack.c.bf16 %v2504, %v2503
      %v2596 = vpack.c.bf16 %v2506, %v2505
      %v2597 = vpack.c.bf16 %v2508, %v2507
      %v2598 = vpack.c.bf16 %v2510, %v2509
      %v2599 = vpack.c.bf16 %v2512, %v2511
      %v2600 = vpack.c.bf16 %v2514, %v2513
      %v2601 = vpack.c.bf16 %v2516, %v2515
      %v2602 = vpack.c.bf16 %v2518, %v2517
      %v2667 = vunpack.c.l.b16 %v2519
      %v2668 = vunpack.c.h.b16 %v2519
      %v2669 = vunpack.c.l.b16 %v2520
      %v2670 = vunpack.c.l.b16 %v2521
      %v2671 = vunpack.c.h.b16 %v2521
      %v2672 = vunpack.c.l.b16 %v2522
      %v2673 = vunpack.c.l.b16 %v2523
      %v2674 = vunpack.c.h.b16 %v2523
      %v2675 = vunpack.c.l.b16 %v2524
      %v2676 = vunpack.c.l.b16 %v2525
      %v2677 = vunpack.c.h.b16 %v2525
      %v2678 = vunpack.c.l.b16 %v2526
      %v2679 = vunpack.c.l.b16 %v2527
      %v2680 = vunpack.c.h.b16 %v2527
      %v2681 = vunpack.c.l.b16 %v2528
      %v2682 = vunpack.c.l.b16 %v2529
      %v2683 = vunpack.c.h.b16 %v2529
      %v2684 = vunpack.c.l.b16 %v2530
      %v2685 = vunpack.c.l.b16 %v2531
      %v2686 = vunpack.c.h.b16 %v2531
      %v2687 = vunpack.c.l.b16 %v2532
      %v2688 = vunpack.c.l.b16 %v2533
      %v2689 = vunpack.c.h.b16 %v2533
      %v2690 = vunpack.c.l.b16 %v2534
      %v2691 = vunpack.c.l.b16 %v2535
      %v2692 = vunpack.c.h.b16 %v2535
      %v2693 = vunpack.c.l.b16 %v2536
      %v2694 = vunpack.c.l.b16 %v2537
      %v2695 = vunpack.c.h.b16 %v2537
      %v2696 = vunpack.c.l.b16 %v2538
      %v2697 = vunpack.c.l.b16 %v2539
      %v2698 = vunpack.c.h.b16 %v2539
      %v2699 = vunpack.c.l.b16 %v2540
      %v2700 = vunpack.c.l.b16 %v2541
      %v2701 = vunpack.c.h.b16 %v2541
      %v2702 = vunpack.c.l.b16 %v2542
      %v2703 = vunpack.c.l.b16 %v2543
      %v2704 = vunpack.c.h.b16 %v2543
      %v2705 = vunpack.c.l.b16 %v2544
      %v2706 = vunpack.c.l.b16 %v2545
      %v2707 = vunpack.c.h.b16 %v2545
      %v2708 = vunpack.c.l.b16 %v2546
      %v2709 = vunpack.c.l.b16 %v2547
      %v2710 = vunpack.c.h.b16 %v2547
      %v2711 = vunpack.c.l.b16 %v2548
      %v2712 = vunpack.c.l.b16 %v2549
      %v2713 = vunpack.c.h.b16 %v2549
      %v2714 = vunpack.c.l.b16 %v2550
      %v2715 = vunpack.c.l.b16 %v2551
      %v2716 = vunpack.c.h.b16 %v2551
      %v2717 = vunpack.c.l.b16 %v2552
      %v2718 = vunpack.c.l.b16 %v2553
      %v2719 = vunpack.c.h.b16 %v2553
      %v2720 = vunpack.c.l.b16 %v2554
      %v2721 = vunpack.c.l.b16 %v2555
      %v2722 = vunpack.c.h.b16 %v2555
      %v2723 = vunpack.c.l.b16 %v2556
      %v2724 = vunpack.c.l.b16 %v2557
      %v2725 = vunpack.c.h.b16 %v2557
      %v2726 = vunpack.c.l.b16 %v2558
      %v2727 = vunpack.c.l.b16 %v2559
      %v2728 = vunpack.c.h.b16 %v2559
      %v2729 = vunpack.c.l.b16 %v2560
      %v2730 = vunpack.c.l.b16 %v2561
      %v2731 = vunpack.c.h.b16 %v2561
      %v2732 = vunpack.c.l.b16 %v2562
      %v2733 = vunpack.c.l.b16 %v2563
      %v2734 = vunpack.c.h.b16 %v2563
      %v2735 = vunpack.c.l.b16 %v2564
      %v2736 = vunpack.c.l.b16 %v2565
      %v2737 = vunpack.c.h.b16 %v2565
      %v2738 = vunpack.c.l.b16 %v2566
      %v2739 = vunpack.c.l.b16 %v2567
      %v2740 = vunpack.c.h.b16 %v2567
      %v2741 = vunpack.c.l.b16 %v2568
      %v2742 = vunpack.c.l.b16 %v2569
      %v2743 = vunpack.c.h.b16 %v2569
      %v2744 = vunpack.c.l.b16 %v2570
      %v2745 = vunpack.c.l.b16 %v2571
      %v2746 = vunpack.c.h.b16 %v2571
      %v2747 = vunpack.c.l.b16 %v2572
      %v2748 = vunpack.c.l.b16 %v2573
      %v2749 = vunpack.c.h.b16 %v2573
      %v2750 = vunpack.c.l.b16 %v2574
      %v2751 = vunpack.c.l.b16 %v2575
      %v2752 = vunpack.c.h.b16 %v2575
      %v2753 = vunpack.c.l.b16 %v2576
      %v2754 = vunpack.c.l.b16 %v2577
      %v2755 = vunpack.c.h.b16 %v2577
      %v2756 = vunpack.c.l.b16 %v2578
      %v2757 = vunpack.c.l.b16 %v2579
      %v2758 = vunpack.c.h.b16 %v2579
      %v2759 = vunpack.c.l.b16 %v2580
      %v2760 = vunpack.c.l.b16 %v2581
      %v2761 = vunpack.c.h.b16 %v2581
      %v2762 = vunpack.c.l.b16 %v2582
      %v2763 = vpack.c.b16 %v2670, %v2667
      %v2764 = vpack.c.b16 %v2671, %v2668
      %v2765 = vpack.c.b16 %v2672, %v2669
      %v2766 = vpack.c.b16 %v2676, %v2673
      %v2767 = vpack.c.b16 %v2677, %v2674
      %v2768 = vpack.c.b16 %v2678, %v2675
      %v2769 = vpack.c.b16 %v2682, %v2679
      %v2770 = vpack.c.b16 %v2683, %v2680
      %v2771 = vpack.c.b16 %v2684, %v2681
      %v2772 = vpack.c.b16 %v2688, %v2685
      %v2773 = vpack.c.b16 %v2689, %v2686
      %v2774 = vpack.c.b16 %v2690, %v2687
      %v2775 = vpack.c.b16 %v2694, %v2691
      %v2776 = vpack.c.b16 %v2695, %v2692
      %v2777 = vpack.c.b16 %v2696, %v2693
      %v2778 = vpack.c.b16 %v2700, %v2697
      %v2779 = vpack.c.b16 %v2701, %v2698
      %v2780 = vpack.c.b16 %v2702, %v2699
      %v2781 = vpack.c.b16 %v2706, %v2703
      %v2782 = vpack.c.b16 %v2707, %v2704
      %v2783 = vpack.c.b16 %v2708, %v2705
      %v2784 = vpack.c.b16 %v2712, %v2709
      %v2785 = vpack.c.b16 %v2713, %v2710
      %v2786 = vpack.c.b16 %v2714, %v2711
      %v2787 = vpack.c.b16 %v2718, %v2715
      %v2788 = vpack.c.b16 %v2719, %v2716
      %v2789 = vpack.c.b16 %v2720, %v2717
      %v2790 = vpack.c.b16 %v2724, %v2721
      %v2791 = vpack.c.b16 %v2725, %v2722
      %v2792 = vpack.c.b16 %v2726, %v2723
      %v2793 = vpack.c.b16 %v2730, %v2727
      %v2794 = vpack.c.b16 %v2731, %v2728
      %v2795 = vpack.c.b16 %v2732, %v2729
      %v2796 = vpack.c.b16 %v2736, %v2733
      %v2797 = vpack.c.b16 %v2737, %v2734
      %v2798 = vpack.c.b16 %v2738, %v2735
      %v2799 = vpack.c.b16 %v2742, %v2739
      %v2800 = vpack.c.b16 %v2743, %v2740
      %v2801 = vpack.c.b16 %v2744, %v2741
      %v2802 = vpack.c.b16 %v2748, %v2745
      %v2803 = vpack.c.b16 %v2749, %v2746
      %v2804 = vpack.c.b16 %v2750, %v2747
      %v2805 = vpack.c.b16 %v2754, %v2751
      %v2806 = vpack.c.b16 %v2755, %v2752
      %v2807 = vpack.c.b16 %v2756, %v2753
      %v2808 = vpack.c.b16 %v2760, %v2757
      %v2809 = vpack.c.b16 %v2761, %v2758
      %v2810 = vpack.c.b16 %v2762, %v2759
      %vm2843 = vcmask 523264
      %v2845 = vsel %vm2843, %v2765, 0
      %v2848 = vsel %vm2843, %v2768, 0
      %v2851 = vsel %vm2843, %v2771, 0
      %v2854 = vsel %vm2843, %v2774, 0
      %v2857 = vsel %vm2843, %v2777, 0
      %v2860 = vsel %vm2843, %v2780, 0
      %v2863 = vsel %vm2843, %v2783, 0
      %v2866 = vsel %vm2843, %v2786, 0
      %v2869 = vsel %vm2843, %v2789, 0
      %v2872 = vsel %vm2843, %v2792, 0
      %v2875 = vsel %vm2843, %v2795, 0
      %v2878 = vsel %vm2843, %v2798, 0
      %v2881 = vsel %vm2843, %v2801, 0
      %v2884 = vsel %vm2843, %v2804, 0
      %v2887 = vsel %vm2843, %v2807, 0
      %v2890 = vsel %vm2843, %v2810, 0
      %2892 = vmatprep.subr.bf16.mxu0 0
      %2893 = vmatpush1.bf16.msra.mxu0 %v2583
      %2894 = vmatprep.subr.bf16.mxu0 0
      %2895 = vmatpush1.bf16.msra.mxu0 %v2584
      %2896 = vmatprep.subr.bf16.mxu0 0
      %2897 = vmatpush1.bf16.msra.mxu0 %v2585
      %2898 = vmatprep.subr.bf16.mxu0 0
      %2899 = vmatpush1.bf16.msra.mxu0 %v2586
      %2900 = vmatprep.subr.bf16.mxu0 0
      %2901 = vmatpush1.bf16.msra.mxu0 %v2587
      %2902 = vmatprep.subr.bf16.mxu0 0
      %2903 = vmatpush1.bf16.msra.mxu0 %v2588
      %2904 = vmatprep.subr.bf16.mxu0 0
      %2905 = vmatpush1.bf16.msra.mxu0 %v2589
      %2906 = vmatprep.subr.bf16.mxu0 0
      %2907 = vmatpush1.bf16.msra.mxu0 %v2590
      %2908 = vmatprep.subr.bf16.mxu0 0
      %2909 = vmatpush1.bf16.msra.mxu0 %v2591
      %2910 = vmatprep.subr.bf16.mxu0 0
      %2911 = vmatpush1.bf16.msra.mxu0 %v2592
      %2912 = vmatprep.subr.bf16.mxu0 0
      %2913 = vmatpush1.bf16.msra.mxu0 %v2593
      %2914 = vmatprep.subr.bf16.mxu0 0
      %2915 = vmatpush1.bf16.msra.mxu0 %v2594
      %2916 = vmatprep.subr.bf16.mxu0 0
      %2917 = vmatpush1.bf16.msra.mxu0 %v2595
      %2918 = vmatprep.subr.bf16.mxu0 0
      %2919 = vmatpush1.bf16.msra.mxu0 %v2596
      %2920 = vmatprep.subr.bf16.mxu0 0
      %2921 = vmatpush1.bf16.msra.mxu0 %v2597
      %2922 = vmatprep.subr.bf16.mxu0 0
      %2923 = vmatpush1.bf16.msra.mxu0 %v2598
      %2924 = vmatprep.mubr.bf16.mxu0 %v2764
      %2925 = vmatmul.mubr.bf16.gmra.mrb[0].mxu0 %v2763
      %v2926 = vpop.f32.mrb[0].mxu0
      %v2927 = vadd.f32 0.0, %v2926
      %v2928 = vpop.f32.mrb[0].mxu0
      %v2929 = vpop.f32.mrb[0].mxu0
      %v2930 = vadd.f32 0.0, %v2929
      %v2931 = vpop.f32.mrb[0].mxu0
      %2932 = vmatprep.mubr.bf16.mxu0 %v2767
      %2933 = vmatmul.mubr.bf16.gmra.mrb[0].mxu0 %v2766
      %v2934 = vpop.f32.mrb[0].mxu0
      %v2935 = vadd.f32 0.0, %v2934
      %v2936 = vpop.f32.mrb[0].mxu0
      %v2937 = vpop.f32.mrb[0].mxu0
      %v2938 = vadd.f32 0.0, %v2937
      %v2939 = vpop.f32.mrb[0].mxu0
      %2940 = vmatprep.mubr.bf16.mxu0 %v2770
      %2941 = vmatmul.mubr.bf16.gmra.mrb[0].mxu0 %v2769
      %v2942 = vpop.f32.mrb[0].mxu0
      %v2943 = vadd.f32 0.0, %v2942
      %v2944 = vpop.f32.mrb[0].mxu0
      %v2945 = vpop.f32.mrb[0].mxu0
      %v2946 = vadd.f32 0.0, %v2945
      %v2947 = vpop.f32.mrb[0].mxu0
      %2948 = vmatprep.mubr.bf16.mxu0 %v2773
      %2949 = vmatmul.mubr.bf16.gmra.mrb[0].mxu0 %v2772
      %v2950 = vpop.f32.mrb[0].mxu0
      %v2951 = vadd.f32 0.0, %v2950
      %v2952 = vpop.f32.mrb[0].mxu0
      %v2953 = vpop.f32.mrb[0].mxu0
      %v2954 = vadd.f32 0.0, %v2953
      %v2955 = vpop.f32.mrb[0].mxu0
      %2956 = vmatprep.mubr.bf16.mxu0 %v2776
      %2957 = vmatmul.mubr.bf16.gmra.mrb[0].mxu0 %v2775
      %v2958 = vpop.f32.mrb[0].mxu0
      %v2959 = vadd.f32 0.0, %v2958
      %v2960 = vpop.f32.mrb[0].mxu0
      %v2961 = vpop.f32.mrb[0].mxu0
      %v2962 = vadd.f32 0.0, %v2961
      %v2963 = vpop.f32.mrb[0].mxu0
      %2964 = vmatprep.mubr.bf16.mxu0 %v2779
      %2965 = vmatmul.mubr.bf16.gmra.mrb[0].mxu0 %v2778
      %v2966 = vpop.f32.mrb[0].mxu0
      %v2967 = vadd.f32 0.0, %v2966
      %v2968 = vpop.f32.mrb[0].mxu0
      %v2969 = vpop.f32.mrb[0].mxu0
      %v2970 = vadd.f32 0.0, %v2969
      %v2971 = vpop.f32.mrb[0].mxu0
      %2972 = vmatprep.mubr.bf16.mxu0 %v2782
      %2973 = vmatmul.mubr.bf16.gmra.mrb[0].mxu0 %v2781
      %v2974 = vpop.f32.mrb[0].mxu0
      %v2975 = vadd.f32 0.0, %v2974
      %v2976 = vpop.f32.mrb[0].mxu0
      %v2977 = vpop.f32.mrb[0].mxu0
      %v2978 = vadd.f32 0.0, %v2977
      %v2979 = vpop.f32.mrb[0].mxu0
      %2980 = vmatprep.mubr.bf16.mxu0 %v2785
      %2981 = vmatmul.mubr.bf16.gmra.mrb[0].mxu0 %v2784
      %v2982 = vpop.f32.mrb[0].mxu0
      %v2983 = vadd.f32 0.0, %v2982
      %v2984 = vpop.f32.mrb[0].mxu0
      %v2985 = vpop.f32.mrb[0].mxu0
      %v2986 = vadd.f32 0.0, %v2985
      %v2987 = vpop.f32.mrb[0].mxu0
      %2988 = vmatprep.mubr.bf16.mxu0 %v2788
      %2989 = vmatmul.mubr.bf16.gmra.mrb[0].mxu0 %v2787
      %v2990 = vpop.f32.mrb[0].mxu0
      %v2991 = vadd.f32 0.0, %v2990
      %v2992 = vpop.f32.mrb[0].mxu0
      %v2993 = vpop.f32.mrb[0].mxu0
      %v2994 = vadd.f32 0.0, %v2993
      %v2995 = vpop.f32.mrb[0].mxu0
      %2996 = vmatprep.mubr.bf16.mxu0 %v2791
      %2997 = vmatmul.mubr.bf16.gmra.mrb[0].mxu0 %v2790
      %v2998 = vpop.f32.mrb[0].mxu0
      %v2999 = vadd.f32 0.0, %v2998
      %v3000 = vpop.f32.mrb[0].mxu0
      %v3001 = vpop.f32.mrb[0].mxu0
      %v3002 = vadd.f32 0.0, %v3001
      %v3003 = vpop.f32.mrb[0].mxu0
      %3004 = vmatprep.mubr.bf16.mxu0 %v2794
      %3005 = vmatmul.mubr.bf16.gmra.mrb[0].mxu0 %v2793
      %v3006 = vpop.f32.mrb[0].mxu0
      %v3007 = vadd.f32 0.0, %v3006
      %v3008 = vpop.f32.mrb[0].mxu0
      %v3009 = vpop.f32.mrb[0].mxu0
      %v3010 = vadd.f32 0.0, %v3009
      %v3011 = vpop.f32.mrb[0].mxu0
      %3012 = vmatprep.mubr.bf16.mxu0 %v2797
      %3013 = vmatmul.mubr.bf16.gmra.mrb[0].mxu0 %v2796
      %v3014 = vpop.f32.mrb[0].mxu0
      %v3015 = vadd.f32 0.0, %v3014
      %v3016 = vpop.f32.mrb[0].mxu0
      %v3017 = vpop.f32.mrb[0].mxu0
      %v3018 = vadd.f32 0.0, %v3017
      %v3019 = vpop.f32.mrb[0].mxu0
      %3020 = vmatprep.mubr.bf16.mxu0 %v2800
      %3021 = vmatmul.mubr.bf16.gmra.mrb[0].mxu0 %v2799
      %v3022 = vpop.f32.mrb[0].mxu0
      %v3023 = vadd.f32 0.0, %v3022
      %v3024 = vpop.f32.mrb[0].mxu0
      %v3025 = vpop.f32.mrb[0].mxu0
      %v3026 = vadd.f32 0.0, %v3025
      %v3027 = vpop.f32.mrb[0].mxu0
      %3028 = vmatprep.mubr.bf16.mxu0 %v2803
      %3029 = vmatmul.mubr.bf16.gmra.mrb[0].mxu0 %v2802
      %v3030 = vpop.f32.mrb[0].mxu0
      %v3031 = vadd.f32 0.0, %v3030
      %v3032 = vpop.f32.mrb[0].mxu0
      %v3033 = vpop.f32.mrb[0].mxu0
      %v3034 = vadd.f32 0.0, %v3033
      %v3035 = vpop.f32.mrb[0].mxu0
      %3036 = vmatprep.mubr.bf16.mxu0 %v2806
      %3037 = vmatmul.mubr.bf16.gmra.mrb[0].mxu0 %v2805
      %v3038 = vpop.f32.mrb[0].mxu0
      %v3039 = vadd.f32 0.0, %v3038
      %v3040 = vpop.f32.mrb[0].mxu0
      %v3041 = vpop.f32.mrb[0].mxu0
      %v3042 = vadd.f32 0.0, %v3041
      %v3043 = vpop.f32.mrb[0].mxu0
      %3044 = vmatprep.mubr.bf16.mxu0 %v2809
      %3045 = vmatmul.mubr.bf16.gmra.mrb[0].mxu0 %v2808
      %v3046 = vpop.f32.mrb[0].mxu0
      %v3047 = vadd.f32 0.0, %v3046
      %v3048 = vpop.f32.mrb[0].mxu0
      %v3049 = vpop.f32.mrb[0].mxu0
      %v3050 = vadd.f32 0.0, %v3049
      %v3051 = vpop.f32.mrb[0].mxu0
      %3052 = vdwg.mxu0
      %3053 = vmatprep.subr.bf16.mxu0 0
      %3054 = vmatpush1.bf16.msra.mxu0 %v2599
      %3055 = vmatprep.subr.bf16.mxu0 0
      %3056 = vmatpush1.bf16.msra.mxu0 %v2600
      %3057 = vmatprep.subr.bf16.mxu0 0
      %3058 = vmatpush1.bf16.msra.mxu0 %v2601
      %3059 = vmatprep.subr.bf16.mxu0 0
      %3060 = vmatpush1.bf16.msra.mxu0 %v2602
      %3061 = vmatprep.subr.bf16.mxu0 0
      %3062 = vmatpush1.bf16.msra.mxu0 0
      %3063 = vmatprep.subr.bf16.mxu0 0
      %3064 = vmatpush1.bf16.msra.mxu0 0
      %3065 = vmatprep.subr.bf16.mxu0 0
      %3066 = vmatpush1.bf16.msra.mxu0 0
      %3067 = vmatprep.subr.bf16.mxu0 0
      %3068 = vmatpush1.bf16.msra.mxu0 0
      %3069 = vmatprep.subr.bf16.mxu0 0
      %3070 = vmatpush1.bf16.msra.mxu0 0
      %3071 = vmatprep.subr.bf16.mxu0 0
      %3072 = vmatpush1.bf16.msra.mxu0 0
      %3073 = vmatprep.subr.bf16.mxu0 0
      %3074 = vmatpush1.bf16.msra.mxu0 0
      %3075 = vmatprep.subr.bf16.mxu0 0
      %3076 = vmatpush1.bf16.msra.mxu0 0
      %3077 = vmatprep.subr.bf16.mxu0 0
      %3078 = vmatpush1.bf16.msra.mxu0 0
      %3079 = vmatprep.subr.bf16.mxu0 0
      %3080 = vmatpush1.bf16.msra.mxu0 0
      %3081 = vmatprep.subr.bf16.mxu0 0
      %3082 = vmatpush1.bf16.msra.mxu0 0
      %3083 = vmatprep.subr.bf16.mxu0 0
      %3084 = vmatpush1.bf16.msra.mxu0 0
      %3085 = vmatprep.mubr.bf16.mxu0 0
      %3086 = vmatmul.mubr.bf16.gmra.mrb[0].mxu0 %v2845
      %v3087 = vpop.f32.mrb[0].mxu0
      %v3088 = vadd.f32 %v2927, %v3087
      %v3089 = vpop.f32.mrb[0].mxu0
      %v3090 = vpop.f32.mrb[0].mxu0
      %v3091 = vadd.f32 %v2930, %v3090
      %v3092 = vpop.f32.mrb[0].mxu0
      %3093 = vmatprep.mubr.bf16.mxu0 0
      %3094 = vmatmul.mubr.bf16.gmra.mrb[0].mxu0 %v2848
      %v3095 = vpop.f32.mrb[0].mxu0
      %v3096 = vadd.f32 %v2935, %v3095
      %v3097 = vpop.f32.mrb[0].mxu0
      %v3098 = vpop.f32.mrb[0].mxu0
      %v3099 = vadd.f32 %v2938, %v3098
      %v3100 = vpop.f32.mrb[0].mxu0
      %3101 = vmatprep.mubr.bf16.mxu0 0
      %3102 = vmatmul.mubr.bf16.gmra.mrb[0].mxu0 %v2851
      %v3103 = vpop.f32.mrb[0].mxu0
      %v3104 = vadd.f32 %v2943, %v3103
      %v3105 = vpop.f32.mrb[0].mxu0
      %v3106 = vpop.f32.mrb[0].mxu0
      %v3107 = vadd.f32 %v2946, %v3106
      %v3108 = vpop.f32.mrb[0].mxu0
      %3109 = vmatprep.mubr.bf16.mxu0 0
      %3110 = vmatmul.mubr.bf16.gmra.mrb[0].mxu0 %v2854
      %v3111 = vpop.f32.mrb[0].mxu0
      %v3112 = vadd.f32 %v2951, %v3111
      %v3113 = vpop.f32.mrb[0].mxu0
      %v3114 = vpop.f32.mrb[0].mxu0
      %v3115 = vadd.f32 %v2954, %v3114
      %v3116 = vpop.f32.mrb[0].mxu0
      %3117 = vmatprep.mubr.bf16.mxu0 0
      %3118 = vmatmul.mubr.bf16.gmra.mrb[0].mxu0 %v2857
      %v3119 = vpop.f32.mrb[0].mxu0
      %v3120 = vadd.f32 %v2959, %v3119
      %v3121 = vpop.f32.mrb[0].mxu0
      %v3122 = vpop.f32.mrb[0].mxu0
      %v3123 = vadd.f32 %v2962, %v3122
      %v3124 = vpop.f32.mrb[0].mxu0
      %3125 = vmatprep.mubr.bf16.mxu0 0
      %3126 = vmatmul.mubr.bf16.gmra.mrb[0].mxu0 %v2860
      %v3127 = vpop.f32.mrb[0].mxu0
      %v3128 = vadd.f32 %v2967, %v3127
      %v3129 = vpop.f32.mrb[0].mxu0
      %v3130 = vpop.f32.mrb[0].mxu0
      %v3131 = vadd.f32 %v2970, %v3130
      %v3132 = vpop.f32.mrb[0].mxu0
      %3133 = vmatprep.mubr.bf16.mxu0 0
      %3134 = vmatmul.mubr.bf16.gmra.mrb[0].mxu0 %v2863
      %v3135 = vpop.f32.mrb[0].mxu0
      %v3136 = vadd.f32 %v2975, %v3135
      %v3137 = vpop.f32.mrb[0].mxu0
      %v3138 = vpop.f32.mrb[0].mxu0
      %v3139 = vadd.f32 %v2978, %v3138
      %v3140 = vpop.f32.mrb[0].mxu0
      %3141 = vmatprep.mubr.bf16.mxu0 0
      %3142 = vmatmul.mubr.bf16.gmra.mrb[0].mxu0 %v2866
      %v3143 = vpop.f32.mrb[0].mxu0
      %v3144 = vadd.f32 %v2983, %v3143
      %v3145 = vpop.f32.mrb[0].mxu0
      %v3146 = vpop.f32.mrb[0].mxu0
      %v3147 = vadd.f32 %v2986, %v3146
      %v3148 = vpop.f32.mrb[0].mxu0
      %3149 = vmatprep.mubr.bf16.mxu0 0
      %3150 = vmatmul.mubr.bf16.gmra.mrb[0].mxu0 %v2869
      %v3151 = vpop.f32.mrb[0].mxu0
      %v3152 = vadd.f32 %v2991, %v3151
      %v3153 = vpop.f32.mrb[0].mxu0
      %v3154 = vpop.f32.mrb[0].mxu0
      %v3155 = vadd.f32 %v2994, %v3154
      %v3156 = vpop.f32.mrb[0].mxu0
      %3157 = vmatprep.mubr.bf16.mxu0 0
      %3158 = vmatmul.mubr.bf16.gmra.mrb[0].mxu0 %v2872
      %v3159 = vpop.f32.mrb[0].mxu0
      %v3160 = vadd.f32 %v2999, %v3159
      %v3161 = vpop.f32.mrb[0].mxu0
      %v3162 = vpop.f32.mrb[0].mxu0
      %v3163 = vadd.f32 %v3002, %v3162
      %v3164 = vpop.f32.mrb[0].mxu0
      %3165 = vmatprep.mubr.bf16.mxu0 0
      %3166 = vmatmul.mubr.bf16.gmra.mrb[0].mxu0 %v2875
      %v3167 = vpop.f32.mrb[0].mxu0
      %v3168 = vadd.f32 %v3007, %v3167
      %v3169 = vpop.f32.mrb[0].mxu0
      %v3170 = vpop.f32.mrb[0].mxu0
      %v3171 = vadd.f32 %v3010, %v3170
      %v3172 = vpop.f32.mrb[0].mxu0
      %3173 = vmatprep.mubr.bf16.mxu0 0
      %3174 = vmatmul.mubr.bf16.gmra.mrb[0].mxu0 %v2878
      %v3175 = vpop.f32.mrb[0].mxu0
      %v3176 = vadd.f32 %v3015, %v3175
      %v3177 = vpop.f32.mrb[0].mxu0
      %v3178 = vpop.f32.mrb[0].mxu0
      %v3179 = vadd.f32 %v3018, %v3178
      %v3180 = vpop.f32.mrb[0].mxu0
      %3181 = vmatprep.mubr.bf16.mxu0 0
      %3182 = vmatmul.mubr.bf16.gmra.mrb[0].mxu0 %v2881
      %v3183 = vpop.f32.mrb[0].mxu0
      %v3184 = vadd.f32 %v3023, %v3183
      %v3185 = vpop.f32.mrb[0].mxu0
      %v3186 = vpop.f32.mrb[0].mxu0
      %v3187 = vadd.f32 %v3026, %v3186
      %v3188 = vpop.f32.mrb[0].mxu0
      %3189 = vmatprep.mubr.bf16.mxu0 0
      %3190 = vmatmul.mubr.bf16.gmra.mrb[0].mxu0 %v2884
      %v3191 = vpop.f32.mrb[0].mxu0
      %v3192 = vadd.f32 %v3031, %v3191
      %v3193 = vpop.f32.mrb[0].mxu0
      %v3194 = vpop.f32.mrb[0].mxu0
      %v3195 = vadd.f32 %v3034, %v3194
      %v3196 = vpop.f32.mrb[0].mxu0
      %3197 = vmatprep.mubr.bf16.mxu0 0
      %3198 = vmatmul.mubr.bf16.gmra.mrb[0].mxu0 %v2887
      %v3199 = vpop.f32.mrb[0].mxu0
      %v3200 = vadd.f32 %v3039, %v3199
      %v3201 = vpop.f32.mrb[0].mxu0
      %v3202 = vpop.f32.mrb[0].mxu0
      %v3203 = vadd.f32 %v3042, %v3202
      %v3204 = vpop.f32.mrb[0].mxu0
      %3205 = vmatprep.mubr.bf16.mxu0 0
      %3206 = vmatmul.mubr.bf16.gmra.mrb[0].mxu0 %v2890
      %v3207 = vpop.f32.mrb[0].mxu0
      %v3208 = vadd.f32 %v3047, %v3207
      %v3209 = vpop.f32.mrb[0].mxu0
      %v3210 = vpop.f32.mrb[0].mxu0
      %v3211 = vadd.f32 %v3050, %v3210
      %v3212 = vpop.f32.mrb[0].mxu0
      %3213 = vdwg.mxu0
      %v3214 = vld [vmem:[%s11] sm:$0x1]
      %v3215 = vlaneseq
      %v3216 = vshrl.u32 %v3215, 7
      %v3217 = vsub.s32 0, %v3216
      %v3218 = vrot.slane %v3214, %v3217
      %v3219 = vmul.f32 %v3218, 0.0
      %v3220 = vmul.f32 %v3088, %v3218
      %v3221 = vmul.f32 %v3091, %v3218
      %v3222 = vmul.f32 %v3096, %v3218
      %v3223 = vmul.f32 %v3099, %v3218
      %v3224 = vmul.f32 %v3104, %v3218
      %v3225 = vmul.f32 %v3107, %v3218
      %v3226 = vmul.f32 %v3112, %v3218
      %v3227 = vmul.f32 %v3115, %v3218
      %v3228 = vmul.f32 %v3120, %v3218
      %v3229 = vmul.f32 %v3123, %v3218
      %v3230 = vmul.f32 %v3128, %v3218
      %v3231 = vmul.f32 %v3131, %v3218
      %v3232 = vmul.f32 %v3136, %v3218
      %v3233 = vmul.f32 %v3139, %v3218
      %v3234 = vmul.f32 %v3144, %v3218
      %v3235 = vmul.f32 %v3147, %v3218
      %v3236 = vmul.f32 %v3152, %v3218
      %v3237 = vmul.f32 %v3155, %v3218
      %v3238 = vmul.f32 %v3160, %v3218
      %v3239 = vmul.f32 %v3163, %v3218
      %v3240 = vmul.f32 %v3168, %v3218
      %v3241 = vmul.f32 %v3171, %v3218
      %v3242 = vmul.f32 %v3176, %v3218
      %v3243 = vmul.f32 %v3179, %v3218
      %v3244 = vmul.f32 %v3184, %v3218
      %v3245 = vmul.f32 %v3187, %v3218
      %v3246 = vmul.f32 %v3192, %v3218
      %v3247 = vmul.f32 %v3195, %v3218
      %v3248 = vmul.f32 %v3200, %v3218
      %v3249 = vmul.f32 %v3203, %v3218
      %v3250 = vadd.f32 %v3219, 0.0
      %v3251 = vadd.f32 %v3220, 0.0
      %v3252 = vadd.f32 %v3221, 0.0
      %v3253 = vadd.f32 %v3222, 0.0
      %v3254 = vadd.f32 %v3223, 0.0
      %v3255 = vadd.f32 %v3224, 0.0
      %v3256 = vadd.f32 %v3225, 0.0
      %v3257 = vadd.f32 %v3226, 0.0
      %v3258 = vadd.f32 %v3227, 0.0
      %v3259 = vadd.f32 %v3228, 0.0
      %v3260 = vadd.f32 %v3229, 0.0
      %v3261 = vadd.f32 %v3230, 0.0
      %v3262 = vadd.f32 %v3231, 0.0
      %v3263 = vadd.f32 %v3232, 0.0
      %v3264 = vadd.f32 %v3233, 0.0
      %v3265 = vadd.f32 %v3234, 0.0
      %v3266 = vadd.f32 %v3235, 0.0
      %v3267 = vadd.f32 %v3236, 0.0
      %v3268 = vadd.f32 %v3237, 0.0
      %v3269 = vadd.f32 %v3238, 0.0
      %v3270 = vadd.f32 %v3239, 0.0
      %v3271 = vadd.f32 %v3240, 0.0
      %v3272 = vadd.f32 %v3241, 0.0
      %v3273 = vadd.f32 %v3242, 0.0
      %v3274 = vadd.f32 %v3243, 0.0
      %v3275 = vadd.f32 %v3244, 0.0
      %v3276 = vadd.f32 %v3245, 0.0
      %v3277 = vadd.f32 %v3246, 0.0
      %v3278 = vadd.f32 %v3247, 0.0
      %v3279 = vadd.f32 %v3248, 0.0
      %v3280 = vadd.f32 %v3249, 0.0
      %v3281 = vld [vmem:[%s11 + $0x1] sm:$0x1]
      %v3282 = vlaneseq
      %v3283 = vshrl.u32 %v3282, 7
      %v3284 = vsub.s32 0, %v3283
      %v3285 = vrot.slane %v3281, %v3284
      %v3286 = vmul.f32 %v3285, 0.0
      %v3287 = vmul.f32 %v3088, %v3285
      %v3288 = vmul.f32 %v3091, %v3285
      %v3289 = vmul.f32 %v3096, %v3285
      %v3290 = vmul.f32 %v3099, %v3285
      %v3291 = vmul.f32 %v3104, %v3285
      %v3292 = vmul.f32 %v3107, %v3285
      %v3293 = vmul.f32 %v3112, %v3285
      %v3294 = vmul.f32 %v3115, %v3285
      %v3295 = vmul.f32 %v3120, %v3285
      %v3296 = vmul.f32 %v3123, %v3285
      %v3297 = vmul.f32 %v3128, %v3285
      %v3298 = vmul.f32 %v3131, %v3285
      %v3299 = vmul.f32 %v3136, %v3285
      %v3300 = vmul.f32 %v3139, %v3285
      %v3301 = vmul.f32 %v3144, %v3285
      %v3302 = vmul.f32 %v3147, %v3285
      %v3303 = vmul.f32 %v3152, %v3285
      %v3304 = vmul.f32 %v3155, %v3285
      %v3305 = vmul.f32 %v3160, %v3285
      %v3306 = vmul.f32 %v3163, %v3285
      %v3307 = vmul.f32 %v3168, %v3285
      %v3308 = vmul.f32 %v3171, %v3285
      %v3309 = vmul.f32 %v3176, %v3285
      %v3310 = vmul.f32 %v3179, %v3285
      %v3311 = vmul.f32 %v3184, %v3285
      %v3312 = vmul.f32 %v3187, %v3285
      %v3313 = vmul.f32 %v3192, %v3285
      %v3314 = vmul.f32 %v3195, %v3285
      %v3315 = vmul.f32 %v3200, %v3285
      %v3316 = vmul.f32 %v3203, %v3285
      %vm3348 = vcmask 1046528
      %v3349 = vrot.slane %v3286, 1
      %v3350 = vsel %vm3348, %v3349, %v3349
      %v3351 = vrot.slane %v3287, 1
      %v3352 = vrot.slane %v3288, 1
      %v3353 = vsel %vm3348, %v3351, %v3352
      %v3354 = vrot.slane %v3289, 1
      %v3355 = vrot.slane %v3290, 1
      %v3356 = vsel %vm3348, %v3354, %v3355
      %v3357 = vrot.slane %v3291, 1
      %v3358 = vrot.slane %v3292, 1
      %v3359 = vsel %vm3348, %v3357, %v3358
      %v3360 = vrot.slane %v3293, 1
      %v3361 = vrot.slane %v3294, 1
      %v3362 = vsel %vm3348, %v3360, %v3361
      %v3363 = vrot.slane %v3295, 1
      %v3364 = vrot.slane %v3296, 1
      %v3365 = vsel %vm3348, %v3363, %v3364
      %v3366 = vrot.slane %v3297, 1
      %v3367 = vrot.slane %v3298, 1
      %v3368 = vsel %vm3348, %v3366, %v3367
      %v3369 = vrot.slane %v3299, 1
      %v3370 = vrot.slane %v3300, 1
      %v3371 = vsel %vm3348, %v3369, %v3370
      %v3372 = vrot.slane %v3301, 1
      %v3373 = vrot.slane %v3302, 1
      %v3374 = vsel %vm3348, %v3372, %v3373
      %v3375 = vrot.slane %v3303, 1
      %v3376 = vrot.slane %v3304, 1
      %v3377 = vsel %vm3348, %v3375, %v3376
      %v3378 = vrot.slane %v3305, 1
      %v3379 = vrot.slane %v3306, 1
      %v3380 = vsel %vm3348, %v3378, %v3379
      %v3381 = vrot.slane %v3307, 1
      %v3382 = vrot.slane %v3308, 1
      %v3383 = vsel %vm3348, %v3381, %v3382
      %v3384 = vrot.slane %v3309, 1
      %v3385 = vrot.slane %v3310, 1
      %v3386 = vsel %vm3348, %v3384, %v3385
      %v3387 = vrot.slane %v3311, 1
      %v3388 = vrot.slane %v3312, 1
      %v3389 = vsel %vm3348, %v3387, %v3388
      %v3390 = vrot.slane %v3313, 1
      %v3391 = vrot.slane %v3314, 1
      %v3392 = vsel %vm3348, %v3390, %v3391
      %v3393 = vrot.slane %v3315, 1
      %v3394 = vrot.slane %v3316, 1
      %v3395 = vsel %vm3348, %v3393, %v3394
      %v3443 = vadd.f32 %v3250, %v3349
      %v3444 = vadd.f32 %v3250, %v3350
      %v3445 = vadd.f32 %v3250, %v3351
      %v3446 = vadd.f32 %v3251, %v3353
      %v3447 = vadd.f32 %v3252, %v3352
      %v3448 = vadd.f32 %v3250, %v3354
      %v3449 = vadd.f32 %v3253, %v3356
      %v3450 = vadd.f32 %v3254, %v3355
      %v3451 = vadd.f32 %v3250, %v3357
      %v3452 = vadd.f32 %v3255, %v3359
      %v3453 = vadd.f32 %v3256, %v3358
      %v3454 = vadd.f32 %v3250, %v3360
      %v3455 = vadd.f32 %v3257, %v3362
      %v3456 = vadd.f32 %v3258, %v3361
      %v3457 = vadd.f32 %v3250, %v3363
      %v3458 = vadd.f32 %v3259, %v3365
      %v3459 = vadd.f32 %v3260, %v3364
      %v3460 = vadd.f32 %v3250, %v3366
      %v3461 = vadd.f32 %v3261, %v3368
      %v3462 = vadd.f32 %v3262, %v3367
      %v3463 = vadd.f32 %v3250, %v3369
      %v3464 = vadd.f32 %v3263, %v3371
      %v3465 = vadd.f32 %v3264, %v3370
      %v3466 = vadd.f32 %v3250, %v3372
      %v3467 = vadd.f32 %v3265, %v3374
      %v3468 = vadd.f32 %v3266, %v3373
      %v3469 = vadd.f32 %v3250, %v3375
      %v3470 = vadd.f32 %v3267, %v3377
      %v3471 = vadd.f32 %v3268, %v3376
      %v3472 = vadd.f32 %v3250, %v3378
      %v3473 = vadd.f32 %v3269, %v3380
      %v3474 = vadd.f32 %v3270, %v3379
      %v3475 = vadd.f32 %v3250, %v3381
      %v3476 = vadd.f32 %v3271, %v3383
      %v3477 = vadd.f32 %v3272, %v3382
      %v3478 = vadd.f32 %v3250, %v3384
      %v3479 = vadd.f32 %v3273, %v3386
      %v3480 = vadd.f32 %v3274, %v3385
      %v3481 = vadd.f32 %v3250, %v3387
      %v3482 = vadd.f32 %v3275, %v3389
      %v3483 = vadd.f32 %v3276, %v3388
      %v3484 = vadd.f32 %v3250, %v3390
      %v3485 = vadd.f32 %v3277, %v3392
      %v3486 = vadd.f32 %v3278, %v3391
      %v3487 = vadd.f32 %v3250, %v3393
      %v3488 = vadd.f32 %v3279, %v3395
      %v3489 = vadd.f32 %v3280, %v3394
      %v3490 = vld [vmem:[%s11 + $0x2] sm:$0x1]
      %v3491 = vlaneseq
      %v3492 = vshrl.u32 %v3491, 7
      %v3493 = vsub.s32 0, %v3492
      %v3494 = vrot.slane %v3490, %v3493
      %v3495 = vmul.f32 %v3494, 0.0
      %v3496 = vmul.f32 %v3088, %v3494
      %v3497 = vmul.f32 %v3091, %v3494
      %v3498 = vmul.f32 %v3096, %v3494
      %v3499 = vmul.f32 %v3099, %v3494
      %v3500 = vmul.f32 %v3104, %v3494
      %v3501 = vmul.f32 %v3107, %v3494
      %v3502 = vmul.f32 %v3112, %v3494
      %v3503 = vmul.f32 %v3115, %v3494
      %v3504 = vmul.f32 %v3120, %v3494
      %v3505 = vmul.f32 %v3123, %v3494
      %v3506 = vmul.f32 %v3128, %v3494
      %v3507 = vmul.f32 %v3131, %v3494
      %v3508 = vmul.f32 %v3136, %v3494
      %v3509 = vmul.f32 %v3139, %v3494
      %v3510 = vmul.f32 %v3144, %v3494
      %v3511 = vmul.f32 %v3147, %v3494
      %v3512 = vmul.f32 %v3152, %v3494
      %v3513 = vmul.f32 %v3155, %v3494
      %v3514 = vmul.f32 %v3160, %v3494
      %v3515 = vmul.f32 %v3163, %v3494
      %v3516 = vmul.f32 %v3168, %v3494
      %v3517 = vmul.f32 %v3171, %v3494
      %v3518 = vmul.f32 %v3176, %v3494
      %v3519 = vmul.f32 %v3179, %v3494
      %v3520 = vmul.f32 %v3184, %v3494
      %v3521 = vmul.f32 %v3187, %v3494
      %v3522 = vmul.f32 %v3192, %v3494
      %v3523 = vmul.f32 %v3195, %v3494
      %v3524 = vmul.f32 %v3200, %v3494
      %v3525 = vmul.f32 %v3203, %v3494
      %vm3557 = vcmask 1045504
      %v3558 = vrot.slane %v3495, 2
      %v3559 = vsel %vm3557, %v3558, %v3558
      %v3560 = vrot.slane %v3496, 2
      %v3561 = vrot.slane %v3497, 2
      %v3562 = vsel %vm3557, %v3560, %v3561
      %v3563 = vsel %vm3557, %v3561, %v3558
      %v3564 = vrot.slane %v3498, 2
      %v3565 = vrot.slane %v3499, 2
      %v3566 = vsel %vm3557, %v3564, %v3565
      %v3567 = vsel %vm3557, %v3565, %v3558
      %v3568 = vrot.slane %v3500, 2
      %v3569 = vrot.slane %v3501, 2
      %v3570 = vsel %vm3557, %v3568, %v3569
      %v3571 = vsel %vm3557, %v3569, %v3558
      %v3572 = vrot.slane %v3502, 2
      %v3573 = vrot.slane %v3503, 2
      %v3574 = vsel %vm3557, %v3572, %v3573
      %v3575 = vsel %vm3557, %v3573, %v3558
      %v3576 = vrot.slane %v3504, 2
      %v3577 = vrot.slane %v3505, 2
      %v3578 = vsel %vm3557, %v3576, %v3577
      %v3579 = vsel %vm3557, %v3577, %v3558
      %v3580 = vrot.slane %v3506, 2
      %v3581 = vrot.slane %v3507, 2
      %v3582 = vsel %vm3557, %v3580, %v3581
      %v3583 = vsel %vm3557, %v3581, %v3558
      %v3584 = vrot.slane %v3508, 2
      %v3585 = vrot.slane %v3509, 2
      %v3586 = vsel %vm3557, %v3584, %v3585
      %v3587 = vsel %vm3557, %v3585, %v3558
      %v3588 = vrot.slane %v3510, 2
      %v3589 = vrot.slane %v3511, 2
      %v3590 = vsel %vm3557, %v3588, %v3589
      %v3591 = vsel %vm3557, %v3589, %v3558
      %v3592 = vrot.slane %v3512, 2
      %v3593 = vrot.slane %v3513, 2
      %v3594 = vsel %vm3557, %v3592, %v3593
      %v3595 = vsel %vm3557, %v3593, %v3558
      %v3596 = vrot.slane %v3514, 2
      %v3597 = vrot.slane %v3515, 2
      %v3598 = vsel %vm3557, %v3596, %v3597
      %v3599 = vsel %vm3557, %v3597, %v3558
      %v3600 = vrot.slane %v3516, 2
      %v3601 = vrot.slane %v3517, 2
      %v3602 = vsel %vm3557, %v3600, %v3601
      %v3603 = vsel %vm3557, %v3601, %v3558
      %v3604 = vrot.slane %v3518, 2
      %v3605 = vrot.slane %v3519, 2
      %v3606 = vsel %vm3557, %v3604, %v3605
      %v3607 = vsel %vm3557, %v3605, %v3558
      %v3608 = vrot.slane %v3520, 2
      %v3609 = vrot.slane %v3521, 2
      %v3610 = vsel %vm3557, %v3608, %v3609
      %v3611 = vsel %vm3557, %v3609, %v3558
      %v3612 = vrot.slane %v3522, 2
      %v3613 = vrot.slane %v3523, 2
      %v3614 = vsel %vm3557, %v3612, %v3613
      %v3615 = vsel %vm3557, %v3613, %v3558
      %v3616 = vrot.slane %v3524, 2
      %v3617 = vrot.slane %v3525, 2
      %v3618 = vsel %vm3557, %v3616, %v3617
      %v3619 = vsel %vm3557, %v3617, %v3558
      %v3667 = vadd.f32 %v3443, %v3558
      %v3668 = vadd.f32 %v3444, %v3559
      %v3669 = vadd.f32 %v3443, %v3559
      %v3670 = vadd.f32 %v3445, %v3560
      %v3671 = vadd.f32 %v3446, %v3562
      %v3672 = vadd.f32 %v3447, %v3563
      %v3673 = vadd.f32 %v3448, %v3564
      %v3674 = vadd.f32 %v3449, %v3566
      %v3675 = vadd.f32 %v3450, %v3567
      %v3676 = vadd.f32 %v3451, %v3568
      %v3677 = vadd.f32 %v3452, %v3570
      %v3678 = vadd.f32 %v3453, %v3571
      %v3679 = vadd.f32 %v3454, %v3572
      %v3680 = vadd.f32 %v3455, %v3574
      %v3681 = vadd.f32 %v3456, %v3575
      %v3682 = vadd.f32 %v3457, %v3576
      %v3683 = vadd.f32 %v3458, %v3578
      %v3684 = vadd.f32 %v3459, %v3579
      %v3685 = vadd.f32 %v3460, %v3580
      %v3686 = vadd.f32 %v3461, %v3582
      %v3687 = vadd.f32 %v3462, %v3583
      %v3688 = vadd.f32 %v3463, %v3584
      %v3689 = vadd.f32 %v3464, %v3586
      %v3690 = vadd.f32 %v3465, %v3587
      %v3691 = vadd.f32 %v3466, %v3588
      %v3692 = vadd.f32 %v3467, %v3590
      %v3693 = vadd.f32 %v3468, %v3591
      %v3694 = vadd.f32 %v3469, %v3592
      %v3695 = vadd.f32 %v3470, %v3594
      %v3696 = vadd.f32 %v3471, %v3595
      %v3697 = vadd.f32 %v3472, %v3596
      %v3698 = vadd.f32 %v3473, %v3598
      %v3699 = vadd.f32 %v3474, %v3599
      %v3700 = vadd.f32 %v3475, %v3600
      %v3701 = vadd.f32 %v3476, %v3602
      %v3702 = vadd.f32 %v3477, %v3603
      %v3703 = vadd.f32 %v3478, %v3604
      %v3704 = vadd.f32 %v3479, %v3606
      %v3705 = vadd.f32 %v3480, %v3607
      %v3706 = vadd.f32 %v3481, %v3608
      %v3707 = vadd.f32 %v3482, %v3610
      %v3708 = vadd.f32 %v3483, %v3611
      %v3709 = vadd.f32 %v3484, %v3612
      %v3710 = vadd.f32 %v3485, %v3614
      %v3711 = vadd.f32 %v3486, %v3615
      %v3712 = vadd.f32 %v3487, %v3616
      %v3713 = vadd.f32 %v3488, %v3618
      %v3714 = vadd.f32 %v3489, %v3619
      %v3715 = vld [vmem:[%s11 + $0x3] sm:$0x1]
      %v3716 = vlaneseq
      %v3717 = vshrl.u32 %v3716, 7
      %v3718 = vsub.s32 0, %v3717
      %v3719 = vrot.slane %v3715, %v3718
      %v3720 = vmul.f32 %v3719, 0.0
      %v3721 = vmul.f32 %v3088, %v3719
      %v3722 = vmul.f32 %v3091, %v3719
      %v3723 = vmul.f32 %v3096, %v3719
      %v3724 = vmul.f32 %v3099, %v3719
      %v3725 = vmul.f32 %v3104, %v3719
      %v3726 = vmul.f32 %v3107, %v3719
      %v3727 = vmul.f32 %v3112, %v3719
      %v3728 = vmul.f32 %v3115, %v3719
      %v3729 = vmul.f32 %v3120, %v3719
      %v3730 = vmul.f32 %v3123, %v3719
      %v3731 = vmul.f32 %v3128, %v3719
      %v3732 = vmul.f32 %v3131, %v3719
      %v3733 = vmul.f32 %v3136, %v3719
      %v3734 = vmul.f32 %v3139, %v3719
      %v3735 = vmul.f32 %v3144, %v3719
      %v3736 = vmul.f32 %v3147, %v3719
      %v3737 = vmul.f32 %v3152, %v3719
      %v3738 = vmul.f32 %v3155, %v3719
      %v3739 = vmul.f32 %v3160, %v3719
      %v3740 = vmul.f32 %v3163, %v3719
      %v3741 = vmul.f32 %v3168, %v3719
      %v3742 = vmul.f32 %v3171, %v3719
      %v3743 = vmul.f32 %v3176, %v3719
      %v3744 = vmul.f32 %v3179, %v3719
      %v3745 = vmul.f32 %v3184, %v3719
      %v3746 = vmul.f32 %v3187, %v3719
      %v3747 = vmul.f32 %v3192, %v3719
      %v3748 = vmul.f32 %v3195, %v3719
      %v3749 = vmul.f32 %v3200, %v3719
      %v3750 = vmul.f32 %v3203, %v3719
      %v3751 = vmul.f32 %v3208, %v3719
      %v3752 = vmul.f32 %v3211, %v3719
      %v3753 = vadd.f32 %v3667, %v3720
      %v3754 = vadd.f32 %v3668, %v3721
      %v3755 = vadd.f32 %v3669, %v3722
      %v3756 = vadd.f32 %v3670, %v3720
      %v3757 = vadd.f32 %v3671, %v3723
      %v3758 = vadd.f32 %v3672, %v3724
      %v3759 = vadd.f32 %v3673, %v3720
      %v3760 = vadd.f32 %v3674, %v3725
      %v3761 = vadd.f32 %v3675, %v3726
      %v3762 = vadd.f32 %v3676, %v3720
      %v3763 = vadd.f32 %v3677, %v3727
      %v3764 = vadd.f32 %v3678, %v3728
      %v3765 = vadd.f32 %v3679, %v3720
      %v3766 = vadd.f32 %v3680, %v3729
      %v3767 = vadd.f32 %v3681, %v3730
      %v3768 = vadd.f32 %v3682, %v3720
      %v3769 = vadd.f32 %v3683, %v3731
      %v3770 = vadd.f32 %v3684, %v3732
      %v3771 = vadd.f32 %v3685, %v3720
      %v3772 = vadd.f32 %v3686, %v3733
      %v3773 = vadd.f32 %v3687, %v3734
      %v3774 = vadd.f32 %v3688, %v3720
      %v3775 = vadd.f32 %v3689, %v3735
      %v3776 = vadd.f32 %v3690, %v3736
      %v3777 = vadd.f32 %v3691, %v3720
      %v3778 = vadd.f32 %v3692, %v3737
      %v3779 = vadd.f32 %v3693, %v3738
      %v3780 = vadd.f32 %v3694, %v3720
      %v3781 = vadd.f32 %v3695, %v3739
      %v3782 = vadd.f32 %v3696, %v3740
      %v3783 = vadd.f32 %v3697, %v3720
      %v3784 = vadd.f32 %v3698, %v3741
      %v3785 = vadd.f32 %v3699, %v3742
      %v3786 = vadd.f32 %v3700, %v3720
      %v3787 = vadd.f32 %v3701, %v3743
      %v3788 = vadd.f32 %v3702, %v3744
      %v3789 = vadd.f32 %v3703, %v3720
      %v3790 = vadd.f32 %v3704, %v3745
      %v3791 = vadd.f32 %v3705, %v3746
      %v3792 = vadd.f32 %v3706, %v3720
      %v3793 = vadd.f32 %v3707, %v3747
      %v3794 = vadd.f32 %v3708, %v3748
      %v3795 = vadd.f32 %v3709, %v3720
      %v3796 = vadd.f32 %v3710, %v3749
      %v3797 = vadd.f32 %v3711, %v3750
      %v3798 = vadd.f32 %v3712, %v3720
      %v3799 = vadd.f32 %v3713, %v3751
      %v3800 = vadd.f32 %v3714, %v3752
      %v3801 = vld [vmem:[%s11 + $0x4] sm:$0x1]
      %v3802 = vlaneseq
      %v3803 = vshrl.u32 %v3802, 7
      %v3804 = vsub.s32 0, %v3803
      %v3805 = vrot.slane %v3801, %v3804
      %v3806 = vmul.f32 %v3088, %v3805
      %v3807 = vmul.f32 %v3091, %v3805
      %v3808 = vmul.f32 %v3096, %v3805
      %v3809 = vmul.f32 %v3099, %v3805
      %v3810 = vmul.f32 %v3104, %v3805
      %v3811 = vmul.f32 %v3107, %v3805
      %v3812 = vmul.f32 %v3112, %v3805
      %v3813 = vmul.f32 %v3115, %v3805
      %v3814 = vmul.f32 %v3120, %v3805
      %v3815 = vmul.f32 %v3123, %v3805
      %v3816 = vmul.f32 %v3128, %v3805
      %v3817 = vmul.f32 %v3131, %v3805
      %v3818 = vmul.f32 %v3136, %v3805
      %v3819 = vmul.f32 %v3139, %v3805
      %v3820 = vmul.f32 %v3144, %v3805
      %v3821 = vmul.f32 %v3147, %v3805
      %v3822 = vmul.f32 %v3152, %v3805
      %v3823 = vmul.f32 %v3155, %v3805
      %v3824 = vmul.f32 %v3160, %v3805
      %v3825 = vmul.f32 %v3163, %v3805
      %v3826 = vmul.f32 %v3168, %v3805
      %v3827 = vmul.f32 %v3171, %v3805
      %v3828 = vmul.f32 %v3176, %v3805
      %v3829 = vmul.f32 %v3179, %v3805
      %v3830 = vmul.f32 %v3184, %v3805
      %v3831 = vmul.f32 %v3187, %v3805
      %v3832 = vmul.f32 %v3192, %v3805
      %v3833 = vmul.f32 %v3195, %v3805
      %v3834 = vmul.f32 %v3200, %v3805
      %v3835 = vmul.f32 %v3203, %v3805
      %v3836 = vmul.f32 %v3208, %v3805
      %v3837 = vmul.f32 %v3211, %v3805
      %v3870 = vrot.slane %v3806, 1
      %v3871 = vrot.slane %v3807, 1
      %v3872 = vsel %vm3348, %v3870, %v3871
      %v3873 = vrot.slane %v3808, 1
      %v3874 = vrot.slane %v3809, 1
      %v3875 = vsel %vm3348, %v3873, %v3874
      %v3876 = vrot.slane %v3810, 1
      %v3877 = vrot.slane %v3811, 1
      %v3878 = vsel %vm3348, %v3876, %v3877
      %v3879 = vrot.slane %v3812, 1
      %v3880 = vrot.slane %v3813, 1
      %v3881 = vsel %vm3348, %v3879, %v3880
      %v3882 = vrot.slane %v3814, 1
      %v3883 = vrot.slane %v3815, 1
      %v3884 = vsel %vm3348, %v3882, %v3883
      %v3885 = vrot.slane %v3816, 1
      %v3886 = vrot.slane %v3817, 1
      %v3887 = vsel %vm3348, %v3885, %v3886
      %v3888 = vrot.slane %v3818, 1
      %v3889 = vrot.slane %v3819, 1
      %v3890 = vsel %vm3348, %v3888, %v3889
      %v3891 = vrot.slane %v3820, 1
      %v3892 = vrot.slane %v3821, 1
      %v3893 = vsel %vm3348, %v3891, %v3892
      %v3894 = vrot.slane %v3822, 1
      %v3895 = vrot.slane %v3823, 1
      %v3896 = vsel %vm3348, %v3894, %v3895
      %v3897 = vrot.slane %v3824, 1
      %v3898 = vrot.slane %v3825, 1
      %v3899 = vsel %vm3348, %v3897, %v3898
      %v3900 = vrot.slane %v3826, 1
      %v3901 = vrot.slane %v3827, 1
      %v3902 = vsel %vm3348, %v3900, %v3901
      %v3903 = vrot.slane %v3828, 1
      %v3904 = vrot.slane %v3829, 1
      %v3905 = vsel %vm3348, %v3903, %v3904
      %v3906 = vrot.slane %v3830, 1
      %v3907 = vrot.slane %v3831, 1
      %v3908 = vsel %vm3348, %v3906, %v3907
      %v3909 = vrot.slane %v3832, 1
      %v3910 = vrot.slane %v3833, 1
      %v3911 = vsel %vm3348, %v3909, %v3910
      %v3912 = vrot.slane %v3834, 1
      %v3913 = vrot.slane %v3835, 1
      %v3914 = vsel %vm3348, %v3912, %v3913
      %v3915 = vrot.slane %v3836, 1
      %v3916 = vrot.slane %v3837, 1
      %v3917 = vsel %vm3348, %v3915, %v3916
      %v3966 = vadd.f32 %v3753, %v3870
      %v3967 = vadd.f32 %v3754, %v3872
      %v3968 = vadd.f32 %v3755, %v3871
      %v3969 = vadd.f32 %v3756, %v3873
      %v3970 = vadd.f32 %v3757, %v3875
      %v3971 = vadd.f32 %v3758, %v3874
      %v3972 = vadd.f32 %v3759, %v3876
      %v3973 = vadd.f32 %v3760, %v3878
      %v3974 = vadd.f32 %v3761, %v3877
      %v3975 = vadd.f32 %v3762, %v3879
      %v3976 = vadd.f32 %v3763, %v3881
      %v3977 = vadd.f32 %v3764, %v3880
      %v3978 = vadd.f32 %v3765, %v3882
      %v3979 = vadd.f32 %v3766, %v3884
      %v3980 = vadd.f32 %v3767, %v3883
      %v3981 = vadd.f32 %v3768, %v3885
      %v3982 = vadd.f32 %v3769, %v3887
      %v3983 = vadd.f32 %v3770, %v3886
      %v3984 = vadd.f32 %v3771, %v3888
      %v3985 = vadd.f32 %v3772, %v3890
      %v3986 = vadd.f32 %v3773, %v3889
      %v3987 = vadd.f32 %v3774, %v3891
      %v3988 = vadd.f32 %v3775, %v3893
      %v3989 = vadd.f32 %v3776, %v3892
      %v3990 = vadd.f32 %v3777, %v3894
      %v3991 = vadd.f32 %v3778, %v3896
      %v3992 = vadd.f32 %v3779, %v3895
      %v3993 = vadd.f32 %v3780, %v3897
      %v3994 = vadd.f32 %v3781, %v3899
      %v3995 = vadd.f32 %v3782, %v3898
      %v3996 = vadd.f32 %v3783, %v3900
      %v3997 = vadd.f32 %v3784, %v3902
      %v3998 = vadd.f32 %v3785, %v3901
      %v3999 = vadd.f32 %v3786, %v3903
      %v4000 = vadd.f32 %v3787, %v3905
      %v4001 = vadd.f32 %v3788, %v3904
      %v4002 = vadd.f32 %v3789, %v3906
      %v4003 = vadd.f32 %v3790, %v3908
      %v4004 = vadd.f32 %v3791, %v3907
      %v4005 = vadd.f32 %v3792, %v3909
      %v4006 = vadd.f32 %v3793, %v3911
      %v4007 = vadd.f32 %v3794, %v3910
      %v4008 = vadd.f32 %v3795, %v3912
      %v4009 = vadd.f32 %v3796, %v3914
      %v4010 = vadd.f32 %v3797, %v3913
      %v4011 = vadd.f32 %v3798, %v3915
      %v4012 = vadd.f32 %v3799, %v3917
      %v4013 = vadd.f32 %v3800, %v3916
      %v4014 = vld [vmem:[%s11 + $0x5] sm:$0x1]
      %v4015 = vlaneseq
      %v4016 = vshrl.u32 %v4015, 7
      %v4017 = vsub.s32 0, %v4016
      %v4018 = vrot.slane %v4014, %v4017
      %v4019 = vmul.f32 %v3088, %v4018
      %v4020 = vmul.f32 %v3091, %v4018
      %v4021 = vmul.f32 %v4018, 0.0
      %v4022 = vmul.f32 %v3096, %v4018
      %v4023 = vmul.f32 %v3099, %v4018
      %v4024 = vmul.f32 %v3104, %v4018
      %v4025 = vmul.f32 %v3107, %v4018
      %v4026 = vmul.f32 %v3112, %v4018
      %v4027 = vmul.f32 %v3115, %v4018
      %v4028 = vmul.f32 %v3120, %v4018
      %v4029 = vmul.f32 %v3123, %v4018
      %v4030 = vmul.f32 %v3128, %v4018
      %v4031 = vmul.f32 %v3131, %v4018
      %v4032 = vmul.f32 %v3136, %v4018
      %v4033 = vmul.f32 %v3139, %v4018
      %v4034 = vmul.f32 %v3144, %v4018
      %v4035 = vmul.f32 %v3147, %v4018
      %v4036 = vmul.f32 %v3152, %v4018
      %v4037 = vmul.f32 %v3155, %v4018
      %v4038 = vmul.f32 %v3160, %v4018
      %v4039 = vmul.f32 %v3163, %v4018
      %v4040 = vmul.f32 %v3168, %v4018
      %v4041 = vmul.f32 %v3171, %v4018
      %v4042 = vmul.f32 %v3176, %v4018
      %v4043 = vmul.f32 %v3179, %v4018
      %v4044 = vmul.f32 %v3184, %v4018
      %v4045 = vmul.f32 %v3187, %v4018
      %v4046 = vmul.f32 %v3192, %v4018
      %v4047 = vmul.f32 %v3195, %v4018
      %v4048 = vmul.f32 %v3200, %v4018
      %v4049 = vmul.f32 %v3203, %v4018
      %v4050 = vmul.f32 %v3208, %v4018
      %v4051 = vmul.f32 %v3211, %v4018
      %v4085 = vrot.slane %v4019, 2
      %v4086 = vrot.slane %v4020, 2
      %v4087 = vsel %vm3557, %v4085, %v4086
      %v4088 = vrot.slane %v4021, 2
      %v4089 = vsel %vm3557, %v4086, %v4088
      %v4090 = vrot.slane %v4022, 2
      %v4091 = vrot.slane %v4023, 2
      %v4092 = vsel %vm3557, %v4090, %v4091
      %v4093 = vsel %vm3557, %v4091, %v4088
      %v4094 = vrot.slane %v4024, 2
      %v4095 = vrot.slane %v4025, 2
      %v4096 = vsel %vm3557, %v4094, %v4095
      %v4097 = vsel %vm3557, %v4095, %v4088
      %v4098 = vrot.slane %v4026, 2
      %v4099 = vrot.slane %v4027, 2
      %v4100 = vsel %vm3557, %v4098, %v4099
      %v4101 = vsel %vm3557, %v4099, %v4088
      %v4102 = vrot.slane %v4028, 2
      %v4103 = vrot.slane %v4029, 2
      %v4104 = vsel %vm3557, %v4102, %v4103
      %v4105 = vsel %vm3557, %v4103, %v4088
      %v4106 = vrot.slane %v4030, 2
      %v4107 = vrot.slane %v4031, 2
      %v4108 = vsel %vm3557, %v4106, %v4107
      %v4109 = vsel %vm3557, %v4107, %v4088
      %v4110 = vrot.slane %v4032, 2
      %v4111 = vrot.slane %v4033, 2
      %v4112 = vsel %vm3557, %v4110, %v4111
      %v4113 = vsel %vm3557, %v4111, %v4088
      %v4114 = vrot.slane %v4034, 2
      %v4115 = vrot.slane %v4035, 2
      %v4116 = vsel %vm3557, %v4114, %v4115
      %v4117 = vsel %vm3557, %v4115, %v4088
      %v4118 = vrot.slane %v4036, 2
      %v4119 = vrot.slane %v4037, 2
      %v4120 = vsel %vm3557, %v4118, %v4119
      %v4121 = vsel %vm3557, %v4119, %v4088
      %v4122 = vrot.slane %v4038, 2
      %v4123 = vrot.slane %v4039, 2
      %v4124 = vsel %vm3557, %v4122, %v4123
      %v4125 = vsel %vm3557, %v4123, %v4088
      %v4126 = vrot.slane %v4040, 2
      %v4127 = vrot.slane %v4041, 2
      %v4128 = vsel %vm3557, %v4126, %v4127
      %v4129 = vsel %vm3557, %v4127, %v4088
      %v4130 = vrot.slane %v4042, 2
      %v4131 = vrot.slane %v4043, 2
      %v4132 = vsel %vm3557, %v4130, %v4131
      %v4133 = vsel %vm3557, %v4131, %v4088
      %v4134 = vrot.slane %v4044, 2
      %v4135 = vrot.slane %v4045, 2
      %v4136 = vsel %vm3557, %v4134, %v4135
      %v4137 = vsel %vm3557, %v4135, %v4088
      %v4138 = vrot.slane %v4046, 2
      %v4139 = vrot.slane %v4047, 2
      %v4140 = vsel %vm3557, %v4138, %v4139
      %v4141 = vsel %vm3557, %v4139, %v4088
      %v4142 = vrot.slane %v4048, 2
      %v4143 = vrot.slane %v4049, 2
      %v4144 = vsel %vm3557, %v4142, %v4143
      %v4145 = vsel %vm3557, %v4143, %v4088
      %v4146 = vrot.slane %v4050, 2
      %v4147 = vrot.slane %v4051, 2
      %v4148 = vsel %vm3557, %v4146, %v4147
      %v4149 = vsel %vm3557, %v4147, %v4088
      %v4198 = vadd.f32 %v3966, %v4085
      %v4199 = vadd.f32 %v3967, %v4087
      %v4200 = vadd.f32 %v3968, %v4089
      %v4201 = vadd.f32 %v3969, %v4090
      %v4202 = vadd.f32 %v3970, %v4092
      %v4203 = vadd.f32 %v3971, %v4093
      %v4204 = vadd.f32 %v3972, %v4094
      %v4205 = vadd.f32 %v3973, %v4096
      %v4206 = vadd.f32 %v3974, %v4097
      %v4207 = vadd.f32 %v3975, %v4098
      %v4208 = vadd.f32 %v3976, %v4100
      %v4209 = vadd.f32 %v3977, %v4101
      %v4210 = vadd.f32 %v3978, %v4102
      %v4211 = vadd.f32 %v3979, %v4104
      %v4212 = vadd.f32 %v3980, %v4105
      %v4213 = vadd.f32 %v3981, %v4106
      %v4214 = vadd.f32 %v3982, %v4108
      %v4215 = vadd.f32 %v3983, %v4109
      %v4216 = vadd.f32 %v3984, %v4110
      %v4217 = vadd.f32 %v3985, %v4112
      %v4218 = vadd.f32 %v3986, %v4113
      %v4219 = vadd.f32 %v3987, %v4114
      %v4220 = vadd.f32 %v3988, %v4116
      %v4221 = vadd.f32 %v3989, %v4117
      %v4222 = vadd.f32 %v3990, %v4118
      %v4223 = vadd.f32 %v3991, %v4120
      %v4224 = vadd.f32 %v3992, %v4121
      %v4225 = vadd.f32 %v3993, %v4122
      %v4226 = vadd.f32 %v3994, %v4124
      %v4227 = vadd.f32 %v3995, %v4125
      %v4228 = vadd.f32 %v3996, %v4126
      %v4229 = vadd.f32 %v3997, %v4128
      %v4230 = vadd.f32 %v3998, %v4129
      %v4231 = vadd.f32 %v3999, %v4130
      %v4232 = vadd.f32 %v4000, %v4132
      %v4233 = vadd.f32 %v4001, %v4133
      %v4234 = vadd.f32 %v4002, %v4134
      %v4235 = vadd.f32 %v4003, %v4136
      %v4236 = vadd.f32 %v4004, %v4137
      %v4237 = vadd.f32 %v4005, %v4138
      %v4238 = vadd.f32 %v4006, %v4140
      %v4239 = vadd.f32 %v4007, %v4141
      %v4240 = vadd.f32 %v4008, %v4142
      %v4241 = vadd.f32 %v4009, %v4144
      %v4242 = vadd.f32 %v4010, %v4145
      %v4243 = vadd.f32 %v4011, %v4146
      %v4244 = vadd.f32 %v4012, %v4148
      %v4245 = vadd.f32 %v4013, %v4149
      %v4246 = vld [vmem:[%s11 + $0x6] sm:$0x1]
      %v4247 = vlaneseq
      %v4248 = vshrl.u32 %v4247, 7
      %v4249 = vsub.s32 0, %v4248
      %v4250 = vrot.slane %v4246, %v4249
      %v4251 = vmul.f32 %v4250, 0.0
      %v4252 = vmul.f32 %v3096, %v4250
      %v4253 = vmul.f32 %v3099, %v4250
      %v4254 = vmul.f32 %v3104, %v4250
      %v4255 = vmul.f32 %v3107, %v4250
      %v4256 = vmul.f32 %v3112, %v4250
      %v4257 = vmul.f32 %v3115, %v4250
      %v4258 = vmul.f32 %v3120, %v4250
      %v4259 = vmul.f32 %v3123, %v4250
      %v4260 = vmul.f32 %v3128, %v4250
      %v4261 = vmul.f32 %v3131, %v4250
      %v4262 = vmul.f32 %v3136, %v4250
      %v4263 = vmul.f32 %v3139, %v4250
      %v4264 = vmul.f32 %v3144, %v4250
      %v4265 = vmul.f32 %v3147, %v4250
      %v4266 = vmul.f32 %v3152, %v4250
      %v4267 = vmul.f32 %v3155, %v4250
      %v4268 = vmul.f32 %v3160, %v4250
      %v4269 = vmul.f32 %v3163, %v4250
      %v4270 = vmul.f32 %v3168, %v4250
      %v4271 = vmul.f32 %v3171, %v4250
      %v4272 = vmul.f32 %v3176, %v4250
      %v4273 = vmul.f32 %v3179, %v4250
      %v4274 = vmul.f32 %v3184, %v4250
      %v4275 = vmul.f32 %v3187, %v4250
      %v4276 = vmul.f32 %v3192, %v4250
      %v4277 = vmul.f32 %v3195, %v4250
      %v4278 = vmul.f32 %v3200, %v4250
      %v4279 = vmul.f32 %v3203, %v4250
      %v4280 = vmul.f32 %v3208, %v4250
      %v4281 = vmul.f32 %v3211, %v4250
      %v4282 = vadd.f32 %v4198, %v4251
      %v4283 = vadd.f32 %v4199, %v4252
      %v4284 = vadd.f32 %v4200, %v4253
      %v4285 = vadd.f32 %v4201, %v4251
      %v4286 = vadd.f32 %v4202, %v4254
      %v4287 = vadd.f32 %v4203, %v4255
      %v4288 = vadd.f32 %v4204, %v4251
      %v4289 = vadd.f32 %v4205, %v4256
      %v4290 = vadd.f32 %v4206, %v4257
      %v4291 = vadd.f32 %v4207, %v4251
      %v4292 = vadd.f32 %v4208, %v4258
      %v4293 = vadd.f32 %v4209, %v4259
      %v4294 = vadd.f32 %v4210, %v4251
      %v4295 = vadd.f32 %v4211, %v4260
      %v4296 = vadd.f32 %v4212, %v4261
      %v4297 = vadd.f32 %v4213, %v4251
      %v4298 = vadd.f32 %v4214, %v4262
      %v4299 = vadd.f32 %v4215, %v4263
      %v4300 = vadd.f32 %v4216, %v4251
      %v4301 = vadd.f32 %v4217, %v4264
      %v4302 = vadd.f32 %v4218, %v4265
      %v4303 = vadd.f32 %v4219, %v4251
      %v4304 = vadd.f32 %v4220, %v4266
      %v4305 = vadd.f32 %v4221, %v4267
      %v4306 = vadd.f32 %v4222, %v4251
      %v4307 = vadd.f32 %v4223, %v4268
      %v4308 = vadd.f32 %v4224, %v4269
      %v4309 = vadd.f32 %v4225, %v4251
      %v4310 = vadd.f32 %v4226, %v4270
      %v4311 = vadd.f32 %v4227, %v4271
      %v4312 = vadd.f32 %v4228, %v4251
      %v4313 = vadd.f32 %v4229, %v4272
      %v4314 = vadd.f32 %v4230, %v4273
      %v4315 = vadd.f32 %v4231, %v4251
      %v4316 = vadd.f32 %v4232, %v4274
      %v4317 = vadd.f32 %v4233, %v4275
      %v4318 = vadd.f32 %v4234, %v4251
      %v4319 = vadd.f32 %v4235, %v4276
      %v4320 = vadd.f32 %v4236, %v4277
      %v4321 = vadd.f32 %v4237, %v4251
      %v4322 = vadd.f32 %v4238, %v4278
      %v4323 = vadd.f32 %v4239, %v4279
      %v4324 = vadd.f32 %v4240, %v4251
      %v4325 = vadd.f32 %v4241, %v4280
      %v4326 = vadd.f32 %v4242, %v4281
      %v4327 = vadd.f32 %v4243, %v4251
      %v4328 = vadd.f32 %v4244, %v4251
      %v4329 = vadd.f32 %v4245, %v4251
      %v4330 = vld [vmem:[%s11 + $0x7] sm:$0x1]
      %v4331 = vlaneseq
      %v4332 = vshrl.u32 %v4331, 7
      %v4333 = vsub.s32 0, %v4332
      %v4334 = vrot.slane %v4330, %v4333
      %v4335 = vmul.f32 %v3096, %v4334
      %v4336 = vmul.f32 %v3099, %v4334
      %v4337 = vmul.f32 %v3104, %v4334
      %v4338 = vmul.f32 %v3107, %v4334
      %v4339 = vmul.f32 %v3112, %v4334
      %v4340 = vmul.f32 %v3115, %v4334
      %v4341 = vmul.f32 %v3120, %v4334
      %v4342 = vmul.f32 %v3123, %v4334
      %v4343 = vmul.f32 %v3128, %v4334
      %v4344 = vmul.f32 %v3131, %v4334
      %v4345 = vmul.f32 %v3136, %v4334
      %v4346 = vmul.f32 %v3139, %v4334
      %v4347 = vmul.f32 %v3144, %v4334
      %v4348 = vmul.f32 %v3147, %v4334
      %v4349 = vmul.f32 %v3152, %v4334
      %v4350 = vmul.f32 %v3155, %v4334
      %v4351 = vmul.f32 %v3160, %v4334
      %v4352 = vmul.f32 %v3163, %v4334
      %v4353 = vmul.f32 %v3168, %v4334
      %v4354 = vmul.f32 %v3171, %v4334
      %v4355 = vmul.f32 %v3176, %v4334
      %v4356 = vmul.f32 %v3179, %v4334
      %v4357 = vmul.f32 %v3184, %v4334
      %v4358 = vmul.f32 %v3187, %v4334
      %v4359 = vmul.f32 %v3192, %v4334
      %v4360 = vmul.f32 %v3195, %v4334
      %v4361 = vmul.f32 %v3200, %v4334
      %v4362 = vmul.f32 %v3203, %v4334
      %v4363 = vmul.f32 %v3208, %v4334
      %v4364 = vmul.f32 %v3211, %v4334
      %v4365 = vmul.f32 %v4334, 0.0
      %v4397 = vrot.slane %v4335, 1
      %v4398 = vrot.slane %v4336, 1
      %v4399 = vsel %vm3348, %v4397, %v4398
      %v4400 = vrot.slane %v4337, 1
      %v4401 = vrot.slane %v4338, 1
      %v4402 = vsel %vm3348, %v4400, %v4401
      %v4403 = vrot.slane %v4339, 1
      %v4404 = vrot.slane %v4340, 1
      %v4405 = vsel %vm3348, %v4403, %v4404
      %v4406 = vrot.slane %v4341, 1
      %v4407 = vrot.slane %v4342, 1
      %v4408 = vsel %vm3348, %v4406, %v4407
      %v4409 = vrot.slane %v4343, 1
      %v4410 = vrot.slane %v4344, 1
      %v4411 = vsel %vm3348, %v4409, %v4410
      %v4412 = vrot.slane %v4345, 1
      %v4413 = vrot.slane %v4346, 1
      %v4414 = vsel %vm3348, %v4412, %v4413
      %v4415 = vrot.slane %v4347, 1
      %v4416 = vrot.slane %v4348, 1
      %v4417 = vsel %vm3348, %v4415, %v4416
      %v4418 = vrot.slane %v4349, 1
      %v4419 = vrot.slane %v4350, 1
      %v4420 = vsel %vm3348, %v4418, %v4419
      %v4421 = vrot.slane %v4351, 1
      %v4422 = vrot.slane %v4352, 1
      %v4423 = vsel %vm3348, %v4421, %v4422
      %v4424 = vrot.slane %v4353, 1
      %v4425 = vrot.slane %v4354, 1
      %v4426 = vsel %vm3348, %v4424, %v4425
      %v4427 = vrot.slane %v4355, 1
      %v4428 = vrot.slane %v4356, 1
      %v4429 = vsel %vm3348, %v4427, %v4428
      %v4430 = vrot.slane %v4357, 1
      %v4431 = vrot.slane %v4358, 1
      %v4432 = vsel %vm3348, %v4430, %v4431
      %v4433 = vrot.slane %v4359, 1
      %v4434 = vrot.slane %v4360, 1
      %v4435 = vsel %vm3348, %v4433, %v4434
      %v4436 = vrot.slane %v4361, 1
      %v4437 = vrot.slane %v4362, 1
      %v4438 = vsel %vm3348, %v4436, %v4437
      %v4439 = vrot.slane %v4363, 1
      %v4440 = vrot.slane %v4364, 1
      %v4441 = vsel %vm3348, %v4439, %v4440
      %v4442 = vrot.slane %v4365, 1
      %v4443 = vsel %vm3348, %v4442, %v4442
      %v4491 = vadd.f32 %v4282, %v4397
      %v4492 = vadd.f32 %v4283, %v4399
      %v4493 = vadd.f32 %v4284, %v4398
      %v4494 = vadd.f32 %v4285, %v4400
      %v4495 = vadd.f32 %v4286, %v4402
      %v4496 = vadd.f32 %v4287, %v4401
      %v4497 = vadd.f32 %v4288, %v4403
      %v4498 = vadd.f32 %v4289, %v4405
      %v4499 = vadd.f32 %v4290, %v4404
      %v4500 = vadd.f32 %v4291, %v4406
      %v4501 = vadd.f32 %v4292, %v4408
      %v4502 = vadd.f32 %v4293, %v4407
      %v4503 = vadd.f32 %v4294, %v4409
      %v4504 = vadd.f32 %v4295, %v4411
      %v4505 = vadd.f32 %v4296, %v4410
      %v4506 = vadd.f32 %v4297, %v4412
      %v4507 = vadd.f32 %v4298, %v4414
      %v4508 = vadd.f32 %v4299, %v4413
      %v4509 = vadd.f32 %v4300, %v4415
      %v4510 = vadd.f32 %v4301, %v4417
      %v4511 = vadd.f32 %v4302, %v4416
      %v4512 = vadd.f32 %v4303, %v4418
      %v4513 = vadd.f32 %v4304, %v4420
      %v4514 = vadd.f32 %v4305, %v4419
      %v4515 = vadd.f32 %v4306, %v4421
      %v4516 = vadd.f32 %v4307, %v4423
      %v4517 = vadd.f32 %v4308, %v4422
      %v4518 = vadd.f32 %v4309, %v4424
      %v4519 = vadd.f32 %v4310, %v4426
      %v4520 = vadd.f32 %v4311, %v4425
      %v4521 = vadd.f32 %v4312, %v4427
      %v4522 = vadd.f32 %v4313, %v4429
      %v4523 = vadd.f32 %v4314, %v4428
      %v4524 = vadd.f32 %v4315, %v4430
      %v4525 = vadd.f32 %v4316, %v4432
      %v4526 = vadd.f32 %v4317, %v4431
      %v4527 = vadd.f32 %v4318, %v4433
      %v4528 = vadd.f32 %v4319, %v4435
      %v4529 = vadd.f32 %v4320, %v4434
      %v4530 = vadd.f32 %v4321, %v4436
      %v4531 = vadd.f32 %v4322, %v4438
      %v4532 = vadd.f32 %v4323, %v4437
      %v4533 = vadd.f32 %v4324, %v4439
      %v4534 = vadd.f32 %v4325, %v4441
      %v4535 = vadd.f32 %v4326, %v4440
      %v4536 = vadd.f32 %v4327, %v4442
      %v4537 = vadd.f32 %v4328, %v4443
      %v4538 = vadd.f32 %v4329, %v4442
      %v4539 = vld [vmem:[%s11 + $0x8] sm:$0x1]
      %v4540 = vlaneseq
      %v4541 = vshrl.u32 %v4540, 7
      %v4542 = vsub.s32 0, %v4541
      %v4543 = vrot.slane %v4539, %v4542
      %v4544 = vmul.f32 %v3096, %v4543
      %v4545 = vmul.f32 %v3099, %v4543
      %v4546 = vmul.f32 %v4543, 0.0
      %v4547 = vmul.f32 %v3104, %v4543
      %v4548 = vmul.f32 %v3107, %v4543
      %v4549 = vmul.f32 %v3112, %v4543
      %v4550 = vmul.f32 %v3115, %v4543
      %v4551 = vmul.f32 %v3120, %v4543
      %v4552 = vmul.f32 %v3123, %v4543
      %v4553 = vmul.f32 %v3128, %v4543
      %v4554 = vmul.f32 %v3131, %v4543
      %v4555 = vmul.f32 %v3136, %v4543
      %v4556 = vmul.f32 %v3139, %v4543
      %v4557 = vmul.f32 %v3144, %v4543
      %v4558 = vmul.f32 %v3147, %v4543
      %v4559 = vmul.f32 %v3152, %v4543
      %v4560 = vmul.f32 %v3155, %v4543
      %v4561 = vmul.f32 %v3160, %v4543
      %v4562 = vmul.f32 %v3163, %v4543
      %v4563 = vmul.f32 %v3168, %v4543
      %v4564 = vmul.f32 %v3171, %v4543
      %v4565 = vmul.f32 %v3176, %v4543
      %v4566 = vmul.f32 %v3179, %v4543
      %v4567 = vmul.f32 %v3184, %v4543
      %v4568 = vmul.f32 %v3187, %v4543
      %v4569 = vmul.f32 %v3192, %v4543
      %v4570 = vmul.f32 %v3195, %v4543
      %v4571 = vmul.f32 %v3200, %v4543
      %v4572 = vmul.f32 %v3203, %v4543
      %v4573 = vmul.f32 %v3208, %v4543
      %v4574 = vmul.f32 %v3211, %v4543
      %v4606 = vrot.slane %v4544, 2
      %v4607 = vrot.slane %v4545, 2
      %v4608 = vsel %vm3557, %v4606, %v4607
      %v4609 = vrot.slane %v4546, 2
      %v4610 = vsel %vm3557, %v4607, %v4609
      %v4611 = vrot.slane %v4547, 2
      %v4612 = vrot.slane %v4548, 2
      %v4613 = vsel %vm3557, %v4611, %v4612
      %v4614 = vsel %vm3557, %v4612, %v4609
      %v4615 = vrot.slane %v4549, 2
      %v4616 = vrot.slane %v4550, 2
      %v4617 = vsel %vm3557, %v4615, %v4616
      %v4618 = vsel %vm3557, %v4616, %v4609
      %v4619 = vrot.slane %v4551, 2
      %v4620 = vrot.slane %v4552, 2
      %v4621 = vsel %vm3557, %v4619, %v4620
      %v4622 = vsel %vm3557, %v4620, %v4609
      %v4623 = vrot.slane %v4553, 2
      %v4624 = vrot.slane %v4554, 2
      %v4625 = vsel %vm3557, %v4623, %v4624
      %v4626 = vsel %vm3557, %v4624, %v4609
      %v4627 = vrot.slane %v4555, 2
      %v4628 = vrot.slane %v4556, 2
      %v4629 = vsel %vm3557, %v4627, %v4628
      %v4630 = vsel %vm3557, %v4628, %v4609
      %v4631 = vrot.slane %v4557, 2
      %v4632 = vrot.slane %v4558, 2
      %v4633 = vsel %vm3557, %v4631, %v4632
      %v4634 = vsel %vm3557, %v4632, %v4609
      %v4635 = vrot.slane %v4559, 2
      %v4636 = vrot.slane %v4560, 2
      %v4637 = vsel %vm3557, %v4635, %v4636
      %v4638 = vsel %vm3557, %v4636, %v4609
      %v4639 = vrot.slane %v4561, 2
      %v4640 = vrot.slane %v4562, 2
      %v4641 = vsel %vm3557, %v4639, %v4640
      %v4642 = vsel %vm3557, %v4640, %v4609
      %v4643 = vrot.slane %v4563, 2
      %v4644 = vrot.slane %v4564, 2
      %v4645 = vsel %vm3557, %v4643, %v4644
      %v4646 = vsel %vm3557, %v4644, %v4609
      %v4647 = vrot.slane %v4565, 2
      %v4648 = vrot.slane %v4566, 2
      %v4649 = vsel %vm3557, %v4647, %v4648
      %v4650 = vsel %vm3557, %v4648, %v4609
      %v4651 = vrot.slane %v4567, 2
      %v4652 = vrot.slane %v4568, 2
      %v4653 = vsel %vm3557, %v4651, %v4652
      %v4654 = vsel %vm3557, %v4652, %v4609
      %v4655 = vrot.slane %v4569, 2
      %v4656 = vrot.slane %v4570, 2
      %v4657 = vsel %vm3557, %v4655, %v4656
      %v4658 = vsel %vm3557, %v4656, %v4609
      %v4659 = vrot.slane %v4571, 2
      %v4660 = vrot.slane %v4572, 2
      %v4661 = vsel %vm3557, %v4659, %v4660
      %v4662 = vsel %vm3557, %v4660, %v4609
      %v4663 = vrot.slane %v4573, 2
      %v4664 = vrot.slane %v4574, 2
      %v4665 = vsel %vm3557, %v4663, %v4664
      %v4666 = vsel %vm3557, %v4664, %v4609
      %v4667 = vsel %vm3557, %v4609, %v4609
      %v4715 = vadd.f32 %v4491, %v4606
      %v4716 = vadd.f32 %v4492, %v4608
      %v4717 = vadd.f32 %v4493, %v4610
      %v4718 = vadd.f32 %v4494, %v4611
      %v4719 = vadd.f32 %v4495, %v4613
      %v4720 = vadd.f32 %v4496, %v4614
      %v4721 = vadd.f32 %v4497, %v4615
      %v4722 = vadd.f32 %v4498, %v4617
      %v4723 = vadd.f32 %v4499, %v4618
      %v4724 = vadd.f32 %v4500, %v4619
      %v4725 = vadd.f32 %v4501, %v4621
      %v4726 = vadd.f32 %v4502, %v4622
      %v4727 = vadd.f32 %v4503, %v4623
      %v4728 = vadd.f32 %v4504, %v4625
      %v4729 = vadd.f32 %v4505, %v4626
      %v4730 = vadd.f32 %v4506, %v4627
      %v4731 = vadd.f32 %v4507, %v4629
      %v4732 = vadd.f32 %v4508, %v4630
      %v4733 = vadd.f32 %v4509, %v4631
      %v4734 = vadd.f32 %v4510, %v4633
      %v4735 = vadd.f32 %v4511, %v4634
      %v4736 = vadd.f32 %v4512, %v4635
      %v4737 = vadd.f32 %v4513, %v4637
      %v4738 = vadd.f32 %v4514, %v4638
      %v4739 = vadd.f32 %v4515, %v4639
      %v4740 = vadd.f32 %v4516, %v4641
      %v4741 = vadd.f32 %v4517, %v4642
      %v4742 = vadd.f32 %v4518, %v4643
      %v4743 = vadd.f32 %v4519, %v4645
      %v4744 = vadd.f32 %v4520, %v4646
      %v4745 = vadd.f32 %v4521, %v4647
      %v4746 = vadd.f32 %v4522, %v4649
      %v4747 = vadd.f32 %v4523, %v4650
      %v4748 = vadd.f32 %v4524, %v4651
      %v4749 = vadd.f32 %v4525, %v4653
      %v4750 = vadd.f32 %v4526, %v4654
      %v4751 = vadd.f32 %v4527, %v4655
      %v4752 = vadd.f32 %v4528, %v4657
      %v4753 = vadd.f32 %v4529, %v4658
      %v4754 = vadd.f32 %v4530, %v4659
      %v4755 = vadd.f32 %v4531, %v4661
      %v4756 = vadd.f32 %v4532, %v4662
      %v4757 = vadd.f32 %v4533, %v4663
      %v4758 = vadd.f32 %v4534, %v4665
      %v4759 = vadd.f32 %v4535, %v4666
      %v4760 = vadd.f32 %v4536, %v4609
      %v4761 = vadd.f32 %v4537, %v4667
      %v4762 = vadd.f32 %v4538, %v4667
      %vm4811 = vcmask 1040384
      %v4812 = vrot.slane %v4715, 7
      %v4813 = vrot.slane %v4716, 7
      %v4814 = vsel %vm4811, %v4812, %v4813
      %v4815 = vrot.slane %v4717, 7
      %v4816 = vsel %vm4811, %v4813, %v4815
      %v4817 = vrot.slane %v4718, 7
      %v4818 = vrot.slane %v4719, 7
      %v4819 = vsel %vm4811, %v4817, %v4818
      %v4820 = vrot.slane %v4720, 7
      %v4821 = vsel %vm4811, %v4818, %v4820
      %v4822 = vrot.slane %v4721, 7
      %v4823 = vrot.slane %v4722, 7
      %v4824 = vsel %vm4811, %v4822, %v4823
      %v4825 = vrot.slane %v4723, 7
      %v4826 = vsel %vm4811, %v4823, %v4825
      %v4827 = vrot.slane %v4724, 7
      %v4828 = vrot.slane %v4725, 7
      %v4829 = vsel %vm4811, %v4827, %v4828
      %v4830 = vrot.slane %v4726, 7
      %v4831 = vsel %vm4811, %v4828, %v4830
      %v4832 = vrot.slane %v4727, 7
      %v4833 = vrot.slane %v4728, 7
      %v4834 = vsel %vm4811, %v4832, %v4833
      %v4835 = vrot.slane %v4729, 7
      %v4836 = vsel %vm4811, %v4833, %v4835
      %v4837 = vrot.slane %v4730, 7
      %v4838 = vrot.slane %v4731, 7
      %v4839 = vsel %vm4811, %v4837, %v4838
      %v4840 = vrot.slane %v4732, 7
      %v4841 = vsel %vm4811, %v4838, %v4840
      %v4842 = vrot.slane %v4733, 7
      %v4843 = vrot.slane %v4734, 7
      %v4844 = vsel %vm4811, %v4842, %v4843
      %v4845 = vrot.slane %v4735, 7
      %v4846 = vsel %vm4811, %v4843, %v4845
      %v4847 = vrot.slane %v4736, 7
      %v4848 = vrot.slane %v4737, 7
      %v4849 = vsel %vm4811, %v4847, %v4848
      %v4850 = vrot.slane %v4738, 7
      %v4851 = vsel %vm4811, %v4848, %v4850
      %v4852 = vrot.slane %v4739, 7
      %v4853 = vrot.slane %v4740, 7
      %v4854 = vsel %vm4811, %v4852, %v4853
      %v4855 = vrot.slane %v4741, 7
      %v4856 = vsel %vm4811, %v4853, %v4855
      %v4857 = vrot.slane %v4742, 7
      %v4858 = vrot.slane %v4743, 7
      %v4859 = vsel %vm4811, %v4857, %v4858
      %v4860 = vrot.slane %v4744, 7
      %v4861 = vsel %vm4811, %v4858, %v4860
      %v4862 = vrot.slane %v4745, 7
      %v4863 = vrot.slane %v4746, 7
      %v4864 = vsel %vm4811, %v4862, %v4863
      %v4865 = vrot.slane %v4747, 7
      %v4866 = vsel %vm4811, %v4863, %v4865
      %v4867 = vrot.slane %v4748, 7
      %v4868 = vrot.slane %v4749, 7
      %v4869 = vsel %vm4811, %v4867, %v4868
      %v4870 = vrot.slane %v4750, 7
      %v4871 = vsel %vm4811, %v4868, %v4870
      %v4872 = vrot.slane %v4751, 7
      %v4873 = vrot.slane %v4752, 7
      %v4874 = vsel %vm4811, %v4872, %v4873
      %v4875 = vrot.slane %v4753, 7
      %v4876 = vsel %vm4811, %v4873, %v4875
      %v4877 = vrot.slane %v4754, 7
      %v4878 = vrot.slane %v4755, 7
      %v4879 = vsel %vm4811, %v4877, %v4878
      %v4880 = vrot.slane %v4756, 7
      %v4881 = vsel %vm4811, %v4878, %v4880
      %v4882 = vrot.slane %v4757, 7
      %v4883 = vrot.slane %v4758, 7
      %v4884 = vsel %vm4811, %v4882, %v4883
      %v4885 = vrot.slane %v4759, 7
      %v4886 = vsel %vm4811, %v4883, %v4885
      %v4887 = vrot.slane %v4760, 7
      %v4888 = vrot.slane %v4761, 7
      %v4889 = vsel %vm4811, %v4887, %v4888
      %v4890 = vrot.slane %v4762, 7
      %v4891 = vsel %vm4811, %v4888, %v4890
      %v4924 = vpack.c.bf16 %v4816, %v4814
      %v4925 = vpack.c.bf16 %v4821, %v4819
      %v4926 = vpack.c.bf16 %v4826, %v4824
      %v4927 = vpack.c.bf16 %v4831, %v4829
      %v4928 = vpack.c.bf16 %v4836, %v4834
      %v4929 = vpack.c.bf16 %v4841, %v4839
      %v4930 = vpack.c.bf16 %v4846, %v4844
      %v4931 = vpack.c.bf16 %v4851, %v4849
      %v4932 = vpack.c.bf16 %v4856, %v4854
      %v4933 = vpack.c.bf16 %v4861, %v4859
      %v4934 = vpack.c.bf16 %v4866, %v4864
      %v4935 = vpack.c.bf16 %v4871, %v4869
      %v4936 = vpack.c.bf16 %v4876, %v4874
      %v4937 = vpack.c.bf16 %v4881, %v4879
      %v4938 = vpack.c.bf16 %v4886, %v4884
      %v4939 = vpack.c.bf16 %v4891, %v4889
      %v4940 = vld [vmem:[%s12] sm:$0xf]
      %v4941 = vld [vmem:[%s12 + $0x4] sm:$0xf]
      %v4942 = vld [vmem:[%s12 + $0x8] sm:$0xf]
      %v4943 = vld [vmem:[%s12 + $0xc] sm:$0xf]
      %v4944 = vld [vmem:[%s12 + $0x10] sm:$0xf]
      %v4945 = vld [vmem:[%s12 + $0x14] sm:$0xf]
      %v4946 = vld [vmem:[%s12 + $0x18] sm:$0xf]
      %v4947 = vld [vmem:[%s12 + $0x1c] sm:$0xf]
      %v4948 = vld [vmem:[%s12 + $0x20] sm:$0xf]
      %v4949 = vld [vmem:[%s12 + $0x24] sm:$0xf]
      %v4950 = vld [vmem:[%s12 + $0x28] sm:$0x3]
      %v4962 = vunpack.c.l.b16 %v4940
      %v4963 = vunpack.c.l.b16 %v4941
      %v4964 = vunpack.c.l.b16 %v4942
      %v4965 = vunpack.c.l.b16 %v4943
      %v4966 = vunpack.c.l.b16 %v4944
      %v4967 = vunpack.c.l.b16 %v4945
      %v4968 = vunpack.c.l.b16 %v4946
      %v4969 = vunpack.c.l.b16 %v4947
      %v4970 = vunpack.c.l.b16 %v4948
      %v4971 = vunpack.c.l.b16 %v4949
      %v4972 = vunpack.c.l.b16 %v4950
      %v4973 = vpack.c.b16 %v4963, %v4962
      %v4974 = vpack.c.b16 %v4965, %v4964
      %v4975 = vpack.c.b16 %v4967, %v4966
      %v4976 = vpack.c.b16 %v4969, %v4968
      %v4977 = vpack.c.b16 %v4971, %v4970
      %v4978 = vpack.c.b16 %v4972, %v4972
      %vm4984 = vcmask 687104
      %v4986 = vsel %vm4984, %v4924, 0
      %v4989 = vsel %vm4984, %v4925, 0
      %v4992 = vsel %vm4984, %v4926, 0
      %v4995 = vsel %vm4984, %v4927, 0
      %v4998 = vsel %vm4984, %v4928, 0
      %v5001 = vsel %vm4984, %v4929, 0
      %v5004 = vsel %vm4984, %v4930, 0
      %v5007 = vsel %vm4984, %v4931, 0
      %v5010 = vsel %vm4984, %v4932, 0
      %v5013 = vsel %vm4984, %v4933, 0
      %v5016 = vsel %vm4984, %v4934, 0
      %v5019 = vsel %vm4984, %v4935, 0
      %v5022 = vsel %vm4984, %v4936, 0
      %v5025 = vsel %vm4984, %v4937, 0
      %v5028 = vsel %vm4984, %v4938, 0
      %v5031 = vsel %vm4984, %v4939, 0
      %vm5033 = vcmask 1041408
      %v5035 = vsel %vm5033, %v4978, 0
      %5037 = vmatprep.subr.bf16.mxu0 0
      %5038 = vmatpush1.bf16.msra.mxu0 %v4973
      %5039 = vmatprep.subr.bf16.mxu0 0
      %5040 = vmatpush1.bf16.msra.mxu0 %v4974
      %5041 = vmatprep.subr.bf16.mxu0 0
      %5042 = vmatpush1.bf16.msra.mxu0 %v4975
      %5043 = vmatprep.subr.bf16.mxu0 0
      %5044 = vmatpush1.bf16.msra.mxu0 %v4976
      %5045 = vmatprep.subr.bf16.mxu0 0
      %5046 = vmatpush1.bf16.msra.mxu0 %v4977
      %5047 = vmatprep.subr.bf16.mxu0 0
      %5048 = vmatpush1.bf16.msra.mxu0 %v5035
      %5049 = vmatprep.subr.bf16.mxu0 0
      %5050 = vmatpush1.bf16.msra.mxu0 0
      %5051 = vmatprep.subr.bf16.mxu0 0
      %5052 = vmatpush1.bf16.msra.mxu0 0
      %5053 = vmatprep.subr.bf16.mxu0 0
      %5054 = vmatpush1.bf16.msra.mxu0 0
      %5055 = vmatprep.subr.bf16.mxu0 0
      %5056 = vmatpush1.bf16.msra.mxu0 0
      %5057 = vmatprep.subr.bf16.mxu0 0
      %5058 = vmatpush1.bf16.msra.mxu0 0
      %5059 = vmatprep.subr.bf16.mxu0 0
      %5060 = vmatpush1.bf16.msra.mxu0 0
      %5061 = vmatprep.subr.bf16.mxu0 0
      %5062 = vmatpush1.bf16.msra.mxu0 0
      %5063 = vmatprep.subr.bf16.mxu0 0
      %5064 = vmatpush1.bf16.msra.mxu0 0
      %5065 = vmatprep.subr.bf16.mxu0 0
      %5066 = vmatpush1.bf16.msra.mxu0 0
      %5067 = vmatprep.subr.bf16.mxu0 0
      %5068 = vmatpush1.bf16.msra.mxu0 0
      %5069 = vmatprep.mubr.bf16.mxu0 0
      %5070 = vmatmul.mubr.bf16.gmra.mrb[0].mxu0 %v4986
      %v5071 = vpop.f32.mrb[0].mxu0
      %v5072 = vadd.f32 0.0, %v5071
      %v5073 = vpop.f32.mrb[0].mxu0
      %v5074 = vpop.f32.mrb[0].mxu0
      %v5075 = vadd.f32 0.0, %v5074
      %v5076 = vpop.f32.mrb[0].mxu0
      %5077 = vmatprep.mubr.bf16.mxu0 0
      %5078 = vmatmul.mubr.bf16.gmra.mrb[0].mxu0 %v4989
      %v5079 = vpop.f32.mrb[0].mxu0
      %v5080 = vadd.f32 0.0, %v5079
      %v5081 = vpop.f32.mrb[0].mxu0
      %v5082 = vpop.f32.mrb[0].mxu0
      %v5083 = vadd.f32 0.0, %v5082
      %v5084 = vpop.f32.mrb[0].mxu0
      %5085 = vmatprep.mubr.bf16.mxu0 0
      %5086 = vmatmul.mubr.bf16.gmra.mrb[0].mxu0 %v4992
      %v5087 = vpop.f32.mrb[0].mxu0
      %v5088 = vadd.f32 0.0, %v5087
      %v5089 = vpop.f32.mrb[0].mxu0
      %v5090 = vpop.f32.mrb[0].mxu0
      %v5091 = vadd.f32 0.0, %v5090
      %v5092 = vpop.f32.mrb[0].mxu0
      %5093 = vmatprep.mubr.bf16.mxu0 0
      %5094 = vmatmul.mubr.bf16.gmra.mrb[0].mxu0 %v4995
      %v5095 = vpop.f32.mrb[0].mxu0
      %v5096 = vadd.f32 0.0, %v5095
      %v5097 = vpop.f32.mrb[0].mxu0
      %v5098 = vpop.f32.mrb[0].mxu0
      %v5099 = vadd.f32 0.0, %v5098
      %v5100 = vpop.f32.mrb[0].mxu0
      %5101 = vmatprep.mubr.bf16.mxu0 0
      %5102 = vmatmul.mubr.bf16.gmra.mrb[0].mxu0 %v4998
      %v5103 = vpop.f32.mrb[0].mxu0
      %v5104 = vadd.f32 0.0, %v5103
      %v5105 = vpop.f32.mrb[0].mxu0
      %v5106 = vpop.f32.mrb[0].mxu0
      %v5107 = vadd.f32 0.0, %v5106
      %v5108 = vpop.f32.mrb[0].mxu0
      %5109 = vmatprep.mubr.bf16.mxu0 0
      %5110 = vmatmul.mubr.bf16.gmra.mrb[0].mxu0 %v5001
      %v5111 = vpop.f32.mrb[0].mxu0
      %v5112 = vadd.f32 0.0, %v5111
      %v5113 = vpop.f32.mrb[0].mxu0
      %v5114 = vpop.f32.mrb[0].mxu0
      %v5115 = vadd.f32 0.0, %v5114
      %v5116 = vpop.f32.mrb[0].mxu0
      %5117 = vmatprep.mubr.bf16.mxu0 0
      %5118 = vmatmul.mubr.bf16.gmra.mrb[0].mxu0 %v5004
      %v5119 = vpop.f32.mrb[0].mxu0
      %v5120 = vadd.f32 0.0, %v5119
      %v5121 = vpop.f32.mrb[0].mxu0
      %v5122 = vpop.f32.mrb[0].mxu0
      %v5123 = vadd.f32 0.0, %v5122
      %v5124 = vpop.f32.mrb[0].mxu0
      %5125 = vmatprep.mubr.bf16.mxu0 0
      %5126 = vmatmul.mubr.bf16.gmra.mrb[0].mxu0 %v5007
      %v5127 = vpop.f32.mrb[0].mxu0
      %v5128 = vadd.f32 0.0, %v5127
      %v5129 = vpop.f32.mrb[0].mxu0
      %v5130 = vpop.f32.mrb[0].mxu0
      %v5131 = vadd.f32 0.0, %v5130
      %v5132 = vpop.f32.mrb[0].mxu0
      %5133 = vmatprep.mubr.bf16.mxu0 0
      %5134 = vmatmul.mubr.bf16.gmra.mrb[0].mxu0 %v5010
      %v5135 = vpop.f32.mrb[0].mxu0
      %v5136 = vadd.f32 0.0, %v5135
      %v5137 = vpop.f32.mrb[0].mxu0
      %v5138 = vpop.f32.mrb[0].mxu0
      %v5139 = vadd.f32 0.0, %v5138
      %v5140 = vpop.f32.mrb[0].mxu0
      %5141 = vmatprep.mubr.bf16.mxu0 0
      %5142 = vmatmul.mubr.bf16.gmra.mrb[0].mxu0 %v5013
      %v5143 = vpop.f32.mrb[0].mxu0
      %v5144 = vadd.f32 0.0, %v5143
      %v5145 = vpop.f32.mrb[0].mxu0
      %v5146 = vpop.f32.mrb[0].mxu0
      %v5147 = vadd.f32 0.0, %v5146
      %v5148 = vpop.f32.mrb[0].mxu0
      %5149 = vmatprep.mubr.bf16.mxu0 0
      %5150 = vmatmul.mubr.bf16.gmra.mrb[0].mxu0 %v5016
      %v5151 = vpop.f32.mrb[0].mxu0
      %v5152 = vadd.f32 0.0, %v5151
      %v5153 = vpop.f32.mrb[0].mxu0
      %v5154 = vpop.f32.mrb[0].mxu0
      %v5155 = vadd.f32 0.0, %v5154
      %v5156 = vpop.f32.mrb[0].mxu0
      %5157 = vmatprep.mubr.bf16.mxu0 0
      %5158 = vmatmul.mubr.bf16.gmra.mrb[0].mxu0 %v5019
      %v5159 = vpop.f32.mrb[0].mxu0
      %v5160 = vadd.f32 0.0, %v5159
      %v5161 = vpop.f32.mrb[0].mxu0
      %v5162 = vpop.f32.mrb[0].mxu0
      %v5163 = vadd.f32 0.0, %v5162
      %v5164 = vpop.f32.mrb[0].mxu0
      %5165 = vmatprep.mubr.bf16.mxu0 0
      %5166 = vmatmul.mubr.bf16.gmra.mrb[0].mxu0 %v5022
      %v5167 = vpop.f32.mrb[0].mxu0
      %v5168 = vadd.f32 0.0, %v5167
      %v5169 = vpop.f32.mrb[0].mxu0
      %v5170 = vpop.f32.mrb[0].mxu0
      %v5171 = vadd.f32 0.0, %v5170
      %v5172 = vpop.f32.mrb[0].mxu0
      %5173 = vmatprep.mubr.bf16.mxu0 0
      %5174 = vmatmul.mubr.bf16.gmra.mrb[0].mxu0 %v5025
      %v5175 = vpop.f32.mrb[0].mxu0
      %v5176 = vadd.f32 0.0, %v5175
      %v5177 = vpop.f32.mrb[0].mxu0
      %v5178 = vpop.f32.mrb[0].mxu0
      %v5179 = vadd.f32 0.0, %v5178
      %v5180 = vpop.f32.mrb[0].mxu0
      %5181 = vmatprep.mubr.bf16.mxu0 0
      %5182 = vmatmul.mubr.bf16.gmra.mrb[0].mxu0 %v5028
      %v5183 = vpop.f32.mrb[0].mxu0
      %v5184 = vadd.f32 0.0, %v5183
      %v5185 = vpop.f32.mrb[0].mxu0
      %v5186 = vpop.f32.mrb[0].mxu0
      %v5187 = vadd.f32 0.0, %v5186
      %v5188 = vpop.f32.mrb[0].mxu0
      %5189 = vmatprep.mubr.bf16.mxu0 0
      %5190 = vmatmul.mubr.bf16.gmra.mrb[0].mxu0 %v5031
      %v5191 = vpop.f32.mrb[0].mxu0
      %v5192 = vadd.f32 0.0, %v5191
      %v5193 = vpop.f32.mrb[0].mxu0
      %v5194 = vpop.f32.mrb[0].mxu0
      %v5195 = vadd.f32 0.0, %v5194
      %v5196 = vpop.f32.mrb[0].mxu0
      %5197 = vdwg.mxu0
      %v5198 = vld [vmem:[%s13] sm:$0xf]
      %v5199 = vld [vmem:[%s13 + $0x4] sm:$0xf]
      %v5200 = vld [vmem:[%s13 + $0x8] sm:$0xf]
      %v5201 = vld [vmem:[%s13 + $0xc] sm:$0xf]
      %v5202 = vld [vmem:[%s13 + $0x10] sm:$0xf]
      %v5203 = vld [vmem:[%s13 + $0x14] sm:$0xf]
      %v5204 = vld [vmem:[%s13 + $0x18] sm:$0xf]
      %v5205 = vld [vmem:[%s13 + $0x1c] sm:$0xf]
      %v5206 = vld [vmem:[%s13 + $0x20] sm:$0xf]
      %v5207 = vld [vmem:[%s13 + $0x24] sm:$0xf]
      %v5208 = vld [vmem:[%s13 + $0x28] sm:$0x3]
      %v5220 = vunpack.c.l.b16 %v5198
      %v5221 = vunpack.c.l.b16 %v5199
      %v5222 = vunpack.c.l.b16 %v5200
      %v5223 = vunpack.c.l.b16 %v5201
      %v5224 = vunpack.c.l.b16 %v5202
      %v5225 = vunpack.c.l.b16 %v5203
      %v5226 = vunpack.c.l.b16 %v5204
      %v5227 = vunpack.c.l.b16 %v5205
      %v5228 = vunpack.c.l.b16 %v5206
      %v5229 = vunpack.c.l.b16 %v5207
      %v5230 = vunpack.c.l.b16 %v5208
      %v5231 = vpack.c.b16 %v5221, %v5220
      %v5232 = vpack.c.b16 %v5223, %v5222
      %v5233 = vpack.c.b16 %v5225, %v5224
      %v5234 = vpack.c.b16 %v5227, %v5226
      %v5235 = vpack.c.b16 %v5229, %v5228
      %v5236 = vpack.c.b16 %v5230, %v5230
      %v5243 = vsel %vm5033, %v5236, 0
      %5245 = vmatprep.subr.bf16.mxu0 0
      %5246 = vmatpush1.bf16.msra.mxu0 %v5231
      %5247 = vmatprep.subr.bf16.mxu0 0
      %5248 = vmatpush1.bf16.msra.mxu0 %v5232
      %5249 = vmatprep.subr.bf16.mxu0 0
      %5250 = vmatpush1.bf16.msra.mxu0 %v5233
      %5251 = vmatprep.subr.bf16.mxu0 0
      %5252 = vmatpush1.bf16.msra.mxu0 %v5234
      %5253 = vmatprep.subr.bf16.mxu0 0
      %5254 = vmatpush1.bf16.msra.mxu0 %v5235
      %5255 = vmatprep.subr.bf16.mxu0 0
      %5256 = vmatpush1.bf16.msra.mxu0 %v5243
      %5257 = vmatprep.subr.bf16.mxu0 0
      %5258 = vmatpush1.bf16.msra.mxu0 0
      %5259 = vmatprep.subr.bf16.mxu0 0
      %5260 = vmatpush1.bf16.msra.mxu0 0
      %5261 = vmatprep.subr.bf16.mxu0 0
      %5262 = vmatpush1.bf16.msra.mxu0 0
      %5263 = vmatprep.subr.bf16.mxu0 0
      %5264 = vmatpush1.bf16.msra.mxu0 0
      %5265 = vmatprep.subr.bf16.mxu0 0
      %5266 = vmatpush1.bf16.msra.mxu0 0
      %5267 = vmatprep.subr.bf16.mxu0 0
      %5268 = vmatpush1.bf16.msra.mxu0 0
      %5269 = vmatprep.subr.bf16.mxu0 0
      %5270 = vmatpush1.bf16.msra.mxu0 0
      %5271 = vmatprep.subr.bf16.mxu0 0
      %5272 = vmatpush1.bf16.msra.mxu0 0
      %5273 = vmatprep.subr.bf16.mxu0 0
      %5274 = vmatpush1.bf16.msra.mxu0 0
      %5275 = vmatprep.subr.bf16.mxu0 0
      %5276 = vmatpush1.bf16.msra.mxu0 0
      %5277 = vmatprep.mubr.bf16.mxu0 0
      %5278 = vmatmul.mubr.bf16.gmra.mrb[0].mxu0 %v4986
      %v5279 = vpop.f32.mrb[0].mxu0
      %v5280 = vadd.f32 0.0, %v5279
      %v5281 = vpop.f32.mrb[0].mxu0
      %v5282 = vpop.f32.mrb[0].mxu0
      %v5283 = vadd.f32 0.0, %v5282
      %v5284 = vpop.f32.mrb[0].mxu0
      %5285 = vmatprep.mubr.bf16.mxu0 0
      %5286 = vmatmul.mubr.bf16.gmra.mrb[0].mxu0 %v4989
      %v5287 = vpop.f32.mrb[0].mxu0
      %v5288 = vadd.f32 0.0, %v5287
      %v5289 = vpop.f32.mrb[0].mxu0
      %v5290 = vpop.f32.mrb[0].mxu0
      %v5291 = vadd.f32 0.0, %v5290
      %v5292 = vpop.f32.mrb[0].mxu0
      %5293 = vmatprep.mubr.bf16.mxu0 0
      %5294 = vmatmul.mubr.bf16.gmra.mrb[0].mxu0 %v4992
      %v5295 = vpop.f32.mrb[0].mxu0
      %v5296 = vadd.f32 0.0, %v5295
      %v5297 = vpop.f32.mrb[0].mxu0
      %v5298 = vpop.f32.mrb[0].mxu0
      %v5299 = vadd.f32 0.0, %v5298
      %v5300 = vpop.f32.mrb[0].mxu0
      %5301 = vmatprep.mubr.bf16.mxu0 0
      %5302 = vmatmul.mubr.bf16.gmra.mrb[0].mxu0 %v4995
      %v5303 = vpop.f32.mrb[0].mxu0
      %v5304 = vadd.f32 0.0, %v5303
      %v5305 = vpop.f32.mrb[0].mxu0
      %v5306 = vpop.f32.mrb[0].mxu0
      %v5307 = vadd.f32 0.0, %v5306
      %v5308 = vpop.f32.mrb[0].mxu0
      %5309 = vmatprep.mubr.bf16.mxu0 0
      %5310 = vmatmul.mubr.bf16.gmra.mrb[0].mxu0 %v4998
      %v5311 = vpop.f32.mrb[0].mxu0
      %v5312 = vadd.f32 0.0, %v5311
      %v5313 = vpop.f32.mrb[0].mxu0
      %v5314 = vpop.f32.mrb[0].mxu0
      %v5315 = vadd.f32 0.0, %v5314
      %v5316 = vpop.f32.mrb[0].mxu0
      %5317 = vmatprep.mubr.bf16.mxu0 0
      %5318 = vmatmul.mubr.bf16.gmra.mrb[0].mxu0 %v5001
      %v5319 = vpop.f32.mrb[0].mxu0
      %v5320 = vadd.f32 0.0, %v5319
      %v5321 = vpop.f32.mrb[0].mxu0
      %v5322 = vpop.f32.mrb[0].mxu0
      %v5323 = vadd.f32 0.0, %v5322
      %v5324 = vpop.f32.mrb[0].mxu0
      %5325 = vmatprep.mubr.bf16.mxu0 0
      %5326 = vmatmul.mubr.bf16.gmra.mrb[0].mxu0 %v5004
      %v5327 = vpop.f32.mrb[0].mxu0
      %v5328 = vadd.f32 0.0, %v5327
      %v5329 = vpop.f32.mrb[0].mxu0
      %v5330 = vpop.f32.mrb[0].mxu0
      %v5331 = vadd.f32 0.0, %v5330
      %v5332 = vpop.f32.mrb[0].mxu0
      %5333 = vmatprep.mubr.bf16.mxu0 0
      %5334 = vmatmul.mubr.bf16.gmra.mrb[0].mxu0 %v5007
      %v5335 = vpop.f32.mrb[0].mxu0
      %v5336 = vadd.f32 0.0, %v5335
      %v5337 = vpop.f32.mrb[0].mxu0
      %v5338 = vpop.f32.mrb[0].mxu0
      %v5339 = vadd.f32 0.0, %v5338
      %v5340 = vpop.f32.mrb[0].mxu0
      %5341 = vmatprep.mubr.bf16.mxu0 0
      %5342 = vmatmul.mubr.bf16.gmra.mrb[0].mxu0 %v5010
      %v5343 = vpop.f32.mrb[0].mxu0
      %v5344 = vadd.f32 0.0, %v5343
      %v5345 = vpop.f32.mrb[0].mxu0
      %v5346 = vpop.f32.mrb[0].mxu0
      %v5347 = vadd.f32 0.0, %v5346
      %v5348 = vpop.f32.mrb[0].mxu0
      %5349 = vmatprep.mubr.bf16.mxu0 0
      %5350 = vmatmul.mubr.bf16.gmra.mrb[0].mxu0 %v5013
      %v5351 = vpop.f32.mrb[0].mxu0
      %v5352 = vadd.f32 0.0, %v5351
      %v5353 = vpop.f32.mrb[0].mxu0
      %v5354 = vpop.f32.mrb[0].mxu0
      %v5355 = vadd.f32 0.0, %v5354
      %v5356 = vpop.f32.mrb[0].mxu0
      %5357 = vmatprep.mubr.bf16.mxu0 0
      %5358 = vmatmul.mubr.bf16.gmra.mrb[0].mxu0 %v5016
      %v5359 = vpop.f32.mrb[0].mxu0
      %v5360 = vadd.f32 0.0, %v5359
      %v5361 = vpop.f32.mrb[0].mxu0
      %v5362 = vpop.f32.mrb[0].mxu0
      %v5363 = vadd.f32 0.0, %v5362
      %v5364 = vpop.f32.mrb[0].mxu0
      %5365 = vmatprep.mubr.bf16.mxu0 0
      %5366 = vmatmul.mubr.bf16.gmra.mrb[0].mxu0 %v5019
      %v5367 = vpop.f32.mrb[0].mxu0
      %v5368 = vadd.f32 0.0, %v5367
      %v5369 = vpop.f32.mrb[0].mxu0
      %v5370 = vpop.f32.mrb[0].mxu0
      %v5371 = vadd.f32 0.0, %v5370
      %v5372 = vpop.f32.mrb[0].mxu0
      %5373 = vmatprep.mubr.bf16.mxu0 0
      %5374 = vmatmul.mubr.bf16.gmra.mrb[0].mxu0 %v5022
      %v5375 = vpop.f32.mrb[0].mxu0
      %v5376 = vadd.f32 0.0, %v5375
      %v5377 = vpop.f32.mrb[0].mxu0
      %v5378 = vpop.f32.mrb[0].mxu0
      %v5379 = vadd.f32 0.0, %v5378
      %v5380 = vpop.f32.mrb[0].mxu0
      %5381 = vmatprep.mubr.bf16.mxu0 0
      %5382 = vmatmul.mubr.bf16.gmra.mrb[0].mxu0 %v5025
      %v5383 = vpop.f32.mrb[0].mxu0
      %v5384 = vadd.f32 0.0, %v5383
      %v5385 = vpop.f32.mrb[0].mxu0
      %v5386 = vpop.f32.mrb[0].mxu0
      %v5387 = vadd.f32 0.0, %v5386
      %v5388 = vpop.f32.mrb[0].mxu0
      %5389 = vmatprep.mubr.bf16.mxu0 0
      %5390 = vmatmul.mubr.bf16.gmra.mrb[0].mxu0 %v5028
      %v5391 = vpop.f32.mrb[0].mxu0
      %v5392 = vadd.f32 0.0, %v5391
      %v5393 = vpop.f32.mrb[0].mxu0
      %v5394 = vpop.f32.mrb[0].mxu0
      %v5395 = vadd.f32 0.0, %v5394
      %v5396 = vpop.f32.mrb[0].mxu0
      %5397 = vmatprep.mubr.bf16.mxu0 0
      %5398 = vmatmul.mubr.bf16.gmra.mrb[0].mxu0 %v5031
      %v5399 = vpop.f32.mrb[0].mxu0
      %v5400 = vadd.f32 0.0, %v5399
      %v5401 = vpop.f32.mrb[0].mxu0
      %v5402 = vpop.f32.mrb[0].mxu0
      %v5403 = vadd.f32 0.0, %v5402
      %v5404 = vpop.f32.mrb[0].mxu0
      %5405 = vdwg.mxu0
      %v5406 = vmul.f32 %v5072, 0.70710677
      %v5407 = vmul.f32 %v5075, 0.70710677
      %v5408 = vmul.f32 %v5080, 0.70710677
      %v5409 = vmul.f32 %v5083, 0.70710677
      %v5410 = vmul.f32 %v5088, 0.70710677
      %v5411 = vmul.f32 %v5091, 0.70710677
      %v5412 = vmul.f32 %v5096, 0.70710677
      %v5413 = vmul.f32 %v5099, 0.70710677
      %v5414 = vmul.f32 %v5104, 0.70710677
      %v5415 = vmul.f32 %v5107, 0.70710677
      %v5416 = vmul.f32 %v5112, 0.70710677
      %v5417 = vmul.f32 %v5115, 0.70710677
      %v5418 = vmul.f32 %v5120, 0.70710677
      %v5419 = vmul.f32 %v5123, 0.70710677
      %v5420 = vmul.f32 %v5128, 0.70710677
      %v5421 = vmul.f32 %v5131, 0.70710677
      %v5422 = vmul.f32 %v5136, 0.70710677
      %v5423 = vmul.f32 %v5139, 0.70710677
      %v5424 = vmul.f32 %v5144, 0.70710677
      %v5425 = vmul.f32 %v5147, 0.70710677
      %v5426 = vmul.f32 %v5152, 0.70710677
      %v5427 = vmul.f32 %v5155, 0.70710677
      %v5428 = vmul.f32 %v5160, 0.70710677
      %v5429 = vmul.f32 %v5163, 0.70710677
      %v5430 = vmul.f32 %v5168, 0.70710677
      %v5431 = vmul.f32 %v5171, 0.70710677
      %v5432 = vmul.f32 %v5176, 0.70710677
      %v5433 = vmul.f32 %v5179, 0.70710677
      %v5434 = vmul.f32 %v5184, 0.70710677
      %v5435 = vmul.f32 %v5187, 0.70710677
      %v5436 = vmul.f32 %v5192, 0.70710677
      %v5437 = vmul.f32 %v5195, 0.70710677
      %v5438 = vand.u32 2147483647, %v5406
      %v5439 = vand.u32 2147483647, %v5407
      %v5440 = vand.u32 2147483647, %v5408
      %v5441 = vand.u32 2147483647, %v5409
      %v5442 = vand.u32 2147483647, %v5410
      %v5443 = vand.u32 2147483647, %v5411
      %v5444 = vand.u32 2147483647, %v5412
      %v5445 = vand.u32 2147483647, %v5413
      %v5446 = vand.u32 2147483647, %v5414
      %v5447 = vand.u32 2147483647, %v5415
      %v5448 = vand.u32 2147483647, %v5416
      %v5449 = vand.u32 2147483647, %v5417
      %v5450 = vand.u32 2147483647, %v5418
      %v5451 = vand.u32 2147483647, %v5419
      %v5452 = vand.u32 2147483647, %v5420
      %v5453 = vand.u32 2147483647, %v5421
      %v5454 = vand.u32 2147483647, %v5422
      %v5455 = vand.u32 2147483647, %v5423
      %v5456 = vand.u32 2147483647, %v5424
      %v5457 = vand.u32 2147483647, %v5425
      %v5458 = vand.u32 2147483647, %v5426
      %v5459 = vand.u32 2147483647, %v5427
      %v5460 = vand.u32 2147483647, %v5428
      %v5461 = vand.u32 2147483647, %v5429
      %v5462 = vand.u32 2147483647, %v5430
      %v5463 = vand.u32 2147483647, %v5431
      %v5464 = vand.u32 2147483647, %v5432
      %v5465 = vand.u32 2147483647, %v5433
      %v5466 = vand.u32 2147483647, %v5434
      %v5467 = vand.u32 2147483647, %v5435
      %v5468 = vand.u32 2147483647, %v5436
      %v5469 = vand.u32 2147483647, %v5437
      %v5470 = vmul.f32 %v5438, 0.3275911
      %v5471 = vmul.f32 %v5439, 0.3275911
      %v5472 = vmul.f32 %v5440, 0.3275911
      %v5473 = vmul.f32 %v5441, 0.3275911
      %v5474 = vmul.f32 %v5442, 0.3275911
      %v5475 = vmul.f32 %v5443, 0.3275911
      %v5476 = vmul.f32 %v5444, 0.3275911
      %v5477 = vmul.f32 %v5445, 0.3275911
      %v5478 = vmul.f32 %v5446, 0.3275911
      %v5479 = vmul.f32 %v5447, 0.3275911
      %v5480 = vmul.f32 %v5448, 0.3275911
      %v5481 = vmul.f32 %v5449, 0.3275911
      %v5482 = vmul.f32 %v5450, 0.3275911
      %v5483 = vmul.f32 %v5451, 0.3275911
      %v5484 = vmul.f32 %v5452, 0.3275911
      %v5485 = vmul.f32 %v5453, 0.3275911
      %v5486 = vmul.f32 %v5454, 0.3275911
      %v5487 = vmul.f32 %v5455, 0.3275911
      %v5488 = vmul.f32 %v5456, 0.3275911
      %v5489 = vmul.f32 %v5457, 0.3275911
      %v5490 = vmul.f32 %v5458, 0.3275911
      %v5491 = vmul.f32 %v5459, 0.3275911
      %v5492 = vmul.f32 %v5460, 0.3275911
      %v5493 = vmul.f32 %v5461, 0.3275911
      %v5494 = vmul.f32 %v5462, 0.3275911
      %v5495 = vmul.f32 %v5463, 0.3275911
      %v5496 = vmul.f32 %v5464, 0.3275911
      %v5497 = vmul.f32 %v5465, 0.3275911
      %v5498 = vmul.f32 %v5466, 0.3275911
      %v5499 = vmul.f32 %v5467, 0.3275911
      %v5500 = vmul.f32 %v5468, 0.3275911
      %v5501 = vmul.f32 %v5469, 0.3275911
      %v5502 = vadd.f32 %v5470, 1.0
      %v5503 = vadd.f32 %v5471, 1.0
      %v5504 = vadd.f32 %v5472, 1.0
      %v5505 = vadd.f32 %v5473, 1.0
      %v5506 = vadd.f32 %v5474, 1.0
      %v5507 = vadd.f32 %v5475, 1.0
      %v5508 = vadd.f32 %v5476, 1.0
      %v5509 = vadd.f32 %v5477, 1.0
      %v5510 = vadd.f32 %v5478, 1.0
      %v5511 = vadd.f32 %v5479, 1.0
      %v5512 = vadd.f32 %v5480, 1.0
      %v5513 = vadd.f32 %v5481, 1.0
      %v5514 = vadd.f32 %v5482, 1.0
      %v5515 = vadd.f32 %v5483, 1.0
      %v5516 = vadd.f32 %v5484, 1.0
      %v5517 = vadd.f32 %v5485, 1.0
      %v5518 = vadd.f32 %v5486, 1.0
      %v5519 = vadd.f32 %v5487, 1.0
      %v5520 = vadd.f32 %v5488, 1.0
      %v5521 = vadd.f32 %v5489, 1.0
      %v5522 = vadd.f32 %v5490, 1.0
      %v5523 = vadd.f32 %v5491, 1.0
      %v5524 = vadd.f32 %v5492, 1.0
      %v5525 = vadd.f32 %v5493, 1.0
      %v5526 = vadd.f32 %v5494, 1.0
      %v5527 = vadd.f32 %v5495, 1.0
      %v5528 = vadd.f32 %v5496, 1.0
      %v5529 = vadd.f32 %v5497, 1.0
      %v5530 = vadd.f32 %v5498, 1.0
      %v5531 = vadd.f32 %v5499, 1.0
      %v5532 = vadd.f32 %v5500, 1.0
      %v5533 = vadd.f32 %v5501, 1.0
      %v5534 = vrcp.pop %v5502
      %v5535 = vmul.f32 1.0, %v5534
      %v5536 = vrcp.pop %v5503
      %v5537 = vmul.f32 1.0, %v5536
      %v5538 = vrcp.pop %v5504
      %v5539 = vmul.f32 1.0, %v5538
      %v5540 = vrcp.pop %v5505
      %v5541 = vmul.f32 1.0, %v5540
      %v5542 = vrcp.pop %v5506
      %v5543 = vmul.f32 1.0, %v5542
      %v5544 = vrcp.pop %v5507
      %v5545 = vmul.f32 1.0, %v5544
      %v5546 = vrcp.pop %v5508
      %v5547 = vmul.f32 1.0, %v5546
      %v5548 = vrcp.pop %v5509
      %v5549 = vmul.f32 1.0, %v5548
      %v5550 = vrcp.pop %v5510
      %v5551 = vmul.f32 1.0, %v5550
      %v5552 = vrcp.pop %v5511
      %v5553 = vmul.f32 1.0, %v5552
      %v5554 = vrcp.pop %v5512
      %v5555 = vmul.f32 1.0, %v5554
      %v5556 = vrcp.pop %v5513
      %v5557 = vmul.f32 1.0, %v5556
      %v5558 = vrcp.pop %v5514
      %v5559 = vmul.f32 1.0, %v5558
      %v5560 = vrcp.pop %v5515
      %v5561 = vmul.f32 1.0, %v5560
      %v5562 = vrcp.pop %v5516
      %v5563 = vmul.f32 1.0, %v5562
      %v5564 = vrcp.pop %v5517
      %v5565 = vmul.f32 1.0, %v5564
      %v5566 = vrcp.pop %v5518
      %v5567 = vmul.f32 1.0, %v5566
      %v5568 = vrcp.pop %v5519
      %v5569 = vmul.f32 1.0, %v5568
      %v5570 = vrcp.pop %v5520
      %v5571 = vmul.f32 1.0, %v5570
      %v5572 = vrcp.pop %v5521
      %v5573 = vmul.f32 1.0, %v5572
      %v5574 = vrcp.pop %v5522
      %v5575 = vmul.f32 1.0, %v5574
      %v5576 = vrcp.pop %v5523
      %v5577 = vmul.f32 1.0, %v5576
      %v5578 = vrcp.pop %v5524
      %v5579 = vmul.f32 1.0, %v5578
      %v5580 = vrcp.pop %v5525
      %v5581 = vmul.f32 1.0, %v5580
      %v5582 = vrcp.pop %v5526
      %v5583 = vmul.f32 1.0, %v5582
      %v5584 = vrcp.pop %v5527
      %v5585 = vmul.f32 1.0, %v5584
      %v5586 = vrcp.pop %v5528
      %v5587 = vmul.f32 1.0, %v5586
      %v5588 = vrcp.pop %v5529
      %v5589 = vmul.f32 1.0, %v5588
      %v5590 = vrcp.pop %v5530
      %v5591 = vmul.f32 1.0, %v5590
      %v5592 = vrcp.pop %v5531
      %v5593 = vmul.f32 1.0, %v5592
      %v5594 = vrcp.pop %v5532
      %v5595 = vmul.f32 1.0, %v5594
      %v5596 = vrcp.pop %v5533
      %v5597 = vmul.f32 1.0, %v5596
      %v5598 = vmul.f32 %v5535, 1.0614054
      %v5599 = vmul.f32 %v5537, 1.0614054
      %v5600 = vmul.f32 %v5539, 1.0614054
      %v5601 = vmul.f32 %v5541, 1.0614054
      %v5602 = vmul.f32 %v5543, 1.0614054
      %v5603 = vmul.f32 %v5545, 1.0614054
      %v5604 = vmul.f32 %v5547, 1.0614054
      %v5605 = vmul.f32 %v5549, 1.0614054
      %v5606 = vmul.f32 %v5551, 1.0614054
      %v5607 = vmul.f32 %v5553, 1.0614054
      %v5608 = vmul.f32 %v5555, 1.0614054
      %v5609 = vmul.f32 %v5557, 1.0614054
      %v5610 = vmul.f32 %v5559, 1.0614054
      %v5611 = vmul.f32 %v5561, 1.0614054
      %v5612 = vmul.f32 %v5563, 1.0614054
      %v5613 = vmul.f32 %v5565, 1.0614054
      %v5614 = vmul.f32 %v5567, 1.0614054
      %v5615 = vmul.f32 %v5569, 1.0614054
      %v5616 = vmul.f32 %v5571, 1.0614054
      %v5617 = vmul.f32 %v5573, 1.0614054
      %v5618 = vmul.f32 %v5575, 1.0614054
      %v5619 = vmul.f32 %v5577, 1.0614054
      %v5620 = vmul.f32 %v5579, 1.0614054
      %v5621 = vmul.f32 %v5581, 1.0614054
      %v5622 = vmul.f32 %v5583, 1.0614054
      %v5623 = vmul.f32 %v5585, 1.0614054
      %v5624 = vmul.f32 %v5587, 1.0614054
      %v5625 = vmul.f32 %v5589, 1.0614054
      %v5626 = vmul.f32 %v5591, 1.0614054
      %v5627 = vmul.f32 %v5593, 1.0614054
      %v5628 = vmul.f32 %v5595, 1.0614054
      %v5629 = vmul.f32 %v5597, 1.0614054
      %v5630 = vadd.f32 %v5598, -1.4531521
      %v5631 = vadd.f32 %v5599, -1.4531521
      %v5632 = vadd.f32 %v5600, -1.4531521
      %v5633 = vadd.f32 %v5601, -1.4531521
      %v5634 = vadd.f32 %v5602, -1.4531521
      %v5635 = vadd.f32 %v5603, -1.4531521
      %v5636 = vadd.f32 %v5604, -1.4531521
      %v5637 = vadd.f32 %v5605, -1.4531521
      %v5638 = vadd.f32 %v5606, -1.4531521
      %v5639 = vadd.f32 %v5607, -1.4531521
      %v5640 = vadd.f32 %v5608, -1.4531521
      %v5641 = vadd.f32 %v5609, -1.4531521
      %v5642 = vadd.f32 %v5610, -1.4531521
      %v5643 = vadd.f32 %v5611, -1.4531521
      %v5644 = vadd.f32 %v5612, -1.4531521
      %v5645 = vadd.f32 %v5613, -1.4531521
      %v5646 = vadd.f32 %v5614, -1.4531521
      %v5647 = vadd.f32 %v5615, -1.4531521
      %v5648 = vadd.f32 %v5616, -1.4531521
      %v5649 = vadd.f32 %v5617, -1.4531521
      %v5650 = vadd.f32 %v5618, -1.4531521
      %v5651 = vadd.f32 %v5619, -1.4531521
      %v5652 = vadd.f32 %v5620, -1.4531521
      %v5653 = vadd.f32 %v5621, -1.4531521
      %v5654 = vadd.f32 %v5622, -1.4531521
      %v5655 = vadd.f32 %v5623, -1.4531521
      %v5656 = vadd.f32 %v5624, -1.4531521
      %v5657 = vadd.f32 %v5625, -1.4531521
      %v5658 = vadd.f32 %v5626, -1.4531521
      %v5659 = vadd.f32 %v5627, -1.4531521
      %v5660 = vadd.f32 %v5628, -1.4531521
      %v5661 = vadd.f32 %v5629, -1.4531521
      %v5662 = vmul.f32 %v5630, %v5535
      %v5663 = vmul.f32 %v5631, %v5537
      %v5664 = vmul.f32 %v5632, %v5539
      %v5665 = vmul.f32 %v5633, %v5541
      %v5666 = vmul.f32 %v5634, %v5543
      %v5667 = vmul.f32 %v5635, %v5545
      %v5668 = vmul.f32 %v5636, %v5547
      %v5669 = vmul.f32 %v5637, %v5549
      %v5670 = vmul.f32 %v5638, %v5551
      %v5671 = vmul.f32 %v5639, %v5553
      %v5672 = vmul.f32 %v5640, %v5555
      %v5673 = vmul.f32 %v5641, %v5557
      %v5674 = vmul.f32 %v5642, %v5559
      %v5675 = vmul.f32 %v5643, %v5561
      %v5676 = vmul.f32 %v5644, %v5563
      %v5677 = vmul.f32 %v5645, %v5565
      %v5678 = vmul.f32 %v5646, %v5567
      %v5679 = vmul.f32 %v5647, %v5569
      %v5680 = vmul.f32 %v5648, %v5571
      %v5681 = vmul.f32 %v5649, %v5573
      %v5682 = vmul.f32 %v5650, %v5575
      %v5683 = vmul.f32 %v5651, %v5577
      %v5684 = vmul.f32 %v5652, %v5579
      %v5685 = vmul.f32 %v5653, %v5581
      %v5686 = vmul.f32 %v5654, %v5583
      %v5687 = vmul.f32 %v5655, %v5585
      %v5688 = vmul.f32 %v5656, %v5587
      %v5689 = vmul.f32 %v5657, %v5589
      %v5690 = vmul.f32 %v5658, %v5591
      %v5691 = vmul.f32 %v5659, %v5593
      %v5692 = vmul.f32 %v5660, %v5595
      %v5693 = vmul.f32 %v5661, %v5597
      %v5694 = vadd.f32 %v5662, 1.4214138
      %v5695 = vadd.f32 %v5663, 1.4214138
      %v5696 = vadd.f32 %v5664, 1.4214138
      %v5697 = vadd.f32 %v5665, 1.4214138
      %v5698 = vadd.f32 %v5666, 1.4214138
      %v5699 = vadd.f32 %v5667, 1.4214138
      %v5700 = vadd.f32 %v5668, 1.4214138
      %v5701 = vadd.f32 %v5669, 1.4214138
      %v5702 = vadd.f32 %v5670, 1.4214138
      %v5703 = vadd.f32 %v5671, 1.4214138
      %v5704 = vadd.f32 %v5672, 1.4214138
      %v5705 = vadd.f32 %v5673, 1.4214138
      %v5706 = vadd.f32 %v5674, 1.4214138
      %v5707 = vadd.f32 %v5675, 1.4214138
      %v5708 = vadd.f32 %v5676, 1.4214138
      %v5709 = vadd.f32 %v5677, 1.4214138
      %v5710 = vadd.f32 %v5678, 1.4214138
      %v5711 = vadd.f32 %v5679, 1.4214138
      %v5712 = vadd.f32 %v5680, 1.4214138
      %v5713 = vadd.f32 %v5681, 1.4214138
      %v5714 = vadd.f32 %v5682, 1.4214138
      %v5715 = vadd.f32 %v5683, 1.4214138
      %v5716 = vadd.f32 %v5684, 1.4214138
      %v5717 = vadd.f32 %v5685, 1.4214138
      %v5718 = vadd.f32 %v5686, 1.4214138
      %v5719 = vadd.f32 %v5687, 1.4214138
      %v5720 = vadd.f32 %v5688, 1.4214138
      %v5721 = vadd.f32 %v5689, 1.4214138
      %v5722 = vadd.f32 %v5690, 1.4214138
      %v5723 = vadd.f32 %v5691, 1.4214138
      %v5724 = vadd.f32 %v5692, 1.4214138
      %v5725 = vadd.f32 %v5693, 1.4214138
      %v5726 = vmul.f32 %v5694, %v5535
      %v5727 = vmul.f32 %v5695, %v5537
      %v5728 = vmul.f32 %v5696, %v5539
      %v5729 = vmul.f32 %v5697, %v5541
      %v5730 = vmul.f32 %v5698, %v5543
      %v5731 = vmul.f32 %v5699, %v5545
      %v5732 = vmul.f32 %v5700, %v5547
      %v5733 = vmul.f32 %v5701, %v5549
      %v5734 = vmul.f32 %v5702, %v5551
      %v5735 = vmul.f32 %v5703, %v5553
      %v5736 = vmul.f32 %v5704, %v5555
      %v5737 = vmul.f32 %v5705, %v5557
      %v5738 = vmul.f32 %v5706, %v5559
      %v5739 = vmul.f32 %v5707, %v5561
      %v5740 = vmul.f32 %v5708, %v5563
      %v5741 = vmul.f32 %v5709, %v5565
      %v5742 = vmul.f32 %v5710, %v5567
      %v5743 = vmul.f32 %v5711, %v5569
      %v5744 = vmul.f32 %v5712, %v5571
      %v5745 = vmul.f32 %v5713, %v5573
      %v5746 = vmul.f32 %v5714, %v5575
      %v5747 = vmul.f32 %v5715, %v5577
      %v5748 = vmul.f32 %v5716, %v5579
      %v5749 = vmul.f32 %v5717, %v5581
      %v5750 = vmul.f32 %v5718, %v5583
      %v5751 = vmul.f32 %v5719, %v5585
      %v5752 = vmul.f32 %v5720, %v5587
      %v5753 = vmul.f32 %v5721, %v5589
      %v5754 = vmul.f32 %v5722, %v5591
      %v5755 = vmul.f32 %v5723, %v5593
      %v5756 = vmul.f32 %v5724, %v5595
      %v5757 = vmul.f32 %v5725, %v5597
      %v5758 = vadd.f32 %v5726, -0.28449672
      %v5759 = vadd.f32 %v5727, -0.28449672
      %v5760 = vadd.f32 %v5728, -0.28449672
      %v5761 = vadd.f32 %v5729, -0.28449672
      %v5762 = vadd.f32 %v5730, -0.28449672
      %v5763 = vadd.f32 %v5731, -0.28449672
      %v5764 = vadd.f32 %v5732, -0.28449672
      %v5765 = vadd.f32 %v5733, -0.28449672
      %v5766 = vadd.f32 %v5734, -0.28449672
      %v5767 = vadd.f32 %v5735, -0.28449672
      %v5768 = vadd.f32 %v5736, -0.28449672
      %v5769 = vadd.f32 %v5737, -0.28449672
      %v5770 = vadd.f32 %v5738, -0.28449672
      %v5771 = vadd.f32 %v5739, -0.28449672
      %v5772 = vadd.f32 %v5740, -0.28449672
      %v5773 = vadd.f32 %v5741, -0.28449672
      %v5774 = vadd.f32 %v5742, -0.28449672
      %v5775 = vadd.f32 %v5743, -0.28449672
      %v5776 = vadd.f32 %v5744, -0.28449672
      %v5777 = vadd.f32 %v5745, -0.28449672
      %v5778 = vadd.f32 %v5746, -0.28449672
      %v5779 = vadd.f32 %v5747, -0.28449672
      %v5780 = vadd.f32 %v5748, -0.28449672
      %v5781 = vadd.f32 %v5749, -0.28449672
      %v5782 = vadd.f32 %v5750, -0.28449672
      %v5783 = vadd.f32 %v5751, -0.28449672
      %v5784 = vadd.f32 %v5752, -0.28449672
      %v5785 = vadd.f32 %v5753, -0.28449672
      %v5786 = vadd.f32 %v5754, -0.28449672
      %v5787 = vadd.f32 %v5755, -0.28449672
      %v5788 = vadd.f32 %v5756, -0.28449672
      %v5789 = vadd.f32 %v5757, -0.28449672
      %v5790 = vmul.f32 %v5758, %v5535
      %v5791 = vmul.f32 %v5759, %v5537
      %v5792 = vmul.f32 %v5760, %v5539
      %v5793 = vmul.f32 %v5761, %v5541
      %v5794 = vmul.f32 %v5762, %v5543
      %v5795 = vmul.f32 %v5763, %v5545
      %v5796 = vmul.f32 %v5764, %v5547
      %v5797 = vmul.f32 %v5765, %v5549
      %v5798 = vmul.f32 %v5766, %v5551
      %v5799 = vmul.f32 %v5767, %v5553
      %v5800 = vmul.f32 %v5768, %v5555
      %v5801 = vmul.f32 %v5769, %v5557
      %v5802 = vmul.f32 %v5770, %v5559
      %v5803 = vmul.f32 %v5771, %v5561
      %v5804 = vmul.f32 %v5772, %v5563
      %v5805 = vmul.f32 %v5773, %v5565
      %v5806 = vmul.f32 %v5774, %v5567
      %v5807 = vmul.f32 %v5775, %v5569
      %v5808 = vmul.f32 %v5776, %v5571
      %v5809 = vmul.f32 %v5777, %v5573
      %v5810 = vmul.f32 %v5778, %v5575
      %v5811 = vmul.f32 %v5779, %v5577
      %v5812 = vmul.f32 %v5780, %v5579
      %v5813 = vmul.f32 %v5781, %v5581
      %v5814 = vmul.f32 %v5782, %v5583
      %v5815 = vmul.f32 %v5783, %v5585
      %v5816 = vmul.f32 %v5784, %v5587
      %v5817 = vmul.f32 %v5785, %v5589
      %v5818 = vmul.f32 %v5786, %v5591
      %v5819 = vmul.f32 %v5787, %v5593
      %v5820 = vmul.f32 %v5788, %v5595
      %v5821 = vmul.f32 %v5789, %v5597
      %v5822 = vadd.f32 %v5790, 0.2548296
      %v5823 = vadd.f32 %v5791, 0.2548296
      %v5824 = vadd.f32 %v5792, 0.2548296
      %v5825 = vadd.f32 %v5793, 0.2548296
      %v5826 = vadd.f32 %v5794, 0.2548296
      %v5827 = vadd.f32 %v5795, 0.2548296
      %v5828 = vadd.f32 %v5796, 0.2548296
      %v5829 = vadd.f32 %v5797, 0.2548296
      %v5830 = vadd.f32 %v5798, 0.2548296
      %v5831 = vadd.f32 %v5799, 0.2548296
      %v5832 = vadd.f32 %v5800, 0.2548296
      %v5833 = vadd.f32 %v5801, 0.2548296
      %v5834 = vadd.f32 %v5802, 0.2548296
      %v5835 = vadd.f32 %v5803, 0.2548296
      %v5836 = vadd.f32 %v5804, 0.2548296
      %v5837 = vadd.f32 %v5805, 0.2548296
      %v5838 = vadd.f32 %v5806, 0.2548296
      %v5839 = vadd.f32 %v5807, 0.2548296
      %v5840 = vadd.f32 %v5808, 0.2548296
      %v5841 = vadd.f32 %v5809, 0.2548296
      %v5842 = vadd.f32 %v5810, 0.2548296
      %v5843 = vadd.f32 %v5811, 0.2548296
      %v5844 = vadd.f32 %v5812, 0.2548296
      %v5845 = vadd.f32 %v5813, 0.2548296
      %v5846 = vadd.f32 %v5814, 0.2548296
      %v5847 = vadd.f32 %v5815, 0.2548296
      %v5848 = vadd.f32 %v5816, 0.2548296
      %v5849 = vadd.f32 %v5817, 0.2548296
      %v5850 = vadd.f32 %v5818, 0.2548296
      %v5851 = vadd.f32 %v5819, 0.2548296
      %v5852 = vadd.f32 %v5820, 0.2548296
      %v5853 = vadd.f32 %v5821, 0.2548296
      %v5854 = vmul.f32 %v5822, %v5535
      %v5855 = vmul.f32 %v5823, %v5537
      %v5856 = vmul.f32 %v5824, %v5539
      %v5857 = vmul.f32 %v5825, %v5541
      %v5858 = vmul.f32 %v5826, %v5543
      %v5859 = vmul.f32 %v5827, %v5545
      %v5860 = vmul.f32 %v5828, %v5547
      %v5861 = vmul.f32 %v5829, %v5549
      %v5862 = vmul.f32 %v5830, %v5551
      %v5863 = vmul.f32 %v5831, %v5553
      %v5864 = vmul.f32 %v5832, %v5555
      %v5865 = vmul.f32 %v5833, %v5557
      %v5866 = vmul.f32 %v5834, %v5559
      %v5867 = vmul.f32 %v5835, %v5561
      %v5868 = vmul.f32 %v5836, %v5563
      %v5869 = vmul.f32 %v5837, %v5565
      %v5870 = vmul.f32 %v5838, %v5567
      %v5871 = vmul.f32 %v5839, %v5569
      %v5872 = vmul.f32 %v5840, %v5571
      %v5873 = vmul.f32 %v5841, %v5573
      %v5874 = vmul.f32 %v5842, %v5575
      %v5875 = vmul.f32 %v5843, %v5577
      %v5876 = vmul.f32 %v5844, %v5579
      %v5877 = vmul.f32 %v5845, %v5581
      %v5878 = vmul.f32 %v5846, %v5583
      %v5879 = vmul.f32 %v5847, %v5585
      %v5880 = vmul.f32 %v5848, %v5587
      %v5881 = vmul.f32 %v5849, %v5589
      %v5882 = vmul.f32 %v5850, %v5591
      %v5883 = vmul.f32 %v5851, %v5593
      %v5884 = vmul.f32 %v5852, %v5595
      %v5885 = vmul.f32 %v5853, %v5597
      %v5886 = vsub.f32 0.0, %v5438
      %v5887 = vsub.f32 0.0, %v5439
      %v5888 = vsub.f32 0.0, %v5440
      %v5889 = vsub.f32 0.0, %v5441
      %v5890 = vsub.f32 0.0, %v5442
      %v5891 = vsub.f32 0.0, %v5443
      %v5892 = vsub.f32 0.0, %v5444
      %v5893 = vsub.f32 0.0, %v5445
      %v5894 = vsub.f32 0.0, %v5446
      %v5895 = vsub.f32 0.0, %v5447
      %v5896 = vsub.f32 0.0, %v5448
      %v5897 = vsub.f32 0.0, %v5449
      %v5898 = vsub.f32 0.0, %v5450
      %v5899 = vsub.f32 0.0, %v5451
      %v5900 = vsub.f32 0.0, %v5452
      %v5901 = vsub.f32 0.0, %v5453
      %v5902 = vsub.f32 0.0, %v5454
      %v5903 = vsub.f32 0.0, %v5455
      %v5904 = vsub.f32 0.0, %v5456
      %v5905 = vsub.f32 0.0, %v5457
      %v5906 = vsub.f32 0.0, %v5458
      %v5907 = vsub.f32 0.0, %v5459
      %v5908 = vsub.f32 0.0, %v5460
      %v5909 = vsub.f32 0.0, %v5461
      %v5910 = vsub.f32 0.0, %v5462
      %v5911 = vsub.f32 0.0, %v5463
      %v5912 = vsub.f32 0.0, %v5464
      %v5913 = vsub.f32 0.0, %v5465
      %v5914 = vsub.f32 0.0, %v5466
      %v5915 = vsub.f32 0.0, %v5467
      %v5916 = vsub.f32 0.0, %v5468
      %v5917 = vsub.f32 0.0, %v5469
      %v5918 = vmul.f32 %v5886, %v5438
      %v5919 = vmul.f32 %v5887, %v5439
      %v5920 = vmul.f32 %v5888, %v5440
      %v5921 = vmul.f32 %v5889, %v5441
      %v5922 = vmul.f32 %v5890, %v5442
      %v5923 = vmul.f32 %v5891, %v5443
      %v5924 = vmul.f32 %v5892, %v5444
      %v5925 = vmul.f32 %v5893, %v5445
      %v5926 = vmul.f32 %v5894, %v5446
      %v5927 = vmul.f32 %v5895, %v5447
      %v5928 = vmul.f32 %v5896, %v5448
      %v5929 = vmul.f32 %v5897, %v5449
      %v5930 = vmul.f32 %v5898, %v5450
      %v5931 = vmul.f32 %v5899, %v5451
      %v5932 = vmul.f32 %v5900, %v5452
      %v5933 = vmul.f32 %v5901, %v5453
      %v5934 = vmul.f32 %v5902, %v5454
      %v5935 = vmul.f32 %v5903, %v5455
      %v5936 = vmul.f32 %v5904, %v5456
      %v5937 = vmul.f32 %v5905, %v5457
      %v5938 = vmul.f32 %v5906, %v5458
      %v5939 = vmul.f32 %v5907, %v5459
      %v5940 = vmul.f32 %v5908, %v5460
      %v5941 = vmul.f32 %v5909, %v5461
      %v5942 = vmul.f32 %v5910, %v5462
      %v5943 = vmul.f32 %v5911, %v5463
      %v5944 = vmul.f32 %v5912, %v5464
      %v5945 = vmul.f32 %v5913, %v5465
      %v5946 = vmul.f32 %v5914, %v5466
      %v5947 = vmul.f32 %v5915, %v5467
      %v5948 = vmul.f32 %v5916, %v5468
      %v5949 = vmul.f32 %v5917, %v5469
      %v5950 = vmul.f32 %v5918, 1.442695
      %v5951 = vpow.pop %v5950
      %v5952 = vmul.f32 %v5919, 1.442695
      %v5953 = vpow.pop %v5952
      %v5954 = vmul.f32 %v5920, 1.442695
      %v5955 = vpow.pop %v5954
      %v5956 = vmul.f32 %v5921, 1.442695
      %v5957 = vpow.pop %v5956
      %v5958 = vmul.f32 %v5922, 1.442695
      %v5959 = vpow.pop %v5958
      %v5960 = vmul.f32 %v5923, 1.442695
      %v5961 = vpow.pop %v5960
      %v5962 = vmul.f32 %v5924, 1.442695
      %v5963 = vpow.pop %v5962
      %v5964 = vmul.f32 %v5925, 1.442695
      %v5965 = vpow.pop %v5964
      %v5966 = vmul.f32 %v5926, 1.442695
      %v5967 = vpow.pop %v5966
      %v5968 = vmul.f32 %v5927, 1.442695
      %v5969 = vpow.pop %v5968
      %v5970 = vmul.f32 %v5928, 1.442695
      %v5971 = vpow.pop %v5970
      %v5972 = vmul.f32 %v5929, 1.442695
      %v5973 = vpow.pop %v5972
      %v5974 = vmul.f32 %v5930, 1.442695
      %v5975 = vpow.pop %v5974
      %v5976 = vmul.f32 %v5931, 1.442695
      %v5977 = vpow.pop %v5976
      %v5978 = vmul.f32 %v5932, 1.442695
      %v5979 = vpow.pop %v5978
      %v5980 = vmul.f32 %v5933, 1.442695
      %v5981 = vpow.pop %v5980
      %v5982 = vmul.f32 %v5934, 1.442695
      %v5983 = vpow.pop %v5982
      %v5984 = vmul.f32 %v5935, 1.442695
      %v5985 = vpow.pop %v5984
      %v5986 = vmul.f32 %v5936, 1.442695
      %v5987 = vpow.pop %v5986
      %v5988 = vmul.f32 %v5937, 1.442695
      %v5989 = vpow.pop %v5988
      %v5990 = vmul.f32 %v5938, 1.442695
      %v5991 = vpow.pop %v5990
      %v5992 = vmul.f32 %v5939, 1.442695
      %v5993 = vpow.pop %v5992
      %v5994 = vmul.f32 %v5940, 1.442695
      %v5995 = vpow.pop %v5994
      %v5996 = vmul.f32 %v5941, 1.442695
      %v5997 = vpow.pop %v5996
      %v5998 = vmul.f32 %v5942, 1.442695
      %v5999 = vpow.pop %v5998
      %v6000 = vmul.f32 %v5943, 1.442695
      %v6001 = vpow.pop %v6000
      %v6002 = vmul.f32 %v5944, 1.442695
      %v6003 = vpow.pop %v6002
      %v6004 = vmul.f32 %v5945, 1.442695
      %v6005 = vpow.pop %v6004
      %v6006 = vmul.f32 %v5946, 1.442695
      %v6007 = vpow.pop %v6006
      %v6008 = vmul.f32 %v5947, 1.442695
      %v6009 = vpow.pop %v6008
      %v6010 = vmul.f32 %v5948, 1.442695
      %v6011 = vpow.pop %v6010
      %v6012 = vmul.f32 %v5949, 1.442695
      %v6013 = vpow.pop %v6012
      %v6014 = vmul.f32 %v5854, %v5951
      %v6015 = vmul.f32 %v5855, %v5953
      %v6016 = vmul.f32 %v5856, %v5955
      %v6017 = vmul.f32 %v5857, %v5957
      %v6018 = vmul.f32 %v5858, %v5959
      %v6019 = vmul.f32 %v5859, %v5961
      %v6020 = vmul.f32 %v5860, %v5963
      %v6021 = vmul.f32 %v5861, %v5965
      %v6022 = vmul.f32 %v5862, %v5967
      %v6023 = vmul.f32 %v5863, %v5969
      %v6024 = vmul.f32 %v5864, %v5971
      %v6025 = vmul.f32 %v5865, %v5973
      %v6026 = vmul.f32 %v5866, %v5975
      %v6027 = vmul.f32 %v5867, %v5977
      %v6028 = vmul.f32 %v5868, %v5979
      %v6029 = vmul.f32 %v5869, %v5981
      %v6030 = vmul.f32 %v5870, %v5983
      %v6031 = vmul.f32 %v5871, %v5985
      %v6032 = vmul.f32 %v5872, %v5987
      %v6033 = vmul.f32 %v5873, %v5989
      %v6034 = vmul.f32 %v5874, %v5991
      %v6035 = vmul.f32 %v5875, %v5993
      %v6036 = vmul.f32 %v5876, %v5995
      %v6037 = vmul.f32 %v5877, %v5997
      %v6038 = vmul.f32 %v5878, %v5999
      %v6039 = vmul.f32 %v5879, %v6001
      %v6040 = vmul.f32 %v5880, %v6003
      %v6041 = vmul.f32 %v5881, %v6005
      %v6042 = vmul.f32 %v5882, %v6007
      %v6043 = vmul.f32 %v5883, %v6009
      %v6044 = vmul.f32 %v5884, %v6011
      %v6045 = vmul.f32 %v5885, %v6013
      %v6046 = vsub.f32 1.0, %v6014
      %v6047 = vsub.f32 1.0, %v6015
      %v6048 = vsub.f32 1.0, %v6016
      %v6049 = vsub.f32 1.0, %v6017
      %v6050 = vsub.f32 1.0, %v6018
      %v6051 = vsub.f32 1.0, %v6019
      %v6052 = vsub.f32 1.0, %v6020
      %v6053 = vsub.f32 1.0, %v6021
      %v6054 = vsub.f32 1.0, %v6022
      %v6055 = vsub.f32 1.0, %v6023
      %v6056 = vsub.f32 1.0, %v6024
      %v6057 = vsub.f32 1.0, %v6025
      %v6058 = vsub.f32 1.0, %v6026
      %v6059 = vsub.f32 1.0, %v6027
      %v6060 = vsub.f32 1.0, %v6028
      %v6061 = vsub.f32 1.0, %v6029
      %v6062 = vsub.f32 1.0, %v6030
      %v6063 = vsub.f32 1.0, %v6031
      %v6064 = vsub.f32 1.0, %v6032
      %v6065 = vsub.f32 1.0, %v6033
      %v6066 = vsub.f32 1.0, %v6034
      %v6067 = vsub.f32 1.0, %v6035
      %v6068 = vsub.f32 1.0, %v6036
      %v6069 = vsub.f32 1.0, %v6037
      %v6070 = vsub.f32 1.0, %v6038
      %v6071 = vsub.f32 1.0, %v6039
      %v6072 = vsub.f32 1.0, %v6040
      %v6073 = vsub.f32 1.0, %v6041
      %v6074 = vsub.f32 1.0, %v6042
      %v6075 = vsub.f32 1.0, %v6043
      %v6076 = vsub.f32 1.0, %v6044
      %v6077 = vsub.f32 1.0, %v6045
      %vm6078 = vcmp.ge.f32.partialorder %v5406, 0.0
      %vm6079 = vcmp.ge.f32.partialorder %v5407, 0.0
      %vm6080 = vcmp.ge.f32.partialorder %v5408, 0.0
      %vm6081 = vcmp.ge.f32.partialorder %v5409, 0.0
      %vm6082 = vcmp.ge.f32.partialorder %v5410, 0.0
      %vm6083 = vcmp.ge.f32.partialorder %v5411, 0.0
      %vm6084 = vcmp.ge.f32.partialorder %v5412, 0.0
      %vm6085 = vcmp.ge.f32.partialorder %v5413, 0.0
      %vm6086 = vcmp.ge.f32.partialorder %v5414, 0.0
      %vm6087 = vcmp.ge.f32.partialorder %v5415, 0.0
      %vm6088 = vcmp.ge.f32.partialorder %v5416, 0.0
      %vm6089 = vcmp.ge.f32.partialorder %v5417, 0.0
      %vm6090 = vcmp.ge.f32.partialorder %v5418, 0.0
      %vm6091 = vcmp.ge.f32.partialorder %v5419, 0.0
      %vm6092 = vcmp.ge.f32.partialorder %v5420, 0.0
      %vm6093 = vcmp.ge.f32.partialorder %v5421, 0.0
      %vm6094 = vcmp.ge.f32.partialorder %v5422, 0.0
      %vm6095 = vcmp.ge.f32.partialorder %v5423, 0.0
      %vm6096 = vcmp.ge.f32.partialorder %v5424, 0.0
      %vm6097 = vcmp.ge.f32.partialorder %v5425, 0.0
      %vm6098 = vcmp.ge.f32.partialorder %v5426, 0.0
      %vm6099 = vcmp.ge.f32.partialorder %v5427, 0.0
      %vm6100 = vcmp.ge.f32.partialorder %v5428, 0.0
      %vm6101 = vcmp.ge.f32.partialorder %v5429, 0.0
      %vm6102 = vcmp.ge.f32.partialorder %v5430, 0.0
      %vm6103 = vcmp.ge.f32.partialorder %v5431, 0.0
      %vm6104 = vcmp.ge.f32.partialorder %v5432, 0.0
      %vm6105 = vcmp.ge.f32.partialorder %v5433, 0.0
      %vm6106 = vcmp.ge.f32.partialorder %v5434, 0.0
      %vm6107 = vcmp.ge.f32.partialorder %v5435, 0.0
      %vm6108 = vcmp.ge.f32.partialorder %v5436, 0.0
      %vm6109 = vcmp.ge.f32.partialorder %v5437, 0.0
      %v6110 = vsub.f32 0.0, %v6046
      %v6111 = vsub.f32 0.0, %v6047
      %v6112 = vsub.f32 0.0, %v6048
      %v6113 = vsub.f32 0.0, %v6049
      %v6114 = vsub.f32 0.0, %v6050
      %v6115 = vsub.f32 0.0, %v6051
      %v6116 = vsub.f32 0.0, %v6052
      %v6117 = vsub.f32 0.0, %v6053
      %v6118 = vsub.f32 0.0, %v6054
      %v6119 = vsub.f32 0.0, %v6055
      %v6120 = vsub.f32 0.0, %v6056
      %v6121 = vsub.f32 0.0, %v6057
      %v6122 = vsub.f32 0.0, %v6058
      %v6123 = vsub.f32 0.0, %v6059
      %v6124 = vsub.f32 0.0, %v6060
      %v6125 = vsub.f32 0.0, %v6061
      %v6126 = vsub.f32 0.0, %v6062
      %v6127 = vsub.f32 0.0, %v6063
      %v6128 = vsub.f32 0.0, %v6064
      %v6129 = vsub.f32 0.0, %v6065
      %v6130 = vsub.f32 0.0, %v6066
      %v6131 = vsub.f32 0.0, %v6067
      %v6132 = vsub.f32 0.0, %v6068
      %v6133 = vsub.f32 0.0, %v6069
      %v6134 = vsub.f32 0.0, %v6070
      %v6135 = vsub.f32 0.0, %v6071
      %v6136 = vsub.f32 0.0, %v6072
      %v6137 = vsub.f32 0.0, %v6073
      %v6138 = vsub.f32 0.0, %v6074
      %v6139 = vsub.f32 0.0, %v6075
      %v6140 = vsub.f32 0.0, %v6076
      %v6141 = vsub.f32 0.0, %v6077
      %v6142 = vsel %vm6078, %v6046, %v6110
      %v6143 = vsel %vm6079, %v6047, %v6111
      %v6144 = vsel %vm6080, %v6048, %v6112
      %v6145 = vsel %vm6081, %v6049, %v6113
      %v6146 = vsel %vm6082, %v6050, %v6114
      %v6147 = vsel %vm6083, %v6051, %v6115
      %v6148 = vsel %vm6084, %v6052, %v6116
      %v6149 = vsel %vm6085, %v6053, %v6117
      %v6150 = vsel %vm6086, %v6054, %v6118
      %v6151 = vsel %vm6087, %v6055, %v6119
      %v6152 = vsel %vm6088, %v6056, %v6120
      %v6153 = vsel %vm6089, %v6057, %v6121
      %v6154 = vsel %vm6090, %v6058, %v6122
      %v6155 = vsel %vm6091, %v6059, %v6123
      %v6156 = vsel %vm6092, %v6060, %v6124
      %v6157 = vsel %vm6093, %v6061, %v6125
      %v6158 = vsel %vm6094, %v6062, %v6126
      %v6159 = vsel %vm6095, %v6063, %v6127
      %v6160 = vsel %vm6096, %v6064, %v6128
      %v6161 = vsel %vm6097, %v6065, %v6129
      %v6162 = vsel %vm6098, %v6066, %v6130
      %v6163 = vsel %vm6099, %v6067, %v6131
      %v6164 = vsel %vm6100, %v6068, %v6132
      %v6165 = vsel %vm6101, %v6069, %v6133
      %v6166 = vsel %vm6102, %v6070, %v6134
      %v6167 = vsel %vm6103, %v6071, %v6135
      %v6168 = vsel %vm6104, %v6072, %v6136
      %v6169 = vsel %vm6105, %v6073, %v6137
      %v6170 = vsel %vm6106, %v6074, %v6138
      %v6171 = vsel %vm6107, %v6075, %v6139
      %v6172 = vsel %vm6108, %v6076, %v6140
      %v6173 = vsel %vm6109, %v6077, %v6141
      %v6174 = vmul.f32 %v5072, 0.5
      %v6175 = vmul.f32 %v5075, 0.5
      %v6176 = vmul.f32 %v5080, 0.5
      %v6177 = vmul.f32 %v5083, 0.5
      %v6178 = vmul.f32 %v5088, 0.5
      %v6179 = vmul.f32 %v5091, 0.5
      %v6180 = vmul.f32 %v5096, 0.5
      %v6181 = vmul.f32 %v5099, 0.5
      %v6182 = vmul.f32 %v5104, 0.5
      %v6183 = vmul.f32 %v5107, 0.5
      %v6184 = vmul.f32 %v5112, 0.5
      %v6185 = vmul.f32 %v5115, 0.5
      %v6186 = vmul.f32 %v5120, 0.5
      %v6187 = vmul.f32 %v5123, 0.5
      %v6188 = vmul.f32 %v5128, 0.5
      %v6189 = vmul.f32 %v5131, 0.5
      %v6190 = vmul.f32 %v5136, 0.5
      %v6191 = vmul.f32 %v5139, 0.5
      %v6192 = vmul.f32 %v5144, 0.5
      %v6193 = vmul.f32 %v5147, 0.5
      %v6194 = vmul.f32 %v5152, 0.5
      %v6195 = vmul.f32 %v5155, 0.5
      %v6196 = vmul.f32 %v5160, 0.5
      %v6197 = vmul.f32 %v5163, 0.5
      %v6198 = vmul.f32 %v5168, 0.5
      %v6199 = vmul.f32 %v5171, 0.5
      %v6200 = vmul.f32 %v5176, 0.5
      %v6201 = vmul.f32 %v5179, 0.5
      %v6202 = vmul.f32 %v5184, 0.5
      %v6203 = vmul.f32 %v5187, 0.5
      %v6204 = vmul.f32 %v5192, 0.5
      %v6205 = vmul.f32 %v5195, 0.5
      %v6206 = vadd.f32 %v6142, 1.0
      %v6207 = vadd.f32 %v6143, 1.0
      %v6208 = vadd.f32 %v6144, 1.0
      %v6209 = vadd.f32 %v6145, 1.0
      %v6210 = vadd.f32 %v6146, 1.0
      %v6211 = vadd.f32 %v6147, 1.0
      %v6212 = vadd.f32 %v6148, 1.0
      %v6213 = vadd.f32 %v6149, 1.0
      %v6214 = vadd.f32 %v6150, 1.0
      %v6215 = vadd.f32 %v6151, 1.0
      %v6216 = vadd.f32 %v6152, 1.0
      %v6217 = vadd.f32 %v6153, 1.0
      %v6218 = vadd.f32 %v6154, 1.0
      %v6219 = vadd.f32 %v6155, 1.0
      %v6220 = vadd.f32 %v6156, 1.0
      %v6221 = vadd.f32 %v6157, 1.0
      %v6222 = vadd.f32 %v6158, 1.0
      %v6223 = vadd.f32 %v6159, 1.0
      %v6224 = vadd.f32 %v6160, 1.0
      %v6225 = vadd.f32 %v6161, 1.0
      %v6226 = vadd.f32 %v6162, 1.0
      %v6227 = vadd.f32 %v6163, 1.0
      %v6228 = vadd.f32 %v6164, 1.0
      %v6229 = vadd.f32 %v6165, 1.0
      %v6230 = vadd.f32 %v6166, 1.0
      %v6231 = vadd.f32 %v6167, 1.0
      %v6232 = vadd.f32 %v6168, 1.0
      %v6233 = vadd.f32 %v6169, 1.0
      %v6234 = vadd.f32 %v6170, 1.0
      %v6235 = vadd.f32 %v6171, 1.0
      %v6236 = vadd.f32 %v6172, 1.0
      %v6237 = vadd.f32 %v6173, 1.0
      %v6238 = vmul.f32 %v6174, %v6206
      %v6239 = vmul.f32 %v6175, %v6207
      %v6240 = vmul.f32 %v6176, %v6208
      %v6241 = vmul.f32 %v6177, %v6209
      %v6242 = vmul.f32 %v6178, %v6210
      %v6243 = vmul.f32 %v6179, %v6211
      %v6244 = vmul.f32 %v6180, %v6212
      %v6245 = vmul.f32 %v6181, %v6213
      %v6246 = vmul.f32 %v6182, %v6214
      %v6247 = vmul.f32 %v6183, %v6215
      %v6248 = vmul.f32 %v6184, %v6216
      %v6249 = vmul.f32 %v6185, %v6217
      %v6250 = vmul.f32 %v6186, %v6218
      %v6251 = vmul.f32 %v6187, %v6219
      %v6252 = vmul.f32 %v6188, %v6220
      %v6253 = vmul.f32 %v6189, %v6221
      %v6254 = vmul.f32 %v6190, %v6222
      %v6255 = vmul.f32 %v6191, %v6223
      %v6256 = vmul.f32 %v6192, %v6224
      %v6257 = vmul.f32 %v6193, %v6225
      %v6258 = vmul.f32 %v6194, %v6226
      %v6259 = vmul.f32 %v6195, %v6227
      %v6260 = vmul.f32 %v6196, %v6228
      %v6261 = vmul.f32 %v6197, %v6229
      %v6262 = vmul.f32 %v6198, %v6230
      %v6263 = vmul.f32 %v6199, %v6231
      %v6264 = vmul.f32 %v6200, %v6232
      %v6265 = vmul.f32 %v6201, %v6233
      %v6266 = vmul.f32 %v6202, %v6234
      %v6267 = vmul.f32 %v6203, %v6235
      %v6268 = vmul.f32 %v6204, %v6236
      %v6269 = vmul.f32 %v6205, %v6237
      %v6270 = vmul.f32 %v6238, %v5280
      %v6271 = vmul.f32 %v6239, %v5283
      %v6272 = vmul.f32 %v6240, %v5288
      %v6273 = vmul.f32 %v6241, %v5291
      %v6274 = vmul.f32 %v6242, %v5296
      %v6275 = vmul.f32 %v6243, %v5299
      %v6276 = vmul.f32 %v6244, %v5304
      %v6277 = vmul.f32 %v6245, %v5307
      %v6278 = vmul.f32 %v6246, %v5312
      %v6279 = vmul.f32 %v6247, %v5315
      %v6280 = vmul.f32 %v6248, %v5320
      %v6281 = vmul.f32 %v6249, %v5323
      %v6282 = vmul.f32 %v6250, %v5328
      %v6283 = vmul.f32 %v6251, %v5331
      %v6284 = vmul.f32 %v6252, %v5336
      %v6285 = vmul.f32 %v6253, %v5339
      %v6286 = vmul.f32 %v6254, %v5344
      %v6287 = vmul.f32 %v6255, %v5347
      %v6288 = vmul.f32 %v6256, %v5352
      %v6289 = vmul.f32 %v6257, %v5355
      %v6290 = vmul.f32 %v6258, %v5360
      %v6291 = vmul.f32 %v6259, %v5363
      %v6292 = vmul.f32 %v6260, %v5368
      %v6293 = vmul.f32 %v6261, %v5371
      %v6294 = vmul.f32 %v6262, %v5376
      %v6295 = vmul.f32 %v6263, %v5379
      %v6296 = vmul.f32 %v6264, %v5384
      %v6297 = vmul.f32 %v6265, %v5387
      %v6298 = vmul.f32 %v6266, %v5392
      %v6299 = vmul.f32 %v6267, %v5395
      %v6300 = vmul.f32 %v6268, %v5400
      %v6301 = vmul.f32 %v6269, %v5403
      %v6302 = vpack.c.bf16 %v6271, %v6270
      %v6303 = vpack.c.bf16 %v6273, %v6272
      %v6304 = vpack.c.bf16 %v6275, %v6274
      %v6305 = vpack.c.bf16 %v6277, %v6276
      %v6306 = vpack.c.bf16 %v6279, %v6278
      %v6307 = vpack.c.bf16 %v6281, %v6280
      %v6308 = vpack.c.bf16 %v6283, %v6282
      %v6309 = vpack.c.bf16 %v6285, %v6284
      %v6310 = vpack.c.bf16 %v6287, %v6286
      %v6311 = vpack.c.bf16 %v6289, %v6288
      %v6312 = vpack.c.bf16 %v6291, %v6290
      %v6313 = vpack.c.bf16 %v6293, %v6292
      %v6314 = vpack.c.bf16 %v6295, %v6294
      %v6315 = vpack.c.bf16 %v6297, %v6296
      %v6316 = vpack.c.bf16 %v6299, %v6298
      %v6317 = vpack.c.bf16 %v6301, %v6300
      %v6318 = vld [vmem:[%s14] sm:$0xf]
      %v6319 = vld [vmem:[%s14 + $0x4] sm:$0xf]
      %v6320 = vld [vmem:[%s14 + $0x8] sm:$0xf]
      %v6321 = vld [vmem:[%s14 + $0xc] sm:$0xf]
      %v6322 = vld [vmem:[%s14 + $0x10] sm:$0xf]
      %v6323 = vld [vmem:[%s14 + $0x14] sm:$0x1]
      %v6330 = vunpack.c.l.b16 %v6318
      %v6331 = vunpack.c.l.b16 %v6319
      %v6332 = vunpack.c.l.b16 %v6320
      %v6333 = vunpack.c.l.b16 %v6321
      %v6334 = vunpack.c.l.b16 %v6322
      %v6335 = vunpack.c.l.b16 %v6323
      %v6336 = vpack.c.b16 %v6331, %v6330
      %v6337 = vpack.c.b16 %v6333, %v6332
      %v6338 = vpack.c.b16 %v6335, %v6334
      %vm6341 = vcmask 343040
      %v6343 = vsel %vm6341, %v6302, 0
      %v6346 = vsel %vm6341, %v6303, 0
      %v6349 = vsel %vm6341, %v6304, 0
      %v6352 = vsel %vm6341, %v6305, 0
      %v6355 = vsel %vm6341, %v6306, 0
      %v6358 = vsel %vm6341, %v6307, 0
      %v6361 = vsel %vm6341, %v6308, 0
      %v6364 = vsel %vm6341, %v6309, 0
      %v6367 = vsel %vm6341, %v6310, 0
      %v6370 = vsel %vm6341, %v6311, 0
      %v6373 = vsel %vm6341, %v6312, 0
      %v6376 = vsel %vm6341, %v6313, 0
      %v6379 = vsel %vm6341, %v6314, 0
      %v6382 = vsel %vm6341, %v6315, 0
      %v6385 = vsel %vm6341, %v6316, 0
      %v6388 = vsel %vm6341, %v6317, 0
      %vm6390 = vcmask 1044480
      %v6392 = vsel %vm6390, %v6338, 0
      %6394 = vmatprep.subr.bf16.mxu0 0
      %6395 = vmatpush1.bf16.msra.mxu0 %v6336
      %6396 = vmatprep.subr.bf16.mxu0 0
      %6397 = vmatpush1.bf16.msra.mxu0 %v6337
      %6398 = vmatprep.subr.bf16.mxu0 0
      %6399 = vmatpush1.bf16.msra.mxu0 %v6392
      %6400 = vmatprep.subr.bf16.mxu0 0
      %6401 = vmatpush1.bf16.msra.mxu0 0
      %6402 = vmatprep.subr.bf16.mxu0 0
      %6403 = vmatpush1.bf16.msra.mxu0 0
      %6404 = vmatprep.subr.bf16.mxu0 0
      %6405 = vmatpush1.bf16.msra.mxu0 0
      %6406 = vmatprep.subr.bf16.mxu0 0
      %6407 = vmatpush1.bf16.msra.mxu0 0
      %6408 = vmatprep.subr.bf16.mxu0 0
      %6409 = vmatpush1.bf16.msra.mxu0 0
      %6410 = vmatprep.subr.bf16.mxu0 0
      %6411 = vmatpush1.bf16.msra.mxu0 0
      %6412 = vmatprep.subr.bf16.mxu0 0
      %6413 = vmatpush1.bf16.msra.mxu0 0
      %6414 = vmatprep.subr.bf16.mxu0 0
      %6415 = vmatpush1.bf16.msra.mxu0 0
      %6416 = vmatprep.subr.bf16.mxu0 0
      %6417 = vmatpush1.bf16.msra.mxu0 0
      %6418 = vmatprep.subr.bf16.mxu0 0
      %6419 = vmatpush1.bf16.msra.mxu0 0
      %6420 = vmatprep.subr.bf16.mxu0 0
      %6421 = vmatpush1.bf16.msra.mxu0 0
      %6422 = vmatprep.subr.bf16.mxu0 0
      %6423 = vmatpush1.bf16.msra.mxu0 0
      %6424 = vmatprep.subr.bf16.mxu0 0
      %6425 = vmatpush1.bf16.msra.mxu0 0
      %6426 = vmatprep.mubr.bf16.mxu0 0
      %6427 = vmatmul.mubr.bf16.gmra.mrb[0].mxu0 %v6343
      %v6428 = vpop.f32.mrb[0].mxu0
      %v6429 = vadd.f32 0.0, %v6428
      %v6430 = vpop.f32.mrb[0].mxu0
      %v6431 = vpop.f32.mrb[0].mxu0
      %v6432 = vadd.f32 0.0, %v6431
      %v6433 = vpop.f32.mrb[0].mxu0
      %6434 = vmatprep.mubr.bf16.mxu0 0
      %6435 = vmatmul.mubr.bf16.gmra.mrb[0].mxu0 %v6346
      %v6436 = vpop.f32.mrb[0].mxu0
      %v6437 = vadd.f32 0.0, %v6436
      %v6438 = vpop.f32.mrb[0].mxu0
      %v6439 = vpop.f32.mrb[0].mxu0
      %v6440 = vadd.f32 0.0, %v6439
      %v6441 = vpop.f32.mrb[0].mxu0
      %6442 = vmatprep.mubr.bf16.mxu0 0
      %6443 = vmatmul.mubr.bf16.gmra.mrb[0].mxu0 %v6349
      %v6444 = vpop.f32.mrb[0].mxu0
      %v6445 = vadd.f32 0.0, %v6444
      %v6446 = vpop.f32.mrb[0].mxu0
      %v6447 = vpop.f32.mrb[0].mxu0
      %v6448 = vadd.f32 0.0, %v6447
      %v6449 = vpop.f32.mrb[0].mxu0
      %6450 = vmatprep.mubr.bf16.mxu0 0
      %6451 = vmatmul.mubr.bf16.gmra.mrb[0].mxu0 %v6352
      %v6452 = vpop.f32.mrb[0].mxu0
      %v6453 = vadd.f32 0.0, %v6452
      %v6454 = vpop.f32.mrb[0].mxu0
      %v6455 = vpop.f32.mrb[0].mxu0
      %v6456 = vadd.f32 0.0, %v6455
      %v6457 = vpop.f32.mrb[0].mxu0
      %6458 = vmatprep.mubr.bf16.mxu0 0
      %6459 = vmatmul.mubr.bf16.gmra.mrb[0].mxu0 %v6355
      %v6460 = vpop.f32.mrb[0].mxu0
      %v6461 = vadd.f32 0.0, %v6460
      %v6462 = vpop.f32.mrb[0].mxu0
      %v6463 = vpop.f32.mrb[0].mxu0
      %v6464 = vadd.f32 0.0, %v6463
      %v6465 = vpop.f32.mrb[0].mxu0
      %6466 = vmatprep.mubr.bf16.mxu0 0
      %6467 = vmatmul.mubr.bf16.gmra.mrb[0].mxu0 %v6358
      %v6468 = vpop.f32.mrb[0].mxu0
      %v6469 = vadd.f32 0.0, %v6468
      %v6470 = vpop.f32.mrb[0].mxu0
      %v6471 = vpop.f32.mrb[0].mxu0
      %v6472 = vadd.f32 0.0, %v6471
      %v6473 = vpop.f32.mrb[0].mxu0
      %6474 = vmatprep.mubr.bf16.mxu0 0
      %6475 = vmatmul.mubr.bf16.gmra.mrb[0].mxu0 %v6361
      %v6476 = vpop.f32.mrb[0].mxu0
      %v6477 = vadd.f32 0.0, %v6476
      %v6478 = vpop.f32.mrb[0].mxu0
      %v6479 = vpop.f32.mrb[0].mxu0
      %v6480 = vadd.f32 0.0, %v6479
      %v6481 = vpop.f32.mrb[0].mxu0
      %6482 = vmatprep.mubr.bf16.mxu0 0
      %6483 = vmatmul.mubr.bf16.gmra.mrb[0].mxu0 %v6364
      %v6484 = vpop.f32.mrb[0].mxu0
      %v6485 = vadd.f32 0.0, %v6484
      %v6486 = vpop.f32.mrb[0].mxu0
      %v6487 = vpop.f32.mrb[0].mxu0
      %v6488 = vadd.f32 0.0, %v6487
      %v6489 = vpop.f32.mrb[0].mxu0
      %6490 = vmatprep.mubr.bf16.mxu0 0
      %6491 = vmatmul.mubr.bf16.gmra.mrb[0].mxu0 %v6367
      %v6492 = vpop.f32.mrb[0].mxu0
      %v6493 = vadd.f32 0.0, %v6492
      %v6494 = vpop.f32.mrb[0].mxu0
      %v6495 = vpop.f32.mrb[0].mxu0
      %v6496 = vadd.f32 0.0, %v6495
      %v6497 = vpop.f32.mrb[0].mxu0
      %6498 = vmatprep.mubr.bf16.mxu0 0
      %6499 = vmatmul.mubr.bf16.gmra.mrb[0].mxu0 %v6370
      %v6500 = vpop.f32.mrb[0].mxu0
      %v6501 = vadd.f32 0.0, %v6500
      %v6502 = vpop.f32.mrb[0].mxu0
      %v6503 = vpop.f32.mrb[0].mxu0
      %v6504 = vadd.f32 0.0, %v6503
      %v6505 = vpop.f32.mrb[0].mxu0
      %6506 = vmatprep.mubr.bf16.mxu0 0
      %6507 = vmatmul.mubr.bf16.gmra.mrb[0].mxu0 %v6373
      %v6508 = vpop.f32.mrb[0].mxu0
      %v6509 = vadd.f32 0.0, %v6508
      %v6510 = vpop.f32.mrb[0].mxu0
      %v6511 = vpop.f32.mrb[0].mxu0
      %v6512 = vadd.f32 0.0, %v6511
      %v6513 = vpop.f32.mrb[0].mxu0
      %6514 = vmatprep.mubr.bf16.mxu0 0
      %6515 = vmatmul.mubr.bf16.gmra.mrb[0].mxu0 %v6376
      %v6516 = vpop.f32.mrb[0].mxu0
      %v6517 = vadd.f32 0.0, %v6516
      %v6518 = vpop.f32.mrb[0].mxu0
      %v6519 = vpop.f32.mrb[0].mxu0
      %v6520 = vadd.f32 0.0, %v6519
      %v6521 = vpop.f32.mrb[0].mxu0
      %6522 = vmatprep.mubr.bf16.mxu0 0
      %6523 = vmatmul.mubr.bf16.gmra.mrb[0].mxu0 %v6379
      %v6524 = vpop.f32.mrb[0].mxu0
      %v6525 = vadd.f32 0.0, %v6524
      %v6526 = vpop.f32.mrb[0].mxu0
      %v6527 = vpop.f32.mrb[0].mxu0
      %v6528 = vadd.f32 0.0, %v6527
      %v6529 = vpop.f32.mrb[0].mxu0
      %6530 = vmatprep.mubr.bf16.mxu0 0
      %6531 = vmatmul.mubr.bf16.gmra.mrb[0].mxu0 %v6382
      %v6532 = vpop.f32.mrb[0].mxu0
      %v6533 = vadd.f32 0.0, %v6532
      %v6534 = vpop.f32.mrb[0].mxu0
      %v6535 = vpop.f32.mrb[0].mxu0
      %v6536 = vadd.f32 0.0, %v6535
      %v6537 = vpop.f32.mrb[0].mxu0
      %6538 = vmatprep.mubr.bf16.mxu0 0
      %6539 = vmatmul.mubr.bf16.gmra.mrb[0].mxu0 %v6385
      %v6540 = vpop.f32.mrb[0].mxu0
      %v6541 = vadd.f32 0.0, %v6540
      %v6542 = vpop.f32.mrb[0].mxu0
      %v6543 = vpop.f32.mrb[0].mxu0
      %v6544 = vadd.f32 0.0, %v6543
      %v6545 = vpop.f32.mrb[0].mxu0
      %6546 = vmatprep.mubr.bf16.mxu0 0
      %6547 = vmatmul.mubr.bf16.gmra.mrb[0].mxu0 %v6388
      %v6548 = vpop.f32.mrb[0].mxu0
      %v6549 = vadd.f32 0.0, %v6548
      %v6550 = vpop.f32.mrb[0].mxu0
      %v6551 = vpop.f32.mrb[0].mxu0
      %v6552 = vadd.f32 0.0, %v6551
      %v6553 = vpop.f32.mrb[0].mxu0
      %6554 = vdwg.mxu0
      %v6555 = vadd.f32 %v1229, %v6429
      %v6556 = vadd.f32 %v1230, %v6432
      %v6557 = vadd.f32 %v1231, %v6437
      %v6558 = vadd.f32 %v1232, %v6440
      %v6559 = vadd.f32 %v1233, %v6445
      %v6560 = vadd.f32 %v1234, %v6448
      %v6561 = vadd.f32 %v1235, %v6453
      %v6562 = vadd.f32 %v1236, %v6456
      %v6563 = vadd.f32 %v1237, %v6461
      %v6564 = vadd.f32 %v1238, %v6464
      %v6565 = vadd.f32 %v1239, %v6469
      %v6566 = vadd.f32 %v1240, %v6472
      %v6567 = vadd.f32 %v1241, %v6477
      %v6568 = vadd.f32 %v1242, %v6480
      %v6569 = vadd.f32 %v1243, %v6485
      %v6570 = vadd.f32 %v1244, %v6488
      %v6571 = vadd.f32 %v1245, %v6493
      %v6572 = vadd.f32 %v1246, %v6496
      %v6573 = vadd.f32 %v1247, %v6501
      %v6574 = vadd.f32 %v1248, %v6504
      %v6575 = vadd.f32 %v1249, %v6509
      %v6576 = vadd.f32 %v1250, %v6512
      %v6577 = vadd.f32 %v1251, %v6517
      %v6578 = vadd.f32 %v1252, %v6520
      %v6579 = vadd.f32 %v1253, %v6525
      %v6580 = vadd.f32 %v1254, %v6528
      %v6581 = vadd.f32 %v1255, %v6533
      %v6582 = vadd.f32 %v1256, %v6536
      %v6583 = vadd.f32 %v1257, %v6541
      %v6584 = vadd.f32 %v1258, %v6544
      %v6585 = vadd.f32 %v1259, %v6549
      %v6586 = vadd.f32 %v1260, %v6552
      %v6587 = vpack.c.bf16 %v6556, %v6555
      %v6588 = vpack.c.bf16 %v6558, %v6557
      %v6589 = vpack.c.bf16 %v6560, %v6559
      %v6590 = vpack.c.bf16 %v6562, %v6561
      %v6591 = vpack.c.bf16 %v6564, %v6563
      %v6592 = vpack.c.bf16 %v6566, %v6565
      %v6593 = vpack.c.bf16 %v6568, %v6567
      %v6594 = vpack.c.bf16 %v6570, %v6569
      %v6595 = vpack.c.bf16 %v6572, %v6571
      %v6596 = vpack.c.bf16 %v6574, %v6573
      %v6597 = vpack.c.bf16 %v6576, %v6575
      %v6598 = vpack.c.bf16 %v6578, %v6577
      %v6599 = vpack.c.bf16 %v6580, %v6579
      %v6600 = vpack.c.bf16 %v6582, %v6581
      %v6601 = vpack.c.bf16 %v6584, %v6583
      %v6602 = vpack.c.bf16 %v6586, %v6585
      %v6603 = vld [vmem:[%s15] sm:$0xf]
      %v6604 = vld [vmem:[%s15 + $0x4] sm:$0xf]
      %v6605 = vld [vmem:[%s16] sm:$0x1]
      %v6607 = vlaneseq
      %v6608 = vshrl.u32 %v6607, 7
      %v6609 = vsub.s32 0, %v6608
      %v6610 = vrot.slane %v6605, %v6609
      %v6614 = vunpack.c.l.b16 %v6603
      %v6615 = vunpack.c.l.b16 %v6604
      %v6616 = vpack.c.b16 %v6615, %v6614
      %v6619 = vsel %vm1261, %v6587, 0
      %v6622 = vsel %vm1261, %v6588, 0
      %v6625 = vsel %vm1261, %v6589, 0
      %v6628 = vsel %vm1261, %v6590, 0
      %v6631 = vsel %vm1261, %v6591, 0
      %v6634 = vsel %vm1261, %v6592, 0
      %v6637 = vsel %vm1261, %v6593, 0
      %v6640 = vsel %vm1261, %v6594, 0
      %v6643 = vsel %vm1261, %v6595, 0
      %v6646 = vsel %vm1261, %v6596, 0
      %v6649 = vsel %vm1261, %v6597, 0
      %v6652 = vsel %vm1261, %v6598, 0
      %v6655 = vsel %vm1261, %v6599, 0
      %v6658 = vsel %vm1261, %v6600, 0
      %v6661 = vsel %vm1261, %v6601, 0
      %v6664 = vsel %vm1261, %v6602, 0
      %6666 = vmatprep.subr.bf16.mxu0 0
      %6667 = vmatpush1.bf16.msra.mxu0 %v6616
      %6668 = vmatprep.subr.bf16.mxu0 0
      %6669 = vmatpush1.bf16.msra.mxu0 0
      %6670 = vmatprep.subr.bf16.mxu0 0
      %6671 = vmatpush1.bf16.msra.mxu0 0
      %6672 = vmatprep.subr.bf16.mxu0 0
      %6673 = vmatpush1.bf16.msra.mxu0 0
      %6674 = vmatprep.subr.bf16.mxu0 0
      %6675 = vmatpush1.bf16.msra.mxu0 0
      %6676 = vmatprep.subr.bf16.mxu0 0
      %6677 = vmatpush1.bf16.msra.mxu0 0
      %6678 = vmatprep.subr.bf16.mxu0 0
      %6679 = vmatpush1.bf16.msra.mxu0 0
      %6680 = vmatprep.subr.bf16.mxu0 0
      %6681 = vmatpush1.bf16.msra.mxu0 0
      %6682 = vmatprep.subr.bf16.mxu0 0
      %6683 = vmatpush1.bf16.msra.mxu0 0
      %6684 = vmatprep.subr.bf16.mxu0 0
      %6685 = vmatpush1.bf16.msra.mxu0 0
      %6686 = vmatprep.subr.bf16.mxu0 0
      %6687 = vmatpush1.bf16.msra.mxu0 0
      %6688 = vmatprep.subr.bf16.mxu0 0
      %6689 = vmatpush1.bf16.msra.mxu0 0
      %6690 = vmatprep.subr.bf16.mxu0 0
      %6691 = vmatpush1.bf16.msra.mxu0 0
      %6692 = vmatprep.subr.bf16.mxu0 0
      %6693 = vmatpush1.bf16.msra.mxu0 0
      %6694 = vmatprep.subr.bf16.mxu0 0
      %6695 = vmatpush1.bf16.msra.mxu0 0
      %6696 = vmatprep.subr.bf16.mxu0 0
      %6697 = vmatpush1.bf16.msra.mxu0 0
      %6698 = vmatprep.mubr.bf16.mxu0 0
      %6699 = vmatmul.mubr.bf16.gmra.mrb[0].mxu0 %v6619
      %v6700 = vpop.f32.mrb[0].mxu0
      %v6701 = vadd.f32 %v6610, %v6700
      %v6702 = vpop.f32.mrb[0].mxu0
      %v6703 = vpop.f32.mrb[0].mxu0
      %v6704 = vadd.f32 %v6610, %v6703
      %v6705 = vpop.f32.mrb[0].mxu0
      %6706 = vmatprep.mubr.bf16.mxu0 0
      %6707 = vmatmul.mubr.bf16.gmra.mrb[0].mxu0 %v6622
      %v6708 = vpop.f32.mrb[0].mxu0
      %v6709 = vadd.f32 %v6610, %v6708
      %v6710 = vpop.f32.mrb[0].mxu0
      %v6711 = vpop.f32.mrb[0].mxu0
      %v6712 = vadd.f32 %v6610, %v6711
      %v6713 = vpop.f32.mrb[0].mxu0
      %6714 = vmatprep.mubr.bf16.mxu0 0
      %6715 = vmatmul.mubr.bf16.gmra.mrb[0].mxu0 %v6625
      %v6716 = vpop.f32.mrb[0].mxu0
      %v6717 = vadd.f32 %v6610, %v6716
      %v6718 = vpop.f32.mrb[0].mxu0
      %v6719 = vpop.f32.mrb[0].mxu0
      %v6720 = vadd.f32 %v6610, %v6719
      %v6721 = vpop.f32.mrb[0].mxu0
      %6722 = vmatprep.mubr.bf16.mxu0 0
      %6723 = vmatmul.mubr.bf16.gmra.mrb[0].mxu0 %v6628
      %v6724 = vpop.f32.mrb[0].mxu0
      %v6725 = vadd.f32 %v6610, %v6724
      %v6726 = vpop.f32.mrb[0].mxu0
      %v6727 = vpop.f32.mrb[0].mxu0
      %v6728 = vadd.f32 %v6610, %v6727
      %v6729 = vpop.f32.mrb[0].mxu0
      %6730 = vmatprep.mubr.bf16.mxu0 0
      %6731 = vmatmul.mubr.bf16.gmra.mrb[0].mxu0 %v6631
      %v6732 = vpop.f32.mrb[0].mxu0
      %v6733 = vadd.f32 %v6610, %v6732
      %v6734 = vpop.f32.mrb[0].mxu0
      %v6735 = vpop.f32.mrb[0].mxu0
      %v6736 = vadd.f32 %v6610, %v6735
      %v6737 = vpop.f32.mrb[0].mxu0
      %6738 = vmatprep.mubr.bf16.mxu0 0
      %6739 = vmatmul.mubr.bf16.gmra.mrb[0].mxu0 %v6634
      %v6740 = vpop.f32.mrb[0].mxu0
      %v6741 = vadd.f32 %v6610, %v6740
      %v6742 = vpop.f32.mrb[0].mxu0
      %v6743 = vpop.f32.mrb[0].mxu0
      %v6744 = vadd.f32 %v6610, %v6743
      %v6745 = vpop.f32.mrb[0].mxu0
      %6746 = vmatprep.mubr.bf16.mxu0 0
      %6747 = vmatmul.mubr.bf16.gmra.mrb[0].mxu0 %v6637
      %v6748 = vpop.f32.mrb[0].mxu0
      %v6749 = vadd.f32 %v6610, %v6748
      %v6750 = vpop.f32.mrb[0].mxu0
      %v6751 = vpop.f32.mrb[0].mxu0
      %v6752 = vadd.f32 %v6610, %v6751
      %v6753 = vpop.f32.mrb[0].mxu0
      %6754 = vmatprep.mubr.bf16.mxu0 0
      %6755 = vmatmul.mubr.bf16.gmra.mrb[0].mxu0 %v6640
      %v6756 = vpop.f32.mrb[0].mxu0
      %v6757 = vadd.f32 %v6610, %v6756
      %v6758 = vpop.f32.mrb[0].mxu0
      %v6759 = vpop.f32.mrb[0].mxu0
      %v6760 = vadd.f32 %v6610, %v6759
      %v6761 = vpop.f32.mrb[0].mxu0
      %6762 = vmatprep.mubr.bf16.mxu0 0
      %6763 = vmatmul.mubr.bf16.gmra.mrb[0].mxu0 %v6643
      %v6764 = vpop.f32.mrb[0].mxu0
      %v6765 = vadd.f32 %v6610, %v6764
      %v6766 = vpop.f32.mrb[0].mxu0
      %v6767 = vpop.f32.mrb[0].mxu0
      %v6768 = vadd.f32 %v6610, %v6767
      %v6769 = vpop.f32.mrb[0].mxu0
      %6770 = vmatprep.mubr.bf16.mxu0 0
      %6771 = vmatmul.mubr.bf16.gmra.mrb[0].mxu0 %v6646
      %v6772 = vpop.f32.mrb[0].mxu0
      %v6773 = vadd.f32 %v6610, %v6772
      %v6774 = vpop.f32.mrb[0].mxu0
      %v6775 = vpop.f32.mrb[0].mxu0
      %v6776 = vadd.f32 %v6610, %v6775
      %v6777 = vpop.f32.mrb[0].mxu0
      %6778 = vmatprep.mubr.bf16.mxu0 0
      %6779 = vmatmul.mubr.bf16.gmra.mrb[0].mxu0 %v6649
      %v6780 = vpop.f32.mrb[0].mxu0
      %v6781 = vadd.f32 %v6610, %v6780
      %v6782 = vpop.f32.mrb[0].mxu0
      %v6783 = vpop.f32.mrb[0].mxu0
      %v6784 = vadd.f32 %v6610, %v6783
      %v6785 = vpop.f32.mrb[0].mxu0
      %6786 = vmatprep.mubr.bf16.mxu0 0
      %6787 = vmatmul.mubr.bf16.gmra.mrb[0].mxu0 %v6652
      %v6788 = vpop.f32.mrb[0].mxu0
      %v6789 = vadd.f32 %v6610, %v6788
      %v6790 = vpop.f32.mrb[0].mxu0
      %v6791 = vpop.f32.mrb[0].mxu0
      %v6792 = vadd.f32 %v6610, %v6791
      %v6793 = vpop.f32.mrb[0].mxu0
      %6794 = vmatprep.mubr.bf16.mxu0 0
      %6795 = vmatmul.mubr.bf16.gmra.mrb[0].mxu0 %v6655
      %v6796 = vpop.f32.mrb[0].mxu0
      %v6797 = vadd.f32 %v6610, %v6796
      %v6798 = vpop.f32.mrb[0].mxu0
      %v6799 = vpop.f32.mrb[0].mxu0
      %v6800 = vadd.f32 %v6610, %v6799
      %v6801 = vpop.f32.mrb[0].mxu0
      %6802 = vmatprep.mubr.bf16.mxu0 0
      %6803 = vmatmul.mubr.bf16.gmra.mrb[0].mxu0 %v6658
      %v6804 = vpop.f32.mrb[0].mxu0
      %v6805 = vadd.f32 %v6610, %v6804
      %v6806 = vpop.f32.mrb[0].mxu0
      %v6807 = vpop.f32.mrb[0].mxu0
      %v6808 = vadd.f32 %v6610, %v6807
      %v6809 = vpop.f32.mrb[0].mxu0
      %6810 = vmatprep.mubr.bf16.mxu0 0
      %6811 = vmatmul.mubr.bf16.gmra.mrb[0].mxu0 %v6661
      %v6812 = vpop.f32.mrb[0].mxu0
      %v6813 = vadd.f32 %v6610, %v6812
      %v6814 = vpop.f32.mrb[0].mxu0
      %v6815 = vpop.f32.mrb[0].mxu0
      %v6816 = vadd.f32 %v6610, %v6815
      %v6817 = vpop.f32.mrb[0].mxu0
      %6818 = vmatprep.mubr.bf16.mxu0 0
      %6819 = vmatmul.mubr.bf16.gmra.mrb[0].mxu0 %v6664
      %v6820 = vpop.f32.mrb[0].mxu0
      %v6821 = vadd.f32 %v6610, %v6820
      %v6822 = vpop.f32.mrb[0].mxu0
      %v6823 = vpop.f32.mrb[0].mxu0
      %v6824 = vadd.f32 %v6610, %v6823
      %v6825 = vpop.f32.mrb[0].mxu0
      %6826 = vdwg.mxu0
      %6827 = vst.msk [vmem:[%s568] sm:$0xff] %vm716, %v6701
      %6828 = vst.msk [vmem:[%s568 + $0x8] sm:$0xff] %vm716, %v6704
      %6829 = vst.msk [vmem:[%s568 + $0x10] sm:$0xff] %vm716, %v6709
      %6830 = vst.msk [vmem:[%s568 + $0x18] sm:$0xff] %vm716, %v6712
      %6831 = vst.msk [vmem:[%s568 + $0x20] sm:$0xff] %vm716, %v6717
      %6832 = vst.msk [vmem:[%s568 + $0x28] sm:$0xff] %vm716, %v6720
      %6833 = vst.msk [vmem:[%s568 + $0x30] sm:$0xff] %vm716, %v6725
      %6834 = vst.msk [vmem:[%s568 + $0x38] sm:$0xff] %vm716, %v6728
      %6835 = vst.msk [vmem:[%s568 + $0x40] sm:$0xff] %vm716, %v6733
      %6836 = vst.msk [vmem:[%s568 + $0x48] sm:$0xff] %vm716, %v6736
      %6837 = vst.msk [vmem:[%s568 + $0x50] sm:$0xff] %vm716, %v6741
      %6838 = vst.msk [vmem:[%s568 + $0x58] sm:$0xff] %vm716, %v6744
      %6839 = vst.msk [vmem:[%s568 + $0x60] sm:$0xff] %vm716, %v6749
      %6840 = vst.msk [vmem:[%s568 + $0x68] sm:$0xff] %vm716, %v6752
      %6841 = vst.msk [vmem:[%s568 + $0x70] sm:$0xff] %vm716, %v6757
      %6842 = vst.msk [vmem:[%s568 + $0x78] sm:$0xff] %vm716, %v6760
      %6843 = vst.msk [vmem:[%s568 + $0x80] sm:$0xff] %vm716, %v6765
      %6844 = vst.msk [vmem:[%s568 + $0x88] sm:$0xff] %vm716, %v6768
      %6845 = vst.msk [vmem:[%s568 + $0x90] sm:$0xff] %vm716, %v6773
      %6846 = vst.msk [vmem:[%s568 + $0x98] sm:$0xff] %vm716, %v6776
      %6847 = vst.msk [vmem:[%s568 + $0xa0] sm:$0xff] %vm716, %v6781
      %6848 = vst.msk [vmem:[%s568 + $0xa8] sm:$0xff] %vm716, %v6784
      %6849 = vst.msk [vmem:[%s568 + $0xb0] sm:$0xff] %vm716, %v6789
      %6850 = vst.msk [vmem:[%s568 + $0xb8] sm:$0xff] %vm716, %v6792
      %6851 = vst.msk [vmem:[%s568 + $0xc0] sm:$0xff] %vm716, %v6797
      %6852 = vst.msk [vmem:[%s568 + $0xc8] sm:$0xff] %vm716, %v6800
      %6853 = vst.msk [vmem:[%s568 + $0xd0] sm:$0xff] %vm716, %v6805
      %6854 = vst.msk [vmem:[%s568 + $0xd8] sm:$0xff] %vm716, %v6808
      %6855 = vst.msk [vmem:[%s568 + $0xe0] sm:$0xff] %vm716, %v6813
      %6856 = vst.msk [vmem:[%s568 + $0xe8] sm:$0xff] %vm716, %v6816
      %6857 = vst.msk [vmem:[%s568 + $0xf0] sm:$0xff] %vm716, %v6821
      %6858 = vst.msk [vmem:[%s568 + $0xf8] sm:$0xff] %vm716, %v6824
      %p6859 = scmp.lt.s32.totalorder %s28, 1
      %s6860 = scalar_select %p6859, %s28, 1
      %s6861 = smul.addr %s6860, 32
      %s6862 = smul.addr %s6861, 8
      %s6863 = scalar_lea.vmem %s17, %s6862
      // Predicated region
      $region89: #{fuse_forward.1} parent=87 // pred_check
        %p6864 = pneg %p413
      $region90: #{fuse_forward.1} parent=87 // pred_check_branch
        %6866 = sbr.rel (%p6864) target = $region92
      $region91: #{fuse_forward.1} parent=87 // pred_region
        _
      $region92: #{fuse_forward.1} parent=87 // pred_fallthru
        _
    $region88: #{fuse_forward.1} parent=5 // pred_fallthru
      _
    %p6867 = scmp.le.s32.totalorder 2, %s23
    // Predicated region
    $region93: #{fuse_forward.1} parent=5 // pred_check
      %p6868 = pneg %p6867
    $region94: #{fuse_forward.1} parent=5 // pred_check_branch
      %6870 = sbr.rel (%p6868) target = $region96
    $region95: #{fuse_forward.1} parent=5 // pred_region
      %s6871 = ssub.s32 %s23, 2
      // Predicated region
      $region97: #{fuse_forward.1} parent=95 // pred_check
        %p6872 = pneg %p419
      $region98: #{fuse_forward.1} parent=95 // pred_check_branch
        %6874 = sbr.rel (%p6872) target = $region100
      $region99: #{fuse_forward.1} parent=95 // pred_region
        %p6875 = scmp.lt.s32.totalorder %s29, 1
        %s6876 = scalar_select %p6875, %s29, 1
        %s6877 = smul.addr %s6876, 32
        %s6878 = smul.addr %s6877, 8
        %s6879 = scalar_lea.vmem %s17, %s6878
      $region100: #{fuse_forward.1} parent=95 // pred_fallthru
        _
    $region96: #{fuse_forward.1} parent=5 // pred_fallthru
      _
  $region6: #{fuse_forward.1} parent=0 // loop_footer
    %s27 = sadd.s32 1, %s23
  $region7: #{fuse_forward.1} parent=0 // loop_footer_branch
    %22 = sbr.rel target = $region3
  $region8: #{fuse_forward.1} parent=0 // loop_exit
    _

</llo_original>
